<compile_context>
chip_gen: v7x
topology: tpu7x:2x2x1
jax: 0.10.0
libtpu: 0.0.40
codegen_flags: <defaults>
</compile_context>

<pallas_src>
import functools

import jax
import jax.numpy as jnp
from jax.experimental import pallas as pl
from jax.experimental.pallas import tpu as pltpu


def _his_block_kernel(
    x_ref,                                   # (1, H, W, C)  bf16
    w12_ref, s12_ref, t12_ref,               # fused conv1|conv2 1x1 + [bn1 affine | conv2 bias]
    wdw_ref, s2_ref, t2_ref,                 # depthwise 3x3 + folded bn2
    wse1_ref, bse1_ref, wse2_ref, bse2_ref,  # SE block
    w3_ref, s3_ref, t3_ref,                  # conv3 3x3 (im2col (9C, C2)) + folded bn3
    w4_ref, s4_ref, t4_ref,                  # conv4 3x3 dilated (im2col (9C, C)) + folded bn4
    o_ref,                                   # (1, H, W, C)  f32
    pad_ref,                                 # VMEM scratch (H+2P, W+2P, C) f32
    *, d_rate: int,
):
    _, H, W, C = x_ref.shape
    C2 = C // 2
    P = (pad_ref.shape[0] - H) // 2          # halo width of the scratch

    # Zero only the P-wide halo border; the interior is fully rewritten before
    # every read below.  Re-done each grid step so it is correct even when the
    # batch axis is sharded across TensorCores (per-core scratch instances).
    zr = jnp.zeros((P, W + 2 * P, C), pad_ref.dtype)
    pad_ref[0:P, :, :] = zr
    pad_ref[P + H:2 * P + H, :, :] = zr
    zc = jnp.zeros((H, P, C), pad_ref.dtype)
    pad_ref[P:P + H, 0:P, :] = zc
    pad_ref[P:P + H, P + W:2 * P + W, :] = zc

    xm = x_ref[0].reshape(H * W, C)          # bf16, (H*W, C)

    # ---- fused conv1|conv2 (1x1): one MXU pass, then split halves ----
    z = jnp.dot(xm, w12_ref[...], preferred_element_type=jnp.float32)
    z = z * s12_ref[...] + t12_ref[...]      # [bn1 scale/shift | 1.0 / conv2 bias]
    y1 = z[:, 0:C2]
    x1 = y1 * jax.nn.sigmoid(y1)             # SiLU, (H*W, C2), f32
    x2 = z[:, C2:C]                          # (H*W, C2), f32
    x1_hw = x1.reshape(H, W, C2)

    # ---- conv1_1: depthwise 3x3 (pad=1) -> bn2 -> ReLU (VPU, f32) ----
    pad_ref[P:P + H, P:P + W, 0:C2] = x1_hw.astype(pad_ref.dtype)
    acc_dw = jnp.zeros((H, W, C2), jnp.float32)
    for ky in range(3):
        for kx in range(3):
            sl = pad_ref[P + ky - 1:P + ky - 1 + H,
                         P + kx - 1:P + kx - 1 + W, 0:C2]
            acc_dw = acc_dw + sl * wdw_ref[ky:ky + 1, kx:kx + 1, :]
    x1_1 = jnp.maximum(acc_dw * s2_ref[...] + t2_ref[...], 0.0)     # (H, W, C2)

    # ---- conv1_2: SE block on x1 ----
    gap = jnp.mean(x1, axis=0, keepdims=True)                        # (1, C2)
    se = jnp.maximum(
        jnp.dot(gap, wse1_ref[...], preferred_element_type=jnp.float32)
        + bse1_ref[...], 0.0)
    gate = jax.nn.sigmoid(
        jnp.dot(se, wse2_ref[...], preferred_element_type=jnp.float32)
        + bse2_ref[...])                                             # (1, C2)
    x1_2 = x1_hw * gate                                              # (H, W, C2)

    # ---- conv3: 3x3 (pad=1) on concat(x1_1, x1_2) via im2col single matmul ----
    pad_ref[P:P + H, P:P + W, :] = jnp.concatenate(
        [x1_1, x1_2], axis=-1).astype(pad_ref.dtype)
    cols3 = [pad_ref[P + ky - 1:P + ky - 1 + H,
                     P + kx - 1:P + kx - 1 + W, :]
             for ky in range(3) for kx in range(3)]
    im3 = jnp.concatenate(cols3, axis=-1).reshape(H * W, 9 * C).astype(jnp.bfloat16)
    acc3 = jnp.dot(im3, w3_ref[...], preferred_element_type=jnp.float32)
    x1_c = jnp.maximum(acc3 * s3_ref[...] + t3_ref[...], 0.0)        # (H*W, C2)

    # ---- conv4: 3x3 dilated (d_rate) on concat(x1_c, x2) via im2col matmul ----
    pad_ref[P:P + H, P:P + W, :] = jnp.concatenate(
        [x1_c.reshape(H, W, C2), x2.reshape(H, W, C2)],
        axis=-1).astype(pad_ref.dtype)
    cols4 = [pad_ref[P + (ky - 1) * d_rate:P + (ky - 1) * d_rate + H,
                     P + (kx - 1) * d_rate:P + (kx - 1) * d_rate + W, :]
             for ky in range(3) for kx in range(3)]
    im4 = jnp.concatenate(cols4, axis=-1).reshape(H * W, 9 * C).astype(jnp.bfloat16)
    acc4 = jnp.dot(im4, w4_ref[...], preferred_element_type=jnp.float32)
    y4 = acc4 * s4_ref[...] + t4_ref[...]
    out = y4 * jax.nn.sigmoid(y4)                                    # (H*W, C)
    o_ref[0] = out.reshape(H, W, C).astype(o_ref.dtype)


def make_params(key, feature, beta=4, d_rate=2):
    """Deterministic synthetic parameters (BN folded into scale/shift)."""
    C = feature
    C2 = C // 2
    Cr = max(1, C2 // beta)
    keys = jax.random.split(key, 16)

    def n(k, shape, scale=0.1):
        return jax.random.normal(k, shape, jnp.float32) * scale

    w1, b1 = n(keys[0], (C, C2)), n(keys[1], (C2,))
    w2, b2 = n(keys[2], (C, C2)), n(keys[3], (C2,))
    wdw = n(keys[4], (3, 3, C2))
    wse1, bse1 = n(keys[5], (C2, Cr)), n(keys[6], (Cr,))
    wse2, bse2 = n(keys[7], (Cr, C2)), n(keys[8], (C2,))
    w3 = n(keys[9], (3, 3, C, C2))
    w4 = n(keys[10], (3, 3, C, C))

    def bn(k, c):
        kg, kb, km, kv = jax.random.split(k, 4)
        gamma = 1.0 + 0.1 * jax.random.normal(kg, (c,), jnp.float32)
        betap = 0.1 * jax.random.normal(kb, (c,), jnp.float32)
        mean = 0.1 * jax.random.normal(km, (c,), jnp.float32)
        var = 0.9 + 0.1 * jnp.abs(jax.random.normal(kv, (c,), jnp.float32))
        return gamma, betap, mean, var

    bn1, bn2, bn3, bn4 = bn(keys[11], C2), bn(keys[12], C2), bn(keys[13], C2), bn(keys[14], C)
    eps = 1e-5

    def fold(bnp, conv_bias=None):
        g, b, m, v = bnp
        scale = g / jnp.sqrt(v + eps)
        shift = b - m * scale
        if conv_bias is not None:
            shift = shift + conv_bias * scale
        return scale.reshape(1, -1), shift.reshape(1, -1)

    s1, t1 = fold(bn1, b1)
    s2, t2 = fold(bn2)
    s3, t3 = fold(bn3)
    s4, t4 = fold(bn4)

    return dict(
        w1=w1, s1=s1, t1=t1,
        w2=w2, b2=b2.reshape(1, -1),
        wdw=wdw, s2=s2, t2=t2,
        wse1=wse1, bse1=bse1.reshape(1, -1), wse2=wse2, bse2=bse2.reshape(1, -1),
        w3=w3, s3=s3, t3=t3,
        w4=w4, s4=s4, t4=t4,
    )


def his_block_forward(x_nchw, params, d_rate=2):
    """Pallas TPU forward. Accepts / returns NCHW (PyTorch convention)."""
    x = jnp.transpose(x_nchw, (0, 2, 3, 1)).astype(jnp.bfloat16)    # -> NHWC, bf16 for MXU/DMA
    N, H, W, C = x.shape
    C2 = C // 2
    P = max(1, d_rate)

    # Fuse conv1|conv2 into one (C, C) 1x1 weight; fold bn1-affine / conv2-bias
    # into a single per-channel scale/shift over the fused output.
    w12 = jnp.concatenate([params['w1'], params['w2']], axis=1).astype(jnp.bfloat16)
    s12 = jnp.concatenate([params['s1'], jnp.ones((1, C2), jnp.float32)], axis=1)
    t12 = jnp.concatenate([params['t1'], params['b2']], axis=1)

    # im2col weight layout: (ky, kx, cin) flattened on rows, cout on columns —
    # matches the order the kernel concatenates the 9 shifted slices.
    w3r = params['w3'].reshape(9 * C, C2).astype(jnp.bfloat16)
    w4r = params['w4'].reshape(9 * C, C).astype(jnp.bfloat16)

    args = [
        x,
        w12, s12, t12,
        params['wdw'], params['s2'], params['t2'],
        params['wse1'], params['bse1'], params['wse2'], params['bse2'],
        w3r, params['s3'], params['t3'],
        w4r, params['s4'], params['t4'],
    ]

    def full_spec(a):
        nd = a.ndim
        return pl.BlockSpec(a.shape, lambda b, _nd=nd: (0,) * _nd)

    in_specs = [pl.BlockSpec((1, H, W, C), lambda b: (b, 0, 0, 0))]
    in_specs += [full_spec(a) for a in args[1:]]

    flops = 2 * N * H * W * (C * C + 9 * C2 + 9 * C * C2 + 9 * C * C)
    transcendentals = N * (H * W * (C2 + C) + C2)
    bytes_accessed = int(
        x.size * x.dtype.itemsize + N * H * W * C * 4
        + sum(int(a.size) * a.dtype.itemsize for a in args[1:]))

    out = pl.pallas_call(
        functools.partial(_his_block_kernel, d_rate=d_rate),
        out_shape=jax.ShapeDtypeStruct((N, H, W, C), jnp.float32),
        grid=(N,),
        in_specs=in_specs,
        out_specs=pl.BlockSpec((1, H, W, C), lambda b: (b, 0, 0, 0)),
        scratch_shapes=[pltpu.VMEM((H + 2 * P, W + 2 * P, C), jnp.float32)],
        compiler_params=pltpu.CompilerParams(dimension_semantics=("parallel",)),
        cost_estimate=pl.CostEstimate(
            flops=flops,
            transcendentals=transcendentals,
            bytes_accessed=bytes_accessed),
    )(*args)
    return jnp.transpose(out, (0, 3, 1, 2))                          # -> NCHW, f32


def his_block_reference(x_nchw, params, d_rate=2):
    """Pure-JAX f32 reference (same folded params) for correctness checking."""
    x = jnp.transpose(x_nchw, (0, 2, 3, 1)).astype(jnp.float32)

    def conv1x1(v, w, b=None):
        y = jnp.einsum('nhwc,co->nhwo', v, w)
        return y if b is None else y + b.reshape(1, 1, 1, -1)

    def conv3x3(v, w, dil=1):
        return jax.lax.conv_general_dilated(
            v, w, (1, 1), 'SAME', rhs_dilation=(dil, dil),
            dimension_numbers=('NHWC', 'HWIO', 'NHWC'))

    def dwconv(v, w):
        c = v.shape[-1]
        return jax.lax.conv_general_dilated(
            v, w.reshape(3, 3, 1, c), (1, 1), 'SAME', feature_group_count=c,
            dimension_numbers=('NHWC', 'HWIO', 'NHWC'))

    silu = lambda z: z * jax.nn.sigmoid(z)
    relu = lambda z: jnp.maximum(z, 0.0)
    aff = lambda z, s, t: z * s.reshape(1, 1, 1, -1) + t.reshape(1, 1, 1, -1)

    x1 = silu(aff(conv1x1(x, params['w1']), params['s1'], params['t1']))
    x2 = conv1x1(x, params['w2'], params['b2'].reshape(-1))
    x1_1 = relu(aff(dwconv(x1, params['wdw']), params['s2'], params['t2']))
    gap = jnp.mean(x1, axis=(1, 2))
    z = relu(gap @ params['wse1'] + params['bse1'])
    gate = jax.nn.sigmoid(z @ params['wse2'] + params['bse2'])
    x1_2 = x1 * gate[:, None, None, :]
    x1_c = relu(aff(conv3x3(jnp.concatenate([x1_1, x1_2], -1), params['w3']),
                    params['s3'], params['t3']))
    x3 = silu(aff(conv3x3(jnp.concatenate([x1_c, x2], -1), params['w4'], dil=d_rate),
                  params['s4'], params['t4']))
    return jnp.transpose(x3, (0, 3, 1, 2))


if __name__ == "__main__":
    feature, beta, d_rate = 16, 4, 2
    N, H, W = 2, 16, 16

    key = jax.random.PRNGKey(0)
    kx, kp = jax.random.split(key)
    x = jax.random.normal(kx, (N, feature, H, W), jnp.float32)       # NCHW input
    params = make_params(kp, feature, beta=beta, d_rate=d_rate)

    out = his_block_forward(x, params, d_rate=d_rate)
    out = jax.block_until_ready(out)

    ref = his_block_reference(x, params, d_rate=d_rate)
    assert out.shape == (N, feature, H, W)
    max_err = float(jnp.max(jnp.abs(out - ref)))
    # bf16 MXU operands with f32 accumulation -> widened tolerance vs pure-f32 ref.
    if max_err > 1e-1:
        raise AssertionError(f"mismatch vs reference: max abs err {max_err}")
    print("KERNEL_OK")
</pallas_src>

<mosaic_0001>
module attributes {stable_mosaic.version = 11 : i64} {
  func.func @_his_block_kernel(%arg0: i32, %arg1: memref<1x16x16x16xbf16, #tpu.memory_space<vmem>>, %arg2: memref<16x16xbf16, #tpu.memory_space<vmem>>, %arg3: memref<1x16xf32, #tpu.memory_space<vmem>>, %arg4: memref<1x16xf32, #tpu.memory_space<vmem>>, %arg5: memref<3x3x8xf32, #tpu.memory_space<vmem>>, %arg6: memref<1x8xf32, #tpu.memory_space<vmem>>, %arg7: memref<1x8xf32, #tpu.memory_space<vmem>>, %arg8: memref<8x2xf32, #tpu.memory_space<vmem>>, %arg9: memref<1x2xf32, #tpu.memory_space<vmem>>, %arg10: memref<2x8xf32, #tpu.memory_space<vmem>>, %arg11: memref<1x8xf32, #tpu.memory_space<vmem>>, %arg12: memref<144x8xbf16, #tpu.memory_space<vmem>>, %arg13: memref<1x8xf32, #tpu.memory_space<vmem>>, %arg14: memref<1x8xf32, #tpu.memory_space<vmem>>, %arg15: memref<144x16xbf16, #tpu.memory_space<vmem>>, %arg16: memref<1x16xf32, #tpu.memory_space<vmem>>, %arg17: memref<1x16xf32, #tpu.memory_space<vmem>>, %arg18: memref<1x16x16x16xf32, #tpu.memory_space<vmem>>, %arg19: memref<20x20x16xf32, #tpu.memory_space<vmem>>) attributes {dimension_semantics = [#tpu.dimension_semantics<parallel>], iteration_bounds = array<i64: 2>, scalar_prefetch = 0 : i64, scratch_operands = 1 : i64, tpu.core_type = #tpu.core_type<tc>, window_params = [{transform_indices = @transform_0, window_bounds = array<i64: 1, 16, 16, 16>}, {pipeline_mode = #tpu.pipeline_mode<synchronous>, transform_indices = @transform_1, window_bounds = array<i64: 16, 16>}, {pipeline_mode = #tpu.pipeline_mode<synchronous>, transform_indices = @transform_2, window_bounds = array<i64: 1, 16>}, {pipeline_mode = #tpu.pipeline_mode<synchronous>, transform_indices = @transform_3, window_bounds = array<i64: 1, 16>}, {pipeline_mode = #tpu.pipeline_mode<synchronous>, transform_indices = @transform_4, window_bounds = array<i64: 3, 3, 8>}, {pipeline_mode = #tpu.pipeline_mode<synchronous>, transform_indices = @transform_5, window_bounds = array<i64: 1, 8>}, {pipeline_mode = #tpu.pipeline_mode<synchronous>, transform_indices = @transform_6, window_bounds = array<i64: 1, 8>}, {pipeline_mode = #tpu.pipeline_mode<synchronous>, transform_indices = @transform_7, window_bounds = array<i64: 8, 2>}, {pipeline_mode = #tpu.pipeline_mode<synchronous>, transform_indices = @transform_8, window_bounds = array<i64: 1, 2>}, {pipeline_mode = #tpu.pipeline_mode<synchronous>, transform_indices = @transform_9, window_bounds = array<i64: 2, 8>}, {pipeline_mode = #tpu.pipeline_mode<synchronous>, transform_indices = @transform_10, window_bounds = array<i64: 1, 8>}, {pipeline_mode = #tpu.pipeline_mode<synchronous>, transform_indices = @transform_11, window_bounds = array<i64: 144, 8>}, {pipeline_mode = #tpu.pipeline_mode<synchronous>, transform_indices = @transform_12, window_bounds = array<i64: 1, 8>}, {pipeline_mode = #tpu.pipeline_mode<synchronous>, transform_indices = @transform_13, window_bounds = array<i64: 1, 8>}, {pipeline_mode = #tpu.pipeline_mode<synchronous>, transform_indices = @transform_14, window_bounds = array<i64: 144, 16>}, {pipeline_mode = #tpu.pipeline_mode<synchronous>, transform_indices = @transform_15, window_bounds = array<i64: 1, 16>}, {pipeline_mode = #tpu.pipeline_mode<synchronous>, transform_indices = @transform_16, window_bounds = array<i64: 1, 16>}, {transform_indices = @transform_17, window_bounds = array<i64: 1, 16, 16, 16>}]} {
    %cst = arith.constant 0.000000e+00 : f32
    %0 = vector.broadcast %cst : f32 to vector<2x20x16xf32>
    %c0 = arith.constant 0 : index
    %c0_0 = arith.constant 0 : index
    %c0_1 = arith.constant 0 : index
    %1 = vector.load %arg19[%c0, %c0_0, %c0_1] : memref<20x20x16xf32, #tpu.memory_space<vmem>>, vector<2x20x16xf32>
    tpu.vector_store %arg19[%c0, %c0_0, %c0_1], %0 {strides = array<i32>} : memref<20x20x16xf32, #tpu.memory_space<vmem>>, vector<2x20x16xf32>,
    %c18 = arith.constant 18 : index
    %c0_2 = arith.constant 0 : index
    %c0_3 = arith.constant 0 : index
    %2 = vector.load %arg19[%c18, %c0_2, %c0_3] : memref<20x20x16xf32, #tpu.memory_space<vmem>>, vector<2x20x16xf32>
    tpu.vector_store %arg19[%c18, %c0_2, %c0_3], %0 {strides = array<i32>} : memref<20x20x16xf32, #tpu.memory_space<vmem>>, vector<2x20x16xf32>,
    %cst_4 = arith.constant 0.000000e+00 : f32
    %3 = vector.broadcast %cst_4 : f32 to vector<16x2x16xf32>
    %c2 = arith.constant 2 : index
    %c0_5 = arith.constant 0 : index
    %c0_6 = arith.constant 0 : index
    %4 = vector.load %arg19[%c2, %c0_5, %c0_6] : memref<20x20x16xf32, #tpu.memory_space<vmem>>, vector<16x2x16xf32>
    tpu.vector_store %arg19[%c2, %c0_5, %c0_6], %3 {strides = array<i32>} : memref<20x20x16xf32, #tpu.memory_space<vmem>>, vector<16x2x16xf32>,
    %c2_7 = arith.constant 2 : index
    %c18_8 = arith.constant 18 : index
    %c0_9 = arith.constant 0 : index
    %5 = vector.load %arg19[%c2_7, %c18_8, %c0_9] : memref<20x20x16xf32, #tpu.memory_space<vmem>>, vector<16x2x16xf32>
    tpu.vector_store %arg19[%c2_7, %c18_8, %c0_9], %3 {strides = array<i32>} : memref<20x20x16xf32, #tpu.memory_space<vmem>>, vector<16x2x16xf32>,
    %c0_10 = arith.constant 0 : index
    %c0_11 = arith.constant 0 : index
    %c0_12 = arith.constant 0 : index
    %c0_13 = arith.constant 0 : index
    %6 = vector.load %arg1[%c0_10, %c0_11, %c0_12, %c0_13] : memref<1x16x16x16xbf16, #tpu.memory_space<vmem>>, vector<1x16x16x16xbf16>
    %7 = vector.shape_cast %6 : vector<1x16x16x16xbf16> to vector<16x16x16xbf16>
    %8 = vector.shape_cast %7 : vector<16x16x16xbf16> to vector<256x16xbf16>
    %c0_14 = arith.constant 0 : index
    %c0_15 = arith.constant 0 : index
    %9 = vector.load %arg2[%c0_14, %c0_15] : memref<16x16xbf16, #tpu.memory_space<vmem>>, vector<16x16xbf16>
    %cst_16 = arith.constant dense<0.000000e+00> : vector<256x16xf32>
    %10 = tpu.matmul %8, %9, %cst_16 {dimension_numbers = #tpu.dot_dimension_numbers<[1], [0], [0], [1], [0, 0, 1, 1], [], []>} : vector<256x16xbf16>, vector<16x16xbf16>, vector<256x16xf32> -> vector<256x16xf32>
    %c0_17 = arith.constant 0 : index
    %c0_18 = arith.constant 0 : index
    %11 = vector.load %arg3[%c0_17, %c0_18] : memref<1x16xf32, #tpu.memory_space<vmem>>, vector<1x16xf32>
    %12 = vector.broadcast %11 : vector<1x16xf32> to vector<256x16xf32>
    %13 = arith.mulf %10, %12 : vector<256x16xf32>
    %c0_19 = arith.constant 0 : index
    %c0_20 = arith.constant 0 : index
    %14 = vector.load %arg4[%c0_19, %c0_20] : memref<1x16xf32, #tpu.memory_space<vmem>>, vector<1x16xf32>
    %15 = vector.broadcast %14 : vector<1x16xf32> to vector<256x16xf32>
    %16 = arith.addf %13, %15 : vector<256x16xf32>
    %17 = vector.extract_strided_slice %16 {offsets = [0, 0], sizes = [256, 8], strides = [1, 1]} : vector<256x16xf32> to vector<256x8xf32>
    %18 = arith.negf %17 : vector<256x8xf32>
    %19 = math.exp %18 : vector<256x8xf32>
    %cst_21 = arith.constant 1.000000e+00 : f32
    %20 = vector.broadcast %cst_21 : f32 to vector<256x8xf32>
    %21 = arith.addf %20, %19 : vector<256x8xf32>
    %22 = arith.divf %20, %21 : vector<256x8xf32>
    %23 = arith.mulf %17, %22 : vector<256x8xf32>
    %24 = vector.extract_strided_slice %16 {offsets = [0, 8], sizes = [256, 8], strides = [1, 1]} : vector<256x16xf32> to vector<256x8xf32>
    %25 = vector.shape_cast %23 : vector<256x8xf32> to vector<16x16x8xf32>
    %c2_22 = arith.constant 2 : index
    %c2_23 = arith.constant 2 : index
    %c0_24 = arith.constant 0 : index
    %26 = vector.load %arg19[%c2_22, %c2_23, %c0_24] : memref<20x20x16xf32, #tpu.memory_space<vmem>>, vector<16x16x8xf32>
    tpu.vector_store %arg19[%c2_22, %c2_23, %c0_24], %25 {strides = array<i32>} : memref<20x20x16xf32, #tpu.memory_space<vmem>>, vector<16x16x8xf32>,
    %cst_25 = arith.constant 0.000000e+00 : f32
    %27 = vector.broadcast %cst_25 : f32 to vector<16x16x8xf32>
    %c1 = arith.constant 1 : index
    %c1_26 = arith.constant 1 : index
    %c0_27 = arith.constant 0 : index
    %28 = vector.load %arg19[%c1, %c1_26, %c0_27] : memref<20x20x16xf32, #tpu.memory_space<vmem>>, vector<16x16x8xf32>
    %c0_28 = arith.constant 0 : index
    %c0_29 = arith.constant 0 : index
    %c0_30 = arith.constant 0 : index
    %29 = vector.load %arg5[%c0_28, %c0_29, %c0_30] : memref<3x3x8xf32, #tpu.memory_space<vmem>>, vector<1x1x8xf32>
    %30 = vector.broadcast %29 : vector<1x1x8xf32> to vector<16x16x8xf32>
    %31 = arith.mulf %28, %30 : vector<16x16x8xf32>
    %32 = arith.addf %27, %31 : vector<16x16x8xf32>
    %c1_31 = arith.constant 1 : index
    %c2_32 = arith.constant 2 : index
    %c0_33 = arith.constant 0 : index
    %33 = vector.load %arg19[%c1_31, %c2_32, %c0_33] : memref<20x20x16xf32, #tpu.memory_space<vmem>>, vector<16x16x8xf32>
    %c0_34 = arith.constant 0 : index
    %c1_35 = arith.constant 1 : index
    %c0_36 = arith.constant 0 : index
    %34 = vector.load %arg5[%c0_34, %c1_35, %c0_36] : memref<3x3x8xf32, #tpu.memory_space<vmem>>, vector<1x1x8xf32>
    %35 = vector.broadcast %34 : vector<1x1x8xf32> to vector<16x16x8xf32>
    %36 = arith.mulf %33, %35 : vector<16x16x8xf32>
    %37 = arith.addf %32, %36 : vector<16x16x8xf32>
    %c1_37 = arith.constant 1 : index
    %c3 = arith.constant 3 : index
    %c0_38 = arith.constant 0 : index
    %38 = vector.load %arg19[%c1_37, %c3, %c0_38] : memref<20x20x16xf32, #tpu.memory_space<vmem>>, vector<16x16x8xf32>
    %c0_39 = arith.constant 0 : index
    %c2_40 = arith.constant 2 : index
    %c0_41 = arith.constant 0 : index
    %39 = vector.load %arg5[%c0_39, %c2_40, %c0_41] : memref<3x3x8xf32, #tpu.memory_space<vmem>>, vector<1x1x8xf32>
    %40 = vector.broadcast %39 : vector<1x1x8xf32> to vector<16x16x8xf32>
    %41 = arith.mulf %38, %40 : vector<16x16x8xf32>
    %42 = arith.addf %37, %41 : vector<16x16x8xf32>
    %c2_42 = arith.constant 2 : index
    %c1_43 = arith.constant 1 : index
    %c0_44 = arith.constant 0 : index
    %43 = vector.load %arg19[%c2_42, %c1_43, %c0_44] : memref<20x20x16xf32, #tpu.memory_space<vmem>>, vector<16x16x8xf32>
    %c1_45 = arith.constant 1 : index
    %c0_46 = arith.constant 0 : index
    %c0_47 = arith.constant 0 : index
    %44 = vector.load %arg5[%c1_45, %c0_46, %c0_47] : memref<3x3x8xf32, #tpu.memory_space<vmem>>, vector<1x1x8xf32>
    %45 = vector.broadcast %44 : vector<1x1x8xf32> to vector<16x16x8xf32>
    %46 = arith.mulf %43, %45 : vector<16x16x8xf32>
    %47 = arith.addf %42, %46 : vector<16x16x8xf32>
    %c2_48 = arith.constant 2 : index
    %c2_49 = arith.constant 2 : index
    %c0_50 = arith.constant 0 : index
    %48 = vector.load %arg19[%c2_48, %c2_49, %c0_50] : memref<20x20x16xf32, #tpu.memory_space<vmem>>, vector<16x16x8xf32>
    %c1_51 = arith.constant 1 : index
    %c1_52 = arith.constant 1 : index
    %c0_53 = arith.constant 0 : index
    %49 = vector.load %arg5[%c1_51, %c1_52, %c0_53] : memref<3x3x8xf32, #tpu.memory_space<vmem>>, vector<1x1x8xf32>
    %50 = vector.broadcast %49 : vector<1x1x8xf32> to vector<16x16x8xf32>
    %51 = arith.mulf %48, %50 : vector<16x16x8xf32>
    %52 = arith.addf %47, %51 : vector<16x16x8xf32>
    %c2_54 = arith.constant 2 : index
    %c3_55 = arith.constant 3 : index
    %c0_56 = arith.constant 0 : index
    %53 = vector.load %arg19[%c2_54, %c3_55, %c0_56] : memref<20x20x16xf32, #tpu.memory_space<vmem>>, vector<16x16x8xf32>
    %c1_57 = arith.constant 1 : index
    %c2_58 = arith.constant 2 : index
    %c0_59 = arith.constant 0 : index
    %54 = vector.load %arg5[%c1_57, %c2_58, %c0_59] : memref<3x3x8xf32, #tpu.memory_space<vmem>>, vector<1x1x8xf32>
    %55 = vector.broadcast %54 : vector<1x1x8xf32> to vector<16x16x8xf32>
    %56 = arith.mulf %53, %55 : vector<16x16x8xf32>
    %57 = arith.addf %52, %56 : vector<16x16x8xf32>
    %c3_60 = arith.constant 3 : index
    %c1_61 = arith.constant 1 : index
    %c0_62 = arith.constant 0 : index
    %58 = vector.load %arg19[%c3_60, %c1_61, %c0_62] : memref<20x20x16xf32, #tpu.memory_space<vmem>>, vector<16x16x8xf32>
    %c2_63 = arith.constant 2 : index
    %c0_64 = arith.constant 0 : index
    %c0_65 = arith.constant 0 : index
    %59 = vector.load %arg5[%c2_63, %c0_64, %c0_65] : memref<3x3x8xf32, #tpu.memory_space<vmem>>, vector<1x1x8xf32>
    %60 = vector.broadcast %59 : vector<1x1x8xf32> to vector<16x16x8xf32>
    %61 = arith.mulf %58, %60 : vector<16x16x8xf32>
    %62 = arith.addf %57, %61 : vector<16x16x8xf32>
    %c3_66 = arith.constant 3 : index
    %c2_67 = arith.constant 2 : index
    %c0_68 = arith.constant 0 : index
    %63 = vector.load %arg19[%c3_66, %c2_67, %c0_68] : memref<20x20x16xf32, #tpu.memory_space<vmem>>, vector<16x16x8xf32>
    %c2_69 = arith.constant 2 : index
    %c1_70 = arith.constant 1 : index
    %c0_71 = arith.constant 0 : index
    %64 = vector.load %arg5[%c2_69, %c1_70, %c0_71] : memref<3x3x8xf32, #tpu.memory_space<vmem>>, vector<1x1x8xf32>
    %65 = vector.broadcast %64 : vector<1x1x8xf32> to vector<16x16x8xf32>
    %66 = arith.mulf %63, %65 : vector<16x16x8xf32>
    %67 = arith.addf %62, %66 : vector<16x16x8xf32>
    %c3_72 = arith.constant 3 : index
    %c3_73 = arith.constant 3 : index
    %c0_74 = arith.constant 0 : index
    %68 = vector.load %arg19[%c3_72, %c3_73, %c0_74] : memref<20x20x16xf32, #tpu.memory_space<vmem>>, vector<16x16x8xf32>
    %c2_75 = arith.constant 2 : index
    %c2_76 = arith.constant 2 : index
    %c0_77 = arith.constant 0 : index
    %69 = vector.load %arg5[%c2_75, %c2_76, %c0_77] : memref<3x3x8xf32, #tpu.memory_space<vmem>>, vector<1x1x8xf32>
    %70 = vector.broadcast %69 : vector<1x1x8xf32> to vector<16x16x8xf32>
    %71 = arith.mulf %68, %70 : vector<16x16x8xf32>
    %72 = arith.addf %67, %71 : vector<16x16x8xf32>
    %c0_78 = arith.constant 0 : index
    %c0_79 = arith.constant 0 : index
    %73 = vector.load %arg6[%c0_78, %c0_79] : memref<1x8xf32, #tpu.memory_space<vmem>>, vector<1x8xf32>
    %74 = vector.shape_cast %73 : vector<1x8xf32> to vector<1x1x8xf32>
    %75 = vector.broadcast %74 : vector<1x1x8xf32> to vector<16x16x8xf32>
    %76 = arith.mulf %72, %75 : vector<16x16x8xf32>
    %c0_80 = arith.constant 0 : index
    %c0_81 = arith.constant 0 : index
    %77 = vector.load %arg7[%c0_80, %c0_81] : memref<1x8xf32, #tpu.memory_space<vmem>>, vector<1x8xf32>
    %78 = vector.shape_cast %77 : vector<1x8xf32> to vector<1x1x8xf32>
    %79 = vector.broadcast %78 : vector<1x1x8xf32> to vector<16x16x8xf32>
    %80 = arith.addf %76, %79 : vector<16x16x8xf32>
    %cst_82 = arith.constant 0.000000e+00 : f32
    %81 = vector.broadcast %cst_82 : f32 to vector<16x16x8xf32>
    %82 = arith.maximumf %80, %81 : vector<16x16x8xf32>
    %cst_83 = arith.constant dense<0.000000e+00> : vector<8xf32>
    %83 = vector.multi_reduction <add>, %23, %cst_83 [0] : vector<256x8xf32> to vector<8xf32>
    %84 = vector.shape_cast %83 : vector<8xf32> to vector<1x8xf32>
    %cst_84 = arith.constant 2.560000e+02 : f32
    %85 = vector.broadcast %cst_84 : f32 to vector<1x8xf32>
    %86 = arith.divf %84, %85 : vector<1x8xf32>
    %c0_85 = arith.constant 0 : index
    %c0_86 = arith.constant 0 : index
    %87 = vector.load %arg8[%c0_85, %c0_86] : memref<8x2xf32, #tpu.memory_space<vmem>>, vector<8x2xf32>
    %cst_87 = arith.constant dense<0.000000e+00> : vector<1x2xf32>
    %88 = tpu.matmul %86, %87, %cst_87 {dimension_numbers = #tpu.dot_dimension_numbers<[1], [0], [0], [1], [0, 0, 1, 1], [], []>} : vector<1x8xf32>, vector<8x2xf32>, vector<1x2xf32> -> vector<1x2xf32>
    %c0_88 = arith.constant 0 : index
    %c0_89 = arith.constant 0 : index
    %89 = vector.load %arg9[%c0_88, %c0_89] : memref<1x2xf32, #tpu.memory_space<vmem>>, vector<1x2xf32>
    %90 = arith.addf %88, %89 : vector<1x2xf32>
    %cst_90 = arith.constant 0.000000e+00 : f32
    %91 = vector.broadcast %cst_90 : f32 to vector<1x2xf32>
    %92 = arith.maximumf %90, %91 : vector<1x2xf32>
    %c0_91 = arith.constant 0 : index
    %c0_92 = arith.constant 0 : index
    %93 = vector.load %arg10[%c0_91, %c0_92] : memref<2x8xf32, #tpu.memory_space<vmem>>, vector<2x8xf32>
    %cst_93 = arith.constant dense<0.000000e+00> : vector<1x8xf32>
    %94 = tpu.matmul %92, %93, %cst_93 {dimension_numbers = #tpu.dot_dimension_numbers<[1], [0], [0], [1], [0, 0, 1, 1], [], []>} : vector<1x2xf32>, vector<2x8xf32>, vector<1x8xf32> -> vector<1x8xf32>
    %c0_94 = arith.constant 0 : index
    %c0_95 = arith.constant 0 : index
    %95 = vector.load %arg11[%c0_94, %c0_95] : memref<1x8xf32, #tpu.memory_space<vmem>>, vector<1x8xf32>
    %96 = arith.addf %94, %95 : vector<1x8xf32>
    %97 = arith.negf %96 : vector<1x8xf32>
    %98 = math.exp %97 : vector<1x8xf32>
    %cst_96 = arith.constant 1.000000e+00 : f32
    %99 = vector.broadcast %cst_96 : f32 to vector<1x8xf32>
    %100 = arith.addf %99, %98 : vector<1x8xf32>
    %101 = arith.divf %99, %100 : vector<1x8xf32>
    %102 = vector.shape_cast %101 : vector<1x8xf32> to vector<1x1x8xf32>
    %103 = vector.broadcast %102 : vector<1x1x8xf32> to vector<16x16x8xf32>
    %104 = arith.mulf %25, %103 : vector<16x16x8xf32>
    %105 = tpu.concatenate %82, %104 in 2 : vector<16x16x8xf32>, vector<16x16x8xf32> -> vector<16x16x16xf32>
    %c2_97 = arith.constant 2 : index
    %c2_98 = arith.constant 2 : index
    %c0_99 = arith.constant 0 : index
    %106 = vector.load %arg19[%c2_97, %c2_98, %c0_99] : memref<20x20x16xf32, #tpu.memory_space<vmem>>, vector<16x16x16xf32>
    tpu.vector_store %arg19[%c2_97, %c2_98, %c0_99], %105 {strides = array<i32>} : memref<20x20x16xf32, #tpu.memory_space<vmem>>, vector<16x16x16xf32>,
    %c1_100 = arith.constant 1 : index
    %c1_101 = arith.constant 1 : index
    %c0_102 = arith.constant 0 : index
    %107 = vector.load %arg19[%c1_100, %c1_101, %c0_102] : memref<20x20x16xf32, #tpu.memory_space<vmem>>, vector<16x16x16xf32>
    %c1_103 = arith.constant 1 : index
    %c2_104 = arith.constant 2 : index
    %c0_105 = arith.constant 0 : index
    %108 = vector.load %arg19[%c1_103, %c2_104, %c0_105] : memref<20x20x16xf32, #tpu.memory_space<vmem>>, vector<16x16x16xf32>
    %c1_106 = arith.constant 1 : index
    %c3_107 = arith.constant 3 : index
    %c0_108 = arith.constant 0 : index
    %109 = vector.load %arg19[%c1_106, %c3_107, %c0_108] : memref<20x20x16xf32, #tpu.memory_space<vmem>>, vector<16x16x16xf32>
    %c2_109 = arith.constant 2 : index
    %c1_110 = arith.constant 1 : index
    %c0_111 = arith.constant 0 : index
    %110 = vector.load %arg19[%c2_109, %c1_110, %c0_111] : memref<20x20x16xf32, #tpu.memory_space<vmem>>, vector<16x16x16xf32>
    %c2_112 = arith.constant 2 : index
    %c2_113 = arith.constant 2 : index
    %c0_114 = arith.constant 0 : index
    %111 = vector.load %arg19[%c2_112, %c2_113, %c0_114] : memref<20x20x16xf32, #tpu.memory_space<vmem>>, vector<16x16x16xf32>
    %c2_115 = arith.constant 2 : index
    %c3_116 = arith.constant 3 : index
    %c0_117 = arith.constant 0 : index
    %112 = vector.load %arg19[%c2_115, %c3_116, %c0_117] : memref<20x20x16xf32, #tpu.memory_space<vmem>>, vector<16x16x16xf32>
    %c3_118 = arith.constant 3 : index
    %c1_119 = arith.constant 1 : index
    %c0_120 = arith.constant 0 : index
    %113 = vector.load %arg19[%c3_118, %c1_119, %c0_120] : memref<20x20x16xf32, #tpu.memory_space<vmem>>, vector<16x16x16xf32>
    %c3_121 = arith.constant 3 : index
    %c2_122 = arith.constant 2 : index
    %c0_123 = arith.constant 0 : index
    %114 = vector.load %arg19[%c3_121, %c2_122, %c0_123] : memref<20x20x16xf32, #tpu.memory_space<vmem>>, vector<16x16x16xf32>
    %c3_124 = arith.constant 3 : index
    %c3_125 = arith.constant 3 : index
    %c0_126 = arith.constant 0 : index
    %115 = vector.load %arg19[%c3_124, %c3_125, %c0_126] : memref<20x20x16xf32, #tpu.memory_space<vmem>>, vector<16x16x16xf32>
    %116 = tpu.concatenate %107, %108, %109, %110, %111, %112, %113, %114, %115 in 2 : vector<16x16x16xf32>, vector<16x16x16xf32>, vector<16x16x16xf32>, vector<16x16x16xf32>, vector<16x16x16xf32>, vector<16x16x16xf32>, vector<16x16x16xf32>, vector<16x16x16xf32>, vector<16x16x16xf32> -> vector<16x16x144xf32>
    %117 = vector.shape_cast %116 : vector<16x16x144xf32> to vector<256x144xf32>
    %118 = arith.truncf %117 : vector<256x144xf32> to vector<256x144xbf16>
    %c0_127 = arith.constant 0 : index
    %c0_128 = arith.constant 0 : index
    %119 = vector.load %arg12[%c0_127, %c0_128] : memref<144x8xbf16, #tpu.memory_space<vmem>>, vector<144x8xbf16>
    %cst_129 = arith.constant dense<0.000000e+00> : vector<256x8xf32>
    %120 = tpu.matmul %118, %119, %cst_129 {dimension_numbers = #tpu.dot_dimension_numbers<[1], [0], [0], [1], [0, 0, 1, 1], [], []>} : vector<256x144xbf16>, vector<144x8xbf16>, vector<256x8xf32> -> vector<256x8xf32>
    %c0_130 = arith.constant 0 : index
    %c0_131 = arith.constant 0 : index
    %121 = vector.load %arg13[%c0_130, %c0_131] : memref<1x8xf32, #tpu.memory_space<vmem>>, vector<1x8xf32>
    %122 = vector.broadcast %121 : vector<1x8xf32> to vector<256x8xf32>
    %123 = arith.mulf %120, %122 : vector<256x8xf32>
    %c0_132 = arith.constant 0 : index
    %c0_133 = arith.constant 0 : index
    %124 = vector.load %arg14[%c0_132, %c0_133] : memref<1x8xf32, #tpu.memory_space<vmem>>, vector<1x8xf32>
    %125 = vector.broadcast %124 : vector<1x8xf32> to vector<256x8xf32>
    %126 = arith.addf %123, %125 : vector<256x8xf32>
    %cst_134 = arith.constant 0.000000e+00 : f32
    %127 = vector.broadcast %cst_134 : f32 to vector<256x8xf32>
    %128 = arith.maximumf %126, %127 : vector<256x8xf32>
    %129 = vector.shape_cast %128 : vector<256x8xf32> to vector<16x16x8xf32>
    %130 = vector.shape_cast %24 : vector<256x8xf32> to vector<16x16x8xf32>
    %131 = tpu.concatenate %129, %130 in 2 : vector<16x16x8xf32>, vector<16x16x8xf32> -> vector<16x16x16xf32>
    %c2_135 = arith.constant 2 : index
    %c2_136 = arith.constant 2 : index
    %c0_137 = arith.constant 0 : index
    %132 = vector.load %arg19[%c2_135, %c2_136, %c0_137] : memref<20x20x16xf32, #tpu.memory_space<vmem>>, vector<16x16x16xf32>
    tpu.vector_store %arg19[%c2_135, %c2_136, %c0_137], %131 {strides = array<i32>} : memref<20x20x16xf32, #tpu.memory_space<vmem>>, vector<16x16x16xf32>,
    %c0_138 = arith.constant 0 : index
    %c0_139 = arith.constant 0 : index
    %c0_140 = arith.constant 0 : index
    %133 = vector.load %arg19[%c0_138, %c0_139, %c0_140] : memref<20x20x16xf32, #tpu.memory_space<vmem>>, vector<16x16x16xf32>
    %c0_141 = arith.constant 0 : index
    %c2_142 = arith.constant 2 : index
    %c0_143 = arith.constant 0 : index
    %134 = vector.load %arg19[%c0_141, %c2_142, %c0_143] : memref<20x20x16xf32, #tpu.memory_space<vmem>>, vector<16x16x16xf32>
    %c0_144 = arith.constant 0 : index
    %c4 = arith.constant 4 : index
    %c0_145 = arith.constant 0 : index
    %135 = vector.load %arg19[%c0_144, %c4, %c0_145] : memref<20x20x16xf32, #tpu.memory_space<vmem>>, vector<16x16x16xf32>
    %c2_146 = arith.constant 2 : index
    %c0_147 = arith.constant 0 : index
    %c0_148 = arith.constant 0 : index
    %136 = vector.load %arg19[%c2_146, %c0_147, %c0_148] : memref<20x20x16xf32, #tpu.memory_space<vmem>>, vector<16x16x16xf32>
    %c2_149 = arith.constant 2 : index
    %c2_150 = arith.constant 2 : index
    %c0_151 = arith.constant 0 : index
    %137 = vector.load %arg19[%c2_149, %c2_150, %c0_151] : memref<20x20x16xf32, #tpu.memory_space<vmem>>, vector<16x16x16xf32>
    %c2_152 = arith.constant 2 : index
    %c4_153 = arith.constant 4 : index
    %c0_154 = arith.constant 0 : index
    %138 = vector.load %arg19[%c2_152, %c4_153, %c0_154] : memref<20x20x16xf32, #tpu.memory_space<vmem>>, vector<16x16x16xf32>
    %c4_155 = arith.constant 4 : index
    %c0_156 = arith.constant 0 : index
    %c0_157 = arith.constant 0 : index
    %139 = vector.load %arg19[%c4_155, %c0_156, %c0_157] : memref<20x20x16xf32, #tpu.memory_space<vmem>>, vector<16x16x16xf32>
    %c4_158 = arith.constant 4 : index
    %c2_159 = arith.constant 2 : index
    %c0_160 = arith.constant 0 : index
    %140 = vector.load %arg19[%c4_158, %c2_159, %c0_160] : memref<20x20x16xf32, #tpu.memory_space<vmem>>, vector<16x16x16xf32>
    %c4_161 = arith.constant 4 : index
    %c4_162 = arith.constant 4 : index
    %c0_163 = arith.constant 0 : index
    %141 = vector.load %arg19[%c4_161, %c4_162, %c0_163] : memref<20x20x16xf32, #tpu.memory_space<vmem>>, vector<16x16x16xf32>
    %142 = tpu.concatenate %133, %134, %135, %136, %137, %138, %139, %140, %141 in 2 : vector<16x16x16xf32>, vector<16x16x16xf32>, vector<16x16x16xf32>, vector<16x16x16xf32>, vector<16x16x16xf32>, vector<16x16x16xf32>, vector<16x16x16xf32>, vector<16x16x16xf32>, vector<16x16x16xf32> -> vector<16x16x144xf32>
    %143 = vector.shape_cast %142 : vector<16x16x144xf32> to vector<256x144xf32>
    %144 = arith.truncf %143 : vector<256x144xf32> to vector<256x144xbf16>
    %c0_164 = arith.constant 0 : index
    %c0_165 = arith.constant 0 : index
    %145 = vector.load %arg15[%c0_164, %c0_165] : memref<144x16xbf16, #tpu.memory_space<vmem>>, vector<144x16xbf16>
    %cst_166 = arith.constant dense<0.000000e+00> : vector<256x16xf32>
    %146 = tpu.matmul %144, %145, %cst_166 {dimension_numbers = #tpu.dot_dimension_numbers<[1], [0], [0], [1], [0, 0, 1, 1], [], []>} : vector<256x144xbf16>, vector<144x16xbf16>, vector<256x16xf32> -> vector<256x16xf32>
    %c0_167 = arith.constant 0 : index
    %c0_168 = arith.constant 0 : index
    %147 = vector.load %arg16[%c0_167, %c0_168] : memref<1x16xf32, #tpu.memory_space<vmem>>, vector<1x16xf32>
    %148 = vector.broadcast %147 : vector<1x16xf32> to vector<256x16xf32>
    %149 = arith.mulf %146, %148 : vector<256x16xf32>
    %c0_169 = arith.constant 0 : index
    %c0_170 = arith.constant 0 : index
    %150 = vector.load %arg17[%c0_169, %c0_170] : memref<1x16xf32, #tpu.memory_space<vmem>>, vector<1x16xf32>
    %151 = vector.broadcast %150 : vector<1x16xf32> to vector<256x16xf32>
    %152 = arith.addf %149, %151 : vector<256x16xf32>
    %153 = arith.negf %152 : vector<256x16xf32>
    %154 = math.exp %153 : vector<256x16xf32>
    %cst_171 = arith.constant 1.000000e+00 : f32
    %155 = vector.broadcast %cst_171 : f32 to vector<256x16xf32>
    %156 = arith.addf %155, %154 : vector<256x16xf32>
    %157 = arith.divf %155, %156 : vector<256x16xf32>
    %158 = arith.mulf %152, %157 : vector<256x16xf32>
    %159 = vector.shape_cast %158 : vector<256x16xf32> to vector<16x16x16xf32>
    %c0_172 = arith.constant 0 : index
    %c0_173 = arith.constant 0 : index
    %c0_174 = arith.constant 0 : index
    %c0_175 = arith.constant 0 : index
    %160 = vector.load %arg18[%c0_172, %c0_173, %c0_174, %c0_175] : memref<1x16x16x16xf32, #tpu.memory_space<vmem>>, vector<1x16x16x16xf32>
    %161 = vector.shape_cast %160 : vector<1x16x16x16xf32> to vector<16x16x16xf32>
    %162 = vector.shape_cast %159 : vector<16x16x16xf32> to vector<1x16x16x16xf32>
    tpu.vector_store %arg18[%c0_172, %c0_173, %c0_174, %c0_175], %162 {strides = array<i32>} : memref<1x16x16x16xf32, #tpu.memory_space<vmem>>, vector<1x16x16x16xf32>,
    return
  }
  func.func @transform_0(%arg0: i32) -> (i32, i32, i32, i32) {
    %c0_i32 = arith.constant 0 : i32
    %c0_i32_0 = arith.constant 0 : i32
    %c0_i32_1 = arith.constant 0 : i32
    %c0_i32_2 = arith.constant 0 : i32
    return %arg0, %c0_i32, %c0_i32_0, %c0_i32_1 : i32, i32, i32, i32
  }
  func.func @transform_1(%arg0: i32) -> (i32, i32) {
    %c0_i32 = arith.constant 0 : i32
    %c0_i32_0 = arith.constant 0 : i32
    %c0_i32_1 = arith.constant 0 : i32
    return %c0_i32, %c0_i32_0 : i32, i32
  }
  func.func @transform_2(%arg0: i32) -> (i32, i32) {
    %c0_i32 = arith.constant 0 : i32
    %c0_i32_0 = arith.constant 0 : i32
    %c0_i32_1 = arith.constant 0 : i32
    return %c0_i32, %c0_i32_0 : i32, i32
  }
  func.func @transform_3(%arg0: i32) -> (i32, i32) {
    %c0_i32 = arith.constant 0 : i32
    %c0_i32_0 = arith.constant 0 : i32
    %c0_i32_1 = arith.constant 0 : i32
    return %c0_i32, %c0_i32_0 : i32, i32
  }
  func.func @transform_4(%arg0: i32) -> (i32, i32, i32) {
    %c0_i32 = arith.constant 0 : i32
    %c0_i32_0 = arith.constant 0 : i32
    %c0_i32_1 = arith.constant 0 : i32
    %c0_i32_2 = arith.constant 0 : i32
    return %c0_i32, %c0_i32_0, %c0_i32_1 : i32, i32, i32
  }
  func.func @transform_5(%arg0: i32) -> (i32, i32) {
    %c0_i32 = arith.constant 0 : i32
    %c0_i32_0 = arith.constant 0 : i32
    %c0_i32_1 = arith.constant 0 : i32
    return %c0_i32, %c0_i32_0 : i32, i32
  }
  func.func @transform_6(%arg0: i32) -> (i32, i32) {
    %c0_i32 = arith.constant 0 : i32
    %c0_i32_0 = arith.constant 0 : i32
    %c0_i32_1 = arith.constant 0 : i32
    return %c0_i32, %c0_i32_0 : i32, i32
  }
  func.func @transform_7(%arg0: i32) -> (i32, i32) {
    %c0_i32 = arith.constant 0 : i32
    %c0_i32_0 = arith.constant 0 : i32
    %c0_i32_1 = arith.constant 0 : i32
    return %c0_i32, %c0_i32_0 : i32, i32
  }
  func.func @transform_8(%arg0: i32) -> (i32, i32) {
    %c0_i32 = arith.constant 0 : i32
    %c0_i32_0 = arith.constant 0 : i32
    %c0_i32_1 = arith.constant 0 : i32
    return %c0_i32, %c0_i32_0 : i32, i32
  }
  func.func @transform_9(%arg0: i32) -> (i32, i32) {
    %c0_i32 = arith.constant 0 : i32
    %c0_i32_0 = arith.constant 0 : i32
    %c0_i32_1 = arith.constant 0 : i32
    return %c0_i32, %c0_i32_0 : i32, i32
  }
  func.func @transform_10(%arg0: i32) -> (i32, i32) {
    %c0_i32 = arith.constant 0 : i32
    %c0_i32_0 = arith.constant 0 : i32
    %c0_i32_1 = arith.constant 0 : i32
    return %c0_i32, %c0_i32_0 : i32, i32
  }
  func.func @transform_11(%arg0: i32) -> (i32, i32) {
    %c0_i32 = arith.constant 0 : i32
    %c0_i32_0 = arith.constant 0 : i32
    %c0_i32_1 = arith.constant 0 : i32
    return %c0_i32, %c0_i32_0 : i32, i32
  }
  func.func @transform_12(%arg0: i32) -> (i32, i32) {
    %c0_i32 = arith.constant 0 : i32
    %c0_i32_0 = arith.constant 0 : i32
    %c0_i32_1 = arith.constant 0 : i32
    return %c0_i32, %c0_i32_0 : i32, i32
  }
  func.func @transform_13(%arg0: i32) -> (i32, i32) {
    %c0_i32 = arith.constant 0 : i32
    %c0_i32_0 = arith.constant 0 : i32
    %c0_i32_1 = arith.constant 0 : i32
    return %c0_i32, %c0_i32_0 : i32, i32
  }
  func.func @transform_14(%arg0: i32) -> (i32, i32) {
    %c0_i32 = arith.constant 0 : i32
    %c0_i32_0 = arith.constant 0 : i32
    %c0_i32_1 = arith.constant 0 : i32
    return %c0_i32, %c0_i32_0 : i32, i32
  }
  func.func @transform_15(%arg0: i32) -> (i32, i32) {
    %c0_i32 = arith.constant 0 : i32
    %c0_i32_0 = arith.constant 0 : i32
    %c0_i32_1 = arith.constant 0 : i32
    return %c0_i32, %c0_i32_0 : i32, i32
  }
  func.func @transform_16(%arg0: i32) -> (i32, i32) {
    %c0_i32 = arith.constant 0 : i32
    %c0_i32_0 = arith.constant 0 : i32
    %c0_i32_1 = arith.constant 0 : i32
    return %c0_i32, %c0_i32_0 : i32, i32
  }
  func.func @transform_17(%arg0: i32) -> (i32, i32, i32, i32) {
    %c0_i32 = arith.constant 0 : i32
    %c0_i32_0 = arith.constant 0 : i32
    %c0_i32_1 = arith.constant 0 : i32
    %c0_i32_2 = arith.constant 0 : i32
    return %arg0, %c0_i32, %c0_i32_0, %c0_i32_1 : i32, i32, i32, i32
  }
}

</mosaic_0001>

<llo_original>
// kernel: tpu_custom_call.1
$region0: #{tpu_custom_call.1}
  #allocation0 [shape = 'u32[]', space=smem, size = 0x4, offset = 0x4, fixed_abs, tag = 'smem constant byte address 0x4 - core index']
  #allocation1 [shape = 'u32[144,128]{1,0:T(1,128)}', space=vmem, size = 0x12000, scoped, tag = 'internal scratch']
  #allocation2 [shape = 'f32[20,20,16]{2,1,0:T(8,128)}', space=vmem, size = 0x3c000, scoped, tag = 'scratch operand']
  %s0 = inlined_call_operand.hbm [shape: bf16[2,16,16,16], index: 0, kind: input, shape index: {}]
  %s1 = inlined_call_operand.vmem [shape: bf16[16,16], index: 1, kind: input, shape index: {}]
  %s2 = inlined_call_operand.vmem [shape: f32[1,16], index: 2, kind: input, shape index: {}]
  %s3 = inlined_call_operand.vmem [shape: f32[1,16], index: 3, kind: input, shape index: {}]
  %s4 = inlined_call_operand.vmem [shape: f32[3,3,8], index: 4, kind: input, shape index: {}]
  %s5 = inlined_call_operand.vmem [shape: f32[1,8], index: 5, kind: input, shape index: {}]
  %s6 = inlined_call_operand.vmem [shape: f32[1,8], index: 6, kind: input, shape index: {}]
  %s7 = inlined_call_operand.vmem [shape: f32[8,2], index: 7, kind: input, shape index: {}]
  %s8 = inlined_call_operand.vmem [shape: f32[1,2], index: 8, kind: input, shape index: {}]
  %s9 = inlined_call_operand.vmem [shape: f32[2,8], index: 9, kind: input, shape index: {}]
  %s10 = inlined_call_operand.vmem [shape: f32[1,8], index: 10, kind: input, shape index: {}]
  %s11 = inlined_call_operand.vmem [shape: bf16[144,8], index: 11, kind: input, shape index: {}]
  %s12 = inlined_call_operand.vmem [shape: f32[1,8], index: 12, kind: input, shape index: {}]
  %s13 = inlined_call_operand.vmem [shape: f32[1,8], index: 13, kind: input, shape index: {}]
  %s14 = inlined_call_operand.vmem [shape: bf16[144,16], index: 14, kind: input, shape index: {}]
  %s15 = inlined_call_operand.vmem [shape: f32[1,16], index: 15, kind: input, shape index: {}]
  %s16 = inlined_call_operand.vmem [shape: f32[1,16], index: 16, kind: input, shape index: {}]
  %s17 = inlined_call_operand.hbm [shape: f32[2,16,16,16], index: 17, kind: output, shape index: {}]
  %s18 = sld [smem:[#allocation0]]
  $region105: #{tpu_custom_call.1} parent=0
    _
  %s20 = ssub.s32 1, %s18
  %s21 = scalar_select 0, %s20, %s18
  $region1: #{tpu_custom_call.1} parent=0
    #allocation3 [shape = 'u8[131072]{0}', space=vmem, size = 0x20000, scoped, tag = 'input window, operand 0']
    #allocation4 [shape = 's32[2]{0}', space=sflag, size = 0x8, scoped, tag = 'scoped memory for tpu_custom_call.1']
    #allocation5 [shape = 's32[2]{0}', space=sflag, size = 0x8, scoped, tag = 'scoped memory for tpu_custom_call.1']
    #allocation6 [shape = 'u8[262144]{0}', space=vmem, size = 0x40000, scoped, tag = 'output window, operand 0']
    %22 = vsyncpa [#allocation4], 0
    %s23 = scalar_lea.sflag [#allocation4], 1
    %24 = vsyncpa %s23, 0
    %25 = vsyncpa [#allocation5], 0
    %s26 = scalar_lea.sflag [#allocation5], 1
    %27 = vsyncpa %s26, 0
    loop: start=0, step=1, limit=4
    $region2: #{tpu_custom_call.1} parent=1 // loop_pre_header
      _
    $region3: #{tpu_custom_call.1} parent=1 // loop_header
      %s29 = sphi 0, %s33
      %p30 = scmp.ge.s32.totalorder %s29, 4
      %s39 = sphi 0, %s41
      %s42 = sphi 0, %s39
      %s43 = sphi 0, %s42
      %s59 = sphi 0, %s43
      %s63 = sphi 0, %s63
      %s65 = sphi 0, %s63
      %s66 = sphi 0, %s65
      %s80 = sphi 0, %s66
      %s84 = sphi 0, %s84
      %s86 = sphi 0, %s84
      %s87 = sphi 0, %s86
      %s101 = sphi 0, %s87
      %s105 = sphi 0, %s105
      %s107 = sphi 0, %s105
      %s108 = sphi 0, %s107
      %s122 = sphi 0, %s108
      %s126 = sphi 0, %s126
      %s128 = sphi 0, %s126
      %s129 = sphi 0, %s128
      %s143 = sphi 0, %s129
      %s147 = sphi 0, %s147
      %s149 = sphi 0, %s147
      %s150 = sphi 0, %s149
      %s164 = sphi 0, %s150
      %s168 = sphi 0, %s168
      %s170 = sphi 0, %s168
      %s171 = sphi 0, %s170
      %s185 = sphi 0, %s171
      %s189 = sphi 0, %s189
      %s191 = sphi 0, %s189
      %s192 = sphi 0, %s191
      %s206 = sphi 0, %s192
      %s210 = sphi 0, %s210
      %s212 = sphi 0, %s210
      %s213 = sphi 0, %s212
      %s227 = sphi 0, %s213
      %s231 = sphi 0, %s231
      %s233 = sphi 0, %s231
      %s234 = sphi 0, %s233
      %s248 = sphi 0, %s234
      %s252 = sphi 0, %s252
      %s254 = sphi 0, %s252
      %s255 = sphi 0, %s254
      %s269 = sphi 0, %s255
      %s273 = sphi 0, %s273
      %s275 = sphi 0, %s273
      %s276 = sphi 0, %s275
      %s290 = sphi 0, %s276
      %s294 = sphi 0, %s294
      %s296 = sphi 0, %s294
      %s297 = sphi 0, %s296
      %s311 = sphi 0, %s297
      %s315 = sphi 0, %s315
      %s317 = sphi 0, %s315
      %s318 = sphi 0, %s317
      %s332 = sphi 0, %s318
      %s336 = sphi 0, %s336
      %s338 = sphi 0, %s336
      %s339 = sphi 0, %s338
      %s353 = sphi 0, %s339
      %s357 = sphi 0, %s357
      %s359 = sphi 0, %s357
      %s360 = sphi 0, %s359
      %s374 = sphi 0, %s360
      %s378 = sphi 0, %s378
      %s380 = sphi 0, %s378
      %s381 = sphi 0, %s380
      %s395 = sphi 0, %s381
      %s401 = sphi 0, %s403
      %s404 = sphi 0, %s401
      %s405 = sphi 0, %s404
      %s421 = sphi 0, %s405
    $region4: #{tpu_custom_call.1} parent=1 // loop_header_branch
      %32 = sbr.rel (%p30) target = $region8
    $region5: #{tpu_custom_call.1} parent=1 // loop_body
      %s34 = ssub.s32 %s29, 1
      %s35 = ssub.s32 %s29, 2
      %s36 = sadd.s32 %s29, 1
      %s37 = ssub.s32 %s29, %s36
      %p38 = scmp.eq.s32.totalorder %s37, 0
      %s40 = sadd.s32 %s39, 1
      %s41 = scalar_select %p38, %s39, %s40
      %p44 = pneg %p38
      %p45 = scmp.eq.s32.totalorder %s29, 1
      %p46 = por %p44, %p45
      %p47 = scmp.ne.s32.totalorder %s39, %s42
      %p48 = scmp.eq.s32.totalorder %s29, 0
      %p49 = por %p47, %p48
      %p50 = scmp.ne.s32.totalorder %s39, %s42
      %p51 = scmp.eq.s32.totalorder %s34, 1
      %p52 = por %p50, %p51
      %p53 = scmp.ne.s32.totalorder %s42, %s43
      %p54 = scmp.eq.s32.totalorder %s34, 0
      %p55 = por %p53, %p54
      %p56 = scmp.ne.s32.totalorder %s42, %s43
      %p57 = scmp.eq.s32.totalorder %s35, 1
      %p58 = por %p56, %p57
      %p60 = scmp.ne.s32.totalorder %s43, %s59
      %p61 = scmp.eq.s32.totalorder %s35, 0
      %p62 = por %p60, %p61
      %s64 = sadd.s32 %s63, 1
      %p67 = scmp.eq.s32.totalorder %s29, 1
      %p68 = scmp.ne.s32.totalorder %s63, %s65
      %p69 = scmp.eq.s32.totalorder %s29, 0
      %p70 = por %p68, %p69
      %p71 = scmp.ne.s32.totalorder %s63, %s65
      %p72 = scmp.eq.s32.totalorder %s34, 1
      %p73 = por %p71, %p72
      %p74 = scmp.ne.s32.totalorder %s65, %s66
      %p75 = scmp.eq.s32.totalorder %s34, 0
      %p76 = por %p74, %p75
      %p77 = scmp.ne.s32.totalorder %s65, %s66
      %p78 = scmp.eq.s32.totalorder %s35, 1
      %p79 = por %p77, %p78
      %p81 = scmp.ne.s32.totalorder %s66, %s80
      %p82 = scmp.eq.s32.totalorder %s35, 0
      %p83 = por %p81, %p82
      %s85 = sadd.s32 %s84, 1
      %p88 = scmp.eq.s32.totalorder %s29, 1
      %p89 = scmp.ne.s32.totalorder %s84, %s86
      %p90 = scmp.eq.s32.totalorder %s29, 0
      %p91 = por %p89, %p90
      %p92 = scmp.ne.s32.totalorder %s84, %s86
      %p93 = scmp.eq.s32.totalorder %s34, 1
      %p94 = por %p92, %p93
      %p95 = scmp.ne.s32.totalorder %s86, %s87
      %p96 = scmp.eq.s32.totalorder %s34, 0
      %p97 = por %p95, %p96
      %p98 = scmp.ne.s32.totalorder %s86, %s87
      %p99 = scmp.eq.s32.totalorder %s35, 1
      %p100 = por %p98, %p99
      %p102 = scmp.ne.s32.totalorder %s87, %s101
      %p103 = scmp.eq.s32.totalorder %s35, 0
      %p104 = por %p102, %p103
      %s106 = sadd.s32 %s105, 1
      %p109 = scmp.eq.s32.totalorder %s29, 1
      %p110 = scmp.ne.s32.totalorder %s105, %s107
      %p111 = scmp.eq.s32.totalorder %s29, 0
      %p112 = por %p110, %p111
      %p113 = scmp.ne.s32.totalorder %s105, %s107
      %p114 = scmp.eq.s32.totalorder %s34, 1
      %p115 = por %p113, %p114
      %p116 = scmp.ne.s32.totalorder %s107, %s108
      %p117 = scmp.eq.s32.totalorder %s34, 0
      %p118 = por %p116, %p117
      %p119 = scmp.ne.s32.totalorder %s107, %s108
      %p120 = scmp.eq.s32.totalorder %s35, 1
      %p121 = por %p119, %p120
      %p123 = scmp.ne.s32.totalorder %s108, %s122
      %p124 = scmp.eq.s32.totalorder %s35, 0
      %p125 = por %p123, %p124
      %s127 = sadd.s32 %s126, 1
      %p130 = scmp.eq.s32.totalorder %s29, 1
      %p131 = scmp.ne.s32.totalorder %s126, %s128
      %p132 = scmp.eq.s32.totalorder %s29, 0
      %p133 = por %p131, %p132
      %p134 = scmp.ne.s32.totalorder %s126, %s128
      %p135 = scmp.eq.s32.totalorder %s34, 1
      %p136 = por %p134, %p135
      %p137 = scmp.ne.s32.totalorder %s128, %s129
      %p138 = scmp.eq.s32.totalorder %s34, 0
      %p139 = por %p137, %p138
      %p140 = scmp.ne.s32.totalorder %s128, %s129
      %p141 = scmp.eq.s32.totalorder %s35, 1
      %p142 = por %p140, %p141
      %p144 = scmp.ne.s32.totalorder %s129, %s143
      %p145 = scmp.eq.s32.totalorder %s35, 0
      %p146 = por %p144, %p145
      %s148 = sadd.s32 %s147, 1
      %p151 = scmp.eq.s32.totalorder %s29, 1
      %p152 = scmp.ne.s32.totalorder %s147, %s149
      %p153 = scmp.eq.s32.totalorder %s29, 0
      %p154 = por %p152, %p153
      %p155 = scmp.ne.s32.totalorder %s147, %s149
      %p156 = scmp.eq.s32.totalorder %s34, 1
      %p157 = por %p155, %p156
      %p158 = scmp.ne.s32.totalorder %s149, %s150
      %p159 = scmp.eq.s32.totalorder %s34, 0
      %p160 = por %p158, %p159
      %p161 = scmp.ne.s32.totalorder %s149, %s150
      %p162 = scmp.eq.s32.totalorder %s35, 1
      %p163 = por %p161, %p162
      %p165 = scmp.ne.s32.totalorder %s150, %s164
      %p166 = scmp.eq.s32.totalorder %s35, 0
      %p167 = por %p165, %p166
      %s169 = sadd.s32 %s168, 1
      %p172 = scmp.eq.s32.totalorder %s29, 1
      %p173 = scmp.ne.s32.totalorder %s168, %s170
      %p174 = scmp.eq.s32.totalorder %s29, 0
      %p175 = por %p173, %p174
      %p176 = scmp.ne.s32.totalorder %s168, %s170
      %p177 = scmp.eq.s32.totalorder %s34, 1
      %p178 = por %p176, %p177
      %p179 = scmp.ne.s32.totalorder %s170, %s171
      %p180 = scmp.eq.s32.totalorder %s34, 0
      %p181 = por %p179, %p180
      %p182 = scmp.ne.s32.totalorder %s170, %s171
      %p183 = scmp.eq.s32.totalorder %s35, 1
      %p184 = por %p182, %p183
      %p186 = scmp.ne.s32.totalorder %s171, %s185
      %p187 = scmp.eq.s32.totalorder %s35, 0
      %p188 = por %p186, %p187
      %s190 = sadd.s32 %s189, 1
      %p193 = scmp.eq.s32.totalorder %s29, 1
      %p194 = scmp.ne.s32.totalorder %s189, %s191
      %p195 = scmp.eq.s32.totalorder %s29, 0
      %p196 = por %p194, %p195
      %p197 = scmp.ne.s32.totalorder %s189, %s191
      %p198 = scmp.eq.s32.totalorder %s34, 1
      %p199 = por %p197, %p198
      %p200 = scmp.ne.s32.totalorder %s191, %s192
      %p201 = scmp.eq.s32.totalorder %s34, 0
      %p202 = por %p200, %p201
      %p203 = scmp.ne.s32.totalorder %s191, %s192
      %p204 = scmp.eq.s32.totalorder %s35, 1
      %p205 = por %p203, %p204
      %p207 = scmp.ne.s32.totalorder %s192, %s206
      %p208 = scmp.eq.s32.totalorder %s35, 0
      %p209 = por %p207, %p208
      %s211 = sadd.s32 %s210, 1
      %p214 = scmp.eq.s32.totalorder %s29, 1
      %p215 = scmp.ne.s32.totalorder %s210, %s212
      %p216 = scmp.eq.s32.totalorder %s29, 0
      %p217 = por %p215, %p216
      %p218 = scmp.ne.s32.totalorder %s210, %s212
      %p219 = scmp.eq.s32.totalorder %s34, 1
      %p220 = por %p218, %p219
      %p221 = scmp.ne.s32.totalorder %s212, %s213
      %p222 = scmp.eq.s32.totalorder %s34, 0
      %p223 = por %p221, %p222
      %p224 = scmp.ne.s32.totalorder %s212, %s213
      %p225 = scmp.eq.s32.totalorder %s35, 1
      %p226 = por %p224, %p225
      %p228 = scmp.ne.s32.totalorder %s213, %s227
      %p229 = scmp.eq.s32.totalorder %s35, 0
      %p230 = por %p228, %p229
      %s232 = sadd.s32 %s231, 1
      %p235 = scmp.eq.s32.totalorder %s29, 1
      %p236 = scmp.ne.s32.totalorder %s231, %s233
      %p237 = scmp.eq.s32.totalorder %s29, 0
      %p238 = por %p236, %p237
      %p239 = scmp.ne.s32.totalorder %s231, %s233
      %p240 = scmp.eq.s32.totalorder %s34, 1
      %p241 = por %p239, %p240
      %p242 = scmp.ne.s32.totalorder %s233, %s234
      %p243 = scmp.eq.s32.totalorder %s34, 0
      %p244 = por %p242, %p243
      %p245 = scmp.ne.s32.totalorder %s233, %s234
      %p246 = scmp.eq.s32.totalorder %s35, 1
      %p247 = por %p245, %p246
      %p249 = scmp.ne.s32.totalorder %s234, %s248
      %p250 = scmp.eq.s32.totalorder %s35, 0
      %p251 = por %p249, %p250
      %s253 = sadd.s32 %s252, 1
      %p256 = scmp.eq.s32.totalorder %s29, 1
      %p257 = scmp.ne.s32.totalorder %s252, %s254
      %p258 = scmp.eq.s32.totalorder %s29, 0
      %p259 = por %p257, %p258
      %p260 = scmp.ne.s32.totalorder %s252, %s254
      %p261 = scmp.eq.s32.totalorder %s34, 1
      %p262 = por %p260, %p261
      %p263 = scmp.ne.s32.totalorder %s254, %s255
      %p264 = scmp.eq.s32.totalorder %s34, 0
      %p265 = por %p263, %p264
      %p266 = scmp.ne.s32.totalorder %s254, %s255
      %p267 = scmp.eq.s32.totalorder %s35, 1
      %p268 = por %p266, %p267
      %p270 = scmp.ne.s32.totalorder %s255, %s269
      %p271 = scmp.eq.s32.totalorder %s35, 0
      %p272 = por %p270, %p271
      %s274 = sadd.s32 %s273, 1
      %p277 = scmp.eq.s32.totalorder %s29, 1
      %p278 = scmp.ne.s32.totalorder %s273, %s275
      %p279 = scmp.eq.s32.totalorder %s29, 0
      %p280 = por %p278, %p279
      %p281 = scmp.ne.s32.totalorder %s273, %s275
      %p282 = scmp.eq.s32.totalorder %s34, 1
      %p283 = por %p281, %p282
      %p284 = scmp.ne.s32.totalorder %s275, %s276
      %p285 = scmp.eq.s32.totalorder %s34, 0
      %p286 = por %p284, %p285
      %p287 = scmp.ne.s32.totalorder %s275, %s276
      %p288 = scmp.eq.s32.totalorder %s35, 1
      %p289 = por %p287, %p288
      %p291 = scmp.ne.s32.totalorder %s276, %s290
      %p292 = scmp.eq.s32.totalorder %s35, 0
      %p293 = por %p291, %p292
      %s295 = sadd.s32 %s294, 1
      %p298 = scmp.eq.s32.totalorder %s29, 1
      %p299 = scmp.ne.s32.totalorder %s294, %s296
      %p300 = scmp.eq.s32.totalorder %s29, 0
      %p301 = por %p299, %p300
      %p302 = scmp.ne.s32.totalorder %s294, %s296
      %p303 = scmp.eq.s32.totalorder %s34, 1
      %p304 = por %p302, %p303
      %p305 = scmp.ne.s32.totalorder %s296, %s297
      %p306 = scmp.eq.s32.totalorder %s34, 0
      %p307 = por %p305, %p306
      %p308 = scmp.ne.s32.totalorder %s296, %s297
      %p309 = scmp.eq.s32.totalorder %s35, 1
      %p310 = por %p308, %p309
      %p312 = scmp.ne.s32.totalorder %s297, %s311
      %p313 = scmp.eq.s32.totalorder %s35, 0
      %p314 = por %p312, %p313
      %s316 = sadd.s32 %s315, 1
      %p319 = scmp.eq.s32.totalorder %s29, 1
      %p320 = scmp.ne.s32.totalorder %s315, %s317
      %p321 = scmp.eq.s32.totalorder %s29, 0
      %p322 = por %p320, %p321
      %p323 = scmp.ne.s32.totalorder %s315, %s317
      %p324 = scmp.eq.s32.totalorder %s34, 1
      %p325 = por %p323, %p324
      %p326 = scmp.ne.s32.totalorder %s317, %s318
      %p327 = scmp.eq.s32.totalorder %s34, 0
      %p328 = por %p326, %p327
      %p329 = scmp.ne.s32.totalorder %s317, %s318
      %p330 = scmp.eq.s32.totalorder %s35, 1
      %p331 = por %p329, %p330
      %p333 = scmp.ne.s32.totalorder %s318, %s332
      %p334 = scmp.eq.s32.totalorder %s35, 0
      %p335 = por %p333, %p334
      %s337 = sadd.s32 %s336, 1
      %p340 = scmp.eq.s32.totalorder %s29, 1
      %p341 = scmp.ne.s32.totalorder %s336, %s338
      %p342 = scmp.eq.s32.totalorder %s29, 0
      %p343 = por %p341, %p342
      %p344 = scmp.ne.s32.totalorder %s336, %s338
      %p345 = scmp.eq.s32.totalorder %s34, 1
      %p346 = por %p344, %p345
      %p347 = scmp.ne.s32.totalorder %s338, %s339
      %p348 = scmp.eq.s32.totalorder %s34, 0
      %p349 = por %p347, %p348
      %p350 = scmp.ne.s32.totalorder %s338, %s339
      %p351 = scmp.eq.s32.totalorder %s35, 1
      %p352 = por %p350, %p351
      %p354 = scmp.ne.s32.totalorder %s339, %s353
      %p355 = scmp.eq.s32.totalorder %s35, 0
      %p356 = por %p354, %p355
      %s358 = sadd.s32 %s357, 1
      %p361 = scmp.eq.s32.totalorder %s29, 1
      %p362 = scmp.ne.s32.totalorder %s357, %s359
      %p363 = scmp.eq.s32.totalorder %s29, 0
      %p364 = por %p362, %p363
      %p365 = scmp.ne.s32.totalorder %s357, %s359
      %p366 = scmp.eq.s32.totalorder %s34, 1
      %p367 = por %p365, %p366
      %p368 = scmp.ne.s32.totalorder %s359, %s360
      %p369 = scmp.eq.s32.totalorder %s34, 0
      %p370 = por %p368, %p369
      %p371 = scmp.ne.s32.totalorder %s359, %s360
      %p372 = scmp.eq.s32.totalorder %s35, 1
      %p373 = por %p371, %p372
      %p375 = scmp.ne.s32.totalorder %s360, %s374
      %p376 = scmp.eq.s32.totalorder %s35, 0
      %p377 = por %p375, %p376
      %s379 = sadd.s32 %s378, 1
      %p382 = scmp.eq.s32.totalorder %s29, 1
      %p383 = scmp.ne.s32.totalorder %s378, %s380
      %p384 = scmp.eq.s32.totalorder %s29, 0
      %p385 = por %p383, %p384
      %p386 = scmp.ne.s32.totalorder %s378, %s380
      %p387 = scmp.eq.s32.totalorder %s34, 1
      %p388 = por %p386, %p387
      %p389 = scmp.ne.s32.totalorder %s380, %s381
      %p390 = scmp.eq.s32.totalorder %s34, 0
      %p391 = por %p389, %p390
      %p392 = scmp.ne.s32.totalorder %s380, %s381
      %p393 = scmp.eq.s32.totalorder %s35, 1
      %p394 = por %p392, %p393
      %p396 = scmp.ne.s32.totalorder %s381, %s395
      %p397 = scmp.eq.s32.totalorder %s35, 0
      %p398 = por %p396, %p397
      %s399 = ssub.s32 %s29, %s36
      %p400 = scmp.eq.s32.totalorder %s399, 0
      %s402 = sadd.s32 %s401, 1
      %s403 = scalar_select %p400, %s401, %s402
      %p406 = pneg %p400
      %p407 = scmp.eq.s32.totalorder %s29, 1
      %p408 = por %p406, %p407
      %p409 = scmp.ne.s32.totalorder %s401, %s404
      %p410 = scmp.eq.s32.totalorder %s29, 0
      %p411 = por %p409, %p410
      %p412 = scmp.ne.s32.totalorder %s401, %s404
      %p413 = scmp.eq.s32.totalorder %s34, 1
      %p414 = por %p412, %p413
      %p415 = scmp.ne.s32.totalorder %s404, %s405
      %p416 = scmp.eq.s32.totalorder %s34, 0
      %p417 = por %p415, %p416
      %p418 = scmp.ne.s32.totalorder %s404, %s405
      %p419 = scmp.eq.s32.totalorder %s35, 1
      %p420 = por %p418, %p419
      %p422 = scmp.ne.s32.totalorder %s405, %s421
      %p423 = scmp.eq.s32.totalorder %s35, 0
      %p424 = por %p422, %p423
      %p425 = scmp.le.s32.totalorder 1, %s29
      %p426 = scmp.lt.s32.totalorder %s29, 3
      %p427 = pnand %p425, %p426
      %p428 = pneg %p427
      // Predicated region
      $region9: #{tpu_custom_call.1} parent=5 // pred_check
        _
      $region10: #{tpu_custom_call.1} parent=5 // pred_check_branch
        %430 = sbr.rel (%p427) target = $region12
      $region11: #{tpu_custom_call.1} parent=5 // pred_region
        %s431 = ssub.s32 %s29, 1
        // Predicated region
        $region13: #{tpu_custom_call.1} parent=11 // pred_check
          %p432 = pneg %p76
        $region14: #{tpu_custom_call.1} parent=11 // pred_check_branch
          %434 = sbr.rel (%p432) target = $region16
        $region15: #{tpu_custom_call.1} parent=11 // pred_region
          _
        $region16: #{tpu_custom_call.1} parent=11 // pred_fallthru
          _
        // Predicated region
        $region17: #{tpu_custom_call.1} parent=11 // pred_check
          %p435 = pneg %p97
        $region18: #{tpu_custom_call.1} parent=11 // pred_check_branch
          %437 = sbr.rel (%p435) target = $region20
        $region19: #{tpu_custom_call.1} parent=11 // pred_region
          _
        $region20: #{tpu_custom_call.1} parent=11 // pred_fallthru
          _
        // Predicated region
        $region21: #{tpu_custom_call.1} parent=11 // pred_check
          %p438 = pneg %p118
        $region22: #{tpu_custom_call.1} parent=11 // pred_check_branch
          %440 = sbr.rel (%p438) target = $region24
        $region23: #{tpu_custom_call.1} parent=11 // pred_region
          _
        $region24: #{tpu_custom_call.1} parent=11 // pred_fallthru
          _
        // Predicated region
        $region25: #{tpu_custom_call.1} parent=11 // pred_check
          %p441 = pneg %p139
        $region26: #{tpu_custom_call.1} parent=11 // pred_check_branch
          %443 = sbr.rel (%p441) target = $region28
        $region27: #{tpu_custom_call.1} parent=11 // pred_region
          _
        $region28: #{tpu_custom_call.1} parent=11 // pred_fallthru
          _
        // Predicated region
        $region29: #{tpu_custom_call.1} parent=11 // pred_check
          %p444 = pneg %p160
        $region30: #{tpu_custom_call.1} parent=11 // pred_check_branch
          %446 = sbr.rel (%p444) target = $region32
        $region31: #{tpu_custom_call.1} parent=11 // pred_region
          _
        $region32: #{tpu_custom_call.1} parent=11 // pred_fallthru
          _
        // Predicated region
        $region33: #{tpu_custom_call.1} parent=11 // pred_check
          %p447 = pneg %p181
        $region34: #{tpu_custom_call.1} parent=11 // pred_check_branch
          %449 = sbr.rel (%p447) target = $region36
        $region35: #{tpu_custom_call.1} parent=11 // pred_region
          _
        $region36: #{tpu_custom_call.1} parent=11 // pred_fallthru
          _
        // Predicated region
        $region37: #{tpu_custom_call.1} parent=11 // pred_check
          %p450 = pneg %p202
        $region38: #{tpu_custom_call.1} parent=11 // pred_check_branch
          %452 = sbr.rel (%p450) target = $region40
        $region39: #{tpu_custom_call.1} parent=11 // pred_region
          _
        $region40: #{tpu_custom_call.1} parent=11 // pred_fallthru
          _
        // Predicated region
        $region41: #{tpu_custom_call.1} parent=11 // pred_check
          %p453 = pneg %p223
        $region42: #{tpu_custom_call.1} parent=11 // pred_check_branch
          %455 = sbr.rel (%p453) target = $region44
        $region43: #{tpu_custom_call.1} parent=11 // pred_region
          _
        $region44: #{tpu_custom_call.1} parent=11 // pred_fallthru
          _
        // Predicated region
        $region45: #{tpu_custom_call.1} parent=11 // pred_check
          %p456 = pneg %p244
        $region46: #{tpu_custom_call.1} parent=11 // pred_check_branch
          %458 = sbr.rel (%p456) target = $region48
        $region47: #{tpu_custom_call.1} parent=11 // pred_region
          _
        $region48: #{tpu_custom_call.1} parent=11 // pred_fallthru
          _
        // Predicated region
        $region49: #{tpu_custom_call.1} parent=11 // pred_check
          %p459 = pneg %p265
        $region50: #{tpu_custom_call.1} parent=11 // pred_check_branch
          %461 = sbr.rel (%p459) target = $region52
        $region51: #{tpu_custom_call.1} parent=11 // pred_region
          _
        $region52: #{tpu_custom_call.1} parent=11 // pred_fallthru
          _
        // Predicated region
        $region53: #{tpu_custom_call.1} parent=11 // pred_check
          %p462 = pneg %p286
        $region54: #{tpu_custom_call.1} parent=11 // pred_check_branch
          %464 = sbr.rel (%p462) target = $region56
        $region55: #{tpu_custom_call.1} parent=11 // pred_region
          _
        $region56: #{tpu_custom_call.1} parent=11 // pred_fallthru
          _
        // Predicated region
        $region57: #{tpu_custom_call.1} parent=11 // pred_check
          %p465 = pneg %p307
        $region58: #{tpu_custom_call.1} parent=11 // pred_check_branch
          %467 = sbr.rel (%p465) target = $region60
        $region59: #{tpu_custom_call.1} parent=11 // pred_region
          _
        $region60: #{tpu_custom_call.1} parent=11 // pred_fallthru
          _
        // Predicated region
        $region61: #{tpu_custom_call.1} parent=11 // pred_check
          %p468 = pneg %p328
        $region62: #{tpu_custom_call.1} parent=11 // pred_check_branch
          %470 = sbr.rel (%p468) target = $region64
        $region63: #{tpu_custom_call.1} parent=11 // pred_region
          _
        $region64: #{tpu_custom_call.1} parent=11 // pred_fallthru
          _
        // Predicated region
        $region65: #{tpu_custom_call.1} parent=11 // pred_check
          %p471 = pneg %p349
        $region66: #{tpu_custom_call.1} parent=11 // pred_check_branch
          %473 = sbr.rel (%p471) target = $region68
        $region67: #{tpu_custom_call.1} parent=11 // pred_region
          _
        $region68: #{tpu_custom_call.1} parent=11 // pred_fallthru
          _
        // Predicated region
        $region69: #{tpu_custom_call.1} parent=11 // pred_check
          %p474 = pneg %p370
        $region70: #{tpu_custom_call.1} parent=11 // pred_check_branch
          %476 = sbr.rel (%p474) target = $region72
        $region71: #{tpu_custom_call.1} parent=11 // pred_region
          _
        $region72: #{tpu_custom_call.1} parent=11 // pred_fallthru
          _
        // Predicated region
        $region73: #{tpu_custom_call.1} parent=11 // pred_check
          %p477 = pneg %p391
        $region74: #{tpu_custom_call.1} parent=11 // pred_check_branch
          %479 = sbr.rel (%p477) target = $region76
        $region75: #{tpu_custom_call.1} parent=11 // pred_region
          _
        $region76: #{tpu_custom_call.1} parent=11 // pred_fallthru
          _
      $region12: #{tpu_custom_call.1} parent=5 // pred_fallthru
        _
      %p480 = scmp.lt.s32.totalorder %s29, 2
      // Predicated region
      $region77: #{tpu_custom_call.1} parent=5 // pred_check
        %p481 = pneg %p480
      $region78: #{tpu_custom_call.1} parent=5 // pred_check_branch
        %483 = sbr.rel (%p481) target = $region80
      $region79: #{tpu_custom_call.1} parent=5 // pred_region
        // Predicated region
        $region81: #{tpu_custom_call.1} parent=79 // pred_check
          %p484 = pneg %p49
        $region82: #{tpu_custom_call.1} parent=79 // pred_check_branch
          %486 = sbr.rel (%p484) target = $region84
        $region83: #{tpu_custom_call.1} parent=79 // pred_region
          %s487 = sand.u32 %s39, 1
          %s488 = scalar_lea.sflag [#allocation4], %s487
          %s489 = sand.u32 %s39, 1
          %s490 = smul.addr %s489, 128
          %s491 = scalar_lea.vmem [#allocation3], %s490
          %s493 = ssub.s32 2048, 2048
          %494 = vsyncadd %s488, %s493
          %s495 = smul.addr %s29, 32
          %s496 = smul.addr %s495, 64
          %s497 = scalar_lea.hbm %s0, %s496
          %s498 = sshll.u32 %s491, 4
          %s499 = int_to_ptr.vmem [resolvable:$true] %s498
          %504 = dma.hbm_to_vmem [thread:$0]  %s497, 2048, %s499, %s488, 64, 64, 4
        $region84: #{tpu_custom_call.1} parent=79 // pred_fallthru
          _
      $region80: #{tpu_custom_call.1} parent=5 // pred_fallthru
        _
      %p505 = scmp.le.s32.totalorder 1, %s29
      %p506 = scmp.lt.s32.totalorder %s29, 3
      %p507 = pnand %p505, %p506
      %p508 = pneg %p507
      // Predicated region
      $region85: #{tpu_custom_call.1} parent=5 // pred_check
        _
      $region86: #{tpu_custom_call.1} parent=5 // pred_check_branch
        %510 = sbr.rel (%p507) target = $region88
      $region87: #{tpu_custom_call.1} parent=5 // pred_region
        %s511 = ssub.s32 %s29, 1
        %s512 = sand.u32 %s42, 1
        %s513 = scalar_lea.sflag [#allocation4], %s512
        %s514 = sand.u32 %s42, 1
        %s515 = smul.addr %s514, 128
        %s516 = scalar_lea.vmem [#allocation3], %s515
        // Predicated region
        $region89: #{tpu_custom_call.1} parent=87 // pred_check
          %p517 = pneg %p55
        $region90: #{tpu_custom_call.1} parent=87 // pred_check_branch
          %519 = sbr.rel (%p517) target = $region92
        $region91: #{tpu_custom_call.1} parent=87 // pred_region
          %520 = dma.done %s513, 2048
        $region92: #{tpu_custom_call.1} parent=87 // pred_fallthru
          _
        %s521 = sand.u32 %s42, 1
        %s522 = scalar_lea.sflag [#allocation4], %s521
        %s523 = sand.u32 %s42, 1
        %s524 = smul.addr %s523, 128
        %s525 = scalar_lea.vmem [#allocation3], %s524
        %p526 = pneg %p55
        %p527 = pneg %p52
        %p528 = pneg %p76
        %p529 = pneg %p73
        %p530 = pneg %p97
        %p531 = pneg %p94
        %p532 = pneg %p118
        %p533 = pneg %p115
        %p534 = pneg %p139
        %p535 = pneg %p136
        %p536 = pneg %p160
        %p537 = pneg %p157
        %p538 = pneg %p181
        %p539 = pneg %p178
        %p540 = pneg %p202
        %p541 = pneg %p199
        %p542 = pneg %p223
        %p543 = pneg %p220
        %p544 = pneg %p244
        %p545 = pneg %p241
        %p546 = pneg %p265
        %p547 = pneg %p262
        %p548 = pneg %p286
        %p549 = pneg %p283
        %p550 = pneg %p307
        %p551 = pneg %p304
        %p552 = pneg %p328
        %p553 = pneg %p325
        %p554 = pneg %p349
        %p555 = pneg %p346
        %p556 = pneg %p370
        %p557 = pneg %p367
        %p558 = pneg %p391
        %p559 = pneg %p388
        %p560 = pneg %p417
        %p561 = pneg %p414
        %s562 = sand.u32 %s404, 1
        %s563 = scalar_lea.sflag [#allocation5], %s562
        %s564 = sand.u32 %s404, 1
        %s565 = smul.addr %s564, 256
        %s566 = scalar_lea.vmem [#allocation6], %s565
        %vm568 = vcmask 130048
        %569 = vst.msk [vmem:[#allocation2] sm:$0xff] %vm568, 0.0
        %570 = vst.msk [vmem:[#allocation2 + $0x8] sm:$0xff] %vm568, 0.0
        %vm571 = vcmask 125952
        %572 = vst.msk [vmem:[#allocation2 + $0x10] sm:$0xf] %vm571, 0.0
        %573 = vst.msk [vmem:[#allocation2 + $0x18] sm:$0xff] %vm568, 0.0
        %574 = vst.msk [vmem:[#allocation2 + $0x20] sm:$0xff] %vm568, 0.0
        %575 = vst.msk [vmem:[#allocation2 + $0x28] sm:$0xf] %vm571, 0.0
        %s576 = scalar_lea.vmem [#allocation2], 432
        %577 = vst.msk [vmem:[%s576] sm:$0xff] %vm568, 0.0
        %578 = vst.msk [vmem:[%s576 + $0x8] sm:$0xff] %vm568, 0.0
        %579 = vst.msk [vmem:[%s576 + $0x10] sm:$0xf] %vm571, 0.0
        %580 = vst.msk [vmem:[%s576 + $0x18] sm:$0xff] %vm568, 0.0
        %581 = vst.msk [vmem:[%s576 + $0x20] sm:$0xff] %vm568, 0.0
        %582 = vst.msk [vmem:[%s576 + $0x28] sm:$0xf] %vm571, 0.0
        %s583 = scalar_lea.vmem [#allocation2], 48
        %vm584 = vcmask 123904
        %585 = vst.msk [vmem:[%s583] sm:$0x3] %vm584, 0.0
        %586 = vst.msk [vmem:[%s583 + $0x18] sm:$0x3] %vm584, 0.0
        %587 = vst.msk [vmem:[%s583 + $0x30] sm:$0x3] %vm584, 0.0
        %588 = vst.msk [vmem:[%s583 + $0x48] sm:$0x3] %vm584, 0.0
        %589 = vst.msk [vmem:[%s583 + $0x60] sm:$0x3] %vm584, 0.0
        %590 = vst.msk [vmem:[%s583 + $0x78] sm:$0x3] %vm584, 0.0
        %591 = vst.msk [vmem:[%s583 + $0x90] sm:$0x3] %vm584, 0.0
        %592 = vst.msk [vmem:[%s583 + $0xa8] sm:$0x3] %vm584, 0.0
        %593 = vst.msk [vmem:[%s583 + $0xc0] sm:$0x3] %vm584, 0.0
        %594 = vst.msk [vmem:[%s583 + $0xd8] sm:$0x3] %vm584, 0.0
        %595 = vst.msk [vmem:[%s583 + $0xf0] sm:$0x3] %vm584, 0.0
        %596 = vst.msk [vmem:[%s583 + $0x108] sm:$0x3] %vm584, 0.0
        %597 = vst.msk [vmem:[%s583 + $0x120] sm:$0x3] %vm584, 0.0
        %598 = vst.msk [vmem:[%s583 + $0x138] sm:$0x3] %vm584, 0.0
        %599 = vst.msk [vmem:[%s583 + $0x150] sm:$0x3] %vm584, 0.0
        %600 = vst.msk [vmem:[%s583 + $0x168] sm:$0x3] %vm584, 0.0
        %601 = vst.msk [vmem:[%s583 + $0x12] sm:$0x3] %vm584, 0.0
        %602 = vst.msk [vmem:[%s583 + $0x2a] sm:$0x3] %vm584, 0.0
        %603 = vst.msk [vmem:[%s583 + $0x42] sm:$0x3] %vm584, 0.0
        %604 = vst.msk [vmem:[%s583 + $0x5a] sm:$0x3] %vm584, 0.0
        %605 = vst.msk [vmem:[%s583 + $0x72] sm:$0x3] %vm584, 0.0
        %606 = vst.msk [vmem:[%s583 + $0x8a] sm:$0x3] %vm584, 0.0
        %607 = vst.msk [vmem:[%s583 + $0xa2] sm:$0x3] %vm584, 0.0
        %608 = vst.msk [vmem:[%s583 + $0xba] sm:$0x3] %vm584, 0.0
        %609 = vst.msk [vmem:[%s583 + $0xd2] sm:$0x3] %vm584, 0.0
        %610 = vst.msk [vmem:[%s583 + $0xea] sm:$0x3] %vm584, 0.0
        %611 = vst.msk [vmem:[%s583 + $0x102] sm:$0x3] %vm584, 0.0
        %612 = vst.msk [vmem:[%s583 + $0x11a] sm:$0x3] %vm584, 0.0
        %613 = vst.msk [vmem:[%s583 + $0x132] sm:$0x3] %vm584, 0.0
        %614 = vst.msk [vmem:[%s583 + $0x14a] sm:$0x3] %vm584, 0.0
        %615 = vst.msk [vmem:[%s583 + $0x162] sm:$0x3] %vm584, 0.0
        %616 = vst.msk [vmem:[%s583 + $0x17a] sm:$0x3] %vm584, 0.0
        %v617 = vld [vmem:[%s516] sm:$0xf]
        %v618 = vld [vmem:[%s516 + $0x4] sm:$0xf]
        %v619 = vld [vmem:[%s516 + $0x8] sm:$0xf]
        %v620 = vld [vmem:[%s516 + $0xc] sm:$0xf]
        %v621 = vld [vmem:[%s516 + $0x10] sm:$0xf]
        %v622 = vld [vmem:[%s516 + $0x14] sm:$0xf]
        %v623 = vld [vmem:[%s516 + $0x18] sm:$0xf]
        %v624 = vld [vmem:[%s516 + $0x1c] sm:$0xf]
        %v625 = vld [vmem:[%s516 + $0x20] sm:$0xf]
        %v626 = vld [vmem:[%s516 + $0x24] sm:$0xf]
        %v627 = vld [vmem:[%s516 + $0x28] sm:$0xf]
        %v628 = vld [vmem:[%s516 + $0x2c] sm:$0xf]
        %v629 = vld [vmem:[%s516 + $0x30] sm:$0xf]
        %v630 = vld [vmem:[%s516 + $0x34] sm:$0xf]
        %v631 = vld [vmem:[%s516 + $0x38] sm:$0xf]
        %v632 = vld [vmem:[%s516 + $0x3c] sm:$0xf]
        %v633 = vld [vmem:[%s516 + $0x40] sm:$0xf]
        %v634 = vld [vmem:[%s516 + $0x44] sm:$0xf]
        %v635 = vld [vmem:[%s516 + $0x48] sm:$0xf]
        %v636 = vld [vmem:[%s516 + $0x4c] sm:$0xf]
        %v637 = vld [vmem:[%s516 + $0x50] sm:$0xf]
        %v638 = vld [vmem:[%s516 + $0x54] sm:$0xf]
        %v639 = vld [vmem:[%s516 + $0x58] sm:$0xf]
        %v640 = vld [vmem:[%s516 + $0x5c] sm:$0xf]
        %v641 = vld [vmem:[%s516 + $0x60] sm:$0xf]
        %v642 = vld [vmem:[%s516 + $0x64] sm:$0xf]
        %v643 = vld [vmem:[%s516 + $0x68] sm:$0xf]
        %v644 = vld [vmem:[%s516 + $0x6c] sm:$0xf]
        %v645 = vld [vmem:[%s516 + $0x70] sm:$0xf]
        %v646 = vld [vmem:[%s516 + $0x74] sm:$0xf]
        %v647 = vld [vmem:[%s516 + $0x78] sm:$0xf]
        %v648 = vld [vmem:[%s516 + $0x7c] sm:$0xf]
        %v649 = vld [vmem:[%s1] sm:$0xf]
        %v650 = vld [vmem:[%s1 + $0x4] sm:$0xf]
        %v683 = vunpack.c.l.b16 %v617
        %v684 = vunpack.c.l.b16 %v618
        %v685 = vunpack.c.l.b16 %v619
        %v686 = vunpack.c.l.b16 %v620
        %v687 = vunpack.c.l.b16 %v621
        %v688 = vunpack.c.l.b16 %v622
        %v689 = vunpack.c.l.b16 %v623
        %v690 = vunpack.c.l.b16 %v624
        %v691 = vunpack.c.l.b16 %v625
        %v692 = vunpack.c.l.b16 %v626
        %v693 = vunpack.c.l.b16 %v627
        %v694 = vunpack.c.l.b16 %v628
        %v695 = vunpack.c.l.b16 %v629
        %v696 = vunpack.c.l.b16 %v630
        %v697 = vunpack.c.l.b16 %v631
        %v698 = vunpack.c.l.b16 %v632
        %v699 = vunpack.c.l.b16 %v633
        %v700 = vunpack.c.l.b16 %v634
        %v701 = vunpack.c.l.b16 %v635
        %v702 = vunpack.c.l.b16 %v636
        %v703 = vunpack.c.l.b16 %v637
        %v704 = vunpack.c.l.b16 %v638
        %v705 = vunpack.c.l.b16 %v639
        %v706 = vunpack.c.l.b16 %v640
        %v707 = vunpack.c.l.b16 %v641
        %v708 = vunpack.c.l.b16 %v642
        %v709 = vunpack.c.l.b16 %v643
        %v710 = vunpack.c.l.b16 %v644
        %v711 = vunpack.c.l.b16 %v645
        %v712 = vunpack.c.l.b16 %v646
        %v713 = vunpack.c.l.b16 %v647
        %v714 = vunpack.c.l.b16 %v648
        %v715 = vpack.c.b16 %v684, %v683
        %v716 = vpack.c.b16 %v686, %v685
        %v717 = vpack.c.b16 %v688, %v687
        %v718 = vpack.c.b16 %v690, %v689
        %v719 = vpack.c.b16 %v692, %v691
        %v720 = vpack.c.b16 %v694, %v693
        %v721 = vpack.c.b16 %v696, %v695
        %v722 = vpack.c.b16 %v698, %v697
        %v723 = vpack.c.b16 %v700, %v699
        %v724 = vpack.c.b16 %v702, %v701
        %v725 = vpack.c.b16 %v704, %v703
        %v726 = vpack.c.b16 %v706, %v705
        %v727 = vpack.c.b16 %v708, %v707
        %v728 = vpack.c.b16 %v710, %v709
        %v729 = vpack.c.b16 %v712, %v711
        %v730 = vpack.c.b16 %v714, %v713
        %v733 = vunpack.c.l.b16 %v649
        %v734 = vunpack.c.l.b16 %v650
        %v735 = vpack.c.b16 %v734, %v733
        %v738 = vsel %vm568, %v715, 0
        %v741 = vsel %vm568, %v716, 0
        %v744 = vsel %vm568, %v717, 0
        %v747 = vsel %vm568, %v718, 0
        %v750 = vsel %vm568, %v719, 0
        %v753 = vsel %vm568, %v720, 0
        %v756 = vsel %vm568, %v721, 0
        %v759 = vsel %vm568, %v722, 0
        %v762 = vsel %vm568, %v723, 0
        %v765 = vsel %vm568, %v724, 0
        %v768 = vsel %vm568, %v725, 0
        %v771 = vsel %vm568, %v726, 0
        %v774 = vsel %vm568, %v727, 0
        %v777 = vsel %vm568, %v728, 0
        %v780 = vsel %vm568, %v729, 0
        %v783 = vsel %vm568, %v730, 0
        %785 = vmatprep.subr.bf16.mxu0 0
        %786 = vmatpush1.bf16.msra.mxu0 %v735
        %787 = vmatprep.subr.bf16.mxu0 0
        %788 = vmatpush1.bf16.msra.mxu0 0
        %789 = vmatprep.subr.bf16.mxu0 0
        %790 = vmatpush1.bf16.msra.mxu0 0
        %791 = vmatprep.subr.bf16.mxu0 0
        %792 = vmatpush1.bf16.msra.mxu0 0
        %793 = vmatprep.subr.bf16.mxu0 0
        %794 = vmatpush1.bf16.msra.mxu0 0
        %795 = vmatprep.subr.bf16.mxu0 0
        %796 = vmatpush1.bf16.msra.mxu0 0
        %797 = vmatprep.subr.bf16.mxu0 0
        %798 = vmatpush1.bf16.msra.mxu0 0
        %799 = vmatprep.subr.bf16.mxu0 0
        %800 = vmatpush1.bf16.msra.mxu0 0
        %801 = vmatprep.subr.bf16.mxu0 0
        %802 = vmatpush1.bf16.msra.mxu0 0
        %803 = vmatprep.subr.bf16.mxu0 0
        %804 = vmatpush1.bf16.msra.mxu0 0
        %805 = vmatprep.subr.bf16.mxu0 0
        %806 = vmatpush1.bf16.msra.mxu0 0
        %807 = vmatprep.subr.bf16.mxu0 0
        %808 = vmatpush1.bf16.msra.mxu0 0
        %809 = vmatprep.subr.bf16.mxu0 0
        %810 = vmatpush1.bf16.msra.mxu0 0
        %811 = vmatprep.subr.bf16.mxu0 0
        %812 = vmatpush1.bf16.msra.mxu0 0
        %813 = vmatprep.subr.bf16.mxu0 0
        %814 = vmatpush1.bf16.msra.mxu0 0
        %815 = vmatprep.subr.bf16.mxu0 0
        %816 = vmatpush1.bf16.msra.mxu0 0
        %817 = vmatprep.mubr.bf16.mxu0 0
        %818 = vmatmul.mubr.bf16.gmra.mrb[0].mxu0 %v738
        %v819 = vpop.f32.mrb[0].mxu0
        %v820 = vadd.f32 0.0, %v819
        %v821 = vpop.f32.mrb[0].mxu0
        %v822 = vpop.f32.mrb[0].mxu0
        %v823 = vadd.f32 0.0, %v822
        %v824 = vpop.f32.mrb[0].mxu0
        %825 = vmatprep.mubr.bf16.mxu0 0
        %826 = vmatmul.mubr.bf16.gmra.mrb[0].mxu0 %v741
        %v827 = vpop.f32.mrb[0].mxu0
        %v828 = vadd.f32 0.0, %v827
        %v829 = vpop.f32.mrb[0].mxu0
        %v830 = vpop.f32.mrb[0].mxu0
        %v831 = vadd.f32 0.0, %v830
        %v832 = vpop.f32.mrb[0].mxu0
        %833 = vmatprep.mubr.bf16.mxu0 0
        %834 = vmatmul.mubr.bf16.gmra.mrb[0].mxu0 %v744
        %v835 = vpop.f32.mrb[0].mxu0
        %v836 = vadd.f32 0.0, %v835
        %v837 = vpop.f32.mrb[0].mxu0
        %v838 = vpop.f32.mrb[0].mxu0
        %v839 = vadd.f32 0.0, %v838
        %v840 = vpop.f32.mrb[0].mxu0
        %841 = vmatprep.mubr.bf16.mxu0 0
        %842 = vmatmul.mubr.bf16.gmra.mrb[0].mxu0 %v747
        %v843 = vpop.f32.mrb[0].mxu0
        %v844 = vadd.f32 0.0, %v843
        %v845 = vpop.f32.mrb[0].mxu0
        %v846 = vpop.f32.mrb[0].mxu0
        %v847 = vadd.f32 0.0, %v846
        %v848 = vpop.f32.mrb[0].mxu0
        %849 = vmatprep.mubr.bf16.mxu0 0
        %850 = vmatmul.mubr.bf16.gmra.mrb[0].mxu0 %v750
        %v851 = vpop.f32.mrb[0].mxu0
        %v852 = vadd.f32 0.0, %v851
        %v853 = vpop.f32.mrb[0].mxu0
        %v854 = vpop.f32.mrb[0].mxu0
        %v855 = vadd.f32 0.0, %v854
        %v856 = vpop.f32.mrb[0].mxu0
        %857 = vmatprep.mubr.bf16.mxu0 0
        %858 = vmatmul.mubr.bf16.gmra.mrb[0].mxu0 %v753
        %v859 = vpop.f32.mrb[0].mxu0
        %v860 = vadd.f32 0.0, %v859
        %v861 = vpop.f32.mrb[0].mxu0
        %v862 = vpop.f32.mrb[0].mxu0
        %v863 = vadd.f32 0.0, %v862
        %v864 = vpop.f32.mrb[0].mxu0
        %865 = vmatprep.mubr.bf16.mxu0 0
        %866 = vmatmul.mubr.bf16.gmra.mrb[0].mxu0 %v756
        %v867 = vpop.f32.mrb[0].mxu0
        %v868 = vadd.f32 0.0, %v867
        %v869 = vpop.f32.mrb[0].mxu0
        %v870 = vpop.f32.mrb[0].mxu0
        %v871 = vadd.f32 0.0, %v870
        %v872 = vpop.f32.mrb[0].mxu0
        %873 = vmatprep.mubr.bf16.mxu0 0
        %874 = vmatmul.mubr.bf16.gmra.mrb[0].mxu0 %v759
        %v875 = vpop.f32.mrb[0].mxu0
        %v876 = vadd.f32 0.0, %v875
        %v877 = vpop.f32.mrb[0].mxu0
        %v878 = vpop.f32.mrb[0].mxu0
        %v879 = vadd.f32 0.0, %v878
        %v880 = vpop.f32.mrb[0].mxu0
        %881 = vmatprep.mubr.bf16.mxu0 0
        %882 = vmatmul.mubr.bf16.gmra.mrb[0].mxu0 %v762
        %v883 = vpop.f32.mrb[0].mxu0
        %v884 = vadd.f32 0.0, %v883
        %v885 = vpop.f32.mrb[0].mxu0
        %v886 = vpop.f32.mrb[0].mxu0
        %v887 = vadd.f32 0.0, %v886
        %v888 = vpop.f32.mrb[0].mxu0
        %889 = vmatprep.mubr.bf16.mxu0 0
        %890 = vmatmul.mubr.bf16.gmra.mrb[0].mxu0 %v765
        %v891 = vpop.f32.mrb[0].mxu0
        %v892 = vadd.f32 0.0, %v891
        %v893 = vpop.f32.mrb[0].mxu0
        %v894 = vpop.f32.mrb[0].mxu0
        %v895 = vadd.f32 0.0, %v894
        %v896 = vpop.f32.mrb[0].mxu0
        %897 = vmatprep.mubr.bf16.mxu0 0
        %898 = vmatmul.mubr.bf16.gmra.mrb[0].mxu0 %v768
        %v899 = vpop.f32.mrb[0].mxu0
        %v900 = vadd.f32 0.0, %v899
        %v901 = vpop.f32.mrb[0].mxu0
        %v902 = vpop.f32.mrb[0].mxu0
        %v903 = vadd.f32 0.0, %v902
        %v904 = vpop.f32.mrb[0].mxu0
        %905 = vmatprep.mubr.bf16.mxu0 0
        %906 = vmatmul.mubr.bf16.gmra.mrb[0].mxu0 %v771
        %v907 = vpop.f32.mrb[0].mxu0
        %v908 = vadd.f32 0.0, %v907
        %v909 = vpop.f32.mrb[0].mxu0
        %v910 = vpop.f32.mrb[0].mxu0
        %v911 = vadd.f32 0.0, %v910
        %v912 = vpop.f32.mrb[0].mxu0
        %913 = vmatprep.mubr.bf16.mxu0 0
        %914 = vmatmul.mubr.bf16.gmra.mrb[0].mxu0 %v774
        %v915 = vpop.f32.mrb[0].mxu0
        %v916 = vadd.f32 0.0, %v915
        %v917 = vpop.f32.mrb[0].mxu0
        %v918 = vpop.f32.mrb[0].mxu0
        %v919 = vadd.f32 0.0, %v918
        %v920 = vpop.f32.mrb[0].mxu0
        %921 = vmatprep.mubr.bf16.mxu0 0
        %922 = vmatmul.mubr.bf16.gmra.mrb[0].mxu0 %v777
        %v923 = vpop.f32.mrb[0].mxu0
        %v924 = vadd.f32 0.0, %v923
        %v925 = vpop.f32.mrb[0].mxu0
        %v926 = vpop.f32.mrb[0].mxu0
        %v927 = vadd.f32 0.0, %v926
        %v928 = vpop.f32.mrb[0].mxu0
        %929 = vmatprep.mubr.bf16.mxu0 0
        %930 = vmatmul.mubr.bf16.gmra.mrb[0].mxu0 %v780
        %v931 = vpop.f32.mrb[0].mxu0
        %v932 = vadd.f32 0.0, %v931
        %v933 = vpop.f32.mrb[0].mxu0
        %v934 = vpop.f32.mrb[0].mxu0
        %v935 = vadd.f32 0.0, %v934
        %v936 = vpop.f32.mrb[0].mxu0
        %937 = vmatprep.mubr.bf16.mxu0 0
        %938 = vmatmul.mubr.bf16.gmra.mrb[0].mxu0 %v783
        %v939 = vpop.f32.mrb[0].mxu0
        %v940 = vadd.f32 0.0, %v939
        %v941 = vpop.f32.mrb[0].mxu0
        %v942 = vpop.f32.mrb[0].mxu0
        %v943 = vadd.f32 0.0, %v942
        %v944 = vpop.f32.mrb[0].mxu0
        %945 = vdwg.mxu0
        %v946 = vld [vmem:[%s2] sm:$0x1]
        %v948 = vlaneseq
        %v949 = vshrl.u32 %v948, 7
        %v950 = vsub.s32 0, %v949
        %v951 = vrot.slane %v946, %v950
        %v953 = vmul.f32 %v820, %v951
        %v954 = vmul.f32 %v823, %v951
        %v955 = vmul.f32 %v828, %v951
        %v956 = vmul.f32 %v831, %v951
        %v957 = vmul.f32 %v836, %v951
        %v958 = vmul.f32 %v839, %v951
        %v959 = vmul.f32 %v844, %v951
        %v960 = vmul.f32 %v847, %v951
        %v961 = vmul.f32 %v852, %v951
        %v962 = vmul.f32 %v855, %v951
        %v963 = vmul.f32 %v860, %v951
        %v964 = vmul.f32 %v863, %v951
        %v965 = vmul.f32 %v868, %v951
        %v966 = vmul.f32 %v871, %v951
        %v967 = vmul.f32 %v876, %v951
        %v968 = vmul.f32 %v879, %v951
        %v969 = vmul.f32 %v884, %v951
        %v970 = vmul.f32 %v887, %v951
        %v971 = vmul.f32 %v892, %v951
        %v972 = vmul.f32 %v895, %v951
        %v973 = vmul.f32 %v900, %v951
        %v974 = vmul.f32 %v903, %v951
        %v975 = vmul.f32 %v908, %v951
        %v976 = vmul.f32 %v911, %v951
        %v977 = vmul.f32 %v916, %v951
        %v978 = vmul.f32 %v919, %v951
        %v979 = vmul.f32 %v924, %v951
        %v980 = vmul.f32 %v927, %v951
        %v981 = vmul.f32 %v932, %v951
        %v982 = vmul.f32 %v935, %v951
        %v983 = vmul.f32 %v940, %v951
        %v984 = vmul.f32 %v943, %v951
        %v985 = vld [vmem:[%s3] sm:$0x1]
        %v987 = vlaneseq
        %v988 = vshrl.u32 %v987, 7
        %v989 = vsub.s32 0, %v988
        %v990 = vrot.slane %v985, %v989
        %v992 = vadd.f32 %v953, %v990
        %v993 = vadd.f32 %v954, %v990
        %v994 = vadd.f32 %v955, %v990
        %v995 = vadd.f32 %v956, %v990
        %v996 = vadd.f32 %v957, %v990
        %v997 = vadd.f32 %v958, %v990
        %v998 = vadd.f32 %v959, %v990
        %v999 = vadd.f32 %v960, %v990
        %v1000 = vadd.f32 %v961, %v990
        %v1001 = vadd.f32 %v962, %v990
        %v1002 = vadd.f32 %v963, %v990
        %v1003 = vadd.f32 %v964, %v990
        %v1004 = vadd.f32 %v965, %v990
        %v1005 = vadd.f32 %v966, %v990
        %v1006 = vadd.f32 %v967, %v990
        %v1007 = vadd.f32 %v968, %v990
        %v1008 = vadd.f32 %v969, %v990
        %v1009 = vadd.f32 %v970, %v990
        %v1010 = vadd.f32 %v971, %v990
        %v1011 = vadd.f32 %v972, %v990
        %v1012 = vadd.f32 %v973, %v990
        %v1013 = vadd.f32 %v974, %v990
        %v1014 = vadd.f32 %v975, %v990
        %v1015 = vadd.f32 %v976, %v990
        %v1016 = vadd.f32 %v977, %v990
        %v1017 = vadd.f32 %v978, %v990
        %v1018 = vadd.f32 %v979, %v990
        %v1019 = vadd.f32 %v980, %v990
        %v1020 = vadd.f32 %v981, %v990
        %v1021 = vadd.f32 %v982, %v990
        %v1022 = vadd.f32 %v983, %v990
        %v1023 = vadd.f32 %v984, %v990
        %v1024 = vxor.u32 %v992, 2147483648
        %v1025 = vxor.u32 %v993, 2147483648
        %v1026 = vxor.u32 %v994, 2147483648
        %v1027 = vxor.u32 %v995, 2147483648
        %v1028 = vxor.u32 %v996, 2147483648
        %v1029 = vxor.u32 %v997, 2147483648
        %v1030 = vxor.u32 %v998, 2147483648
        %v1031 = vxor.u32 %v999, 2147483648
        %v1032 = vxor.u32 %v1000, 2147483648
        %v1033 = vxor.u32 %v1001, 2147483648
        %v1034 = vxor.u32 %v1002, 2147483648
        %v1035 = vxor.u32 %v1003, 2147483648
        %v1036 = vxor.u32 %v1004, 2147483648
        %v1037 = vxor.u32 %v1005, 2147483648
        %v1038 = vxor.u32 %v1006, 2147483648
        %v1039 = vxor.u32 %v1007, 2147483648
        %v1040 = vxor.u32 %v1008, 2147483648
        %v1041 = vxor.u32 %v1009, 2147483648
        %v1042 = vxor.u32 %v1010, 2147483648
        %v1043 = vxor.u32 %v1011, 2147483648
        %v1044 = vxor.u32 %v1012, 2147483648
        %v1045 = vxor.u32 %v1013, 2147483648
        %v1046 = vxor.u32 %v1014, 2147483648
        %v1047 = vxor.u32 %v1015, 2147483648
        %v1048 = vxor.u32 %v1016, 2147483648
        %v1049 = vxor.u32 %v1017, 2147483648
        %v1050 = vxor.u32 %v1018, 2147483648
        %v1051 = vxor.u32 %v1019, 2147483648
        %v1052 = vxor.u32 %v1020, 2147483648
        %v1053 = vxor.u32 %v1021, 2147483648
        %v1054 = vxor.u32 %v1022, 2147483648
        %v1055 = vxor.u32 %v1023, 2147483648
        %v1056 = vmul.f32 %v1024, 1.442695
        %v1057 = vpow.pop %v1056
        %v1058 = vmul.f32 %v1025, 1.442695
        %v1059 = vpow.pop %v1058
        %v1060 = vmul.f32 %v1026, 1.442695
        %v1061 = vpow.pop %v1060
        %v1062 = vmul.f32 %v1027, 1.442695
        %v1063 = vpow.pop %v1062
        %v1064 = vmul.f32 %v1028, 1.442695
        %v1065 = vpow.pop %v1064
        %v1066 = vmul.f32 %v1029, 1.442695
        %v1067 = vpow.pop %v1066
        %v1068 = vmul.f32 %v1030, 1.442695
        %v1069 = vpow.pop %v1068
        %v1070 = vmul.f32 %v1031, 1.442695
        %v1071 = vpow.pop %v1070
        %v1072 = vmul.f32 %v1032, 1.442695
        %v1073 = vpow.pop %v1072
        %v1074 = vmul.f32 %v1033, 1.442695
        %v1075 = vpow.pop %v1074
        %v1076 = vmul.f32 %v1034, 1.442695
        %v1077 = vpow.pop %v1076
        %v1078 = vmul.f32 %v1035, 1.442695
        %v1079 = vpow.pop %v1078
        %v1080 = vmul.f32 %v1036, 1.442695
        %v1081 = vpow.pop %v1080
        %v1082 = vmul.f32 %v1037, 1.442695
        %v1083 = vpow.pop %v1082
        %v1084 = vmul.f32 %v1038, 1.442695
        %v1085 = vpow.pop %v1084
        %v1086 = vmul.f32 %v1039, 1.442695
        %v1087 = vpow.pop %v1086
        %v1088 = vmul.f32 %v1040, 1.442695
        %v1089 = vpow.pop %v1088
        %v1090 = vmul.f32 %v1041, 1.442695
        %v1091 = vpow.pop %v1090
        %v1092 = vmul.f32 %v1042, 1.442695
        %v1093 = vpow.pop %v1092
        %v1094 = vmul.f32 %v1043, 1.442695
        %v1095 = vpow.pop %v1094
        %v1096 = vmul.f32 %v1044, 1.442695
        %v1097 = vpow.pop %v1096
        %v1098 = vmul.f32 %v1045, 1.442695
        %v1099 = vpow.pop %v1098
        %v1100 = vmul.f32 %v1046, 1.442695
        %v1101 = vpow.pop %v1100
        %v1102 = vmul.f32 %v1047, 1.442695
        %v1103 = vpow.pop %v1102
        %v1104 = vmul.f32 %v1048, 1.442695
        %v1105 = vpow.pop %v1104
        %v1106 = vmul.f32 %v1049, 1.442695
        %v1107 = vpow.pop %v1106
        %v1108 = vmul.f32 %v1050, 1.442695
        %v1109 = vpow.pop %v1108
        %v1110 = vmul.f32 %v1051, 1.442695
        %v1111 = vpow.pop %v1110
        %v1112 = vmul.f32 %v1052, 1.442695
        %v1113 = vpow.pop %v1112
        %v1114 = vmul.f32 %v1053, 1.442695
        %v1115 = vpow.pop %v1114
        %v1116 = vmul.f32 %v1054, 1.442695
        %v1117 = vpow.pop %v1116
        %v1118 = vmul.f32 %v1055, 1.442695
        %v1119 = vpow.pop %v1118
        %v1120 = vadd.f32 %v1057, 1.0
        %v1121 = vadd.f32 %v1059, 1.0
        %v1122 = vadd.f32 %v1061, 1.0
        %v1123 = vadd.f32 %v1063, 1.0
        %v1124 = vadd.f32 %v1065, 1.0
        %v1125 = vadd.f32 %v1067, 1.0
        %v1126 = vadd.f32 %v1069, 1.0
        %v1127 = vadd.f32 %v1071, 1.0
        %v1128 = vadd.f32 %v1073, 1.0
        %v1129 = vadd.f32 %v1075, 1.0
        %v1130 = vadd.f32 %v1077, 1.0
        %v1131 = vadd.f32 %v1079, 1.0
        %v1132 = vadd.f32 %v1081, 1.0
        %v1133 = vadd.f32 %v1083, 1.0
        %v1134 = vadd.f32 %v1085, 1.0
        %v1135 = vadd.f32 %v1087, 1.0
        %v1136 = vadd.f32 %v1089, 1.0
        %v1137 = vadd.f32 %v1091, 1.0
        %v1138 = vadd.f32 %v1093, 1.0
        %v1139 = vadd.f32 %v1095, 1.0
        %v1140 = vadd.f32 %v1097, 1.0
        %v1141 = vadd.f32 %v1099, 1.0
        %v1142 = vadd.f32 %v1101, 1.0
        %v1143 = vadd.f32 %v1103, 1.0
        %v1144 = vadd.f32 %v1105, 1.0
        %v1145 = vadd.f32 %v1107, 1.0
        %v1146 = vadd.f32 %v1109, 1.0
        %v1147 = vadd.f32 %v1111, 1.0
        %v1148 = vadd.f32 %v1113, 1.0
        %v1149 = vadd.f32 %v1115, 1.0
        %v1150 = vadd.f32 %v1117, 1.0
        %v1151 = vadd.f32 %v1119, 1.0
        %v1152 = vrcp.pop %v1120
        %v1153 = vmul.f32 1.0, %v1152
        %v1154 = vrcp.pop %v1121
        %v1155 = vmul.f32 1.0, %v1154
        %v1156 = vrcp.pop %v1122
        %v1157 = vmul.f32 1.0, %v1156
        %v1158 = vrcp.pop %v1123
        %v1159 = vmul.f32 1.0, %v1158
        %v1160 = vrcp.pop %v1124
        %v1161 = vmul.f32 1.0, %v1160
        %v1162 = vrcp.pop %v1125
        %v1163 = vmul.f32 1.0, %v1162
        %v1164 = vrcp.pop %v1126
        %v1165 = vmul.f32 1.0, %v1164
        %v1166 = vrcp.pop %v1127
        %v1167 = vmul.f32 1.0, %v1166
        %v1168 = vrcp.pop %v1128
        %v1169 = vmul.f32 1.0, %v1168
        %v1170 = vrcp.pop %v1129
        %v1171 = vmul.f32 1.0, %v1170
        %v1172 = vrcp.pop %v1130
        %v1173 = vmul.f32 1.0, %v1172
        %v1174 = vrcp.pop %v1131
        %v1175 = vmul.f32 1.0, %v1174
        %v1176 = vrcp.pop %v1132
        %v1177 = vmul.f32 1.0, %v1176
        %v1178 = vrcp.pop %v1133
        %v1179 = vmul.f32 1.0, %v1178
        %v1180 = vrcp.pop %v1134
        %v1181 = vmul.f32 1.0, %v1180
        %v1182 = vrcp.pop %v1135
        %v1183 = vmul.f32 1.0, %v1182
        %v1184 = vrcp.pop %v1136
        %v1185 = vmul.f32 1.0, %v1184
        %v1186 = vrcp.pop %v1137
        %v1187 = vmul.f32 1.0, %v1186
        %v1188 = vrcp.pop %v1138
        %v1189 = vmul.f32 1.0, %v1188
        %v1190 = vrcp.pop %v1139
        %v1191 = vmul.f32 1.0, %v1190
        %v1192 = vrcp.pop %v1140
        %v1193 = vmul.f32 1.0, %v1192
        %v1194 = vrcp.pop %v1141
        %v1195 = vmul.f32 1.0, %v1194
        %v1196 = vrcp.pop %v1142
        %v1197 = vmul.f32 1.0, %v1196
        %v1198 = vrcp.pop %v1143
        %v1199 = vmul.f32 1.0, %v1198
        %v1200 = vrcp.pop %v1144
        %v1201 = vmul.f32 1.0, %v1200
        %v1202 = vrcp.pop %v1145
        %v1203 = vmul.f32 1.0, %v1202
        %v1204 = vrcp.pop %v1146
        %v1205 = vmul.f32 1.0, %v1204
        %v1206 = vrcp.pop %v1147
        %v1207 = vmul.f32 1.0, %v1206
        %v1208 = vrcp.pop %v1148
        %v1209 = vmul.f32 1.0, %v1208
        %v1210 = vrcp.pop %v1149
        %v1211 = vmul.f32 1.0, %v1210
        %v1212 = vrcp.pop %v1150
        %v1213 = vmul.f32 1.0, %v1212
        %v1214 = vrcp.pop %v1151
        %v1215 = vmul.f32 1.0, %v1214
        %v1216 = vmul.f32 %v992, %v1153
        %v1217 = vmul.f32 %v993, %v1155
        %v1218 = vmul.f32 %v994, %v1157
        %v1219 = vmul.f32 %v995, %v1159
        %v1220 = vmul.f32 %v996, %v1161
        %v1221 = vmul.f32 %v997, %v1163
        %v1222 = vmul.f32 %v998, %v1165
        %v1223 = vmul.f32 %v999, %v1167
        %v1224 = vmul.f32 %v1000, %v1169
        %v1225 = vmul.f32 %v1001, %v1171
        %v1226 = vmul.f32 %v1002, %v1173
        %v1227 = vmul.f32 %v1003, %v1175
        %v1228 = vmul.f32 %v1004, %v1177
        %v1229 = vmul.f32 %v1005, %v1179
        %v1230 = vmul.f32 %v1006, %v1181
        %v1231 = vmul.f32 %v1007, %v1183
        %v1232 = vmul.f32 %v1008, %v1185
        %v1233 = vmul.f32 %v1009, %v1187
        %v1234 = vmul.f32 %v1010, %v1189
        %v1235 = vmul.f32 %v1011, %v1191
        %v1236 = vmul.f32 %v1012, %v1193
        %v1237 = vmul.f32 %v1013, %v1195
        %v1238 = vmul.f32 %v1014, %v1197
        %v1239 = vmul.f32 %v1015, %v1199
        %v1240 = vmul.f32 %v1016, %v1201
        %v1241 = vmul.f32 %v1017, %v1203
        %v1242 = vmul.f32 %v1018, %v1205
        %v1243 = vmul.f32 %v1019, %v1207
        %v1244 = vmul.f32 %v1020, %v1209
        %v1245 = vmul.f32 %v1021, %v1211
        %v1246 = vmul.f32 %v1022, %v1213
        %v1247 = vmul.f32 %v1023, %v1215
        %vm1248 = vcmask 64512
        %1249 = vst.msk [vmem:[%s583 + $0x2] sm:$0xff] %vm1248, %v1216
        %1250 = vst.msk [vmem:[%s583 + $0xa] sm:$0xff] %vm1248, %v1217
        %1251 = vst.msk [vmem:[%s583 + $0x1a] sm:$0xff] %vm1248, %v1218
        %1252 = vst.msk [vmem:[%s583 + $0x22] sm:$0xff] %vm1248, %v1219
        %1253 = vst.msk [vmem:[%s583 + $0x32] sm:$0xff] %vm1248, %v1220
        %1254 = vst.msk [vmem:[%s583 + $0x3a] sm:$0xff] %vm1248, %v1221
        %1255 = vst.msk [vmem:[%s583 + $0x4a] sm:$0xff] %vm1248, %v1222
        %1256 = vst.msk [vmem:[%s583 + $0x52] sm:$0xff] %vm1248, %v1223
        %1257 = vst.msk [vmem:[%s583 + $0x62] sm:$0xff] %vm1248, %v1224
        %1258 = vst.msk [vmem:[%s583 + $0x6a] sm:$0xff] %vm1248, %v1225
        %1259 = vst.msk [vmem:[%s583 + $0x7a] sm:$0xff] %vm1248, %v1226
        %1260 = vst.msk [vmem:[%s583 + $0x82] sm:$0xff] %vm1248, %v1227
        %1261 = vst.msk [vmem:[%s583 + $0x92] sm:$0xff] %vm1248, %v1228
        %1262 = vst.msk [vmem:[%s583 + $0x9a] sm:$0xff] %vm1248, %v1229
        %1263 = vst.msk [vmem:[%s583 + $0xaa] sm:$0xff] %vm1248, %v1230
        %1264 = vst.msk [vmem:[%s583 + $0xb2] sm:$0xff] %vm1248, %v1231
        %1265 = vst.msk [vmem:[%s583 + $0xc2] sm:$0xff] %vm1248, %v1232
        %1266 = vst.msk [vmem:[%s583 + $0xca] sm:$0xff] %vm1248, %v1233
        %1267 = vst.msk [vmem:[%s583 + $0xda] sm:$0xff] %vm1248, %v1234
        %1268 = vst.msk [vmem:[%s583 + $0xe2] sm:$0xff] %vm1248, %v1235
        %1269 = vst.msk [vmem:[%s583 + $0xf2] sm:$0xff] %vm1248, %v1236
        %1270 = vst.msk [vmem:[%s583 + $0xfa] sm:$0xff] %vm1248, %v1237
        %1271 = vst.msk [vmem:[%s583 + $0x10a] sm:$0xff] %vm1248, %v1238
        %1272 = vst.msk [vmem:[%s583 + $0x112] sm:$0xff] %vm1248, %v1239
        %1273 = vst.msk [vmem:[%s583 + $0x122] sm:$0xff] %vm1248, %v1240
        %1274 = vst.msk [vmem:[%s583 + $0x12a] sm:$0xff] %vm1248, %v1241
        %1275 = vst.msk [vmem:[%s583 + $0x13a] sm:$0xff] %vm1248, %v1242
        %1276 = vst.msk [vmem:[%s583 + $0x142] sm:$0xff] %vm1248, %v1243
        %1277 = vst.msk [vmem:[%s583 + $0x152] sm:$0xff] %vm1248, %v1244
        %1278 = vst.msk [vmem:[%s583 + $0x15a] sm:$0xff] %vm1248, %v1245
        %1279 = vst.msk [vmem:[%s583 + $0x16a] sm:$0xff] %vm1248, %v1246
        %1280 = vst.msk [vmem:[%s583 + $0x172] sm:$0xff] %vm1248, %v1247
        %s1281 = scalar_lea.vmem [#allocation2], 24
        %v1282 = vld [vmem:[%s1281 + $0x1] sm:$0xff]
        %v1283 = vld [vmem:[%s1281 + $0x9] sm:$0xff]
        %v1284 = vld [vmem:[%s1281 + $0x19] sm:$0xff]
        %v1285 = vld [vmem:[%s1281 + $0x21] sm:$0xff]
        %v1286 = vld [vmem:[%s1281 + $0x31] sm:$0xff]
        %v1287 = vld [vmem:[%s1281 + $0x39] sm:$0xff]
        %v1288 = vld [vmem:[%s1281 + $0x49] sm:$0xff]
        %v1289 = vld [vmem:[%s1281 + $0x51] sm:$0xff]
        %v1290 = vld [vmem:[%s1281 + $0x61] sm:$0xff]
        %v1291 = vld [vmem:[%s1281 + $0x69] sm:$0xff]
        %v1292 = vld [vmem:[%s1281 + $0x79] sm:$0xff]
        %v1293 = vld [vmem:[%s1281 + $0x81] sm:$0xff]
        %v1294 = vld [vmem:[%s1281 + $0x91] sm:$0xff]
        %v1295 = vld [vmem:[%s1281 + $0x99] sm:$0xff]
        %v1296 = vld [vmem:[%s1281 + $0xa9] sm:$0xff]
        %v1297 = vld [vmem:[%s1281 + $0xb1] sm:$0xff]
        %v1298 = vld [vmem:[%s1281 + $0xc1] sm:$0xff]
        %v1299 = vld [vmem:[%s1281 + $0xc9] sm:$0xff]
        %v1300 = vld [vmem:[%s1281 + $0xd9] sm:$0xff]
        %v1301 = vld [vmem:[%s1281 + $0xe1] sm:$0xff]
        %v1302 = vld [vmem:[%s1281 + $0xf1] sm:$0xff]
        %v1303 = vld [vmem:[%s1281 + $0xf9] sm:$0xff]
        %v1304 = vld [vmem:[%s1281 + $0x109] sm:$0xff]
        %v1305 = vld [vmem:[%s1281 + $0x111] sm:$0xff]
        %v1306 = vld [vmem:[%s1281 + $0x121] sm:$0xff]
        %v1307 = vld [vmem:[%s1281 + $0x129] sm:$0xff]
        %v1308 = vld [vmem:[%s1281 + $0x139] sm:$0xff]
        %v1309 = vld [vmem:[%s1281 + $0x141] sm:$0xff]
        %v1310 = vld [vmem:[%s1281 + $0x151] sm:$0xff]
        %v1311 = vld [vmem:[%s1281 + $0x159] sm:$0xff]
        %v1312 = vld [vmem:[%s1281 + $0x169] sm:$0xff]
        %v1313 = vld [vmem:[%s1281 + $0x171] sm:$0xff]
        %v1314 = vld [vmem:[%s4] sm:$0x1]
        %v1315 = vlaneseq
        %v1316 = vshrl.u32 %v1315, 7
        %v1317 = vsub.s32 0, %v1316
        %v1318 = vrot.slane %v1314, %v1317
        %v1319 = vmul.f32 %v1282, %v1318
        %v1320 = vmul.f32 %v1283, %v1318
        %v1321 = vmul.f32 %v1284, %v1318
        %v1322 = vmul.f32 %v1285, %v1318
        %v1323 = vmul.f32 %v1286, %v1318
        %v1324 = vmul.f32 %v1287, %v1318
        %v1325 = vmul.f32 %v1288, %v1318
        %v1326 = vmul.f32 %v1289, %v1318
        %v1327 = vmul.f32 %v1290, %v1318
        %v1328 = vmul.f32 %v1291, %v1318
        %v1329 = vmul.f32 %v1292, %v1318
        %v1330 = vmul.f32 %v1293, %v1318
        %v1331 = vmul.f32 %v1294, %v1318
        %v1332 = vmul.f32 %v1295, %v1318
        %v1333 = vmul.f32 %v1296, %v1318
        %v1334 = vmul.f32 %v1297, %v1318
        %v1335 = vmul.f32 %v1298, %v1318
        %v1336 = vmul.f32 %v1299, %v1318
        %v1337 = vmul.f32 %v1300, %v1318
        %v1338 = vmul.f32 %v1301, %v1318
        %v1339 = vmul.f32 %v1302, %v1318
        %v1340 = vmul.f32 %v1303, %v1318
        %v1341 = vmul.f32 %v1304, %v1318
        %v1342 = vmul.f32 %v1305, %v1318
        %v1343 = vmul.f32 %v1306, %v1318
        %v1344 = vmul.f32 %v1307, %v1318
        %v1345 = vmul.f32 %v1308, %v1318
        %v1346 = vmul.f32 %v1309, %v1318
        %v1347 = vmul.f32 %v1310, %v1318
        %v1348 = vmul.f32 %v1311, %v1318
        %v1349 = vmul.f32 %v1312, %v1318
        %v1350 = vmul.f32 %v1313, %v1318
        %v1351 = vadd.f32 %v1319, 0.0
        %v1352 = vadd.f32 %v1320, 0.0
        %v1353 = vadd.f32 %v1321, 0.0
        %v1354 = vadd.f32 %v1322, 0.0
        %v1355 = vadd.f32 %v1323, 0.0
        %v1356 = vadd.f32 %v1324, 0.0
        %v1357 = vadd.f32 %v1325, 0.0
        %v1358 = vadd.f32 %v1326, 0.0
        %v1359 = vadd.f32 %v1327, 0.0
        %v1360 = vadd.f32 %v1328, 0.0
        %v1361 = vadd.f32 %v1329, 0.0
        %v1362 = vadd.f32 %v1330, 0.0
        %v1363 = vadd.f32 %v1331, 0.0
        %v1364 = vadd.f32 %v1332, 0.0
        %v1365 = vadd.f32 %v1333, 0.0
        %v1366 = vadd.f32 %v1334, 0.0
        %v1367 = vadd.f32 %v1335, 0.0
        %v1368 = vadd.f32 %v1336, 0.0
        %v1369 = vadd.f32 %v1337, 0.0
        %v1370 = vadd.f32 %v1338, 0.0
        %v1371 = vadd.f32 %v1339, 0.0
        %v1372 = vadd.f32 %v1340, 0.0
        %v1373 = vadd.f32 %v1341, 0.0
        %v1374 = vadd.f32 %v1342, 0.0
        %v1375 = vadd.f32 %v1343, 0.0
        %v1376 = vadd.f32 %v1344, 0.0
        %v1377 = vadd.f32 %v1345, 0.0
        %v1378 = vadd.f32 %v1346, 0.0
        %v1379 = vadd.f32 %v1347, 0.0
        %v1380 = vadd.f32 %v1348, 0.0
        %v1381 = vadd.f32 %v1349, 0.0
        %v1382 = vadd.f32 %v1350, 0.0
        %v1383 = vld [vmem:[%s1281 + $0x2] sm:$0xff]
        %v1384 = vld [vmem:[%s1281 + $0xa] sm:$0xff]
        %v1385 = vld [vmem:[%s1281 + $0x1a] sm:$0xff]
        %v1386 = vld [vmem:[%s1281 + $0x22] sm:$0xff]
        %v1387 = vld [vmem:[%s1281 + $0x32] sm:$0xff]
        %v1388 = vld [vmem:[%s1281 + $0x3a] sm:$0xff]
        %v1389 = vld [vmem:[%s1281 + $0x4a] sm:$0xff]
        %v1390 = vld [vmem:[%s1281 + $0x52] sm:$0xff]
        %v1391 = vld [vmem:[%s1281 + $0x62] sm:$0xff]
        %v1392 = vld [vmem:[%s1281 + $0x6a] sm:$0xff]
        %v1393 = vld [vmem:[%s1281 + $0x7a] sm:$0xff]
        %v1394 = vld [vmem:[%s1281 + $0x82] sm:$0xff]
        %v1395 = vld [vmem:[%s1281 + $0x92] sm:$0xff]
        %v1396 = vld [vmem:[%s1281 + $0x9a] sm:$0xff]
        %v1397 = vld [vmem:[%s1281 + $0xaa] sm:$0xff]
        %v1398 = vld [vmem:[%s1281 + $0xb2] sm:$0xff]
        %v1399 = vld [vmem:[%s1281 + $0xc2] sm:$0xff]
        %v1400 = vld [vmem:[%s1281 + $0xca] sm:$0xff]
        %v1401 = vld [vmem:[%s1281 + $0xda] sm:$0xff]
        %v1402 = vld [vmem:[%s1281 + $0xe2] sm:$0xff]
        %v1403 = vld [vmem:[%s1281 + $0xf2] sm:$0xff]
        %v1404 = vld [vmem:[%s1281 + $0xfa] sm:$0xff]
        %v1405 = vld [vmem:[%s1281 + $0x10a] sm:$0xff]
        %v1406 = vld [vmem:[%s1281 + $0x112] sm:$0xff]
        %v1407 = vld [vmem:[%s1281 + $0x122] sm:$0xff]
        %v1408 = vld [vmem:[%s1281 + $0x12a] sm:$0xff]
        %v1409 = vld [vmem:[%s1281 + $0x13a] sm:$0xff]
        %v1410 = vld [vmem:[%s1281 + $0x142] sm:$0xff]
        %v1411 = vld [vmem:[%s1281 + $0x152] sm:$0xff]
        %v1412 = vld [vmem:[%s1281 + $0x15a] sm:$0xff]
        %v1413 = vld [vmem:[%s1281 + $0x16a] sm:$0xff]
        %v1414 = vld [vmem:[%s1281 + $0x172] sm:$0xff]
        %v1415 = vld [vmem:[%s4 + $0x1] sm:$0x1]
        %v1416 = vlaneseq
        %v1417 = vshrl.u32 %v1416, 7
        %v1418 = vsub.s32 0, %v1417
        %v1419 = vrot.slane %v1415, %v1418
        %v1420 = vmul.f32 %v1383, %v1419
        %v1421 = vmul.f32 %v1384, %v1419
        %v1422 = vmul.f32 %v1385, %v1419
        %v1423 = vmul.f32 %v1386, %v1419
        %v1424 = vmul.f32 %v1387, %v1419
        %v1425 = vmul.f32 %v1388, %v1419
        %v1426 = vmul.f32 %v1389, %v1419
        %v1427 = vmul.f32 %v1390, %v1419
        %v1428 = vmul.f32 %v1391, %v1419
        %v1429 = vmul.f32 %v1392, %v1419
        %v1430 = vmul.f32 %v1393, %v1419
        %v1431 = vmul.f32 %v1394, %v1419
        %v1432 = vmul.f32 %v1395, %v1419
        %v1433 = vmul.f32 %v1396, %v1419
        %v1434 = vmul.f32 %v1397, %v1419
        %v1435 = vmul.f32 %v1398, %v1419
        %v1436 = vmul.f32 %v1399, %v1419
        %v1437 = vmul.f32 %v1400, %v1419
        %v1438 = vmul.f32 %v1401, %v1419
        %v1439 = vmul.f32 %v1402, %v1419
        %v1440 = vmul.f32 %v1403, %v1419
        %v1441 = vmul.f32 %v1404, %v1419
        %v1442 = vmul.f32 %v1405, %v1419
        %v1443 = vmul.f32 %v1406, %v1419
        %v1444 = vmul.f32 %v1407, %v1419
        %v1445 = vmul.f32 %v1408, %v1419
        %v1446 = vmul.f32 %v1409, %v1419
        %v1447 = vmul.f32 %v1410, %v1419
        %v1448 = vmul.f32 %v1411, %v1419
        %v1449 = vmul.f32 %v1412, %v1419
        %v1450 = vmul.f32 %v1413, %v1419
        %v1451 = vmul.f32 %v1414, %v1419
        %v1452 = vadd.f32 %v1351, %v1420
        %v1453 = vadd.f32 %v1352, %v1421
        %v1454 = vadd.f32 %v1353, %v1422
        %v1455 = vadd.f32 %v1354, %v1423
        %v1456 = vadd.f32 %v1355, %v1424
        %v1457 = vadd.f32 %v1356, %v1425
        %v1458 = vadd.f32 %v1357, %v1426
        %v1459 = vadd.f32 %v1358, %v1427
        %v1460 = vadd.f32 %v1359, %v1428
        %v1461 = vadd.f32 %v1360, %v1429
        %v1462 = vadd.f32 %v1361, %v1430
        %v1463 = vadd.f32 %v1362, %v1431
        %v1464 = vadd.f32 %v1363, %v1432
        %v1465 = vadd.f32 %v1364, %v1433
        %v1466 = vadd.f32 %v1365, %v1434
        %v1467 = vadd.f32 %v1366, %v1435
        %v1468 = vadd.f32 %v1367, %v1436
        %v1469 = vadd.f32 %v1368, %v1437
        %v1470 = vadd.f32 %v1369, %v1438
        %v1471 = vadd.f32 %v1370, %v1439
        %v1472 = vadd.f32 %v1371, %v1440
        %v1473 = vadd.f32 %v1372, %v1441
        %v1474 = vadd.f32 %v1373, %v1442
        %v1475 = vadd.f32 %v1374, %v1443
        %v1476 = vadd.f32 %v1375, %v1444
        %v1477 = vadd.f32 %v1376, %v1445
        %v1478 = vadd.f32 %v1377, %v1446
        %v1479 = vadd.f32 %v1378, %v1447
        %v1480 = vadd.f32 %v1379, %v1448
        %v1481 = vadd.f32 %v1380, %v1449
        %v1482 = vadd.f32 %v1381, %v1450
        %v1483 = vadd.f32 %v1382, %v1451
        %v1484 = vld [vmem:[%s1281 + $0x3] sm:$0xff]
        %v1485 = vld [vmem:[%s1281 + $0xb] sm:$0xff]
        %v1486 = vld [vmem:[%s1281 + $0x1b] sm:$0xff]
        %v1487 = vld [vmem:[%s1281 + $0x23] sm:$0xff]
        %v1488 = vld [vmem:[%s1281 + $0x33] sm:$0xff]
        %v1489 = vld [vmem:[%s1281 + $0x3b] sm:$0xff]
        %v1490 = vld [vmem:[%s1281 + $0x4b] sm:$0xff]
        %v1491 = vld [vmem:[%s1281 + $0x53] sm:$0xff]
        %v1492 = vld [vmem:[%s1281 + $0x63] sm:$0xff]
        %v1493 = vld [vmem:[%s1281 + $0x6b] sm:$0xff]
        %v1494 = vld [vmem:[%s1281 + $0x7b] sm:$0xff]
        %v1495 = vld [vmem:[%s1281 + $0x83] sm:$0xff]
        %v1496 = vld [vmem:[%s1281 + $0x93] sm:$0xff]
        %v1497 = vld [vmem:[%s1281 + $0x9b] sm:$0xff]
        %v1498 = vld [vmem:[%s1281 + $0xab] sm:$0xff]
        %v1499 = vld [vmem:[%s1281 + $0xb3] sm:$0xff]
        %v1500 = vld [vmem:[%s1281 + $0xc3] sm:$0xff]
        %v1501 = vld [vmem:[%s1281 + $0xcb] sm:$0xff]
        %v1502 = vld [vmem:[%s1281 + $0xdb] sm:$0xff]
        %v1503 = vld [vmem:[%s1281 + $0xe3] sm:$0xff]
        %v1504 = vld [vmem:[%s1281 + $0xf3] sm:$0xff]
        %v1505 = vld [vmem:[%s1281 + $0xfb] sm:$0xff]
        %v1506 = vld [vmem:[%s1281 + $0x10b] sm:$0xff]
        %v1507 = vld [vmem:[%s1281 + $0x113] sm:$0xff]
        %v1508 = vld [vmem:[%s1281 + $0x123] sm:$0xff]
        %v1509 = vld [vmem:[%s1281 + $0x12b] sm:$0xff]
        %v1510 = vld [vmem:[%s1281 + $0x13b] sm:$0xff]
        %v1511 = vld [vmem:[%s1281 + $0x143] sm:$0xff]
        %v1512 = vld [vmem:[%s1281 + $0x153] sm:$0xff]
        %v1513 = vld [vmem:[%s1281 + $0x15b] sm:$0xff]
        %v1514 = vld [vmem:[%s1281 + $0x16b] sm:$0xff]
        %v1515 = vld [vmem:[%s1281 + $0x173] sm:$0xff]
        %v1516 = vld [vmem:[%s4 + $0x2] sm:$0x1]
        %v1517 = vlaneseq
        %v1518 = vshrl.u32 %v1517, 7
        %v1519 = vsub.s32 0, %v1518
        %v1520 = vrot.slane %v1516, %v1519
        %v1521 = vmul.f32 %v1484, %v1520
        %v1522 = vmul.f32 %v1485, %v1520
        %v1523 = vmul.f32 %v1486, %v1520
        %v1524 = vmul.f32 %v1487, %v1520
        %v1525 = vmul.f32 %v1488, %v1520
        %v1526 = vmul.f32 %v1489, %v1520
        %v1527 = vmul.f32 %v1490, %v1520
        %v1528 = vmul.f32 %v1491, %v1520
        %v1529 = vmul.f32 %v1492, %v1520
        %v1530 = vmul.f32 %v1493, %v1520
        %v1531 = vmul.f32 %v1494, %v1520
        %v1532 = vmul.f32 %v1495, %v1520
        %v1533 = vmul.f32 %v1496, %v1520
        %v1534 = vmul.f32 %v1497, %v1520
        %v1535 = vmul.f32 %v1498, %v1520
        %v1536 = vmul.f32 %v1499, %v1520
        %v1537 = vmul.f32 %v1500, %v1520
        %v1538 = vmul.f32 %v1501, %v1520
        %v1539 = vmul.f32 %v1502, %v1520
        %v1540 = vmul.f32 %v1503, %v1520
        %v1541 = vmul.f32 %v1504, %v1520
        %v1542 = vmul.f32 %v1505, %v1520
        %v1543 = vmul.f32 %v1506, %v1520
        %v1544 = vmul.f32 %v1507, %v1520
        %v1545 = vmul.f32 %v1508, %v1520
        %v1546 = vmul.f32 %v1509, %v1520
        %v1547 = vmul.f32 %v1510, %v1520
        %v1548 = vmul.f32 %v1511, %v1520
        %v1549 = vmul.f32 %v1512, %v1520
        %v1550 = vmul.f32 %v1513, %v1520
        %v1551 = vmul.f32 %v1514, %v1520
        %v1552 = vmul.f32 %v1515, %v1520
        %v1553 = vadd.f32 %v1452, %v1521
        %v1554 = vadd.f32 %v1453, %v1522
        %v1555 = vadd.f32 %v1454, %v1523
        %v1556 = vadd.f32 %v1455, %v1524
        %v1557 = vadd.f32 %v1456, %v1525
        %v1558 = vadd.f32 %v1457, %v1526
        %v1559 = vadd.f32 %v1458, %v1527
        %v1560 = vadd.f32 %v1459, %v1528
        %v1561 = vadd.f32 %v1460, %v1529
        %v1562 = vadd.f32 %v1461, %v1530
        %v1563 = vadd.f32 %v1462, %v1531
        %v1564 = vadd.f32 %v1463, %v1532
        %v1565 = vadd.f32 %v1464, %v1533
        %v1566 = vadd.f32 %v1465, %v1534
        %v1567 = vadd.f32 %v1466, %v1535
        %v1568 = vadd.f32 %v1467, %v1536
        %v1569 = vadd.f32 %v1468, %v1537
        %v1570 = vadd.f32 %v1469, %v1538
        %v1571 = vadd.f32 %v1470, %v1539
        %v1572 = vadd.f32 %v1471, %v1540
        %v1573 = vadd.f32 %v1472, %v1541
        %v1574 = vadd.f32 %v1473, %v1542
        %v1575 = vadd.f32 %v1474, %v1543
        %v1576 = vadd.f32 %v1475, %v1544
        %v1577 = vadd.f32 %v1476, %v1545
        %v1578 = vadd.f32 %v1477, %v1546
        %v1579 = vadd.f32 %v1478, %v1547
        %v1580 = vadd.f32 %v1479, %v1548
        %v1581 = vadd.f32 %v1480, %v1549
        %v1582 = vadd.f32 %v1481, %v1550
        %v1583 = vadd.f32 %v1482, %v1551
        %v1584 = vadd.f32 %v1483, %v1552
        %v1585 = vld [vmem:[%s583 + $0x1] sm:$0xff]
        %v1586 = vld [vmem:[%s583 + $0x9] sm:$0xff]
        %v1587 = vld [vmem:[%s583 + $0x19] sm:$0xff]
        %v1588 = vld [vmem:[%s583 + $0x21] sm:$0xff]
        %v1589 = vld [vmem:[%s583 + $0x31] sm:$0xff]
        %v1590 = vld [vmem:[%s583 + $0x39] sm:$0xff]
        %v1591 = vld [vmem:[%s583 + $0x49] sm:$0xff]
        %v1592 = vld [vmem:[%s583 + $0x51] sm:$0xff]
        %v1593 = vld [vmem:[%s583 + $0x61] sm:$0xff]
        %v1594 = vld [vmem:[%s583 + $0x69] sm:$0xff]
        %v1595 = vld [vmem:[%s583 + $0x79] sm:$0xff]
        %v1596 = vld [vmem:[%s583 + $0x81] sm:$0xff]
        %v1597 = vld [vmem:[%s583 + $0x91] sm:$0xff]
        %v1598 = vld [vmem:[%s583 + $0x99] sm:$0xff]
        %v1599 = vld [vmem:[%s583 + $0xa9] sm:$0xff]
        %v1600 = vld [vmem:[%s583 + $0xb1] sm:$0xff]
        %v1601 = vld [vmem:[%s583 + $0xc1] sm:$0xff]
        %v1602 = vld [vmem:[%s583 + $0xc9] sm:$0xff]
        %v1603 = vld [vmem:[%s583 + $0xd9] sm:$0xff]
        %v1604 = vld [vmem:[%s583 + $0xe1] sm:$0xff]
        %v1605 = vld [vmem:[%s583 + $0xf1] sm:$0xff]
        %v1606 = vld [vmem:[%s583 + $0xf9] sm:$0xff]
        %v1607 = vld [vmem:[%s583 + $0x109] sm:$0xff]
        %v1608 = vld [vmem:[%s583 + $0x111] sm:$0xff]
        %v1609 = vld [vmem:[%s583 + $0x121] sm:$0xff]
        %v1610 = vld [vmem:[%s583 + $0x129] sm:$0xff]
        %v1611 = vld [vmem:[%s583 + $0x139] sm:$0xff]
        %v1612 = vld [vmem:[%s583 + $0x141] sm:$0xff]
        %v1613 = vld [vmem:[%s583 + $0x151] sm:$0xff]
        %v1614 = vld [vmem:[%s583 + $0x159] sm:$0xff]
        %v1615 = vld [vmem:[%s583 + $0x169] sm:$0xff]
        %v1616 = vld [vmem:[%s583 + $0x171] sm:$0xff]
        %s1617 = scalar_lea.vmem %s4, 4
        %v1618 = vld [vmem:[%s1617] sm:$0x1]
        %v1619 = vlaneseq
        %v1620 = vshrl.u32 %v1619, 7
        %v1621 = vsub.s32 0, %v1620
        %v1622 = vrot.slane %v1618, %v1621
        %v1623 = vmul.f32 %v1585, %v1622
        %v1624 = vmul.f32 %v1586, %v1622
        %v1625 = vmul.f32 %v1587, %v1622
        %v1626 = vmul.f32 %v1588, %v1622
        %v1627 = vmul.f32 %v1589, %v1622
        %v1628 = vmul.f32 %v1590, %v1622
        %v1629 = vmul.f32 %v1591, %v1622
        %v1630 = vmul.f32 %v1592, %v1622
        %v1631 = vmul.f32 %v1593, %v1622
        %v1632 = vmul.f32 %v1594, %v1622
        %v1633 = vmul.f32 %v1595, %v1622
        %v1634 = vmul.f32 %v1596, %v1622
        %v1635 = vmul.f32 %v1597, %v1622
        %v1636 = vmul.f32 %v1598, %v1622
        %v1637 = vmul.f32 %v1599, %v1622
        %v1638 = vmul.f32 %v1600, %v1622
        %v1639 = vmul.f32 %v1601, %v1622
        %v1640 = vmul.f32 %v1602, %v1622
        %v1641 = vmul.f32 %v1603, %v1622
        %v1642 = vmul.f32 %v1604, %v1622
        %v1643 = vmul.f32 %v1605, %v1622
        %v1644 = vmul.f32 %v1606, %v1622
        %v1645 = vmul.f32 %v1607, %v1622
        %v1646 = vmul.f32 %v1608, %v1622
        %v1647 = vmul.f32 %v1609, %v1622
        %v1648 = vmul.f32 %v1610, %v1622
        %v1649 = vmul.f32 %v1611, %v1622
        %v1650 = vmul.f32 %v1612, %v1622
        %v1651 = vmul.f32 %v1613, %v1622
        %v1652 = vmul.f32 %v1614, %v1622
        %v1653 = vmul.f32 %v1615, %v1622
        %v1654 = vmul.f32 %v1616, %v1622
        %v1655 = vadd.f32 %v1553, %v1623
        %v1656 = vadd.f32 %v1554, %v1624
        %v1657 = vadd.f32 %v1555, %v1625
        %v1658 = vadd.f32 %v1556, %v1626
        %v1659 = vadd.f32 %v1557, %v1627
        %v1660 = vadd.f32 %v1558, %v1628
        %v1661 = vadd.f32 %v1559, %v1629
        %v1662 = vadd.f32 %v1560, %v1630
        %v1663 = vadd.f32 %v1561, %v1631
        %v1664 = vadd.f32 %v1562, %v1632
        %v1665 = vadd.f32 %v1563, %v1633
        %v1666 = vadd.f32 %v1564, %v1634
        %v1667 = vadd.f32 %v1565, %v1635
        %v1668 = vadd.f32 %v1566, %v1636
        %v1669 = vadd.f32 %v1567, %v1637
        %v1670 = vadd.f32 %v1568, %v1638
        %v1671 = vadd.f32 %v1569, %v1639
        %v1672 = vadd.f32 %v1570, %v1640
        %v1673 = vadd.f32 %v1571, %v1641
        %v1674 = vadd.f32 %v1572, %v1642
        %v1675 = vadd.f32 %v1573, %v1643
        %v1676 = vadd.f32 %v1574, %v1644
        %v1677 = vadd.f32 %v1575, %v1645
        %v1678 = vadd.f32 %v1576, %v1646
        %v1679 = vadd.f32 %v1577, %v1647
        %v1680 = vadd.f32 %v1578, %v1648
        %v1681 = vadd.f32 %v1579, %v1649
        %v1682 = vadd.f32 %v1580, %v1650
        %v1683 = vadd.f32 %v1581, %v1651
        %v1684 = vadd.f32 %v1582, %v1652
        %v1685 = vadd.f32 %v1583, %v1653
        %v1686 = vadd.f32 %v1584, %v1654
        %v1687 = vld [vmem:[%s583 + $0x2] sm:$0xff]
        %v1688 = vld [vmem:[%s583 + $0xa] sm:$0xff]
        %v1689 = vld [vmem:[%s583 + $0x1a] sm:$0xff]
        %v1690 = vld [vmem:[%s583 + $0x22] sm:$0xff]
        %v1691 = vld [vmem:[%s583 + $0x32] sm:$0xff]
        %v1692 = vld [vmem:[%s583 + $0x3a] sm:$0xff]
        %v1693 = vld [vmem:[%s583 + $0x4a] sm:$0xff]
        %v1694 = vld [vmem:[%s583 + $0x52] sm:$0xff]
        %v1695 = vld [vmem:[%s583 + $0x62] sm:$0xff]
        %v1696 = vld [vmem:[%s583 + $0x6a] sm:$0xff]
        %v1697 = vld [vmem:[%s583 + $0x7a] sm:$0xff]
        %v1698 = vld [vmem:[%s583 + $0x82] sm:$0xff]
        %v1699 = vld [vmem:[%s583 + $0x92] sm:$0xff]
        %v1700 = vld [vmem:[%s583 + $0x9a] sm:$0xff]
        %v1701 = vld [vmem:[%s583 + $0xaa] sm:$0xff]
        %v1702 = vld [vmem:[%s583 + $0xb2] sm:$0xff]
        %v1703 = vld [vmem:[%s583 + $0xc2] sm:$0xff]
        %v1704 = vld [vmem:[%s583 + $0xca] sm:$0xff]
        %v1705 = vld [vmem:[%s583 + $0xda] sm:$0xff]
        %v1706 = vld [vmem:[%s583 + $0xe2] sm:$0xff]
        %v1707 = vld [vmem:[%s583 + $0xf2] sm:$0xff]
        %v1708 = vld [vmem:[%s583 + $0xfa] sm:$0xff]
        %v1709 = vld [vmem:[%s583 + $0x10a] sm:$0xff]
        %v1710 = vld [vmem:[%s583 + $0x112] sm:$0xff]
        %v1711 = vld [vmem:[%s583 + $0x122] sm:$0xff]
        %v1712 = vld [vmem:[%s583 + $0x12a] sm:$0xff]
        %v1713 = vld [vmem:[%s583 + $0x13a] sm:$0xff]
        %v1714 = vld [vmem:[%s583 + $0x142] sm:$0xff]
        %v1715 = vld [vmem:[%s583 + $0x152] sm:$0xff]
        %v1716 = vld [vmem:[%s583 + $0x15a] sm:$0xff]
        %v1717 = vld [vmem:[%s583 + $0x16a] sm:$0xff]
        %v1718 = vld [vmem:[%s583 + $0x172] sm:$0xff]
        %v1719 = vld [vmem:[%s1617 + $0x1] sm:$0x1]
        %v1720 = vlaneseq
        %v1721 = vshrl.u32 %v1720, 7
        %v1722 = vsub.s32 0, %v1721
        %v1723 = vrot.slane %v1719, %v1722
        %v1724 = vmul.f32 %v1687, %v1723
        %v1725 = vmul.f32 %v1688, %v1723
        %v1726 = vmul.f32 %v1689, %v1723
        %v1727 = vmul.f32 %v1690, %v1723
        %v1728 = vmul.f32 %v1691, %v1723
        %v1729 = vmul.f32 %v1692, %v1723
        %v1730 = vmul.f32 %v1693, %v1723
        %v1731 = vmul.f32 %v1694, %v1723
        %v1732 = vmul.f32 %v1695, %v1723
        %v1733 = vmul.f32 %v1696, %v1723
        %v1734 = vmul.f32 %v1697, %v1723
        %v1735 = vmul.f32 %v1698, %v1723
        %v1736 = vmul.f32 %v1699, %v1723
        %v1737 = vmul.f32 %v1700, %v1723
        %v1738 = vmul.f32 %v1701, %v1723
        %v1739 = vmul.f32 %v1702, %v1723
        %v1740 = vmul.f32 %v1703, %v1723
        %v1741 = vmul.f32 %v1704, %v1723
        %v1742 = vmul.f32 %v1705, %v1723
        %v1743 = vmul.f32 %v1706, %v1723
        %v1744 = vmul.f32 %v1707, %v1723
        %v1745 = vmul.f32 %v1708, %v1723
        %v1746 = vmul.f32 %v1709, %v1723
        %v1747 = vmul.f32 %v1710, %v1723
        %v1748 = vmul.f32 %v1711, %v1723
        %v1749 = vmul.f32 %v1712, %v1723
        %v1750 = vmul.f32 %v1713, %v1723
        %v1751 = vmul.f32 %v1714, %v1723
        %v1752 = vmul.f32 %v1715, %v1723
        %v1753 = vmul.f32 %v1716, %v1723
        %v1754 = vmul.f32 %v1717, %v1723
        %v1755 = vmul.f32 %v1718, %v1723
        %v1756 = vadd.f32 %v1655, %v1724
        %v1757 = vadd.f32 %v1656, %v1725
        %v1758 = vadd.f32 %v1657, %v1726
        %v1759 = vadd.f32 %v1658, %v1727
        %v1760 = vadd.f32 %v1659, %v1728
        %v1761 = vadd.f32 %v1660, %v1729
        %v1762 = vadd.f32 %v1661, %v1730
        %v1763 = vadd.f32 %v1662, %v1731
        %v1764 = vadd.f32 %v1663, %v1732
        %v1765 = vadd.f32 %v1664, %v1733
        %v1766 = vadd.f32 %v1665, %v1734
        %v1767 = vadd.f32 %v1666, %v1735
        %v1768 = vadd.f32 %v1667, %v1736
        %v1769 = vadd.f32 %v1668, %v1737
        %v1770 = vadd.f32 %v1669, %v1738
        %v1771 = vadd.f32 %v1670, %v1739
        %v1772 = vadd.f32 %v1671, %v1740
        %v1773 = vadd.f32 %v1672, %v1741
        %v1774 = vadd.f32 %v1673, %v1742
        %v1775 = vadd.f32 %v1674, %v1743
        %v1776 = vadd.f32 %v1675, %v1744
        %v1777 = vadd.f32 %v1676, %v1745
        %v1778 = vadd.f32 %v1677, %v1746
        %v1779 = vadd.f32 %v1678, %v1747
        %v1780 = vadd.f32 %v1679, %v1748
        %v1781 = vadd.f32 %v1680, %v1749
        %v1782 = vadd.f32 %v1681, %v1750
        %v1783 = vadd.f32 %v1682, %v1751
        %v1784 = vadd.f32 %v1683, %v1752
        %v1785 = vadd.f32 %v1684, %v1753
        %v1786 = vadd.f32 %v1685, %v1754
        %v1787 = vadd.f32 %v1686, %v1755
        %v1788 = vld [vmem:[%s583 + $0x3] sm:$0xff]
        %v1789 = vld [vmem:[%s583 + $0xb] sm:$0xff]
        %v1790 = vld [vmem:[%s583 + $0x1b] sm:$0xff]
        %v1791 = vld [vmem:[%s583 + $0x23] sm:$0xff]
        %v1792 = vld [vmem:[%s583 + $0x33] sm:$0xff]
        %v1793 = vld [vmem:[%s583 + $0x3b] sm:$0xff]
        %v1794 = vld [vmem:[%s583 + $0x4b] sm:$0xff]
        %v1795 = vld [vmem:[%s583 + $0x53] sm:$0xff]
        %v1796 = vld [vmem:[%s583 + $0x63] sm:$0xff]
        %v1797 = vld [vmem:[%s583 + $0x6b] sm:$0xff]
        %v1798 = vld [vmem:[%s583 + $0x7b] sm:$0xff]
        %v1799 = vld [vmem:[%s583 + $0x83] sm:$0xff]
        %v1800 = vld [vmem:[%s583 + $0x93] sm:$0xff]
        %v1801 = vld [vmem:[%s583 + $0x9b] sm:$0xff]
        %v1802 = vld [vmem:[%s583 + $0xab] sm:$0xff]
        %v1803 = vld [vmem:[%s583 + $0xb3] sm:$0xff]
        %v1804 = vld [vmem:[%s583 + $0xc3] sm:$0xff]
        %v1805 = vld [vmem:[%s583 + $0xcb] sm:$0xff]
        %v1806 = vld [vmem:[%s583 + $0xdb] sm:$0xff]
        %v1807 = vld [vmem:[%s583 + $0xe3] sm:$0xff]
        %v1808 = vld [vmem:[%s583 + $0xf3] sm:$0xff]
        %v1809 = vld [vmem:[%s583 + $0xfb] sm:$0xff]
        %v1810 = vld [vmem:[%s583 + $0x10b] sm:$0xff]
        %v1811 = vld [vmem:[%s583 + $0x113] sm:$0xff]
        %v1812 = vld [vmem:[%s583 + $0x123] sm:$0xff]
        %v1813 = vld [vmem:[%s583 + $0x12b] sm:$0xff]
        %v1814 = vld [vmem:[%s583 + $0x13b] sm:$0xff]
        %v1815 = vld [vmem:[%s583 + $0x143] sm:$0xff]
        %v1816 = vld [vmem:[%s583 + $0x153] sm:$0xff]
        %v1817 = vld [vmem:[%s583 + $0x15b] sm:$0xff]
        %v1818 = vld [vmem:[%s583 + $0x16b] sm:$0xff]
        %v1819 = vld [vmem:[%s583 + $0x173] sm:$0xff]
        %v1820 = vld [vmem:[%s1617 + $0x2] sm:$0x1]
        %v1821 = vlaneseq
        %v1822 = vshrl.u32 %v1821, 7
        %v1823 = vsub.s32 0, %v1822
        %v1824 = vrot.slane %v1820, %v1823
        %v1825 = vmul.f32 %v1788, %v1824
        %v1826 = vmul.f32 %v1789, %v1824
        %v1827 = vmul.f32 %v1790, %v1824
        %v1828 = vmul.f32 %v1791, %v1824
        %v1829 = vmul.f32 %v1792, %v1824
        %v1830 = vmul.f32 %v1793, %v1824
        %v1831 = vmul.f32 %v1794, %v1824
        %v1832 = vmul.f32 %v1795, %v1824
        %v1833 = vmul.f32 %v1796, %v1824
        %v1834 = vmul.f32 %v1797, %v1824
        %v1835 = vmul.f32 %v1798, %v1824
        %v1836 = vmul.f32 %v1799, %v1824
        %v1837 = vmul.f32 %v1800, %v1824
        %v1838 = vmul.f32 %v1801, %v1824
        %v1839 = vmul.f32 %v1802, %v1824
        %v1840 = vmul.f32 %v1803, %v1824
        %v1841 = vmul.f32 %v1804, %v1824
        %v1842 = vmul.f32 %v1805, %v1824
        %v1843 = vmul.f32 %v1806, %v1824
        %v1844 = vmul.f32 %v1807, %v1824
        %v1845 = vmul.f32 %v1808, %v1824
        %v1846 = vmul.f32 %v1809, %v1824
        %v1847 = vmul.f32 %v1810, %v1824
        %v1848 = vmul.f32 %v1811, %v1824
        %v1849 = vmul.f32 %v1812, %v1824
        %v1850 = vmul.f32 %v1813, %v1824
        %v1851 = vmul.f32 %v1814, %v1824
        %v1852 = vmul.f32 %v1815, %v1824
        %v1853 = vmul.f32 %v1816, %v1824
        %v1854 = vmul.f32 %v1817, %v1824
        %v1855 = vmul.f32 %v1818, %v1824
        %v1856 = vmul.f32 %v1819, %v1824
        %v1857 = vadd.f32 %v1756, %v1825
        %v1858 = vadd.f32 %v1757, %v1826
        %v1859 = vadd.f32 %v1758, %v1827
        %v1860 = vadd.f32 %v1759, %v1828
        %v1861 = vadd.f32 %v1760, %v1829
        %v1862 = vadd.f32 %v1761, %v1830
        %v1863 = vadd.f32 %v1762, %v1831
        %v1864 = vadd.f32 %v1763, %v1832
        %v1865 = vadd.f32 %v1764, %v1833
        %v1866 = vadd.f32 %v1765, %v1834
        %v1867 = vadd.f32 %v1766, %v1835
        %v1868 = vadd.f32 %v1767, %v1836
        %v1869 = vadd.f32 %v1768, %v1837
        %v1870 = vadd.f32 %v1769, %v1838
        %v1871 = vadd.f32 %v1770, %v1839
        %v1872 = vadd.f32 %v1771, %v1840
        %v1873 = vadd.f32 %v1772, %v1841
        %v1874 = vadd.f32 %v1773, %v1842
        %v1875 = vadd.f32 %v1774, %v1843
        %v1876 = vadd.f32 %v1775, %v1844
        %v1877 = vadd.f32 %v1776, %v1845
        %v1878 = vadd.f32 %v1777, %v1846
        %v1879 = vadd.f32 %v1778, %v1847
        %v1880 = vadd.f32 %v1779, %v1848
        %v1881 = vadd.f32 %v1780, %v1849
        %v1882 = vadd.f32 %v1781, %v1850
        %v1883 = vadd.f32 %v1782, %v1851
        %v1884 = vadd.f32 %v1783, %v1852
        %v1885 = vadd.f32 %v1784, %v1853
        %v1886 = vadd.f32 %v1785, %v1854
        %v1887 = vadd.f32 %v1786, %v1855
        %v1888 = vadd.f32 %v1787, %v1856
        %s1889 = scalar_lea.vmem [#allocation2], 72
        %v1890 = vld [vmem:[%s1889 + $0x1] sm:$0xff]
        %v1891 = vld [vmem:[%s1889 + $0x9] sm:$0xff]
        %v1892 = vld [vmem:[%s1889 + $0x19] sm:$0xff]
        %v1893 = vld [vmem:[%s1889 + $0x21] sm:$0xff]
        %v1894 = vld [vmem:[%s1889 + $0x31] sm:$0xff]
        %v1895 = vld [vmem:[%s1889 + $0x39] sm:$0xff]
        %v1896 = vld [vmem:[%s1889 + $0x49] sm:$0xff]
        %v1897 = vld [vmem:[%s1889 + $0x51] sm:$0xff]
        %v1898 = vld [vmem:[%s1889 + $0x61] sm:$0xff]
        %v1899 = vld [vmem:[%s1889 + $0x69] sm:$0xff]
        %v1900 = vld [vmem:[%s1889 + $0x79] sm:$0xff]
        %v1901 = vld [vmem:[%s1889 + $0x81] sm:$0xff]
        %v1902 = vld [vmem:[%s1889 + $0x91] sm:$0xff]
        %v1903 = vld [vmem:[%s1889 + $0x99] sm:$0xff]
        %v1904 = vld [vmem:[%s1889 + $0xa9] sm:$0xff]
        %v1905 = vld [vmem:[%s1889 + $0xb1] sm:$0xff]
        %v1906 = vld [vmem:[%s1889 + $0xc1] sm:$0xff]
        %v1907 = vld [vmem:[%s1889 + $0xc9] sm:$0xff]
        %v1908 = vld [vmem:[%s1889 + $0xd9] sm:$0xff]
        %v1909 = vld [vmem:[%s1889 + $0xe1] sm:$0xff]
        %v1910 = vld [vmem:[%s1889 + $0xf1] sm:$0xff]
        %v1911 = vld [vmem:[%s1889 + $0xf9] sm:$0xff]
        %v1912 = vld [vmem:[%s1889 + $0x109] sm:$0xff]
        %v1913 = vld [vmem:[%s1889 + $0x111] sm:$0xff]
        %v1914 = vld [vmem:[%s1889 + $0x121] sm:$0xff]
        %v1915 = vld [vmem:[%s1889 + $0x129] sm:$0xff]
        %v1916 = vld [vmem:[%s1889 + $0x139] sm:$0xff]
        %v1917 = vld [vmem:[%s1889 + $0x141] sm:$0xff]
        %v1918 = vld [vmem:[%s1889 + $0x151] sm:$0xff]
        %v1919 = vld [vmem:[%s1889 + $0x159] sm:$0xff]
        %v1920 = vld [vmem:[%s1889 + $0x169] sm:$0xff]
        %v1921 = vld [vmem:[%s1889 + $0x171] sm:$0xff]
        %s1922 = scalar_lea.vmem %s4, 8
        %v1923 = vld [vmem:[%s1922] sm:$0x1]
        %v1924 = vlaneseq
        %v1925 = vshrl.u32 %v1924, 7
        %v1926 = vsub.s32 0, %v1925
        %v1927 = vrot.slane %v1923, %v1926
        %v1928 = vmul.f32 %v1890, %v1927
        %v1929 = vmul.f32 %v1891, %v1927
        %v1930 = vmul.f32 %v1892, %v1927
        %v1931 = vmul.f32 %v1893, %v1927
        %v1932 = vmul.f32 %v1894, %v1927
        %v1933 = vmul.f32 %v1895, %v1927
        %v1934 = vmul.f32 %v1896, %v1927
        %v1935 = vmul.f32 %v1897, %v1927
        %v1936 = vmul.f32 %v1898, %v1927
        %v1937 = vmul.f32 %v1899, %v1927
        %v1938 = vmul.f32 %v1900, %v1927
        %v1939 = vmul.f32 %v1901, %v1927
        %v1940 = vmul.f32 %v1902, %v1927
        %v1941 = vmul.f32 %v1903, %v1927
        %v1942 = vmul.f32 %v1904, %v1927
        %v1943 = vmul.f32 %v1905, %v1927
        %v1944 = vmul.f32 %v1906, %v1927
        %v1945 = vmul.f32 %v1907, %v1927
        %v1946 = vmul.f32 %v1908, %v1927
        %v1947 = vmul.f32 %v1909, %v1927
        %v1948 = vmul.f32 %v1910, %v1927
        %v1949 = vmul.f32 %v1911, %v1927
        %v1950 = vmul.f32 %v1912, %v1927
        %v1951 = vmul.f32 %v1913, %v1927
        %v1952 = vmul.f32 %v1914, %v1927
        %v1953 = vmul.f32 %v1915, %v1927
        %v1954 = vmul.f32 %v1916, %v1927
        %v1955 = vmul.f32 %v1917, %v1927
        %v1956 = vmul.f32 %v1918, %v1927
        %v1957 = vmul.f32 %v1919, %v1927
        %v1958 = vmul.f32 %v1920, %v1927
        %v1959 = vmul.f32 %v1921, %v1927
        %v1960 = vadd.f32 %v1857, %v1928
        %v1961 = vadd.f32 %v1858, %v1929
        %v1962 = vadd.f32 %v1859, %v1930
        %v1963 = vadd.f32 %v1860, %v1931
        %v1964 = vadd.f32 %v1861, %v1932
        %v1965 = vadd.f32 %v1862, %v1933
        %v1966 = vadd.f32 %v1863, %v1934
        %v1967 = vadd.f32 %v1864, %v1935
        %v1968 = vadd.f32 %v1865, %v1936
        %v1969 = vadd.f32 %v1866, %v1937
        %v1970 = vadd.f32 %v1867, %v1938
        %v1971 = vadd.f32 %v1868, %v1939
        %v1972 = vadd.f32 %v1869, %v1940
        %v1973 = vadd.f32 %v1870, %v1941
        %v1974 = vadd.f32 %v1871, %v1942
        %v1975 = vadd.f32 %v1872, %v1943
        %v1976 = vadd.f32 %v1873, %v1944
        %v1977 = vadd.f32 %v1874, %v1945
        %v1978 = vadd.f32 %v1875, %v1946
        %v1979 = vadd.f32 %v1876, %v1947
        %v1980 = vadd.f32 %v1877, %v1948
        %v1981 = vadd.f32 %v1878, %v1949
        %v1982 = vadd.f32 %v1879, %v1950
        %v1983 = vadd.f32 %v1880, %v1951
        %v1984 = vadd.f32 %v1881, %v1952
        %v1985 = vadd.f32 %v1882, %v1953
        %v1986 = vadd.f32 %v1883, %v1954
        %v1987 = vadd.f32 %v1884, %v1955
        %v1988 = vadd.f32 %v1885, %v1956
        %v1989 = vadd.f32 %v1886, %v1957
        %v1990 = vadd.f32 %v1887, %v1958
        %v1991 = vadd.f32 %v1888, %v1959
        %v1992 = vld [vmem:[%s1889 + $0x2] sm:$0xff]
        %v1993 = vld [vmem:[%s1889 + $0xa] sm:$0xff]
        %v1994 = vld [vmem:[%s1889 + $0x1a] sm:$0xff]
        %v1995 = vld [vmem:[%s1889 + $0x22] sm:$0xff]
        %v1996 = vld [vmem:[%s1889 + $0x32] sm:$0xff]
        %v1997 = vld [vmem:[%s1889 + $0x3a] sm:$0xff]
        %v1998 = vld [vmem:[%s1889 + $0x4a] sm:$0xff]
        %v1999 = vld [vmem:[%s1889 + $0x52] sm:$0xff]
        %v2000 = vld [vmem:[%s1889 + $0x62] sm:$0xff]
        %v2001 = vld [vmem:[%s1889 + $0x6a] sm:$0xff]
        %v2002 = vld [vmem:[%s1889 + $0x7a] sm:$0xff]
        %v2003 = vld [vmem:[%s1889 + $0x82] sm:$0xff]
        %v2004 = vld [vmem:[%s1889 + $0x92] sm:$0xff]
        %v2005 = vld [vmem:[%s1889 + $0x9a] sm:$0xff]
        %v2006 = vld [vmem:[%s1889 + $0xaa] sm:$0xff]
        %v2007 = vld [vmem:[%s1889 + $0xb2] sm:$0xff]
        %v2008 = vld [vmem:[%s1889 + $0xc2] sm:$0xff]
        %v2009 = vld [vmem:[%s1889 + $0xca] sm:$0xff]
        %v2010 = vld [vmem:[%s1889 + $0xda] sm:$0xff]
        %v2011 = vld [vmem:[%s1889 + $0xe2] sm:$0xff]
        %v2012 = vld [vmem:[%s1889 + $0xf2] sm:$0xff]
        %v2013 = vld [vmem:[%s1889 + $0xfa] sm:$0xff]
        %v2014 = vld [vmem:[%s1889 + $0x10a] sm:$0xff]
        %v2015 = vld [vmem:[%s1889 + $0x112] sm:$0xff]
        %v2016 = vld [vmem:[%s1889 + $0x122] sm:$0xff]
        %v2017 = vld [vmem:[%s1889 + $0x12a] sm:$0xff]
        %v2018 = vld [vmem:[%s1889 + $0x13a] sm:$0xff]
        %v2019 = vld [vmem:[%s1889 + $0x142] sm:$0xff]
        %v2020 = vld [vmem:[%s1889 + $0x152] sm:$0xff]
        %v2021 = vld [vmem:[%s1889 + $0x15a] sm:$0xff]
        %v2022 = vld [vmem:[%s1889 + $0x16a] sm:$0xff]
        %v2023 = vld [vmem:[%s1889 + $0x172] sm:$0xff]
        %v2024 = vld [vmem:[%s1922 + $0x1] sm:$0x1]
        %v2025 = vlaneseq
        %v2026 = vshrl.u32 %v2025, 7
        %v2027 = vsub.s32 0, %v2026
        %v2028 = vrot.slane %v2024, %v2027
        %v2029 = vmul.f32 %v1992, %v2028
        %v2030 = vmul.f32 %v1993, %v2028
        %v2031 = vmul.f32 %v1994, %v2028
        %v2032 = vmul.f32 %v1995, %v2028
        %v2033 = vmul.f32 %v1996, %v2028
        %v2034 = vmul.f32 %v1997, %v2028
        %v2035 = vmul.f32 %v1998, %v2028
        %v2036 = vmul.f32 %v1999, %v2028
        %v2037 = vmul.f32 %v2000, %v2028
        %v2038 = vmul.f32 %v2001, %v2028
        %v2039 = vmul.f32 %v2002, %v2028
        %v2040 = vmul.f32 %v2003, %v2028
        %v2041 = vmul.f32 %v2004, %v2028
        %v2042 = vmul.f32 %v2005, %v2028
        %v2043 = vmul.f32 %v2006, %v2028
        %v2044 = vmul.f32 %v2007, %v2028
        %v2045 = vmul.f32 %v2008, %v2028
        %v2046 = vmul.f32 %v2009, %v2028
        %v2047 = vmul.f32 %v2010, %v2028
        %v2048 = vmul.f32 %v2011, %v2028
        %v2049 = vmul.f32 %v2012, %v2028
        %v2050 = vmul.f32 %v2013, %v2028
        %v2051 = vmul.f32 %v2014, %v2028
        %v2052 = vmul.f32 %v2015, %v2028
        %v2053 = vmul.f32 %v2016, %v2028
        %v2054 = vmul.f32 %v2017, %v2028
        %v2055 = vmul.f32 %v2018, %v2028
        %v2056 = vmul.f32 %v2019, %v2028
        %v2057 = vmul.f32 %v2020, %v2028
        %v2058 = vmul.f32 %v2021, %v2028
        %v2059 = vmul.f32 %v2022, %v2028
        %v2060 = vmul.f32 %v2023, %v2028
        %v2061 = vadd.f32 %v1960, %v2029
        %v2062 = vadd.f32 %v1961, %v2030
        %v2063 = vadd.f32 %v1962, %v2031
        %v2064 = vadd.f32 %v1963, %v2032
        %v2065 = vadd.f32 %v1964, %v2033
        %v2066 = vadd.f32 %v1965, %v2034
        %v2067 = vadd.f32 %v1966, %v2035
        %v2068 = vadd.f32 %v1967, %v2036
        %v2069 = vadd.f32 %v1968, %v2037
        %v2070 = vadd.f32 %v1969, %v2038
        %v2071 = vadd.f32 %v1970, %v2039
        %v2072 = vadd.f32 %v1971, %v2040
        %v2073 = vadd.f32 %v1972, %v2041
        %v2074 = vadd.f32 %v1973, %v2042
        %v2075 = vadd.f32 %v1974, %v2043
        %v2076 = vadd.f32 %v1975, %v2044
        %v2077 = vadd.f32 %v1976, %v2045
        %v2078 = vadd.f32 %v1977, %v2046
        %v2079 = vadd.f32 %v1978, %v2047
        %v2080 = vadd.f32 %v1979, %v2048
        %v2081 = vadd.f32 %v1980, %v2049
        %v2082 = vadd.f32 %v1981, %v2050
        %v2083 = vadd.f32 %v1982, %v2051
        %v2084 = vadd.f32 %v1983, %v2052
        %v2085 = vadd.f32 %v1984, %v2053
        %v2086 = vadd.f32 %v1985, %v2054
        %v2087 = vadd.f32 %v1986, %v2055
        %v2088 = vadd.f32 %v1987, %v2056
        %v2089 = vadd.f32 %v1988, %v2057
        %v2090 = vadd.f32 %v1989, %v2058
        %v2091 = vadd.f32 %v1990, %v2059
        %v2092 = vadd.f32 %v1991, %v2060
        %v2093 = vld [vmem:[%s1889 + $0x3] sm:$0xff]
        %v2094 = vld [vmem:[%s1889 + $0xb] sm:$0xff]
        %v2095 = vld [vmem:[%s1889 + $0x1b] sm:$0xff]
        %v2096 = vld [vmem:[%s1889 + $0x23] sm:$0xff]
        %v2097 = vld [vmem:[%s1889 + $0x33] sm:$0xff]
        %v2098 = vld [vmem:[%s1889 + $0x3b] sm:$0xff]
        %v2099 = vld [vmem:[%s1889 + $0x4b] sm:$0xff]
        %v2100 = vld [vmem:[%s1889 + $0x53] sm:$0xff]
        %v2101 = vld [vmem:[%s1889 + $0x63] sm:$0xff]
        %v2102 = vld [vmem:[%s1889 + $0x6b] sm:$0xff]
        %v2103 = vld [vmem:[%s1889 + $0x7b] sm:$0xff]
        %v2104 = vld [vmem:[%s1889 + $0x83] sm:$0xff]
        %v2105 = vld [vmem:[%s1889 + $0x93] sm:$0xff]
        %v2106 = vld [vmem:[%s1889 + $0x9b] sm:$0xff]
        %v2107 = vld [vmem:[%s1889 + $0xab] sm:$0xff]
        %v2108 = vld [vmem:[%s1889 + $0xb3] sm:$0xff]
        %v2109 = vld [vmem:[%s1889 + $0xc3] sm:$0xff]
        %v2110 = vld [vmem:[%s1889 + $0xcb] sm:$0xff]
        %v2111 = vld [vmem:[%s1889 + $0xdb] sm:$0xff]
        %v2112 = vld [vmem:[%s1889 + $0xe3] sm:$0xff]
        %v2113 = vld [vmem:[%s1889 + $0xf3] sm:$0xff]
        %v2114 = vld [vmem:[%s1889 + $0xfb] sm:$0xff]
        %v2115 = vld [vmem:[%s1889 + $0x10b] sm:$0xff]
        %v2116 = vld [vmem:[%s1889 + $0x113] sm:$0xff]
        %v2117 = vld [vmem:[%s1889 + $0x123] sm:$0xff]
        %v2118 = vld [vmem:[%s1889 + $0x12b] sm:$0xff]
        %v2119 = vld [vmem:[%s1889 + $0x13b] sm:$0xff]
        %v2120 = vld [vmem:[%s1889 + $0x143] sm:$0xff]
        %v2121 = vld [vmem:[%s1889 + $0x153] sm:$0xff]
        %v2122 = vld [vmem:[%s1889 + $0x15b] sm:$0xff]
        %v2123 = vld [vmem:[%s1889 + $0x16b] sm:$0xff]
        %v2124 = vld [vmem:[%s1889 + $0x173] sm:$0xff]
        %v2125 = vld [vmem:[%s1922 + $0x2] sm:$0x1]
        %v2126 = vlaneseq
        %v2127 = vshrl.u32 %v2126, 7
        %v2128 = vsub.s32 0, %v2127
        %v2129 = vrot.slane %v2125, %v2128
        %v2130 = vmul.f32 %v2093, %v2129
        %v2131 = vmul.f32 %v2094, %v2129
        %v2132 = vmul.f32 %v2095, %v2129
        %v2133 = vmul.f32 %v2096, %v2129
        %v2134 = vmul.f32 %v2097, %v2129
        %v2135 = vmul.f32 %v2098, %v2129
        %v2136 = vmul.f32 %v2099, %v2129
        %v2137 = vmul.f32 %v2100, %v2129
        %v2138 = vmul.f32 %v2101, %v2129
        %v2139 = vmul.f32 %v2102, %v2129
        %v2140 = vmul.f32 %v2103, %v2129
        %v2141 = vmul.f32 %v2104, %v2129
        %v2142 = vmul.f32 %v2105, %v2129
        %v2143 = vmul.f32 %v2106, %v2129
        %v2144 = vmul.f32 %v2107, %v2129
        %v2145 = vmul.f32 %v2108, %v2129
        %v2146 = vmul.f32 %v2109, %v2129
        %v2147 = vmul.f32 %v2110, %v2129
        %v2148 = vmul.f32 %v2111, %v2129
        %v2149 = vmul.f32 %v2112, %v2129
        %v2150 = vmul.f32 %v2113, %v2129
        %v2151 = vmul.f32 %v2114, %v2129
        %v2152 = vmul.f32 %v2115, %v2129
        %v2153 = vmul.f32 %v2116, %v2129
        %v2154 = vmul.f32 %v2117, %v2129
        %v2155 = vmul.f32 %v2118, %v2129
        %v2156 = vmul.f32 %v2119, %v2129
        %v2157 = vmul.f32 %v2120, %v2129
        %v2158 = vmul.f32 %v2121, %v2129
        %v2159 = vmul.f32 %v2122, %v2129
        %v2160 = vmul.f32 %v2123, %v2129
        %v2161 = vmul.f32 %v2124, %v2129
        %v2162 = vadd.f32 %v2061, %v2130
        %v2163 = vadd.f32 %v2062, %v2131
        %v2164 = vadd.f32 %v2063, %v2132
        %v2165 = vadd.f32 %v2064, %v2133
        %v2166 = vadd.f32 %v2065, %v2134
        %v2167 = vadd.f32 %v2066, %v2135
        %v2168 = vadd.f32 %v2067, %v2136
        %v2169 = vadd.f32 %v2068, %v2137
        %v2170 = vadd.f32 %v2069, %v2138
        %v2171 = vadd.f32 %v2070, %v2139
        %v2172 = vadd.f32 %v2071, %v2140
        %v2173 = vadd.f32 %v2072, %v2141
        %v2174 = vadd.f32 %v2073, %v2142
        %v2175 = vadd.f32 %v2074, %v2143
        %v2176 = vadd.f32 %v2075, %v2144
        %v2177 = vadd.f32 %v2076, %v2145
        %v2178 = vadd.f32 %v2077, %v2146
        %v2179 = vadd.f32 %v2078, %v2147
        %v2180 = vadd.f32 %v2079, %v2148
        %v2181 = vadd.f32 %v2080, %v2149
        %v2182 = vadd.f32 %v2081, %v2150
        %v2183 = vadd.f32 %v2082, %v2151
        %v2184 = vadd.f32 %v2083, %v2152
        %v2185 = vadd.f32 %v2084, %v2153
        %v2186 = vadd.f32 %v2085, %v2154
        %v2187 = vadd.f32 %v2086, %v2155
        %v2188 = vadd.f32 %v2087, %v2156
        %v2189 = vadd.f32 %v2088, %v2157
        %v2190 = vadd.f32 %v2089, %v2158
        %v2191 = vadd.f32 %v2090, %v2159
        %v2192 = vadd.f32 %v2091, %v2160
        %v2193 = vadd.f32 %v2092, %v2161
        %v2194 = vld [vmem:[%s5] sm:$0x1]
        %v2196 = vlaneseq
        %v2197 = vshrl.u32 %v2196, 7
        %v2198 = vsub.s32 0, %v2197
        %v2199 = vrot.slane %v2194, %v2198
        %v2201 = vmul.f32 %v2162, %v2199
        %v2202 = vmul.f32 %v2163, %v2199
        %v2203 = vmul.f32 %v2164, %v2199
        %v2204 = vmul.f32 %v2165, %v2199
        %v2205 = vmul.f32 %v2166, %v2199
        %v2206 = vmul.f32 %v2167, %v2199
        %v2207 = vmul.f32 %v2168, %v2199
        %v2208 = vmul.f32 %v2169, %v2199
        %v2209 = vmul.f32 %v2170, %v2199
        %v2210 = vmul.f32 %v2171, %v2199
        %v2211 = vmul.f32 %v2172, %v2199
        %v2212 = vmul.f32 %v2173, %v2199
        %v2213 = vmul.f32 %v2174, %v2199
        %v2214 = vmul.f32 %v2175, %v2199
        %v2215 = vmul.f32 %v2176, %v2199
        %v2216 = vmul.f32 %v2177, %v2199
        %v2217 = vmul.f32 %v2178, %v2199
        %v2218 = vmul.f32 %v2179, %v2199
        %v2219 = vmul.f32 %v2180, %v2199
        %v2220 = vmul.f32 %v2181, %v2199
        %v2221 = vmul.f32 %v2182, %v2199
        %v2222 = vmul.f32 %v2183, %v2199
        %v2223 = vmul.f32 %v2184, %v2199
        %v2224 = vmul.f32 %v2185, %v2199
        %v2225 = vmul.f32 %v2186, %v2199
        %v2226 = vmul.f32 %v2187, %v2199
        %v2227 = vmul.f32 %v2188, %v2199
        %v2228 = vmul.f32 %v2189, %v2199
        %v2229 = vmul.f32 %v2190, %v2199
        %v2230 = vmul.f32 %v2191, %v2199
        %v2231 = vmul.f32 %v2192, %v2199
        %v2232 = vmul.f32 %v2193, %v2199
        %v2233 = vld [vmem:[%s6] sm:$0x1]
        %v2235 = vlaneseq
        %v2236 = vshrl.u32 %v2235, 7
        %v2237 = vsub.s32 0, %v2236
        %v2238 = vrot.slane %v2233, %v2237
        %v2240 = vadd.f32 %v2201, %v2238
        %v2241 = vadd.f32 %v2202, %v2238
        %v2242 = vadd.f32 %v2203, %v2238
        %v2243 = vadd.f32 %v2204, %v2238
        %v2244 = vadd.f32 %v2205, %v2238
        %v2245 = vadd.f32 %v2206, %v2238
        %v2246 = vadd.f32 %v2207, %v2238
        %v2247 = vadd.f32 %v2208, %v2238
        %v2248 = vadd.f32 %v2209, %v2238
        %v2249 = vadd.f32 %v2210, %v2238
        %v2250 = vadd.f32 %v2211, %v2238
        %v2251 = vadd.f32 %v2212, %v2238
        %v2252 = vadd.f32 %v2213, %v2238
        %v2253 = vadd.f32 %v2214, %v2238
        %v2254 = vadd.f32 %v2215, %v2238
        %v2255 = vadd.f32 %v2216, %v2238
        %v2256 = vadd.f32 %v2217, %v2238
        %v2257 = vadd.f32 %v2218, %v2238
        %v2258 = vadd.f32 %v2219, %v2238
        %v2259 = vadd.f32 %v2220, %v2238
        %v2260 = vadd.f32 %v2221, %v2238
        %v2261 = vadd.f32 %v2222, %v2238
        %v2262 = vadd.f32 %v2223, %v2238
        %v2263 = vadd.f32 %v2224, %v2238
        %v2264 = vadd.f32 %v2225, %v2238
        %v2265 = vadd.f32 %v2226, %v2238
        %v2266 = vadd.f32 %v2227, %v2238
        %v2267 = vadd.f32 %v2228, %v2238
        %v2268 = vadd.f32 %v2229, %v2238
        %v2269 = vadd.f32 %v2230, %v2238
        %v2270 = vadd.f32 %v2231, %v2238
        %v2271 = vadd.f32 %v2232, %v2238
        %v2272 = vmax.f32 %v2240, 0.0
        %v2273 = vmax.f32 %v2241, 0.0
        %v2274 = vmax.f32 %v2242, 0.0
        %v2275 = vmax.f32 %v2243, 0.0
        %v2276 = vmax.f32 %v2244, 0.0
        %v2277 = vmax.f32 %v2245, 0.0
        %v2278 = vmax.f32 %v2246, 0.0
        %v2279 = vmax.f32 %v2247, 0.0
        %v2280 = vmax.f32 %v2248, 0.0
        %v2281 = vmax.f32 %v2249, 0.0
        %v2282 = vmax.f32 %v2250, 0.0
        %v2283 = vmax.f32 %v2251, 0.0
        %v2284 = vmax.f32 %v2252, 0.0
        %v2285 = vmax.f32 %v2253, 0.0
        %v2286 = vmax.f32 %v2254, 0.0
        %v2287 = vmax.f32 %v2255, 0.0
        %v2288 = vmax.f32 %v2256, 0.0
        %v2289 = vmax.f32 %v2257, 0.0
        %v2290 = vmax.f32 %v2258, 0.0
        %v2291 = vmax.f32 %v2259, 0.0
        %v2292 = vmax.f32 %v2260, 0.0
        %v2293 = vmax.f32 %v2261, 0.0
        %v2294 = vmax.f32 %v2262, 0.0
        %v2295 = vmax.f32 %v2263, 0.0
        %v2296 = vmax.f32 %v2264, 0.0
        %v2297 = vmax.f32 %v2265, 0.0
        %v2298 = vmax.f32 %v2266, 0.0
        %v2299 = vmax.f32 %v2267, 0.0
        %v2300 = vmax.f32 %v2268, 0.0
        %v2301 = vmax.f32 %v2269, 0.0
        %v2302 = vmax.f32 %v2270, 0.0
        %v2303 = vmax.f32 %v2271, 0.0
        %v2304 = vsel %vm1248, %v1216, 0.0
        %v2305 = vsel %vm1248, %v1217, 0.0
        %v2306 = vadd.f32 %v2304, %v2305
        %v2307 = vsel %vm1248, %v1218, 0.0
        %v2308 = vadd.f32 %v2306, %v2307
        %v2309 = vsel %vm1248, %v1219, 0.0
        %v2310 = vadd.f32 %v2308, %v2309
        %v2311 = vsel %vm1248, %v1220, 0.0
        %v2312 = vadd.f32 %v2310, %v2311
        %v2313 = vsel %vm1248, %v1221, 0.0
        %v2314 = vadd.f32 %v2312, %v2313
        %v2315 = vsel %vm1248, %v1222, 0.0
        %v2316 = vadd.f32 %v2314, %v2315
        %v2317 = vsel %vm1248, %v1223, 0.0
        %v2318 = vadd.f32 %v2316, %v2317
        %v2319 = vsel %vm1248, %v1224, 0.0
        %v2320 = vadd.f32 %v2318, %v2319
        %v2321 = vsel %vm1248, %v1225, 0.0
        %v2322 = vadd.f32 %v2320, %v2321
        %v2323 = vsel %vm1248, %v1226, 0.0
        %v2324 = vadd.f32 %v2322, %v2323
        %v2325 = vsel %vm1248, %v1227, 0.0
        %v2326 = vadd.f32 %v2324, %v2325
        %v2327 = vsel %vm1248, %v1228, 0.0
        %v2328 = vadd.f32 %v2326, %v2327
        %v2329 = vsel %vm1248, %v1229, 0.0
        %v2330 = vadd.f32 %v2328, %v2329
        %v2331 = vsel %vm1248, %v1230, 0.0
        %v2332 = vadd.f32 %v2330, %v2331
        %v2333 = vsel %vm1248, %v1231, 0.0
        %v2334 = vadd.f32 %v2332, %v2333
        %v2335 = vsel %vm1248, %v1232, 0.0
        %v2336 = vadd.f32 %v2334, %v2335
        %v2337 = vsel %vm1248, %v1233, 0.0
        %v2338 = vadd.f32 %v2336, %v2337
        %v2339 = vsel %vm1248, %v1234, 0.0
        %v2340 = vadd.f32 %v2338, %v2339
        %v2341 = vsel %vm1248, %v1235, 0.0
        %v2342 = vadd.f32 %v2340, %v2341
        %v2343 = vsel %vm1248, %v1236, 0.0
        %v2344 = vadd.f32 %v2342, %v2343
        %v2345 = vsel %vm1248, %v1237, 0.0
        %v2346 = vadd.f32 %v2344, %v2345
        %v2347 = vsel %vm1248, %v1238, 0.0
        %v2348 = vadd.f32 %v2346, %v2347
        %v2349 = vsel %vm1248, %v1239, 0.0
        %v2350 = vadd.f32 %v2348, %v2349
        %v2351 = vsel %vm1248, %v1240, 0.0
        %v2352 = vadd.f32 %v2350, %v2351
        %v2353 = vsel %vm1248, %v1241, 0.0
        %v2354 = vadd.f32 %v2352, %v2353
        %v2355 = vsel %vm1248, %v1242, 0.0
        %v2356 = vadd.f32 %v2354, %v2355
        %v2357 = vsel %vm1248, %v1243, 0.0
        %v2358 = vadd.f32 %v2356, %v2357
        %v2359 = vsel %vm1248, %v1244, 0.0
        %v2360 = vadd.f32 %v2358, %v2359
        %v2361 = vsel %vm1248, %v1245, 0.0
        %v2362 = vadd.f32 %v2360, %v2361
        %v2363 = vsel %vm1248, %v1246, 0.0
        %v2364 = vadd.f32 %v2362, %v2363
        %v2365 = vsel %vm1248, %v1247, 0.0
        %v2366 = vadd.f32 %v2364, %v2365
        %v2367 = vrot.slane %v2366, 4
        %v2368 = vadd.f32 %v2366, %v2367
        %v2369 = vrot.slane %v2368, 2
        %v2370 = vadd.f32 %v2368, %v2369
        %v2371 = vrot.slane %v2370, 1
        %v2372 = vadd.f32 %v2370, %v2371
        %v2373 = vrcp.pop 256.0
        %v2374 = vmul.f32 %v2372, %v2373
        %v2375 = vld [vmem:[%s7] sm:$0xff]
        %v2376 = vld [vmem:[%s8] sm:$0x1]
        %v2378 = vsel %vm1248, %v2374, 0
        %2380 = vmatprep.subr.mxu0 0.0
        %2381 = vmatpush1.msra.mxu0 %v2375
        %2382 = vmatprep.subr.mxu0 0.0
        %2383 = vmatpush1.msra.mxu0 0.0
        %2384 = vmatprep.subr.mxu0 0.0
        %2385 = vmatpush1.msra.mxu0 0.0
        %2386 = vmatprep.subr.mxu0 0.0
        %2387 = vmatpush1.msra.mxu0 0.0
        %2388 = vmatprep.subr.mxu0 0.0
        %2389 = vmatpush1.msra.mxu0 0.0
        %2390 = vmatprep.subr.mxu0 0.0
        %2391 = vmatpush1.msra.mxu0 0.0
        %2392 = vmatprep.subr.mxu0 0.0
        %2393 = vmatpush1.msra.mxu0 0.0
        %2394 = vmatprep.subr.mxu0 0.0
        %2395 = vmatpush1.msra.mxu0 0.0
        %2396 = vmatprep.subr.mxu0 0.0
        %2397 = vmatpush1.msra.mxu0 0.0
        %2398 = vmatprep.subr.mxu0 0.0
        %2399 = vmatpush1.msra.mxu0 0.0
        %2400 = vmatprep.subr.mxu0 0.0
        %2401 = vmatpush1.msra.mxu0 0.0
        %2402 = vmatprep.subr.mxu0 0.0
        %2403 = vmatpush1.msra.mxu0 0.0
        %2404 = vmatprep.subr.mxu0 0.0
        %2405 = vmatpush1.msra.mxu0 0.0
        %2406 = vmatprep.subr.mxu0 0.0
        %2407 = vmatpush1.msra.mxu0 0.0
        %2408 = vmatprep.subr.mxu0 0.0
        %2409 = vmatpush1.msra.mxu0 0.0
        %2410 = vmatprep.subr.mxu0 0.0
        %2411 = vmatpush1.msra.mxu0 0.0
        %2412 = vmatprep.subr.mxu0 0.0
        %2413 = vmatpush1.msra.mxu0 0.0
        %2414 = vmatprep.subr.mxu0 0.0
        %2415 = vmatpush1.msra.mxu0 0.0
        %2416 = vmatprep.subr.mxu0 0.0
        %2417 = vmatpush1.msra.mxu0 0.0
        %2418 = vmatprep.subr.mxu0 0.0
        %2419 = vmatpush1.msra.mxu0 0.0
        %2420 = vmatprep.subr.mxu0 0.0
        %2421 = vmatpush1.msra.mxu0 0.0
        %2422 = vmatprep.subr.mxu0 0.0
        %2423 = vmatpush1.msra.mxu0 0.0
        %2424 = vmatprep.subr.mxu0 0.0
        %2425 = vmatpush1.msra.mxu0 0.0
        %2426 = vmatprep.subr.mxu0 0.0
        %2427 = vmatpush1.msra.mxu0 0.0
        %2428 = vmatprep.subr.mxu0 0.0
        %2429 = vmatpush1.msra.mxu0 0.0
        %2430 = vmatprep.subr.mxu0 0.0
        %2431 = vmatpush1.msra.mxu0 0.0
        %2432 = vmatprep.subr.mxu0 0.0
        %2433 = vmatpush1.msra.mxu0 0.0
        %2434 = vmatprep.subr.mxu0 0.0
        %2435 = vmatpush1.msra.mxu0 0.0
        %2436 = vmatprep.subr.mxu0 0.0
        %2437 = vmatpush1.msra.mxu0 0.0
        %2438 = vmatprep.subr.mxu0 0.0
        %2439 = vmatpush1.msra.mxu0 0.0
        %2440 = vmatprep.subr.mxu0 0.0
        %2441 = vmatpush1.msra.mxu0 0.0
        %2442 = vmatprep.subr.mxu0 0.0
        %2443 = vmatpush1.msra.mxu0 0.0
        %2444 = vmatprep.mubr.f32.mxu0 0.0
        %2445 = vmatmul.mubr.f32.gmra.mrb[0].mxu0 %v2378
        %v2446 = vpop.f32.mrb[0].mxu0
        %v2447 = vadd.f32 %v2376, %v2446
        %v2448 = vpop.f32.mrb[0].mxu0
        %2449 = vdwg.mxu0
        %v2450 = vmax.f32 %v2447, 0.0
        %v2451 = vld [vmem:[%s9] sm:$0x3]
        %v2452 = vld [vmem:[%s10] sm:$0x1]
        %vm2453 = vcmask 15360
        %v2455 = vsel %vm2453, %v2450, 0
        %vm2457 = vcmask 1041408
        %v2459 = vsel %vm2457, %v2451, 0
        %2461 = vmatprep.subr.mxu0 0.0
        %2462 = vmatpush1.msra.mxu0 %v2459
        %2463 = vmatprep.subr.mxu0 0.0
        %2464 = vmatpush1.msra.mxu0 0.0
        %2465 = vmatprep.subr.mxu0 0.0
        %2466 = vmatpush1.msra.mxu0 0.0
        %2467 = vmatprep.subr.mxu0 0.0
        %2468 = vmatpush1.msra.mxu0 0.0
        %2469 = vmatprep.subr.mxu0 0.0
        %2470 = vmatpush1.msra.mxu0 0.0
        %2471 = vmatprep.subr.mxu0 0.0
        %2472 = vmatpush1.msra.mxu0 0.0
        %2473 = vmatprep.subr.mxu0 0.0
        %2474 = vmatpush1.msra.mxu0 0.0
        %2475 = vmatprep.subr.mxu0 0.0
        %2476 = vmatpush1.msra.mxu0 0.0
        %2477 = vmatprep.subr.mxu0 0.0
        %2478 = vmatpush1.msra.mxu0 0.0
        %2479 = vmatprep.subr.mxu0 0.0
        %2480 = vmatpush1.msra.mxu0 0.0
        %2481 = vmatprep.subr.mxu0 0.0
        %2482 = vmatpush1.msra.mxu0 0.0
        %2483 = vmatprep.subr.mxu0 0.0
        %2484 = vmatpush1.msra.mxu0 0.0
        %2485 = vmatprep.subr.mxu0 0.0
        %2486 = vmatpush1.msra.mxu0 0.0
        %2487 = vmatprep.subr.mxu0 0.0
        %2488 = vmatpush1.msra.mxu0 0.0
        %2489 = vmatprep.subr.mxu0 0.0
        %2490 = vmatpush1.msra.mxu0 0.0
        %2491 = vmatprep.subr.mxu0 0.0
        %2492 = vmatpush1.msra.mxu0 0.0
        %2493 = vmatprep.subr.mxu0 0.0
        %2494 = vmatpush1.msra.mxu0 0.0
        %2495 = vmatprep.subr.mxu0 0.0
        %2496 = vmatpush1.msra.mxu0 0.0
        %2497 = vmatprep.subr.mxu0 0.0
        %2498 = vmatpush1.msra.mxu0 0.0
        %2499 = vmatprep.subr.mxu0 0.0
        %2500 = vmatpush1.msra.mxu0 0.0
        %2501 = vmatprep.subr.mxu0 0.0
        %2502 = vmatpush1.msra.mxu0 0.0
        %2503 = vmatprep.subr.mxu0 0.0
        %2504 = vmatpush1.msra.mxu0 0.0
        %2505 = vmatprep.subr.mxu0 0.0
        %2506 = vmatpush1.msra.mxu0 0.0
        %2507 = vmatprep.subr.mxu0 0.0
        %2508 = vmatpush1.msra.mxu0 0.0
        %2509 = vmatprep.subr.mxu0 0.0
        %2510 = vmatpush1.msra.mxu0 0.0
        %2511 = vmatprep.subr.mxu0 0.0
        %2512 = vmatpush1.msra.mxu0 0.0
        %2513 = vmatprep.subr.mxu0 0.0
        %2514 = vmatpush1.msra.mxu0 0.0
        %2515 = vmatprep.subr.mxu0 0.0
        %2516 = vmatpush1.msra.mxu0 0.0
        %2517 = vmatprep.subr.mxu0 0.0
        %2518 = vmatpush1.msra.mxu0 0.0
        %2519 = vmatprep.subr.mxu0 0.0
        %2520 = vmatpush1.msra.mxu0 0.0
        %2521 = vmatprep.subr.mxu0 0.0
        %2522 = vmatpush1.msra.mxu0 0.0
        %2523 = vmatprep.subr.mxu0 0.0
        %2524 = vmatpush1.msra.mxu0 0.0
        %2525 = vmatprep.mubr.f32.mxu0 0.0
        %2526 = vmatmul.mubr.f32.gmra.mrb[0].mxu0 %v2455
        %v2527 = vpop.f32.mrb[0].mxu0
        %v2528 = vadd.f32 %v2452, %v2527
        %v2529 = vpop.f32.mrb[0].mxu0
        %2530 = vdwg.mxu0
        %v2531 = vxor.u32 %v2528, 2147483648
        %v2532 = vmul.f32 %v2531, 1.442695
        %v2533 = vpow.pop %v2532
        %v2534 = vadd.f32 %v2533, 1.0
        %v2535 = vrcp.pop %v2534
        %v2536 = vmul.f32 1.0, %v2535
        %v2537 = vlaneseq
        %v2538 = vshrl.u32 %v2537, 7
        %v2539 = vsub.s32 0, %v2538
        %v2540 = vrot.slane %v2536, %v2539
        %v2541 = vmul.f32 %v1216, %v2540
        %v2542 = vmul.f32 %v1217, %v2540
        %v2543 = vmul.f32 %v1218, %v2540
        %v2544 = vmul.f32 %v1219, %v2540
        %v2545 = vmul.f32 %v1220, %v2540
        %v2546 = vmul.f32 %v1221, %v2540
        %v2547 = vmul.f32 %v1222, %v2540
        %v2548 = vmul.f32 %v1223, %v2540
        %v2549 = vmul.f32 %v1224, %v2540
        %v2550 = vmul.f32 %v1225, %v2540
        %v2551 = vmul.f32 %v1226, %v2540
        %v2552 = vmul.f32 %v1227, %v2540
        %v2553 = vmul.f32 %v1228, %v2540
        %v2554 = vmul.f32 %v1229, %v2540
        %v2555 = vmul.f32 %v1230, %v2540
        %v2556 = vmul.f32 %v1231, %v2540
        %v2557 = vmul.f32 %v1232, %v2540
        %v2558 = vmul.f32 %v1233, %v2540
        %v2559 = vmul.f32 %v1234, %v2540
        %v2560 = vmul.f32 %v1235, %v2540
        %v2561 = vmul.f32 %v1236, %v2540
        %v2562 = vmul.f32 %v1237, %v2540
        %v2563 = vmul.f32 %v1238, %v2540
        %v2564 = vmul.f32 %v1239, %v2540
        %v2565 = vmul.f32 %v1240, %v2540
        %v2566 = vmul.f32 %v1241, %v2540
        %v2567 = vmul.f32 %v1242, %v2540
        %v2568 = vmul.f32 %v1243, %v2540
        %v2569 = vmul.f32 %v1244, %v2540
        %v2570 = vmul.f32 %v1245, %v2540
        %v2571 = vmul.f32 %v1246, %v2540
        %v2572 = vmul.f32 %v1247, %v2540
        %2605 = vrot.lane.b32.xlu0 %v2541, 8
        %v2606 = vpop.permute.xlu0 %2605
        %2607 = vrot.lane.b32.xlu0 %v2542, 8
        %v2608 = vpop.permute.xlu0 %2607
        %2609 = vrot.lane.b32.xlu0 %v2543, 8
        %v2610 = vpop.permute.xlu0 %2609
        %2611 = vrot.lane.b32.xlu0 %v2544, 8
        %v2612 = vpop.permute.xlu0 %2611
        %2613 = vrot.lane.b32.xlu0 %v2545, 8
        %v2614 = vpop.permute.xlu0 %2613
        %2615 = vrot.lane.b32.xlu0 %v2546, 8
        %v2616 = vpop.permute.xlu0 %2615
        %2617 = vrot.lane.b32.xlu0 %v2547, 8
        %v2618 = vpop.permute.xlu0 %2617
        %2619 = vrot.lane.b32.xlu0 %v2548, 8
        %v2620 = vpop.permute.xlu0 %2619
        %2621 = vrot.lane.b32.xlu0 %v2549, 8
        %v2622 = vpop.permute.xlu0 %2621
        %2623 = vrot.lane.b32.xlu0 %v2550, 8
        %v2624 = vpop.permute.xlu0 %2623
        %2625 = vrot.lane.b32.xlu0 %v2551, 8
        %v2626 = vpop.permute.xlu0 %2625
        %2627 = vrot.lane.b32.xlu0 %v2552, 8
        %v2628 = vpop.permute.xlu0 %2627
        %2629 = vrot.lane.b32.xlu0 %v2553, 8
        %v2630 = vpop.permute.xlu0 %2629
        %2631 = vrot.lane.b32.xlu0 %v2554, 8
        %v2632 = vpop.permute.xlu0 %2631
        %2633 = vrot.lane.b32.xlu0 %v2555, 8
        %v2634 = vpop.permute.xlu0 %2633
        %2635 = vrot.lane.b32.xlu0 %v2556, 8
        %v2636 = vpop.permute.xlu0 %2635
        %2637 = vrot.lane.b32.xlu0 %v2557, 8
        %v2638 = vpop.permute.xlu0 %2637
        %2639 = vrot.lane.b32.xlu0 %v2558, 8
        %v2640 = vpop.permute.xlu0 %2639
        %2641 = vrot.lane.b32.xlu0 %v2559, 8
        %v2642 = vpop.permute.xlu0 %2641
        %2643 = vrot.lane.b32.xlu0 %v2560, 8
        %v2644 = vpop.permute.xlu0 %2643
        %2645 = vrot.lane.b32.xlu0 %v2561, 8
        %v2646 = vpop.permute.xlu0 %2645
        %2647 = vrot.lane.b32.xlu0 %v2562, 8
        %v2648 = vpop.permute.xlu0 %2647
        %2649 = vrot.lane.b32.xlu0 %v2563, 8
        %v2650 = vpop.permute.xlu0 %2649
        %2651 = vrot.lane.b32.xlu0 %v2564, 8
        %v2652 = vpop.permute.xlu0 %2651
        %2653 = vrot.lane.b32.xlu0 %v2565, 8
        %v2654 = vpop.permute.xlu0 %2653
        %2655 = vrot.lane.b32.xlu0 %v2566, 8
        %v2656 = vpop.permute.xlu0 %2655
        %2657 = vrot.lane.b32.xlu0 %v2567, 8
        %v2658 = vpop.permute.xlu0 %2657
        %2659 = vrot.lane.b32.xlu0 %v2568, 8
        %v2660 = vpop.permute.xlu0 %2659
        %2661 = vrot.lane.b32.xlu0 %v2569, 8
        %v2662 = vpop.permute.xlu0 %2661
        %2663 = vrot.lane.b32.xlu0 %v2570, 8
        %v2664 = vpop.permute.xlu0 %2663
        %2665 = vrot.lane.b32.xlu0 %v2571, 8
        %v2666 = vpop.permute.xlu0 %2665
        %2667 = vrot.lane.b32.xlu0 %v2572, 8
        %v2668 = vpop.permute.xlu0 %2667
        %v2701 = vsel %vm1248, %v2272, %v2606
        %v2702 = vsel %vm1248, %v2273, %v2608
        %v2703 = vsel %vm1248, %v2274, %v2610
        %v2704 = vsel %vm1248, %v2275, %v2612
        %v2705 = vsel %vm1248, %v2276, %v2614
        %v2706 = vsel %vm1248, %v2277, %v2616
        %v2707 = vsel %vm1248, %v2278, %v2618
        %v2708 = vsel %vm1248, %v2279, %v2620
        %v2709 = vsel %vm1248, %v2280, %v2622
        %v2710 = vsel %vm1248, %v2281, %v2624
        %v2711 = vsel %vm1248, %v2282, %v2626
        %v2712 = vsel %vm1248, %v2283, %v2628
        %v2713 = vsel %vm1248, %v2284, %v2630
        %v2714 = vsel %vm1248, %v2285, %v2632
        %v2715 = vsel %vm1248, %v2286, %v2634
        %v2716 = vsel %vm1248, %v2287, %v2636
        %v2717 = vsel %vm1248, %v2288, %v2638
        %v2718 = vsel %vm1248, %v2289, %v2640
        %v2719 = vsel %vm1248, %v2290, %v2642
        %v2720 = vsel %vm1248, %v2291, %v2644
        %v2721 = vsel %vm1248, %v2292, %v2646
        %v2722 = vsel %vm1248, %v2293, %v2648
        %v2723 = vsel %vm1248, %v2294, %v2650
        %v2724 = vsel %vm1248, %v2295, %v2652
        %v2725 = vsel %vm1248, %v2296, %v2654
        %v2726 = vsel %vm1248, %v2297, %v2656
        %v2727 = vsel %vm1248, %v2298, %v2658
        %v2728 = vsel %vm1248, %v2299, %v2660
        %v2729 = vsel %vm1248, %v2300, %v2662
        %v2730 = vsel %vm1248, %v2301, %v2664
        %v2731 = vsel %vm1248, %v2302, %v2666
        %v2732 = vsel %vm1248, %v2303, %v2668
        %2733 = vst.msk [vmem:[%s583 + $0x2] sm:$0xff] %vm568, %v2701
        %2734 = vst.msk [vmem:[%s583 + $0xa] sm:$0xff] %vm568, %v2702
        %2735 = vst.msk [vmem:[%s583 + $0x1a] sm:$0xff] %vm568, %v2703
        %2736 = vst.msk [vmem:[%s583 + $0x22] sm:$0xff] %vm568, %v2704
        %2737 = vst.msk [vmem:[%s583 + $0x32] sm:$0xff] %vm568, %v2705
        %2738 = vst.msk [vmem:[%s583 + $0x3a] sm:$0xff] %vm568, %v2706
        %2739 = vst.msk [vmem:[%s583 + $0x4a] sm:$0xff] %vm568, %v2707
        %2740 = vst.msk [vmem:[%s583 + $0x52] sm:$0xff] %vm568, %v2708
        %2741 = vst.msk [vmem:[%s583 + $0x62] sm:$0xff] %vm568, %v2709
        %2742 = vst.msk [vmem:[%s583 + $0x6a] sm:$0xff] %vm568, %v2710
        %2743 = vst.msk [vmem:[%s583 + $0x7a] sm:$0xff] %vm568, %v2711
        %2744 = vst.msk [vmem:[%s583 + $0x82] sm:$0xff] %vm568, %v2712
        %2745 = vst.msk [vmem:[%s583 + $0x92] sm:$0xff] %vm568, %v2713
        %2746 = vst.msk [vmem:[%s583 + $0x9a] sm:$0xff] %vm568, %v2714
        %2747 = vst.msk [vmem:[%s583 + $0xaa] sm:$0xff] %vm568, %v2715
        %2748 = vst.msk [vmem:[%s583 + $0xb2] sm:$0xff] %vm568, %v2716
        %2749 = vst.msk [vmem:[%s583 + $0xc2] sm:$0xff] %vm568, %v2717
        %2750 = vst.msk [vmem:[%s583 + $0xca] sm:$0xff] %vm568, %v2718
        %2751 = vst.msk [vmem:[%s583 + $0xda] sm:$0xff] %vm568, %v2719
        %2752 = vst.msk [vmem:[%s583 + $0xe2] sm:$0xff] %vm568, %v2720
        %2753 = vst.msk [vmem:[%s583 + $0xf2] sm:$0xff] %vm568, %v2721
        %2754 = vst.msk [vmem:[%s583 + $0xfa] sm:$0xff] %vm568, %v2722
        %2755 = vst.msk [vmem:[%s583 + $0x10a] sm:$0xff] %vm568, %v2723
        %2756 = vst.msk [vmem:[%s583 + $0x112] sm:$0xff] %vm568, %v2724
        %2757 = vst.msk [vmem:[%s583 + $0x122] sm:$0xff] %vm568, %v2725
        %2758 = vst.msk [vmem:[%s583 + $0x12a] sm:$0xff] %vm568, %v2726
        %2759 = vst.msk [vmem:[%s583 + $0x13a] sm:$0xff] %vm568, %v2727
        %2760 = vst.msk [vmem:[%s583 + $0x142] sm:$0xff] %vm568, %v2728
        %2761 = vst.msk [vmem:[%s583 + $0x152] sm:$0xff] %vm568, %v2729
        %2762 = vst.msk [vmem:[%s583 + $0x15a] sm:$0xff] %vm568, %v2730
        %2763 = vst.msk [vmem:[%s583 + $0x16a] sm:$0xff] %vm568, %v2731
        %2764 = vst.msk [vmem:[%s583 + $0x172] sm:$0xff] %vm568, %v2732
        %v2765 = vld [vmem:[%s1281 + $0x1] sm:$0xff]
        %v2766 = vld [vmem:[%s1281 + $0x9] sm:$0xff]
        %v2767 = vld [vmem:[%s1281 + $0x19] sm:$0xff]
        %v2768 = vld [vmem:[%s1281 + $0x21] sm:$0xff]
        %v2769 = vld [vmem:[%s1281 + $0x31] sm:$0xff]
        %v2770 = vld [vmem:[%s1281 + $0x39] sm:$0xff]
        %v2771 = vld [vmem:[%s1281 + $0x49] sm:$0xff]
        %v2772 = vld [vmem:[%s1281 + $0x51] sm:$0xff]
        %v2773 = vld [vmem:[%s1281 + $0x61] sm:$0xff]
        %v2774 = vld [vmem:[%s1281 + $0x69] sm:$0xff]
        %v2775 = vld [vmem:[%s1281 + $0x79] sm:$0xff]
        %v2776 = vld [vmem:[%s1281 + $0x81] sm:$0xff]
        %v2777 = vld [vmem:[%s1281 + $0x91] sm:$0xff]
        %v2778 = vld [vmem:[%s1281 + $0x99] sm:$0xff]
        %v2779 = vld [vmem:[%s1281 + $0xa9] sm:$0xff]
        %v2780 = vld [vmem:[%s1281 + $0xb1] sm:$0xff]
        %v2781 = vld [vmem:[%s1281 + $0xc1] sm:$0xff]
        %v2782 = vld [vmem:[%s1281 + $0xc9] sm:$0xff]
        %v2783 = vld [vmem:[%s1281 + $0xd9] sm:$0xff]
        %v2784 = vld [vmem:[%s1281 + $0xe1] sm:$0xff]
        %v2785 = vld [vmem:[%s1281 + $0xf1] sm:$0xff]
        %v2786 = vld [vmem:[%s1281 + $0xf9] sm:$0xff]
        %v2787 = vld [vmem:[%s1281 + $0x109] sm:$0xff]
        %v2788 = vld [vmem:[%s1281 + $0x111] sm:$0xff]
        %v2789 = vld [vmem:[%s1281 + $0x121] sm:$0xff]
        %v2790 = vld [vmem:[%s1281 + $0x129] sm:$0xff]
        %v2791 = vld [vmem:[%s1281 + $0x139] sm:$0xff]
        %v2792 = vld [vmem:[%s1281 + $0x141] sm:$0xff]
        %v2793 = vld [vmem:[%s1281 + $0x151] sm:$0xff]
        %v2794 = vld [vmem:[%s1281 + $0x159] sm:$0xff]
        %v2795 = vld [vmem:[%s1281 + $0x169] sm:$0xff]
        %v2796 = vld [vmem:[%s1281 + $0x171] sm:$0xff]
        %v2797 = vld [vmem:[%s1281 + $0x2] sm:$0xff]
        %v2798 = vld [vmem:[%s1281 + $0xa] sm:$0xff]
        %v2799 = vld [vmem:[%s1281 + $0x1a] sm:$0xff]
        %v2800 = vld [vmem:[%s1281 + $0x22] sm:$0xff]
        %v2801 = vld [vmem:[%s1281 + $0x32] sm:$0xff]
        %v2802 = vld [vmem:[%s1281 + $0x3a] sm:$0xff]
        %v2803 = vld [vmem:[%s1281 + $0x4a] sm:$0xff]
        %v2804 = vld [vmem:[%s1281 + $0x52] sm:$0xff]
        %v2805 = vld [vmem:[%s1281 + $0x62] sm:$0xff]
        %v2806 = vld [vmem:[%s1281 + $0x6a] sm:$0xff]
        %v2807 = vld [vmem:[%s1281 + $0x7a] sm:$0xff]
        %v2808 = vld [vmem:[%s1281 + $0x82] sm:$0xff]
        %v2809 = vld [vmem:[%s1281 + $0x92] sm:$0xff]
        %v2810 = vld [vmem:[%s1281 + $0x9a] sm:$0xff]
        %v2811 = vld [vmem:[%s1281 + $0xaa] sm:$0xff]
        %v2812 = vld [vmem:[%s1281 + $0xb2] sm:$0xff]
        %v2813 = vld [vmem:[%s1281 + $0xc2] sm:$0xff]
        %v2814 = vld [vmem:[%s1281 + $0xca] sm:$0xff]
        %v2815 = vld [vmem:[%s1281 + $0xda] sm:$0xff]
        %v2816 = vld [vmem:[%s1281 + $0xe2] sm:$0xff]
        %v2817 = vld [vmem:[%s1281 + $0xf2] sm:$0xff]
        %v2818 = vld [vmem:[%s1281 + $0xfa] sm:$0xff]
        %v2819 = vld [vmem:[%s1281 + $0x10a] sm:$0xff]
        %v2820 = vld [vmem:[%s1281 + $0x112] sm:$0xff]
        %v2821 = vld [vmem:[%s1281 + $0x122] sm:$0xff]
        %v2822 = vld [vmem:[%s1281 + $0x12a] sm:$0xff]
        %v2823 = vld [vmem:[%s1281 + $0x13a] sm:$0xff]
        %v2824 = vld [vmem:[%s1281 + $0x142] sm:$0xff]
        %v2825 = vld [vmem:[%s1281 + $0x152] sm:$0xff]
        %v2826 = vld [vmem:[%s1281 + $0x15a] sm:$0xff]
        %v2827 = vld [vmem:[%s1281 + $0x16a] sm:$0xff]
        %v2828 = vld [vmem:[%s1281 + $0x172] sm:$0xff]
        %v2829 = vld [vmem:[%s1281 + $0x3] sm:$0xff]
        %v2830 = vld [vmem:[%s1281 + $0xb] sm:$0xff]
        %v2831 = vld [vmem:[%s1281 + $0x1b] sm:$0xff]
        %v2832 = vld [vmem:[%s1281 + $0x23] sm:$0xff]
        %v2833 = vld [vmem:[%s1281 + $0x33] sm:$0xff]
        %v2834 = vld [vmem:[%s1281 + $0x3b] sm:$0xff]
        %v2835 = vld [vmem:[%s1281 + $0x4b] sm:$0xff]
        %v2836 = vld [vmem:[%s1281 + $0x53] sm:$0xff]
        %v2837 = vld [vmem:[%s1281 + $0x63] sm:$0xff]
        %v2838 = vld [vmem:[%s1281 + $0x6b] sm:$0xff]
        %v2839 = vld [vmem:[%s1281 + $0x7b] sm:$0xff]
        %v2840 = vld [vmem:[%s1281 + $0x83] sm:$0xff]
        %v2841 = vld [vmem:[%s1281 + $0x93] sm:$0xff]
        %v2842 = vld [vmem:[%s1281 + $0x9b] sm:$0xff]
        %v2843 = vld [vmem:[%s1281 + $0xab] sm:$0xff]
        %v2844 = vld [vmem:[%s1281 + $0xb3] sm:$0xff]
        %v2845 = vld [vmem:[%s1281 + $0xc3] sm:$0xff]
        %v2846 = vld [vmem:[%s1281 + $0xcb] sm:$0xff]
        %v2847 = vld [vmem:[%s1281 + $0xdb] sm:$0xff]
        %v2848 = vld [vmem:[%s1281 + $0xe3] sm:$0xff]
        %v2849 = vld [vmem:[%s1281 + $0xf3] sm:$0xff]
        %v2850 = vld [vmem:[%s1281 + $0xfb] sm:$0xff]
        %v2851 = vld [vmem:[%s1281 + $0x10b] sm:$0xff]
        %v2852 = vld [vmem:[%s1281 + $0x113] sm:$0xff]
        %v2853 = vld [vmem:[%s1281 + $0x123] sm:$0xff]
        %v2854 = vld [vmem:[%s1281 + $0x12b] sm:$0xff]
        %v2855 = vld [vmem:[%s1281 + $0x13b] sm:$0xff]
        %v2856 = vld [vmem:[%s1281 + $0x143] sm:$0xff]
        %v2857 = vld [vmem:[%s1281 + $0x153] sm:$0xff]
        %v2858 = vld [vmem:[%s1281 + $0x15b] sm:$0xff]
        %v2859 = vld [vmem:[%s1281 + $0x16b] sm:$0xff]
        %v2860 = vld [vmem:[%s1281 + $0x173] sm:$0xff]
        %v2861 = vld [vmem:[%s583 + $0x1] sm:$0xff]
        %v2862 = vld [vmem:[%s583 + $0x9] sm:$0xff]
        %v2863 = vld [vmem:[%s583 + $0x19] sm:$0xff]
        %v2864 = vld [vmem:[%s583 + $0x21] sm:$0xff]
        %v2865 = vld [vmem:[%s583 + $0x31] sm:$0xff]
        %v2866 = vld [vmem:[%s583 + $0x39] sm:$0xff]
        %v2867 = vld [vmem:[%s583 + $0x49] sm:$0xff]
        %v2868 = vld [vmem:[%s583 + $0x51] sm:$0xff]
        %v2869 = vld [vmem:[%s583 + $0x61] sm:$0xff]
        %v2870 = vld [vmem:[%s583 + $0x69] sm:$0xff]
        %v2871 = vld [vmem:[%s583 + $0x79] sm:$0xff]
        %v2872 = vld [vmem:[%s583 + $0x81] sm:$0xff]
        %v2873 = vld [vmem:[%s583 + $0x91] sm:$0xff]
        %v2874 = vld [vmem:[%s583 + $0x99] sm:$0xff]
        %v2875 = vld [vmem:[%s583 + $0xa9] sm:$0xff]
        %v2876 = vld [vmem:[%s583 + $0xb1] sm:$0xff]
        %v2877 = vld [vmem:[%s583 + $0xc1] sm:$0xff]
        %v2878 = vld [vmem:[%s583 + $0xc9] sm:$0xff]
        %v2879 = vld [vmem:[%s583 + $0xd9] sm:$0xff]
        %v2880 = vld [vmem:[%s583 + $0xe1] sm:$0xff]
        %v2881 = vld [vmem:[%s583 + $0xf1] sm:$0xff]
        %v2882 = vld [vmem:[%s583 + $0xf9] sm:$0xff]
        %v2883 = vld [vmem:[%s583 + $0x109] sm:$0xff]
        %v2884 = vld [vmem:[%s583 + $0x111] sm:$0xff]
        %v2885 = vld [vmem:[%s583 + $0x121] sm:$0xff]
        %v2886 = vld [vmem:[%s583 + $0x129] sm:$0xff]
        %v2887 = vld [vmem:[%s583 + $0x139] sm:$0xff]
        %v2888 = vld [vmem:[%s583 + $0x141] sm:$0xff]
        %v2889 = vld [vmem:[%s583 + $0x151] sm:$0xff]
        %v2890 = vld [vmem:[%s583 + $0x159] sm:$0xff]
        %v2891 = vld [vmem:[%s583 + $0x169] sm:$0xff]
        %v2892 = vld [vmem:[%s583 + $0x171] sm:$0xff]
        %v2893 = vld [vmem:[%s583 + $0x2] sm:$0xff]
        %v2894 = vld [vmem:[%s583 + $0xa] sm:$0xff]
        %v2895 = vld [vmem:[%s583 + $0x1a] sm:$0xff]
        %v2896 = vld [vmem:[%s583 + $0x22] sm:$0xff]
        %v2897 = vld [vmem:[%s583 + $0x32] sm:$0xff]
        %v2898 = vld [vmem:[%s583 + $0x3a] sm:$0xff]
        %v2899 = vld [vmem:[%s583 + $0x4a] sm:$0xff]
        %v2900 = vld [vmem:[%s583 + $0x52] sm:$0xff]
        %v2901 = vld [vmem:[%s583 + $0x62] sm:$0xff]
        %v2902 = vld [vmem:[%s583 + $0x6a] sm:$0xff]
        %v2903 = vld [vmem:[%s583 + $0x7a] sm:$0xff]
        %v2904 = vld [vmem:[%s583 + $0x82] sm:$0xff]
        %v2905 = vld [vmem:[%s583 + $0x92] sm:$0xff]
        %v2906 = vld [vmem:[%s583 + $0x9a] sm:$0xff]
        %v2907 = vld [vmem:[%s583 + $0xaa] sm:$0xff]
        %v2908 = vld [vmem:[%s583 + $0xb2] sm:$0xff]
        %v2909 = vld [vmem:[%s583 + $0xc2] sm:$0xff]
        %v2910 = vld [vmem:[%s583 + $0xca] sm:$0xff]
        %v2911 = vld [vmem:[%s583 + $0xda] sm:$0xff]
        %v2912 = vld [vmem:[%s583 + $0xe2] sm:$0xff]
        %v2913 = vld [vmem:[%s583 + $0xf2] sm:$0xff]
        %v2914 = vld [vmem:[%s583 + $0xfa] sm:$0xff]
        %v2915 = vld [vmem:[%s583 + $0x10a] sm:$0xff]
        %v2916 = vld [vmem:[%s583 + $0x112] sm:$0xff]
        %v2917 = vld [vmem:[%s583 + $0x122] sm:$0xff]
        %v2918 = vld [vmem:[%s583 + $0x12a] sm:$0xff]
        %v2919 = vld [vmem:[%s583 + $0x13a] sm:$0xff]
        %v2920 = vld [vmem:[%s583 + $0x142] sm:$0xff]
        %v2921 = vld [vmem:[%s583 + $0x152] sm:$0xff]
        %v2922 = vld [vmem:[%s583 + $0x15a] sm:$0xff]
        %v2923 = vld [vmem:[%s583 + $0x16a] sm:$0xff]
        %v2924 = vld [vmem:[%s583 + $0x172] sm:$0xff]
        %v2925 = vld [vmem:[%s583 + $0x3] sm:$0xff]
        %v2926 = vld [vmem:[%s583 + $0xb] sm:$0xff]
        %v2927 = vld [vmem:[%s583 + $0x1b] sm:$0xff]
        %v2928 = vld [vmem:[%s583 + $0x23] sm:$0xff]
        %v2929 = vld [vmem:[%s583 + $0x33] sm:$0xff]
        %v2930 = vld [vmem:[%s583 + $0x3b] sm:$0xff]
        %v2931 = vld [vmem:[%s583 + $0x4b] sm:$0xff]
        %v2932 = vld [vmem:[%s583 + $0x53] sm:$0xff]
        %v2933 = vld [vmem:[%s583 + $0x63] sm:$0xff]
        %v2934 = vld [vmem:[%s583 + $0x6b] sm:$0xff]
        %v2935 = vld [vmem:[%s583 + $0x7b] sm:$0xff]
        %v2936 = vld [vmem:[%s583 + $0x83] sm:$0xff]
        %v2937 = vld [vmem:[%s583 + $0x93] sm:$0xff]
        %v2938 = vld [vmem:[%s583 + $0x9b] sm:$0xff]
        %v2939 = vld [vmem:[%s583 + $0xab] sm:$0xff]
        %v2940 = vld [vmem:[%s583 + $0xb3] sm:$0xff]
        %v2941 = vld [vmem:[%s583 + $0xc3] sm:$0xff]
        %v2942 = vld [vmem:[%s583 + $0xcb] sm:$0xff]
        %v2943 = vld [vmem:[%s583 + $0xdb] sm:$0xff]
        %v2944 = vld [vmem:[%s583 + $0xe3] sm:$0xff]
        %v2945 = vld [vmem:[%s583 + $0xf3] sm:$0xff]
        %v2946 = vld [vmem:[%s583 + $0xfb] sm:$0xff]
        %v2947 = vld [vmem:[%s583 + $0x10b] sm:$0xff]
        %v2948 = vld [vmem:[%s583 + $0x113] sm:$0xff]
        %v2949 = vld [vmem:[%s583 + $0x123] sm:$0xff]
        %v2950 = vld [vmem:[%s583 + $0x12b] sm:$0xff]
        %v2951 = vld [vmem:[%s583 + $0x13b] sm:$0xff]
        %v2952 = vld [vmem:[%s583 + $0x143] sm:$0xff]
        %v2953 = vld [vmem:[%s583 + $0x153] sm:$0xff]
        %v2954 = vld [vmem:[%s583 + $0x15b] sm:$0xff]
        %v2955 = vld [vmem:[%s583 + $0x16b] sm:$0xff]
        %v2956 = vld [vmem:[%s583 + $0x173] sm:$0xff]
        %v2957 = vld [vmem:[%s1889 + $0x1] sm:$0xff]
        %v2958 = vld [vmem:[%s1889 + $0x9] sm:$0xff]
        %v2959 = vld [vmem:[%s1889 + $0x19] sm:$0xff]
        %v2960 = vld [vmem:[%s1889 + $0x21] sm:$0xff]
        %v2961 = vld [vmem:[%s1889 + $0x31] sm:$0xff]
        %v2962 = vld [vmem:[%s1889 + $0x39] sm:$0xff]
        %v2963 = vld [vmem:[%s1889 + $0x49] sm:$0xff]
        %v2964 = vld [vmem:[%s1889 + $0x51] sm:$0xff]
        %v2965 = vld [vmem:[%s1889 + $0x61] sm:$0xff]
        %v2966 = vld [vmem:[%s1889 + $0x69] sm:$0xff]
        %v2967 = vld [vmem:[%s1889 + $0x79] sm:$0xff]
        %v2968 = vld [vmem:[%s1889 + $0x81] sm:$0xff]
        %v2969 = vld [vmem:[%s1889 + $0x91] sm:$0xff]
        %v2970 = vld [vmem:[%s1889 + $0x99] sm:$0xff]
        %v2971 = vld [vmem:[%s1889 + $0xa9] sm:$0xff]
        %v2972 = vld [vmem:[%s1889 + $0xb1] sm:$0xff]
        %v2973 = vld [vmem:[%s1889 + $0xc1] sm:$0xff]
        %v2974 = vld [vmem:[%s1889 + $0xc9] sm:$0xff]
        %v2975 = vld [vmem:[%s1889 + $0xd9] sm:$0xff]
        %v2976 = vld [vmem:[%s1889 + $0xe1] sm:$0xff]
        %v2977 = vld [vmem:[%s1889 + $0xf1] sm:$0xff]
        %v2978 = vld [vmem:[%s1889 + $0xf9] sm:$0xff]
        %v2979 = vld [vmem:[%s1889 + $0x109] sm:$0xff]
        %v2980 = vld [vmem:[%s1889 + $0x111] sm:$0xff]
        %v2981 = vld [vmem:[%s1889 + $0x121] sm:$0xff]
        %v2982 = vld [vmem:[%s1889 + $0x129] sm:$0xff]
        %v2983 = vld [vmem:[%s1889 + $0x139] sm:$0xff]
        %v2984 = vld [vmem:[%s1889 + $0x141] sm:$0xff]
        %v2985 = vld [vmem:[%s1889 + $0x151] sm:$0xff]
        %v2986 = vld [vmem:[%s1889 + $0x159] sm:$0xff]
        %v2987 = vld [vmem:[%s1889 + $0x169] sm:$0xff]
        %v2988 = vld [vmem:[%s1889 + $0x171] sm:$0xff]
        %v2989 = vld [vmem:[%s1889 + $0x2] sm:$0xff]
        %v2990 = vld [vmem:[%s1889 + $0xa] sm:$0xff]
        %v2991 = vld [vmem:[%s1889 + $0x1a] sm:$0xff]
        %v2992 = vld [vmem:[%s1889 + $0x22] sm:$0xff]
        %v2993 = vld [vmem:[%s1889 + $0x32] sm:$0xff]
        %v2994 = vld [vmem:[%s1889 + $0x3a] sm:$0xff]
        %v2995 = vld [vmem:[%s1889 + $0x4a] sm:$0xff]
        %v2996 = vld [vmem:[%s1889 + $0x52] sm:$0xff]
        %v2997 = vld [vmem:[%s1889 + $0x62] sm:$0xff]
        %v2998 = vld [vmem:[%s1889 + $0x6a] sm:$0xff]
        %v2999 = vld [vmem:[%s1889 + $0x7a] sm:$0xff]
        %v3000 = vld [vmem:[%s1889 + $0x82] sm:$0xff]
        %v3001 = vld [vmem:[%s1889 + $0x92] sm:$0xff]
        %v3002 = vld [vmem:[%s1889 + $0x9a] sm:$0xff]
        %v3003 = vld [vmem:[%s1889 + $0xaa] sm:$0xff]
        %v3004 = vld [vmem:[%s1889 + $0xb2] sm:$0xff]
        %v3005 = vld [vmem:[%s1889 + $0xc2] sm:$0xff]
        %v3006 = vld [vmem:[%s1889 + $0xca] sm:$0xff]
        %v3007 = vld [vmem:[%s1889 + $0xda] sm:$0xff]
        %v3008 = vld [vmem:[%s1889 + $0xe2] sm:$0xff]
        %v3009 = vld [vmem:[%s1889 + $0xf2] sm:$0xff]
        %v3010 = vld [vmem:[%s1889 + $0xfa] sm:$0xff]
        %v3011 = vld [vmem:[%s1889 + $0x10a] sm:$0xff]
        %v3012 = vld [vmem:[%s1889 + $0x112] sm:$0xff]
        %v3013 = vld [vmem:[%s1889 + $0x122] sm:$0xff]
        %v3014 = vld [vmem:[%s1889 + $0x12a] sm:$0xff]
        %v3015 = vld [vmem:[%s1889 + $0x13a] sm:$0xff]
        %v3016 = vld [vmem:[%s1889 + $0x142] sm:$0xff]
        %v3017 = vld [vmem:[%s1889 + $0x152] sm:$0xff]
        %v3018 = vld [vmem:[%s1889 + $0x15a] sm:$0xff]
        %v3019 = vld [vmem:[%s1889 + $0x16a] sm:$0xff]
        %v3020 = vld [vmem:[%s1889 + $0x172] sm:$0xff]
        %v3021 = vld [vmem:[%s1889 + $0x3] sm:$0xff]
        %v3022 = vld [vmem:[%s1889 + $0xb] sm:$0xff]
        %v3023 = vld [vmem:[%s1889 + $0x1b] sm:$0xff]
        %v3024 = vld [vmem:[%s1889 + $0x23] sm:$0xff]
        %v3025 = vld [vmem:[%s1889 + $0x33] sm:$0xff]
        %v3026 = vld [vmem:[%s1889 + $0x3b] sm:$0xff]
        %v3027 = vld [vmem:[%s1889 + $0x4b] sm:$0xff]
        %v3028 = vld [vmem:[%s1889 + $0x53] sm:$0xff]
        %v3029 = vld [vmem:[%s1889 + $0x63] sm:$0xff]
        %v3030 = vld [vmem:[%s1889 + $0x6b] sm:$0xff]
        %v3031 = vld [vmem:[%s1889 + $0x7b] sm:$0xff]
        %v3032 = vld [vmem:[%s1889 + $0x83] sm:$0xff]
        %v3033 = vld [vmem:[%s1889 + $0x93] sm:$0xff]
        %v3034 = vld [vmem:[%s1889 + $0x9b] sm:$0xff]
        %v3035 = vld [vmem:[%s1889 + $0xab] sm:$0xff]
        %v3036 = vld [vmem:[%s1889 + $0xb3] sm:$0xff]
        %v3037 = vld [vmem:[%s1889 + $0xc3] sm:$0xff]
        %v3038 = vld [vmem:[%s1889 + $0xcb] sm:$0xff]
        %v3039 = vld [vmem:[%s1889 + $0xdb] sm:$0xff]
        %v3040 = vld [vmem:[%s1889 + $0xe3] sm:$0xff]
        %v3041 = vld [vmem:[%s1889 + $0xf3] sm:$0xff]
        %v3042 = vld [vmem:[%s1889 + $0xfb] sm:$0xff]
        %v3043 = vld [vmem:[%s1889 + $0x10b] sm:$0xff]
        %v3044 = vld [vmem:[%s1889 + $0x113] sm:$0xff]
        %v3045 = vld [vmem:[%s1889 + $0x123] sm:$0xff]
        %v3046 = vld [vmem:[%s1889 + $0x12b] sm:$0xff]
        %v3047 = vld [vmem:[%s1889 + $0x13b] sm:$0xff]
        %v3048 = vld [vmem:[%s1889 + $0x143] sm:$0xff]
        %v3049 = vld [vmem:[%s1889 + $0x153] sm:$0xff]
        %v3050 = vld [vmem:[%s1889 + $0x15b] sm:$0xff]
        %v3051 = vld [vmem:[%s1889 + $0x16b] sm:$0xff]
        %v3052 = vld [vmem:[%s1889 + $0x173] sm:$0xff]
        %3085 = vrot.lane.b32.xlu0 %v2797, 16
        %v3086 = vpop.permute.xlu0 %3085
        %3087 = vrot.lane.b32.xlu0 %v2798, 16
        %v3088 = vpop.permute.xlu0 %3087
        %3089 = vrot.lane.b32.xlu0 %v2799, 16
        %v3090 = vpop.permute.xlu0 %3089
        %3091 = vrot.lane.b32.xlu0 %v2800, 16
        %v3092 = vpop.permute.xlu0 %3091
        %3093 = vrot.lane.b32.xlu0 %v2801, 16
        %v3094 = vpop.permute.xlu0 %3093
        %3095 = vrot.lane.b32.xlu0 %v2802, 16
        %v3096 = vpop.permute.xlu0 %3095
        %3097 = vrot.lane.b32.xlu0 %v2803, 16
        %v3098 = vpop.permute.xlu0 %3097
        %3099 = vrot.lane.b32.xlu0 %v2804, 16
        %v3100 = vpop.permute.xlu0 %3099
        %3101 = vrot.lane.b32.xlu0 %v2805, 16
        %v3102 = vpop.permute.xlu0 %3101
        %3103 = vrot.lane.b32.xlu0 %v2806, 16
        %v3104 = vpop.permute.xlu0 %3103
        %3105 = vrot.lane.b32.xlu0 %v2807, 16
        %v3106 = vpop.permute.xlu0 %3105
        %3107 = vrot.lane.b32.xlu0 %v2808, 16
        %v3108 = vpop.permute.xlu0 %3107
        %3109 = vrot.lane.b32.xlu0 %v2809, 16
        %v3110 = vpop.permute.xlu0 %3109
        %3111 = vrot.lane.b32.xlu0 %v2810, 16
        %v3112 = vpop.permute.xlu0 %3111
        %3113 = vrot.lane.b32.xlu0 %v2811, 16
        %v3114 = vpop.permute.xlu0 %3113
        %3115 = vrot.lane.b32.xlu0 %v2812, 16
        %v3116 = vpop.permute.xlu0 %3115
        %3117 = vrot.lane.b32.xlu0 %v2813, 16
        %v3118 = vpop.permute.xlu0 %3117
        %3119 = vrot.lane.b32.xlu0 %v2814, 16
        %v3120 = vpop.permute.xlu0 %3119
        %3121 = vrot.lane.b32.xlu0 %v2815, 16
        %v3122 = vpop.permute.xlu0 %3121
        %3123 = vrot.lane.b32.xlu0 %v2816, 16
        %v3124 = vpop.permute.xlu0 %3123
        %3125 = vrot.lane.b32.xlu0 %v2817, 16
        %v3126 = vpop.permute.xlu0 %3125
        %3127 = vrot.lane.b32.xlu0 %v2818, 16
        %v3128 = vpop.permute.xlu0 %3127
        %3129 = vrot.lane.b32.xlu0 %v2819, 16
        %v3130 = vpop.permute.xlu0 %3129
        %3131 = vrot.lane.b32.xlu0 %v2820, 16
        %v3132 = vpop.permute.xlu0 %3131
        %3133 = vrot.lane.b32.xlu0 %v2821, 16
        %v3134 = vpop.permute.xlu0 %3133
        %3135 = vrot.lane.b32.xlu0 %v2822, 16
        %v3136 = vpop.permute.xlu0 %3135
        %3137 = vrot.lane.b32.xlu0 %v2823, 16
        %v3138 = vpop.permute.xlu0 %3137
        %3139 = vrot.lane.b32.xlu0 %v2824, 16
        %v3140 = vpop.permute.xlu0 %3139
        %3141 = vrot.lane.b32.xlu0 %v2825, 16
        %v3142 = vpop.permute.xlu0 %3141
        %3143 = vrot.lane.b32.xlu0 %v2826, 16
        %v3144 = vpop.permute.xlu0 %3143
        %3145 = vrot.lane.b32.xlu0 %v2827, 16
        %v3146 = vpop.permute.xlu0 %3145
        %3147 = vrot.lane.b32.xlu0 %v2828, 16
        %v3148 = vpop.permute.xlu0 %3147
        %3213 = vrot.lane.b32.xlu0 %v2829, 32
        %v3214 = vpop.permute.xlu0 %3213
        %3215 = vrot.lane.b32.xlu0 %v2830, 32
        %v3216 = vpop.permute.xlu0 %3215
        %3217 = vrot.lane.b32.xlu0 %v2831, 32
        %v3218 = vpop.permute.xlu0 %3217
        %3219 = vrot.lane.b32.xlu0 %v2832, 32
        %v3220 = vpop.permute.xlu0 %3219
        %3221 = vrot.lane.b32.xlu0 %v2833, 32
        %v3222 = vpop.permute.xlu0 %3221
        %3223 = vrot.lane.b32.xlu0 %v2834, 32
        %v3224 = vpop.permute.xlu0 %3223
        %3225 = vrot.lane.b32.xlu0 %v2835, 32
        %v3226 = vpop.permute.xlu0 %3225
        %3227 = vrot.lane.b32.xlu0 %v2836, 32
        %v3228 = vpop.permute.xlu0 %3227
        %3229 = vrot.lane.b32.xlu0 %v2837, 32
        %v3230 = vpop.permute.xlu0 %3229
        %3231 = vrot.lane.b32.xlu0 %v2838, 32
        %v3232 = vpop.permute.xlu0 %3231
        %3233 = vrot.lane.b32.xlu0 %v2839, 32
        %v3234 = vpop.permute.xlu0 %3233
        %3235 = vrot.lane.b32.xlu0 %v2840, 32
        %v3236 = vpop.permute.xlu0 %3235
        %3237 = vrot.lane.b32.xlu0 %v2841, 32
        %v3238 = vpop.permute.xlu0 %3237
        %3239 = vrot.lane.b32.xlu0 %v2842, 32
        %v3240 = vpop.permute.xlu0 %3239
        %3241 = vrot.lane.b32.xlu0 %v2843, 32
        %v3242 = vpop.permute.xlu0 %3241
        %3243 = vrot.lane.b32.xlu0 %v2844, 32
        %v3244 = vpop.permute.xlu0 %3243
        %3245 = vrot.lane.b32.xlu0 %v2845, 32
        %v3246 = vpop.permute.xlu0 %3245
        %3247 = vrot.lane.b32.xlu0 %v2846, 32
        %v3248 = vpop.permute.xlu0 %3247
        %3249 = vrot.lane.b32.xlu0 %v2847, 32
        %v3250 = vpop.permute.xlu0 %3249
        %3251 = vrot.lane.b32.xlu0 %v2848, 32
        %v3252 = vpop.permute.xlu0 %3251
        %3253 = vrot.lane.b32.xlu0 %v2849, 32
        %v3254 = vpop.permute.xlu0 %3253
        %3255 = vrot.lane.b32.xlu0 %v2850, 32
        %v3256 = vpop.permute.xlu0 %3255
        %3257 = vrot.lane.b32.xlu0 %v2851, 32
        %v3258 = vpop.permute.xlu0 %3257
        %3259 = vrot.lane.b32.xlu0 %v2852, 32
        %v3260 = vpop.permute.xlu0 %3259
        %3261 = vrot.lane.b32.xlu0 %v2853, 32
        %v3262 = vpop.permute.xlu0 %3261
        %3263 = vrot.lane.b32.xlu0 %v2854, 32
        %v3264 = vpop.permute.xlu0 %3263
        %3265 = vrot.lane.b32.xlu0 %v2855, 32
        %v3266 = vpop.permute.xlu0 %3265
        %3267 = vrot.lane.b32.xlu0 %v2856, 32
        %v3268 = vpop.permute.xlu0 %3267
        %3269 = vrot.lane.b32.xlu0 %v2857, 32
        %v3270 = vpop.permute.xlu0 %3269
        %3271 = vrot.lane.b32.xlu0 %v2858, 32
        %v3272 = vpop.permute.xlu0 %3271
        %3273 = vrot.lane.b32.xlu0 %v2859, 32
        %v3274 = vpop.permute.xlu0 %3273
        %3275 = vrot.lane.b32.xlu0 %v2860, 32
        %v3276 = vpop.permute.xlu0 %3275
        %3341 = vrot.lane.b32.xlu0 %v2861, 48
        %v3342 = vpop.permute.xlu0 %3341
        %3343 = vrot.lane.b32.xlu0 %v2862, 48
        %v3344 = vpop.permute.xlu0 %3343
        %3345 = vrot.lane.b32.xlu0 %v2863, 48
        %v3346 = vpop.permute.xlu0 %3345
        %3347 = vrot.lane.b32.xlu0 %v2864, 48
        %v3348 = vpop.permute.xlu0 %3347
        %3349 = vrot.lane.b32.xlu0 %v2865, 48
        %v3350 = vpop.permute.xlu0 %3349
        %3351 = vrot.lane.b32.xlu0 %v2866, 48
        %v3352 = vpop.permute.xlu0 %3351
        %3353 = vrot.lane.b32.xlu0 %v2867, 48
        %v3354 = vpop.permute.xlu0 %3353
        %3355 = vrot.lane.b32.xlu0 %v2868, 48
        %v3356 = vpop.permute.xlu0 %3355
        %3357 = vrot.lane.b32.xlu0 %v2869, 48
        %v3358 = vpop.permute.xlu0 %3357
        %3359 = vrot.lane.b32.xlu0 %v2870, 48
        %v3360 = vpop.permute.xlu0 %3359
        %3361 = vrot.lane.b32.xlu0 %v2871, 48
        %v3362 = vpop.permute.xlu0 %3361
        %3363 = vrot.lane.b32.xlu0 %v2872, 48
        %v3364 = vpop.permute.xlu0 %3363
        %3365 = vrot.lane.b32.xlu0 %v2873, 48
        %v3366 = vpop.permute.xlu0 %3365
        %3367 = vrot.lane.b32.xlu0 %v2874, 48
        %v3368 = vpop.permute.xlu0 %3367
        %3369 = vrot.lane.b32.xlu0 %v2875, 48
        %v3370 = vpop.permute.xlu0 %3369
        %3371 = vrot.lane.b32.xlu0 %v2876, 48
        %v3372 = vpop.permute.xlu0 %3371
        %3373 = vrot.lane.b32.xlu0 %v2877, 48
        %v3374 = vpop.permute.xlu0 %3373
        %3375 = vrot.lane.b32.xlu0 %v2878, 48
        %v3376 = vpop.permute.xlu0 %3375
        %3377 = vrot.lane.b32.xlu0 %v2879, 48
        %v3378 = vpop.permute.xlu0 %3377
        %3379 = vrot.lane.b32.xlu0 %v2880, 48
        %v3380 = vpop.permute.xlu0 %3379
        %3381 = vrot.lane.b32.xlu0 %v2881, 48
        %v3382 = vpop.permute.xlu0 %3381
        %3383 = vrot.lane.b32.xlu0 %v2882, 48
        %v3384 = vpop.permute.xlu0 %3383
        %3385 = vrot.lane.b32.xlu0 %v2883, 48
        %v3386 = vpop.permute.xlu0 %3385
        %3387 = vrot.lane.b32.xlu0 %v2884, 48
        %v3388 = vpop.permute.xlu0 %3387
        %3389 = vrot.lane.b32.xlu0 %v2885, 48
        %v3390 = vpop.permute.xlu0 %3389
        %3391 = vrot.lane.b32.xlu0 %v2886, 48
        %v3392 = vpop.permute.xlu0 %3391
        %3393 = vrot.lane.b32.xlu0 %v2887, 48
        %v3394 = vpop.permute.xlu0 %3393
        %3395 = vrot.lane.b32.xlu0 %v2888, 48
        %v3396 = vpop.permute.xlu0 %3395
        %3397 = vrot.lane.b32.xlu0 %v2889, 48
        %v3398 = vpop.permute.xlu0 %3397
        %3399 = vrot.lane.b32.xlu0 %v2890, 48
        %v3400 = vpop.permute.xlu0 %3399
        %3401 = vrot.lane.b32.xlu0 %v2891, 48
        %v3402 = vpop.permute.xlu0 %3401
        %3403 = vrot.lane.b32.xlu0 %v2892, 48
        %v3404 = vpop.permute.xlu0 %3403
        %3469 = vrot.lane.b32.xlu0 %v2893, 64
        %v3470 = vpop.permute.xlu0 %3469
        %3471 = vrot.lane.b32.xlu0 %v2894, 64
        %v3472 = vpop.permute.xlu0 %3471
        %3473 = vrot.lane.b32.xlu0 %v2895, 64
        %v3474 = vpop.permute.xlu0 %3473
        %3475 = vrot.lane.b32.xlu0 %v2896, 64
        %v3476 = vpop.permute.xlu0 %3475
        %3477 = vrot.lane.b32.xlu0 %v2897, 64
        %v3478 = vpop.permute.xlu0 %3477
        %3479 = vrot.lane.b32.xlu0 %v2898, 64
        %v3480 = vpop.permute.xlu0 %3479
        %3481 = vrot.lane.b32.xlu0 %v2899, 64
        %v3482 = vpop.permute.xlu0 %3481
        %3483 = vrot.lane.b32.xlu0 %v2900, 64
        %v3484 = vpop.permute.xlu0 %3483
        %3485 = vrot.lane.b32.xlu0 %v2901, 64
        %v3486 = vpop.permute.xlu0 %3485
        %3487 = vrot.lane.b32.xlu0 %v2902, 64
        %v3488 = vpop.permute.xlu0 %3487
        %3489 = vrot.lane.b32.xlu0 %v2903, 64
        %v3490 = vpop.permute.xlu0 %3489
        %3491 = vrot.lane.b32.xlu0 %v2904, 64
        %v3492 = vpop.permute.xlu0 %3491
        %3493 = vrot.lane.b32.xlu0 %v2905, 64
        %v3494 = vpop.permute.xlu0 %3493
        %3495 = vrot.lane.b32.xlu0 %v2906, 64
        %v3496 = vpop.permute.xlu0 %3495
        %3497 = vrot.lane.b32.xlu0 %v2907, 64
        %v3498 = vpop.permute.xlu0 %3497
        %3499 = vrot.lane.b32.xlu0 %v2908, 64
        %v3500 = vpop.permute.xlu0 %3499
        %3501 = vrot.lane.b32.xlu0 %v2909, 64
        %v3502 = vpop.permute.xlu0 %3501
        %3503 = vrot.lane.b32.xlu0 %v2910, 64
        %v3504 = vpop.permute.xlu0 %3503
        %3505 = vrot.lane.b32.xlu0 %v2911, 64
        %v3506 = vpop.permute.xlu0 %3505
        %3507 = vrot.lane.b32.xlu0 %v2912, 64
        %v3508 = vpop.permute.xlu0 %3507
        %3509 = vrot.lane.b32.xlu0 %v2913, 64
        %v3510 = vpop.permute.xlu0 %3509
        %3511 = vrot.lane.b32.xlu0 %v2914, 64
        %v3512 = vpop.permute.xlu0 %3511
        %3513 = vrot.lane.b32.xlu0 %v2915, 64
        %v3514 = vpop.permute.xlu0 %3513
        %3515 = vrot.lane.b32.xlu0 %v2916, 64
        %v3516 = vpop.permute.xlu0 %3515
        %3517 = vrot.lane.b32.xlu0 %v2917, 64
        %v3518 = vpop.permute.xlu0 %3517
        %3519 = vrot.lane.b32.xlu0 %v2918, 64
        %v3520 = vpop.permute.xlu0 %3519
        %3521 = vrot.lane.b32.xlu0 %v2919, 64
        %v3522 = vpop.permute.xlu0 %3521
        %3523 = vrot.lane.b32.xlu0 %v2920, 64
        %v3524 = vpop.permute.xlu0 %3523
        %3525 = vrot.lane.b32.xlu0 %v2921, 64
        %v3526 = vpop.permute.xlu0 %3525
        %3527 = vrot.lane.b32.xlu0 %v2922, 64
        %v3528 = vpop.permute.xlu0 %3527
        %3529 = vrot.lane.b32.xlu0 %v2923, 64
        %v3530 = vpop.permute.xlu0 %3529
        %3531 = vrot.lane.b32.xlu0 %v2924, 64
        %v3532 = vpop.permute.xlu0 %3531
        %3597 = vrot.lane.b32.xlu0 %v2925, 80
        %v3598 = vpop.permute.xlu0 %3597
        %3599 = vrot.lane.b32.xlu0 %v2926, 80
        %v3600 = vpop.permute.xlu0 %3599
        %3601 = vrot.lane.b32.xlu0 %v2927, 80
        %v3602 = vpop.permute.xlu0 %3601
        %3603 = vrot.lane.b32.xlu0 %v2928, 80
        %v3604 = vpop.permute.xlu0 %3603
        %3605 = vrot.lane.b32.xlu0 %v2929, 80
        %v3606 = vpop.permute.xlu0 %3605
        %3607 = vrot.lane.b32.xlu0 %v2930, 80
        %v3608 = vpop.permute.xlu0 %3607
        %3609 = vrot.lane.b32.xlu0 %v2931, 80
        %v3610 = vpop.permute.xlu0 %3609
        %3611 = vrot.lane.b32.xlu0 %v2932, 80
        %v3612 = vpop.permute.xlu0 %3611
        %3613 = vrot.lane.b32.xlu0 %v2933, 80
        %v3614 = vpop.permute.xlu0 %3613
        %3615 = vrot.lane.b32.xlu0 %v2934, 80
        %v3616 = vpop.permute.xlu0 %3615
        %3617 = vrot.lane.b32.xlu0 %v2935, 80
        %v3618 = vpop.permute.xlu0 %3617
        %3619 = vrot.lane.b32.xlu0 %v2936, 80
        %v3620 = vpop.permute.xlu0 %3619
        %3621 = vrot.lane.b32.xlu0 %v2937, 80
        %v3622 = vpop.permute.xlu0 %3621
        %3623 = vrot.lane.b32.xlu0 %v2938, 80
        %v3624 = vpop.permute.xlu0 %3623
        %3625 = vrot.lane.b32.xlu0 %v2939, 80
        %v3626 = vpop.permute.xlu0 %3625
        %3627 = vrot.lane.b32.xlu0 %v2940, 80
        %v3628 = vpop.permute.xlu0 %3627
        %3629 = vrot.lane.b32.xlu0 %v2941, 80
        %v3630 = vpop.permute.xlu0 %3629
        %3631 = vrot.lane.b32.xlu0 %v2942, 80
        %v3632 = vpop.permute.xlu0 %3631
        %3633 = vrot.lane.b32.xlu0 %v2943, 80
        %v3634 = vpop.permute.xlu0 %3633
        %3635 = vrot.lane.b32.xlu0 %v2944, 80
        %v3636 = vpop.permute.xlu0 %3635
        %3637 = vrot.lane.b32.xlu0 %v2945, 80
        %v3638 = vpop.permute.xlu0 %3637
        %3639 = vrot.lane.b32.xlu0 %v2946, 80
        %v3640 = vpop.permute.xlu0 %3639
        %3641 = vrot.lane.b32.xlu0 %v2947, 80
        %v3642 = vpop.permute.xlu0 %3641
        %3643 = vrot.lane.b32.xlu0 %v2948, 80
        %v3644 = vpop.permute.xlu0 %3643
        %3645 = vrot.lane.b32.xlu0 %v2949, 80
        %v3646 = vpop.permute.xlu0 %3645
        %3647 = vrot.lane.b32.xlu0 %v2950, 80
        %v3648 = vpop.permute.xlu0 %3647
        %3649 = vrot.lane.b32.xlu0 %v2951, 80
        %v3650 = vpop.permute.xlu0 %3649
        %3651 = vrot.lane.b32.xlu0 %v2952, 80
        %v3652 = vpop.permute.xlu0 %3651
        %3653 = vrot.lane.b32.xlu0 %v2953, 80
        %v3654 = vpop.permute.xlu0 %3653
        %3655 = vrot.lane.b32.xlu0 %v2954, 80
        %v3656 = vpop.permute.xlu0 %3655
        %3657 = vrot.lane.b32.xlu0 %v2955, 80
        %v3658 = vpop.permute.xlu0 %3657
        %3659 = vrot.lane.b32.xlu0 %v2956, 80
        %v3660 = vpop.permute.xlu0 %3659
        %3725 = vrot.lane.b32.xlu0 %v2957, 96
        %v3726 = vpop.permute.xlu0 %3725
        %3727 = vrot.lane.b32.xlu0 %v2958, 96
        %v3728 = vpop.permute.xlu0 %3727
        %3729 = vrot.lane.b32.xlu0 %v2959, 96
        %v3730 = vpop.permute.xlu0 %3729
        %3731 = vrot.lane.b32.xlu0 %v2960, 96
        %v3732 = vpop.permute.xlu0 %3731
        %3733 = vrot.lane.b32.xlu0 %v2961, 96
        %v3734 = vpop.permute.xlu0 %3733
        %3735 = vrot.lane.b32.xlu0 %v2962, 96
        %v3736 = vpop.permute.xlu0 %3735
        %3737 = vrot.lane.b32.xlu0 %v2963, 96
        %v3738 = vpop.permute.xlu0 %3737
        %3739 = vrot.lane.b32.xlu0 %v2964, 96
        %v3740 = vpop.permute.xlu0 %3739
        %3741 = vrot.lane.b32.xlu0 %v2965, 96
        %v3742 = vpop.permute.xlu0 %3741
        %3743 = vrot.lane.b32.xlu0 %v2966, 96
        %v3744 = vpop.permute.xlu0 %3743
        %3745 = vrot.lane.b32.xlu0 %v2967, 96
        %v3746 = vpop.permute.xlu0 %3745
        %3747 = vrot.lane.b32.xlu0 %v2968, 96
        %v3748 = vpop.permute.xlu0 %3747
        %3749 = vrot.lane.b32.xlu0 %v2969, 96
        %v3750 = vpop.permute.xlu0 %3749
        %3751 = vrot.lane.b32.xlu0 %v2970, 96
        %v3752 = vpop.permute.xlu0 %3751
        %3753 = vrot.lane.b32.xlu0 %v2971, 96
        %v3754 = vpop.permute.xlu0 %3753
        %3755 = vrot.lane.b32.xlu0 %v2972, 96
        %v3756 = vpop.permute.xlu0 %3755
        %3757 = vrot.lane.b32.xlu0 %v2973, 96
        %v3758 = vpop.permute.xlu0 %3757
        %3759 = vrot.lane.b32.xlu0 %v2974, 96
        %v3760 = vpop.permute.xlu0 %3759
        %3761 = vrot.lane.b32.xlu0 %v2975, 96
        %v3762 = vpop.permute.xlu0 %3761
        %3763 = vrot.lane.b32.xlu0 %v2976, 96
        %v3764 = vpop.permute.xlu0 %3763
        %3765 = vrot.lane.b32.xlu0 %v2977, 96
        %v3766 = vpop.permute.xlu0 %3765
        %3767 = vrot.lane.b32.xlu0 %v2978, 96
        %v3768 = vpop.permute.xlu0 %3767
        %3769 = vrot.lane.b32.xlu0 %v2979, 96
        %v3770 = vpop.permute.xlu0 %3769
        %3771 = vrot.lane.b32.xlu0 %v2980, 96
        %v3772 = vpop.permute.xlu0 %3771
        %3773 = vrot.lane.b32.xlu0 %v2981, 96
        %v3774 = vpop.permute.xlu0 %3773
        %3775 = vrot.lane.b32.xlu0 %v2982, 96
        %v3776 = vpop.permute.xlu0 %3775
        %3777 = vrot.lane.b32.xlu0 %v2983, 96
        %v3778 = vpop.permute.xlu0 %3777
        %3779 = vrot.lane.b32.xlu0 %v2984, 96
        %v3780 = vpop.permute.xlu0 %3779
        %3781 = vrot.lane.b32.xlu0 %v2985, 96
        %v3782 = vpop.permute.xlu0 %3781
        %3783 = vrot.lane.b32.xlu0 %v2986, 96
        %v3784 = vpop.permute.xlu0 %3783
        %3785 = vrot.lane.b32.xlu0 %v2987, 96
        %v3786 = vpop.permute.xlu0 %3785
        %3787 = vrot.lane.b32.xlu0 %v2988, 96
        %v3788 = vpop.permute.xlu0 %3787
        %3853 = vrot.lane.b32.xlu0 %v2989, 112
        %v3854 = vpop.permute.xlu0 %3853
        %3855 = vrot.lane.b32.xlu0 %v2990, 112
        %v3856 = vpop.permute.xlu0 %3855
        %3857 = vrot.lane.b32.xlu0 %v2991, 112
        %v3858 = vpop.permute.xlu0 %3857
        %3859 = vrot.lane.b32.xlu0 %v2992, 112
        %v3860 = vpop.permute.xlu0 %3859
        %3861 = vrot.lane.b32.xlu0 %v2993, 112
        %v3862 = vpop.permute.xlu0 %3861
        %3863 = vrot.lane.b32.xlu0 %v2994, 112
        %v3864 = vpop.permute.xlu0 %3863
        %3865 = vrot.lane.b32.xlu0 %v2995, 112
        %v3866 = vpop.permute.xlu0 %3865
        %3867 = vrot.lane.b32.xlu0 %v2996, 112
        %v3868 = vpop.permute.xlu0 %3867
        %3869 = vrot.lane.b32.xlu0 %v2997, 112
        %v3870 = vpop.permute.xlu0 %3869
        %3871 = vrot.lane.b32.xlu0 %v2998, 112
        %v3872 = vpop.permute.xlu0 %3871
        %3873 = vrot.lane.b32.xlu0 %v2999, 112
        %v3874 = vpop.permute.xlu0 %3873
        %3875 = vrot.lane.b32.xlu0 %v3000, 112
        %v3876 = vpop.permute.xlu0 %3875
        %3877 = vrot.lane.b32.xlu0 %v3001, 112
        %v3878 = vpop.permute.xlu0 %3877
        %3879 = vrot.lane.b32.xlu0 %v3002, 112
        %v3880 = vpop.permute.xlu0 %3879
        %3881 = vrot.lane.b32.xlu0 %v3003, 112
        %v3882 = vpop.permute.xlu0 %3881
        %3883 = vrot.lane.b32.xlu0 %v3004, 112
        %v3884 = vpop.permute.xlu0 %3883
        %3885 = vrot.lane.b32.xlu0 %v3005, 112
        %v3886 = vpop.permute.xlu0 %3885
        %3887 = vrot.lane.b32.xlu0 %v3006, 112
        %v3888 = vpop.permute.xlu0 %3887
        %3889 = vrot.lane.b32.xlu0 %v3007, 112
        %v3890 = vpop.permute.xlu0 %3889
        %3891 = vrot.lane.b32.xlu0 %v3008, 112
        %v3892 = vpop.permute.xlu0 %3891
        %3893 = vrot.lane.b32.xlu0 %v3009, 112
        %v3894 = vpop.permute.xlu0 %3893
        %3895 = vrot.lane.b32.xlu0 %v3010, 112
        %v3896 = vpop.permute.xlu0 %3895
        %3897 = vrot.lane.b32.xlu0 %v3011, 112
        %v3898 = vpop.permute.xlu0 %3897
        %3899 = vrot.lane.b32.xlu0 %v3012, 112
        %v3900 = vpop.permute.xlu0 %3899
        %3901 = vrot.lane.b32.xlu0 %v3013, 112
        %v3902 = vpop.permute.xlu0 %3901
        %3903 = vrot.lane.b32.xlu0 %v3014, 112
        %v3904 = vpop.permute.xlu0 %3903
        %3905 = vrot.lane.b32.xlu0 %v3015, 112
        %v3906 = vpop.permute.xlu0 %3905
        %3907 = vrot.lane.b32.xlu0 %v3016, 112
        %v3908 = vpop.permute.xlu0 %3907
        %3909 = vrot.lane.b32.xlu0 %v3017, 112
        %v3910 = vpop.permute.xlu0 %3909
        %3911 = vrot.lane.b32.xlu0 %v3018, 112
        %v3912 = vpop.permute.xlu0 %3911
        %3913 = vrot.lane.b32.xlu0 %v3019, 112
        %v3914 = vpop.permute.xlu0 %3913
        %3915 = vrot.lane.b32.xlu0 %v3020, 112
        %v3916 = vpop.permute.xlu0 %3915
        %v3949 = vsel %vm568, %v2765, %v3086
        %v3950 = vsel %vm568, %v2766, %v3088
        %v3951 = vsel %vm568, %v2767, %v3090
        %v3952 = vsel %vm568, %v2768, %v3092
        %v3953 = vsel %vm568, %v2769, %v3094
        %v3954 = vsel %vm568, %v2770, %v3096
        %v3955 = vsel %vm568, %v2771, %v3098
        %v3956 = vsel %vm568, %v2772, %v3100
        %v3957 = vsel %vm568, %v2773, %v3102
        %v3958 = vsel %vm568, %v2774, %v3104
        %v3959 = vsel %vm568, %v2775, %v3106
        %v3960 = vsel %vm568, %v2776, %v3108
        %v3961 = vsel %vm568, %v2777, %v3110
        %v3962 = vsel %vm568, %v2778, %v3112
        %v3963 = vsel %vm568, %v2779, %v3114
        %v3964 = vsel %vm568, %v2780, %v3116
        %v3965 = vsel %vm568, %v2781, %v3118
        %v3966 = vsel %vm568, %v2782, %v3120
        %v3967 = vsel %vm568, %v2783, %v3122
        %v3968 = vsel %vm568, %v2784, %v3124
        %v3969 = vsel %vm568, %v2785, %v3126
        %v3970 = vsel %vm568, %v2786, %v3128
        %v3971 = vsel %vm568, %v2787, %v3130
        %v3972 = vsel %vm568, %v2788, %v3132
        %v3973 = vsel %vm568, %v2789, %v3134
        %v3974 = vsel %vm568, %v2790, %v3136
        %v3975 = vsel %vm568, %v2791, %v3138
        %v3976 = vsel %vm568, %v2792, %v3140
        %v3977 = vsel %vm568, %v2793, %v3142
        %v3978 = vsel %vm568, %v2794, %v3144
        %v3979 = vsel %vm568, %v2795, %v3146
        %v3980 = vsel %vm568, %v2796, %v3148
        %vm3981 = vcmask 261120
        %v3982 = vsel %vm3981, %v3949, %v3214
        %v3983 = vsel %vm3981, %v3950, %v3216
        %v3984 = vsel %vm3981, %v3951, %v3218
        %v3985 = vsel %vm3981, %v3952, %v3220
        %v3986 = vsel %vm3981, %v3953, %v3222
        %v3987 = vsel %vm3981, %v3954, %v3224
        %v3988 = vsel %vm3981, %v3955, %v3226
        %v3989 = vsel %vm3981, %v3956, %v3228
        %v3990 = vsel %vm3981, %v3957, %v3230
        %v3991 = vsel %vm3981, %v3958, %v3232
        %v3992 = vsel %vm3981, %v3959, %v3234
        %v3993 = vsel %vm3981, %v3960, %v3236
        %v3994 = vsel %vm3981, %v3961, %v3238
        %v3995 = vsel %vm3981, %v3962, %v3240
        %v3996 = vsel %vm3981, %v3963, %v3242
        %v3997 = vsel %vm3981, %v3964, %v3244
        %v3998 = vsel %vm3981, %v3965, %v3246
        %v3999 = vsel %vm3981, %v3966, %v3248
        %v4000 = vsel %vm3981, %v3967, %v3250
        %v4001 = vsel %vm3981, %v3968, %v3252
        %v4002 = vsel %vm3981, %v3969, %v3254
        %v4003 = vsel %vm3981, %v3970, %v3256
        %v4004 = vsel %vm3981, %v3971, %v3258
        %v4005 = vsel %vm3981, %v3972, %v3260
        %v4006 = vsel %vm3981, %v3973, %v3262
        %v4007 = vsel %vm3981, %v3974, %v3264
        %v4008 = vsel %vm3981, %v3975, %v3266
        %v4009 = vsel %vm3981, %v3976, %v3268
        %v4010 = vsel %vm3981, %v3977, %v3270
        %v4011 = vsel %vm3981, %v3978, %v3272
        %v4012 = vsel %vm3981, %v3979, %v3274
        %v4013 = vsel %vm3981, %v3980, %v3276
        %vm4014 = vcmask 392192
        %v4015 = vsel %vm4014, %v3982, %v3342
        %v4016 = vsel %vm4014, %v3983, %v3344
        %v4017 = vsel %vm4014, %v3984, %v3346
        %v4018 = vsel %vm4014, %v3985, %v3348
        %v4019 = vsel %vm4014, %v3986, %v3350
        %v4020 = vsel %vm4014, %v3987, %v3352
        %v4021 = vsel %vm4014, %v3988, %v3354
        %v4022 = vsel %vm4014, %v3989, %v3356
        %v4023 = vsel %vm4014, %v3990, %v3358
        %v4024 = vsel %vm4014, %v3991, %v3360
        %v4025 = vsel %vm4014, %v3992, %v3362
        %v4026 = vsel %vm4014, %v3993, %v3364
        %v4027 = vsel %vm4014, %v3994, %v3366
        %v4028 = vsel %vm4014, %v3995, %v3368
        %v4029 = vsel %vm4014, %v3996, %v3370
        %v4030 = vsel %vm4014, %v3997, %v3372
        %v4031 = vsel %vm4014, %v3998, %v3374
        %v4032 = vsel %vm4014, %v3999, %v3376
        %v4033 = vsel %vm4014, %v4000, %v3378
        %v4034 = vsel %vm4014, %v4001, %v3380
        %v4035 = vsel %vm4014, %v4002, %v3382
        %v4036 = vsel %vm4014, %v4003, %v3384
        %v4037 = vsel %vm4014, %v4004, %v3386
        %v4038 = vsel %vm4014, %v4005, %v3388
        %v4039 = vsel %vm4014, %v4006, %v3390
        %v4040 = vsel %vm4014, %v4007, %v3392
        %v4041 = vsel %vm4014, %v4008, %v3394
        %v4042 = vsel %vm4014, %v4009, %v3396
        %v4043 = vsel %vm4014, %v4010, %v3398
        %v4044 = vsel %vm4014, %v4011, %v3400
        %v4045 = vsel %vm4014, %v4012, %v3402
        %v4046 = vsel %vm4014, %v4013, %v3404
        %vm4047 = vcmask 523264
        %v4048 = vsel %vm4047, %v4015, %v3470
        %v4049 = vsel %vm4047, %v4016, %v3472
        %v4050 = vsel %vm4047, %v4017, %v3474
        %v4051 = vsel %vm4047, %v4018, %v3476
        %v4052 = vsel %vm4047, %v4019, %v3478
        %v4053 = vsel %vm4047, %v4020, %v3480
        %v4054 = vsel %vm4047, %v4021, %v3482
        %v4055 = vsel %vm4047, %v4022, %v3484
        %v4056 = vsel %vm4047, %v4023, %v3486
        %v4057 = vsel %vm4047, %v4024, %v3488
        %v4058 = vsel %vm4047, %v4025, %v3490
        %v4059 = vsel %vm4047, %v4026, %v3492
        %v4060 = vsel %vm4047, %v4027, %v3494
        %v4061 = vsel %vm4047, %v4028, %v3496
        %v4062 = vsel %vm4047, %v4029, %v3498
        %v4063 = vsel %vm4047, %v4030, %v3500
        %v4064 = vsel %vm4047, %v4031, %v3502
        %v4065 = vsel %vm4047, %v4032, %v3504
        %v4066 = vsel %vm4047, %v4033, %v3506
        %v4067 = vsel %vm4047, %v4034, %v3508
        %v4068 = vsel %vm4047, %v4035, %v3510
        %v4069 = vsel %vm4047, %v4036, %v3512
        %v4070 = vsel %vm4047, %v4037, %v3514
        %v4071 = vsel %vm4047, %v4038, %v3516
        %v4072 = vsel %vm4047, %v4039, %v3518
        %v4073 = vsel %vm4047, %v4040, %v3520
        %v4074 = vsel %vm4047, %v4041, %v3522
        %v4075 = vsel %vm4047, %v4042, %v3524
        %v4076 = vsel %vm4047, %v4043, %v3526
        %v4077 = vsel %vm4047, %v4044, %v3528
        %v4078 = vsel %vm4047, %v4045, %v3530
        %v4079 = vsel %vm4047, %v4046, %v3532
        %vm4080 = vcmask 654336
        %v4081 = vsel %vm4080, %v4048, %v3598
        %v4082 = vsel %vm4080, %v4049, %v3600
        %v4083 = vsel %vm4080, %v4050, %v3602
        %v4084 = vsel %vm4080, %v4051, %v3604
        %v4085 = vsel %vm4080, %v4052, %v3606
        %v4086 = vsel %vm4080, %v4053, %v3608
        %v4087 = vsel %vm4080, %v4054, %v3610
        %v4088 = vsel %vm4080, %v4055, %v3612
        %v4089 = vsel %vm4080, %v4056, %v3614
        %v4090 = vsel %vm4080, %v4057, %v3616
        %v4091 = vsel %vm4080, %v4058, %v3618
        %v4092 = vsel %vm4080, %v4059, %v3620
        %v4093 = vsel %vm4080, %v4060, %v3622
        %v4094 = vsel %vm4080, %v4061, %v3624
        %v4095 = vsel %vm4080, %v4062, %v3626
        %v4096 = vsel %vm4080, %v4063, %v3628
        %v4097 = vsel %vm4080, %v4064, %v3630
        %v4098 = vsel %vm4080, %v4065, %v3632
        %v4099 = vsel %vm4080, %v4066, %v3634
        %v4100 = vsel %vm4080, %v4067, %v3636
        %v4101 = vsel %vm4080, %v4068, %v3638
        %v4102 = vsel %vm4080, %v4069, %v3640
        %v4103 = vsel %vm4080, %v4070, %v3642
        %v4104 = vsel %vm4080, %v4071, %v3644
        %v4105 = vsel %vm4080, %v4072, %v3646
        %v4106 = vsel %vm4080, %v4073, %v3648
        %v4107 = vsel %vm4080, %v4074, %v3650
        %v4108 = vsel %vm4080, %v4075, %v3652
        %v4109 = vsel %vm4080, %v4076, %v3654
        %v4110 = vsel %vm4080, %v4077, %v3656
        %v4111 = vsel %vm4080, %v4078, %v3658
        %v4112 = vsel %vm4080, %v4079, %v3660
        %vm4113 = vcmask 785408
        %v4114 = vsel %vm4113, %v4081, %v3726
        %v4115 = vsel %vm4113, %v4082, %v3728
        %v4116 = vsel %vm4113, %v4083, %v3730
        %v4117 = vsel %vm4113, %v4084, %v3732
        %v4118 = vsel %vm4113, %v4085, %v3734
        %v4119 = vsel %vm4113, %v4086, %v3736
        %v4120 = vsel %vm4113, %v4087, %v3738
        %v4121 = vsel %vm4113, %v4088, %v3740
        %v4122 = vsel %vm4113, %v4089, %v3742
        %v4123 = vsel %vm4113, %v4090, %v3744
        %v4124 = vsel %vm4113, %v4091, %v3746
        %v4125 = vsel %vm4113, %v4092, %v3748
        %v4126 = vsel %vm4113, %v4093, %v3750
        %v4127 = vsel %vm4113, %v4094, %v3752
        %v4128 = vsel %vm4113, %v4095, %v3754
        %v4129 = vsel %vm4113, %v4096, %v3756
        %v4130 = vsel %vm4113, %v4097, %v3758
        %v4131 = vsel %vm4113, %v4098, %v3760
        %v4132 = vsel %vm4113, %v4099, %v3762
        %v4133 = vsel %vm4113, %v4100, %v3764
        %v4134 = vsel %vm4113, %v4101, %v3766
        %v4135 = vsel %vm4113, %v4102, %v3768
        %v4136 = vsel %vm4113, %v4103, %v3770
        %v4137 = vsel %vm4113, %v4104, %v3772
        %v4138 = vsel %vm4113, %v4105, %v3774
        %v4139 = vsel %vm4113, %v4106, %v3776
        %v4140 = vsel %vm4113, %v4107, %v3778
        %v4141 = vsel %vm4113, %v4108, %v3780
        %v4142 = vsel %vm4113, %v4109, %v3782
        %v4143 = vsel %vm4113, %v4110, %v3784
        %v4144 = vsel %vm4113, %v4111, %v3786
        %v4145 = vsel %vm4113, %v4112, %v3788
        %vm4146 = vcmask 916480
        %v4147 = vsel %vm4146, %v4114, %v3854
        %v4148 = vsel %vm4146, %v4115, %v3856
        %v4149 = vsel %vm4146, %v4116, %v3858
        %v4150 = vsel %vm4146, %v4117, %v3860
        %v4151 = vsel %vm4146, %v4118, %v3862
        %v4152 = vsel %vm4146, %v4119, %v3864
        %v4153 = vsel %vm4146, %v4120, %v3866
        %v4154 = vsel %vm4146, %v4121, %v3868
        %v4155 = vsel %vm4146, %v4122, %v3870
        %v4156 = vsel %vm4146, %v4123, %v3872
        %v4157 = vsel %vm4146, %v4124, %v3874
        %v4158 = vsel %vm4146, %v4125, %v3876
        %v4159 = vsel %vm4146, %v4126, %v3878
        %v4160 = vsel %vm4146, %v4127, %v3880
        %v4161 = vsel %vm4146, %v4128, %v3882
        %v4162 = vsel %vm4146, %v4129, %v3884
        %v4163 = vsel %vm4146, %v4130, %v3886
        %v4164 = vsel %vm4146, %v4131, %v3888
        %v4165 = vsel %vm4146, %v4132, %v3890
        %v4166 = vsel %vm4146, %v4133, %v3892
        %v4167 = vsel %vm4146, %v4134, %v3894
        %v4168 = vsel %vm4146, %v4135, %v3896
        %v4169 = vsel %vm4146, %v4136, %v3898
        %v4170 = vsel %vm4146, %v4137, %v3900
        %v4171 = vsel %vm4146, %v4138, %v3902
        %v4172 = vsel %vm4146, %v4139, %v3904
        %v4173 = vsel %vm4146, %v4140, %v3906
        %v4174 = vsel %vm4146, %v4141, %v3908
        %v4175 = vsel %vm4146, %v4142, %v3910
        %v4176 = vsel %vm4146, %v4143, %v3912
        %v4177 = vsel %vm4146, %v4144, %v3914
        %v4178 = vsel %vm4146, %v4145, %v3916
        %v4179 = vpack.c.bf16 %v4148, %v4147
        %v4180 = vpack.c.bf16 %v3022, %v3021
        %v4181 = vpack.c.bf16 %v4150, %v4149
        %v4182 = vpack.c.bf16 %v3024, %v3023
        %v4183 = vpack.c.bf16 %v4152, %v4151
        %v4184 = vpack.c.bf16 %v3026, %v3025
        %v4185 = vpack.c.bf16 %v4154, %v4153
        %v4186 = vpack.c.bf16 %v3028, %v3027
        %v4187 = vpack.c.bf16 %v4156, %v4155
        %v4188 = vpack.c.bf16 %v3030, %v3029
        %v4189 = vpack.c.bf16 %v4158, %v4157
        %v4190 = vpack.c.bf16 %v3032, %v3031
        %v4191 = vpack.c.bf16 %v4160, %v4159
        %v4192 = vpack.c.bf16 %v3034, %v3033
        %v4193 = vpack.c.bf16 %v4162, %v4161
        %v4194 = vpack.c.bf16 %v3036, %v3035
        %v4195 = vpack.c.bf16 %v4164, %v4163
        %v4196 = vpack.c.bf16 %v3038, %v3037
        %v4197 = vpack.c.bf16 %v4166, %v4165
        %v4198 = vpack.c.bf16 %v3040, %v3039
        %v4199 = vpack.c.bf16 %v4168, %v4167
        %v4200 = vpack.c.bf16 %v3042, %v3041
        %v4201 = vpack.c.bf16 %v4170, %v4169
        %v4202 = vpack.c.bf16 %v3044, %v3043
        %v4203 = vpack.c.bf16 %v4172, %v4171
        %v4204 = vpack.c.bf16 %v3046, %v3045
        %v4205 = vpack.c.bf16 %v4174, %v4173
        %v4206 = vpack.c.bf16 %v3048, %v3047
        %v4207 = vpack.c.bf16 %v4176, %v4175
        %v4208 = vpack.c.bf16 %v3050, %v3049
        %v4209 = vpack.c.bf16 %v4178, %v4177
        %v4210 = vpack.c.bf16 %v3052, %v3051
        %v4211 = vld [vmem:[%s11] sm:$0xf]
        %v4212 = vld [vmem:[%s11 + $0x4] sm:$0xf]
        %v4213 = vld [vmem:[%s11 + $0x8] sm:$0xf]
        %v4214 = vld [vmem:[%s11 + $0xc] sm:$0xf]
        %v4215 = vld [vmem:[%s11 + $0x10] sm:$0xf]
        %v4216 = vld [vmem:[%s11 + $0x14] sm:$0xf]
        %v4217 = vld [vmem:[%s11 + $0x18] sm:$0xf]
        %v4218 = vld [vmem:[%s11 + $0x1c] sm:$0xf]
        %v4219 = vld [vmem:[%s11 + $0x20] sm:$0xf]
        %v4220 = vld [vmem:[%s11 + $0x24] sm:$0xf]
        %v4221 = vld [vmem:[%s11 + $0x28] sm:$0xf]
        %v4222 = vld [vmem:[%s11 + $0x2c] sm:$0xf]
        %v4223 = vld [vmem:[%s11 + $0x30] sm:$0xf]
        %v4224 = vld [vmem:[%s11 + $0x34] sm:$0xf]
        %v4225 = vld [vmem:[%s11 + $0x38] sm:$0xf]
        %v4226 = vld [vmem:[%s11 + $0x3c] sm:$0xf]
        %v4227 = vld [vmem:[%s11 + $0x40] sm:$0xf]
        %v4228 = vld [vmem:[%s11 + $0x44] sm:$0xf]
        %v4247 = vunpack.c.l.b16 %v4211
        %v4248 = vunpack.c.l.b16 %v4212
        %v4249 = vunpack.c.l.b16 %v4213
        %v4250 = vunpack.c.l.b16 %v4214
        %v4251 = vunpack.c.l.b16 %v4215
        %v4252 = vunpack.c.l.b16 %v4216
        %v4253 = vunpack.c.l.b16 %v4217
        %v4254 = vunpack.c.l.b16 %v4218
        %v4255 = vunpack.c.l.b16 %v4219
        %v4256 = vunpack.c.l.b16 %v4220
        %v4257 = vunpack.c.l.b16 %v4221
        %v4258 = vunpack.c.l.b16 %v4222
        %v4259 = vunpack.c.l.b16 %v4223
        %v4260 = vunpack.c.l.b16 %v4224
        %v4261 = vunpack.c.l.b16 %v4225
        %v4262 = vunpack.c.l.b16 %v4226
        %v4263 = vunpack.c.l.b16 %v4227
        %v4264 = vunpack.c.l.b16 %v4228
        %v4265 = vpack.c.b16 %v4248, %v4247
        %v4266 = vpack.c.b16 %v4250, %v4249
        %v4267 = vpack.c.b16 %v4252, %v4251
        %v4268 = vpack.c.b16 %v4254, %v4253
        %v4269 = vpack.c.b16 %v4256, %v4255
        %v4270 = vpack.c.b16 %v4258, %v4257
        %v4271 = vpack.c.b16 %v4260, %v4259
        %v4272 = vpack.c.b16 %v4262, %v4261
        %v4273 = vpack.c.b16 %v4264, %v4263
        %v4284 = vsel %vm568, %v4180, 0
        %v4287 = vsel %vm568, %v4182, 0
        %v4290 = vsel %vm568, %v4184, 0
        %v4293 = vsel %vm568, %v4186, 0
        %v4296 = vsel %vm568, %v4188, 0
        %v4299 = vsel %vm568, %v4190, 0
        %v4302 = vsel %vm568, %v4192, 0
        %v4305 = vsel %vm568, %v4194, 0
        %v4308 = vsel %vm568, %v4196, 0
        %v4311 = vsel %vm568, %v4198, 0
        %v4314 = vsel %vm568, %v4200, 0
        %v4317 = vsel %vm568, %v4202, 0
        %v4320 = vsel %vm568, %v4204, 0
        %v4323 = vsel %vm568, %v4206, 0
        %v4326 = vsel %vm568, %v4208, 0
        %v4329 = vsel %vm568, %v4210, 0
        %4331 = vmatprep.subr.bf16.mxu0 0
        %4332 = vmatpush1.bf16.msra.mxu0 %v4265
        %4333 = vmatprep.subr.bf16.mxu0 0
        %4334 = vmatpush1.bf16.msra.mxu0 %v4266
        %4335 = vmatprep.subr.bf16.mxu0 0
        %4336 = vmatpush1.bf16.msra.mxu0 %v4267
        %4337 = vmatprep.subr.bf16.mxu0 0
        %4338 = vmatpush1.bf16.msra.mxu0 %v4268
        %4339 = vmatprep.subr.bf16.mxu0 0
        %4340 = vmatpush1.bf16.msra.mxu0 %v4269
        %4341 = vmatprep.subr.bf16.mxu0 0
        %4342 = vmatpush1.bf16.msra.mxu0 %v4270
        %4343 = vmatprep.subr.bf16.mxu0 0
        %4344 = vmatpush1.bf16.msra.mxu0 %v4271
        %4345 = vmatprep.subr.bf16.mxu0 0
        %4346 = vmatpush1.bf16.msra.mxu0 %v4272
        %4347 = vmatprep.subr.bf16.mxu0 0
        %4348 = vmatpush1.bf16.msra.mxu0 %v4273
        %4349 = vmatprep.subr.bf16.mxu0 0
        %4350 = vmatpush1.bf16.msra.mxu0 0
        %4351 = vmatprep.subr.bf16.mxu0 0
        %4352 = vmatpush1.bf16.msra.mxu0 0
        %4353 = vmatprep.subr.bf16.mxu0 0
        %4354 = vmatpush1.bf16.msra.mxu0 0
        %4355 = vmatprep.subr.bf16.mxu0 0
        %4356 = vmatpush1.bf16.msra.mxu0 0
        %4357 = vmatprep.subr.bf16.mxu0 0
        %4358 = vmatpush1.bf16.msra.mxu0 0
        %4359 = vmatprep.subr.bf16.mxu0 0
        %4360 = vmatpush1.bf16.msra.mxu0 0
        %4361 = vmatprep.subr.bf16.mxu0 0
        %4362 = vmatpush1.bf16.msra.mxu0 0
        %4363 = vmatprep.mubr.bf16.mxu0 %v4284
        %4364 = vmatmul.mubr.bf16.gmra.mrb[0].mxu0 %v4179
        %v4365 = vpop.f32.mrb[0].mxu0
        %v4366 = vadd.f32 0.0, %v4365
        %v4367 = vpop.f32.mrb[0].mxu0
        %v4368 = vpop.f32.mrb[0].mxu0
        %v4369 = vadd.f32 0.0, %v4368
        %v4370 = vpop.f32.mrb[0].mxu0
        %4371 = vmatprep.mubr.bf16.mxu0 %v4287
        %4372 = vmatmul.mubr.bf16.gmra.mrb[0].mxu0 %v4181
        %v4373 = vpop.f32.mrb[0].mxu0
        %v4374 = vadd.f32 0.0, %v4373
        %v4375 = vpop.f32.mrb[0].mxu0
        %v4376 = vpop.f32.mrb[0].mxu0
        %v4377 = vadd.f32 0.0, %v4376
        %v4378 = vpop.f32.mrb[0].mxu0
        %4379 = vmatprep.mubr.bf16.mxu0 %v4290
        %4380 = vmatmul.mubr.bf16.gmra.mrb[0].mxu0 %v4183
        %v4381 = vpop.f32.mrb[0].mxu0
        %v4382 = vadd.f32 0.0, %v4381
        %v4383 = vpop.f32.mrb[0].mxu0
        %v4384 = vpop.f32.mrb[0].mxu0
        %v4385 = vadd.f32 0.0, %v4384
        %v4386 = vpop.f32.mrb[0].mxu0
        %4387 = vmatprep.mubr.bf16.mxu0 %v4293
        %4388 = vmatmul.mubr.bf16.gmra.mrb[0].mxu0 %v4185
        %v4389 = vpop.f32.mrb[0].mxu0
        %v4390 = vadd.f32 0.0, %v4389
        %v4391 = vpop.f32.mrb[0].mxu0
        %v4392 = vpop.f32.mrb[0].mxu0
        %v4393 = vadd.f32 0.0, %v4392
        %v4394 = vpop.f32.mrb[0].mxu0
        %4395 = vmatprep.mubr.bf16.mxu0 %v4296
        %4396 = vmatmul.mubr.bf16.gmra.mrb[0].mxu0 %v4187
        %v4397 = vpop.f32.mrb[0].mxu0
        %v4398 = vadd.f32 0.0, %v4397
        %v4399 = vpop.f32.mrb[0].mxu0
        %v4400 = vpop.f32.mrb[0].mxu0
        %v4401 = vadd.f32 0.0, %v4400
        %v4402 = vpop.f32.mrb[0].mxu0
        %4403 = vmatprep.mubr.bf16.mxu0 %v4299
        %4404 = vmatmul.mubr.bf16.gmra.mrb[0].mxu0 %v4189
        %v4405 = vpop.f32.mrb[0].mxu0
        %v4406 = vadd.f32 0.0, %v4405
        %v4407 = vpop.f32.mrb[0].mxu0
        %v4408 = vpop.f32.mrb[0].mxu0
        %v4409 = vadd.f32 0.0, %v4408
        %v4410 = vpop.f32.mrb[0].mxu0
        %4411 = vmatprep.mubr.bf16.mxu0 %v4302
        %4412 = vmatmul.mubr.bf16.gmra.mrb[0].mxu0 %v4191
        %v4413 = vpop.f32.mrb[0].mxu0
        %v4414 = vadd.f32 0.0, %v4413
        %v4415 = vpop.f32.mrb[0].mxu0
        %v4416 = vpop.f32.mrb[0].mxu0
        %v4417 = vadd.f32 0.0, %v4416
        %v4418 = vpop.f32.mrb[0].mxu0
        %4419 = vmatprep.mubr.bf16.mxu0 %v4305
        %4420 = vmatmul.mubr.bf16.gmra.mrb[0].mxu0 %v4193
        %v4421 = vpop.f32.mrb[0].mxu0
        %v4422 = vadd.f32 0.0, %v4421
        %v4423 = vpop.f32.mrb[0].mxu0
        %v4424 = vpop.f32.mrb[0].mxu0
        %v4425 = vadd.f32 0.0, %v4424
        %v4426 = vpop.f32.mrb[0].mxu0
        %4427 = vmatprep.mubr.bf16.mxu0 %v4308
        %4428 = vmatmul.mubr.bf16.gmra.mrb[0].mxu0 %v4195
        %v4429 = vpop.f32.mrb[0].mxu0
        %v4430 = vadd.f32 0.0, %v4429
        %v4431 = vpop.f32.mrb[0].mxu0
        %v4432 = vpop.f32.mrb[0].mxu0
        %v4433 = vadd.f32 0.0, %v4432
        %v4434 = vpop.f32.mrb[0].mxu0
        %4435 = vmatprep.mubr.bf16.mxu0 %v4311
        %4436 = vmatmul.mubr.bf16.gmra.mrb[0].mxu0 %v4197
        %v4437 = vpop.f32.mrb[0].mxu0
        %v4438 = vadd.f32 0.0, %v4437
        %v4439 = vpop.f32.mrb[0].mxu0
        %v4440 = vpop.f32.mrb[0].mxu0
        %v4441 = vadd.f32 0.0, %v4440
        %v4442 = vpop.f32.mrb[0].mxu0
        %4443 = vmatprep.mubr.bf16.mxu0 %v4314
        %4444 = vmatmul.mubr.bf16.gmra.mrb[0].mxu0 %v4199
        %v4445 = vpop.f32.mrb[0].mxu0
        %v4446 = vadd.f32 0.0, %v4445
        %v4447 = vpop.f32.mrb[0].mxu0
        %v4448 = vpop.f32.mrb[0].mxu0
        %v4449 = vadd.f32 0.0, %v4448
        %v4450 = vpop.f32.mrb[0].mxu0
        %4451 = vmatprep.mubr.bf16.mxu0 %v4317
        %4452 = vmatmul.mubr.bf16.gmra.mrb[0].mxu0 %v4201
        %v4453 = vpop.f32.mrb[0].mxu0
        %v4454 = vadd.f32 0.0, %v4453
        %v4455 = vpop.f32.mrb[0].mxu0
        %v4456 = vpop.f32.mrb[0].mxu0
        %v4457 = vadd.f32 0.0, %v4456
        %v4458 = vpop.f32.mrb[0].mxu0
        %4459 = vmatprep.mubr.bf16.mxu0 %v4320
        %4460 = vmatmul.mubr.bf16.gmra.mrb[0].mxu0 %v4203
        %v4461 = vpop.f32.mrb[0].mxu0
        %v4462 = vadd.f32 0.0, %v4461
        %v4463 = vpop.f32.mrb[0].mxu0
        %v4464 = vpop.f32.mrb[0].mxu0
        %v4465 = vadd.f32 0.0, %v4464
        %v4466 = vpop.f32.mrb[0].mxu0
        %4467 = vmatprep.mubr.bf16.mxu0 %v4323
        %4468 = vmatmul.mubr.bf16.gmra.mrb[0].mxu0 %v4205
        %v4469 = vpop.f32.mrb[0].mxu0
        %v4470 = vadd.f32 0.0, %v4469
        %v4471 = vpop.f32.mrb[0].mxu0
        %v4472 = vpop.f32.mrb[0].mxu0
        %v4473 = vadd.f32 0.0, %v4472
        %v4474 = vpop.f32.mrb[0].mxu0
        %4475 = vmatprep.mubr.bf16.mxu0 %v4326
        %4476 = vmatmul.mubr.bf16.gmra.mrb[0].mxu0 %v4207
        %v4477 = vpop.f32.mrb[0].mxu0
        %v4478 = vadd.f32 0.0, %v4477
        %v4479 = vpop.f32.mrb[0].mxu0
        %v4480 = vpop.f32.mrb[0].mxu0
        %v4481 = vadd.f32 0.0, %v4480
        %v4482 = vpop.f32.mrb[0].mxu0
        %4483 = vmatprep.mubr.bf16.mxu0 %v4329
        %4484 = vmatmul.mubr.bf16.gmra.mrb[0].mxu0 %v4209
        %v4485 = vpop.f32.mrb[0].mxu0
        %v4486 = vadd.f32 0.0, %v4485
        %v4487 = vpop.f32.mrb[0].mxu0
        %v4488 = vpop.f32.mrb[0].mxu0
        %v4489 = vadd.f32 0.0, %v4488
        %v4490 = vpop.f32.mrb[0].mxu0
        %4491 = vdwg.mxu0
        %v4492 = vld [vmem:[%s12] sm:$0x1]
        %v4494 = vlaneseq
        %v4495 = vshrl.u32 %v4494, 7
        %v4496 = vsub.s32 0, %v4495
        %v4497 = vrot.slane %v4492, %v4496
        %v4499 = vmul.f32 %v4366, %v4497
        %v4500 = vmul.f32 %v4369, %v4497
        %v4501 = vmul.f32 %v4374, %v4497
        %v4502 = vmul.f32 %v4377, %v4497
        %v4503 = vmul.f32 %v4382, %v4497
        %v4504 = vmul.f32 %v4385, %v4497
        %v4505 = vmul.f32 %v4390, %v4497
        %v4506 = vmul.f32 %v4393, %v4497
        %v4507 = vmul.f32 %v4398, %v4497
        %v4508 = vmul.f32 %v4401, %v4497
        %v4509 = vmul.f32 %v4406, %v4497
        %v4510 = vmul.f32 %v4409, %v4497
        %v4511 = vmul.f32 %v4414, %v4497
        %v4512 = vmul.f32 %v4417, %v4497
        %v4513 = vmul.f32 %v4422, %v4497
        %v4514 = vmul.f32 %v4425, %v4497
        %v4515 = vmul.f32 %v4430, %v4497
        %v4516 = vmul.f32 %v4433, %v4497
        %v4517 = vmul.f32 %v4438, %v4497
        %v4518 = vmul.f32 %v4441, %v4497
        %v4519 = vmul.f32 %v4446, %v4497
        %v4520 = vmul.f32 %v4449, %v4497
        %v4521 = vmul.f32 %v4454, %v4497
        %v4522 = vmul.f32 %v4457, %v4497
        %v4523 = vmul.f32 %v4462, %v4497
        %v4524 = vmul.f32 %v4465, %v4497
        %v4525 = vmul.f32 %v4470, %v4497
        %v4526 = vmul.f32 %v4473, %v4497
        %v4527 = vmul.f32 %v4478, %v4497
        %v4528 = vmul.f32 %v4481, %v4497
        %v4529 = vmul.f32 %v4486, %v4497
        %v4530 = vmul.f32 %v4489, %v4497
        %v4531 = vld [vmem:[%s13] sm:$0x1]
        %v4533 = vlaneseq
        %v4534 = vshrl.u32 %v4533, 7
        %v4535 = vsub.s32 0, %v4534
        %v4536 = vrot.slane %v4531, %v4535
        %v4538 = vadd.f32 %v4499, %v4536
        %v4539 = vadd.f32 %v4500, %v4536
        %v4540 = vadd.f32 %v4501, %v4536
        %v4541 = vadd.f32 %v4502, %v4536
        %v4542 = vadd.f32 %v4503, %v4536
        %v4543 = vadd.f32 %v4504, %v4536
        %v4544 = vadd.f32 %v4505, %v4536
        %v4545 = vadd.f32 %v4506, %v4536
        %v4546 = vadd.f32 %v4507, %v4536
        %v4547 = vadd.f32 %v4508, %v4536
        %v4548 = vadd.f32 %v4509, %v4536
        %v4549 = vadd.f32 %v4510, %v4536
        %v4550 = vadd.f32 %v4511, %v4536
        %v4551 = vadd.f32 %v4512, %v4536
        %v4552 = vadd.f32 %v4513, %v4536
        %v4553 = vadd.f32 %v4514, %v4536
        %v4554 = vadd.f32 %v4515, %v4536
        %v4555 = vadd.f32 %v4516, %v4536
        %v4556 = vadd.f32 %v4517, %v4536
        %v4557 = vadd.f32 %v4518, %v4536
        %v4558 = vadd.f32 %v4519, %v4536
        %v4559 = vadd.f32 %v4520, %v4536
        %v4560 = vadd.f32 %v4521, %v4536
        %v4561 = vadd.f32 %v4522, %v4536
        %v4562 = vadd.f32 %v4523, %v4536
        %v4563 = vadd.f32 %v4524, %v4536
        %v4564 = vadd.f32 %v4525, %v4536
        %v4565 = vadd.f32 %v4526, %v4536
        %v4566 = vadd.f32 %v4527, %v4536
        %v4567 = vadd.f32 %v4528, %v4536
        %v4568 = vadd.f32 %v4529, %v4536
        %v4569 = vadd.f32 %v4530, %v4536
        %v4570 = vmax.f32 %v4538, 0.0
        %v4571 = vmax.f32 %v4539, 0.0
        %v4572 = vmax.f32 %v4540, 0.0
        %v4573 = vmax.f32 %v4541, 0.0
        %v4574 = vmax.f32 %v4542, 0.0
        %v4575 = vmax.f32 %v4543, 0.0
        %v4576 = vmax.f32 %v4544, 0.0
        %v4577 = vmax.f32 %v4545, 0.0
        %v4578 = vmax.f32 %v4546, 0.0
        %v4579 = vmax.f32 %v4547, 0.0
        %v4580 = vmax.f32 %v4548, 0.0
        %v4581 = vmax.f32 %v4549, 0.0
        %v4582 = vmax.f32 %v4550, 0.0
        %v4583 = vmax.f32 %v4551, 0.0
        %v4584 = vmax.f32 %v4552, 0.0
        %v4585 = vmax.f32 %v4553, 0.0
        %v4586 = vmax.f32 %v4554, 0.0
        %v4587 = vmax.f32 %v4555, 0.0
        %v4588 = vmax.f32 %v4556, 0.0
        %v4589 = vmax.f32 %v4557, 0.0
        %v4590 = vmax.f32 %v4558, 0.0
        %v4591 = vmax.f32 %v4559, 0.0
        %v4592 = vmax.f32 %v4560, 0.0
        %v4593 = vmax.f32 %v4561, 0.0
        %v4594 = vmax.f32 %v4562, 0.0
        %v4595 = vmax.f32 %v4563, 0.0
        %v4596 = vmax.f32 %v4564, 0.0
        %v4597 = vmax.f32 %v4565, 0.0
        %v4598 = vmax.f32 %v4566, 0.0
        %v4599 = vmax.f32 %v4567, 0.0
        %v4600 = vmax.f32 %v4568, 0.0
        %v4601 = vmax.f32 %v4569, 0.0
        %v4602 = vsel %vm1248, %v4570, %v992
        %v4603 = vsel %vm1248, %v4571, %v993
        %v4604 = vsel %vm1248, %v4572, %v994
        %v4605 = vsel %vm1248, %v4573, %v995
        %v4606 = vsel %vm1248, %v4574, %v996
        %v4607 = vsel %vm1248, %v4575, %v997
        %v4608 = vsel %vm1248, %v4576, %v998
        %v4609 = vsel %vm1248, %v4577, %v999
        %v4610 = vsel %vm1248, %v4578, %v1000
        %v4611 = vsel %vm1248, %v4579, %v1001
        %v4612 = vsel %vm1248, %v4580, %v1002
        %v4613 = vsel %vm1248, %v4581, %v1003
        %v4614 = vsel %vm1248, %v4582, %v1004
        %v4615 = vsel %vm1248, %v4583, %v1005
        %v4616 = vsel %vm1248, %v4584, %v1006
        %v4617 = vsel %vm1248, %v4585, %v1007
        %v4618 = vsel %vm1248, %v4586, %v1008
        %v4619 = vsel %vm1248, %v4587, %v1009
        %v4620 = vsel %vm1248, %v4588, %v1010
        %v4621 = vsel %vm1248, %v4589, %v1011
        %v4622 = vsel %vm1248, %v4590, %v1012
        %v4623 = vsel %vm1248, %v4591, %v1013
        %v4624 = vsel %vm1248, %v4592, %v1014
        %v4625 = vsel %vm1248, %v4593, %v1015
        %v4626 = vsel %vm1248, %v4594, %v1016
        %v4627 = vsel %vm1248, %v4595, %v1017
        %v4628 = vsel %vm1248, %v4596, %v1018
        %v4629 = vsel %vm1248, %v4597, %v1019
        %v4630 = vsel %vm1248, %v4598, %v1020
        %v4631 = vsel %vm1248, %v4599, %v1021
        %v4632 = vsel %vm1248, %v4600, %v1022
        %v4633 = vsel %vm1248, %v4601, %v1023
        %4634 = vst.msk [vmem:[%s583 + $0x2] sm:$0xff] %vm568, %v4602
        %4635 = vst.msk [vmem:[%s583 + $0xa] sm:$0xff] %vm568, %v4603
        %4636 = vst.msk [vmem:[%s583 + $0x1a] sm:$0xff] %vm568, %v4604
        %4637 = vst.msk [vmem:[%s583 + $0x22] sm:$0xff] %vm568, %v4605
        %4638 = vst.msk [vmem:[%s583 + $0x32] sm:$0xff] %vm568, %v4606
        %4639 = vst.msk [vmem:[%s583 + $0x3a] sm:$0xff] %vm568, %v4607
        %4640 = vst.msk [vmem:[%s583 + $0x4a] sm:$0xff] %vm568, %v4608
        %4641 = vst.msk [vmem:[%s583 + $0x52] sm:$0xff] %vm568, %v4609
        %4642 = vst.msk [vmem:[%s583 + $0x62] sm:$0xff] %vm568, %v4610
        %4643 = vst.msk [vmem:[%s583 + $0x6a] sm:$0xff] %vm568, %v4611
        %4644 = vst.msk [vmem:[%s583 + $0x7a] sm:$0xff] %vm568, %v4612
        %4645 = vst.msk [vmem:[%s583 + $0x82] sm:$0xff] %vm568, %v4613
        %4646 = vst.msk [vmem:[%s583 + $0x92] sm:$0xff] %vm568, %v4614
        %4647 = vst.msk [vmem:[%s583 + $0x9a] sm:$0xff] %vm568, %v4615
        %4648 = vst.msk [vmem:[%s583 + $0xaa] sm:$0xff] %vm568, %v4616
        %4649 = vst.msk [vmem:[%s583 + $0xb2] sm:$0xff] %vm568, %v4617
        %4650 = vst.msk [vmem:[%s583 + $0xc2] sm:$0xff] %vm568, %v4618
        %4651 = vst.msk [vmem:[%s583 + $0xca] sm:$0xff] %vm568, %v4619
        %4652 = vst.msk [vmem:[%s583 + $0xda] sm:$0xff] %vm568, %v4620
        %4653 = vst.msk [vmem:[%s583 + $0xe2] sm:$0xff] %vm568, %v4621
        %4654 = vst.msk [vmem:[%s583 + $0xf2] sm:$0xff] %vm568, %v4622
        %4655 = vst.msk [vmem:[%s583 + $0xfa] sm:$0xff] %vm568, %v4623
        %4656 = vst.msk [vmem:[%s583 + $0x10a] sm:$0xff] %vm568, %v4624
        %4657 = vst.msk [vmem:[%s583 + $0x112] sm:$0xff] %vm568, %v4625
        %4658 = vst.msk [vmem:[%s583 + $0x122] sm:$0xff] %vm568, %v4626
        %4659 = vst.msk [vmem:[%s583 + $0x12a] sm:$0xff] %vm568, %v4627
        %4660 = vst.msk [vmem:[%s583 + $0x13a] sm:$0xff] %vm568, %v4628
        %4661 = vst.msk [vmem:[%s583 + $0x142] sm:$0xff] %vm568, %v4629
        %4662 = vst.msk [vmem:[%s583 + $0x152] sm:$0xff] %vm568, %v4630
        %4663 = vst.msk [vmem:[%s583 + $0x15a] sm:$0xff] %vm568, %v4631
        %4664 = vst.msk [vmem:[%s583 + $0x16a] sm:$0xff] %vm568, %v4632
        %4665 = vst.msk [vmem:[%s583 + $0x172] sm:$0xff] %vm568, %v4633
        %v4666 = vld [vmem:[#allocation2] sm:$0xff]
        %v4667 = vld [vmem:[#allocation2 + $0x8] sm:$0xff]
        %v4668 = vld [vmem:[#allocation2 + $0x18] sm:$0xff]
        %v4669 = vld [vmem:[#allocation2 + $0x20] sm:$0xff]
        %v4670 = vld [vmem:[#allocation2 + $0x30] sm:$0xff]
        %v4671 = vld [vmem:[#allocation2 + $0x38] sm:$0xff]
        %v4672 = vld [vmem:[#allocation2 + $0x48] sm:$0xff]
        %v4673 = vld [vmem:[#allocation2 + $0x50] sm:$0xff]
        %v4674 = vld [vmem:[#allocation2 + $0x60] sm:$0xff]
        %v4675 = vld [vmem:[#allocation2 + $0x68] sm:$0xff]
        %v4676 = vld [vmem:[#allocation2 + $0x78] sm:$0xff]
        %v4677 = vld [vmem:[#allocation2 + $0x80] sm:$0xff]
        %v4678 = vld [vmem:[#allocation2 + $0x90] sm:$0xff]
        %v4679 = vld [vmem:[#allocation2 + $0x98] sm:$0xff]
        %v4680 = vld [vmem:[#allocation2 + $0xa8] sm:$0xff]
        %v4681 = vld [vmem:[#allocation2 + $0xb0] sm:$0xff]
        %v4682 = vld [vmem:[#allocation2 + $0xc0] sm:$0xff]
        %v4683 = vld [vmem:[#allocation2 + $0xc8] sm:$0xff]
        %v4684 = vld [vmem:[#allocation2 + $0xd8] sm:$0xff]
        %v4685 = vld [vmem:[#allocation2 + $0xe0] sm:$0xff]
        %v4686 = vld [vmem:[#allocation2 + $0xf0] sm:$0xff]
        %v4687 = vld [vmem:[#allocation2 + $0xf8] sm:$0xff]
        %v4688 = vld [vmem:[#allocation2 + $0x108] sm:$0xff]
        %v4689 = vld [vmem:[#allocation2 + $0x110] sm:$0xff]
        %v4690 = vld [vmem:[#allocation2 + $0x120] sm:$0xff]
        %v4691 = vld [vmem:[#allocation2 + $0x128] sm:$0xff]
        %v4692 = vld [vmem:[#allocation2 + $0x138] sm:$0xff]
        %v4693 = vld [vmem:[#allocation2 + $0x140] sm:$0xff]
        %v4694 = vld [vmem:[#allocation2 + $0x150] sm:$0xff]
        %v4695 = vld [vmem:[#allocation2 + $0x158] sm:$0xff]
        %v4696 = vld [vmem:[#allocation2 + $0x168] sm:$0xff]
        %v4697 = vld [vmem:[#allocation2 + $0x170] sm:$0xff]
        %v4698 = vld [vmem:[#allocation2 + $0x2] sm:$0xff]
        %v4699 = vld [vmem:[#allocation2 + $0xa] sm:$0xff]
        %v4700 = vld [vmem:[#allocation2 + $0x1a] sm:$0xff]
        %v4701 = vld [vmem:[#allocation2 + $0x22] sm:$0xff]
        %v4702 = vld [vmem:[#allocation2 + $0x32] sm:$0xff]
        %v4703 = vld [vmem:[#allocation2 + $0x3a] sm:$0xff]
        %v4704 = vld [vmem:[#allocation2 + $0x4a] sm:$0xff]
        %v4705 = vld [vmem:[#allocation2 + $0x52] sm:$0xff]
        %v4706 = vld [vmem:[#allocation2 + $0x62] sm:$0xff]
        %v4707 = vld [vmem:[#allocation2 + $0x6a] sm:$0xff]
        %v4708 = vld [vmem:[#allocation2 + $0x7a] sm:$0xff]
        %v4709 = vld [vmem:[#allocation2 + $0x82] sm:$0xff]
        %v4710 = vld [vmem:[#allocation2 + $0x92] sm:$0xff]
        %v4711 = vld [vmem:[#allocation2 + $0x9a] sm:$0xff]
        %v4712 = vld [vmem:[#allocation2 + $0xaa] sm:$0xff]
        %v4713 = vld [vmem:[#allocation2 + $0xb2] sm:$0xff]
        %v4714 = vld [vmem:[#allocation2 + $0xc2] sm:$0xff]
        %v4715 = vld [vmem:[#allocation2 + $0xca] sm:$0xff]
        %v4716 = vld [vmem:[#allocation2 + $0xda] sm:$0xff]
        %v4717 = vld [vmem:[#allocation2 + $0xe2] sm:$0xff]
        %v4718 = vld [vmem:[#allocation2 + $0xf2] sm:$0xff]
        %v4719 = vld [vmem:[#allocation2 + $0xfa] sm:$0xff]
        %v4720 = vld [vmem:[#allocation2 + $0x10a] sm:$0xff]
        %v4721 = vld [vmem:[#allocation2 + $0x112] sm:$0xff]
        %v4722 = vld [vmem:[#allocation2 + $0x122] sm:$0xff]
        %v4723 = vld [vmem:[#allocation2 + $0x12a] sm:$0xff]
        %v4724 = vld [vmem:[#allocation2 + $0x13a] sm:$0xff]
        %v4725 = vld [vmem:[#allocation2 + $0x142] sm:$0xff]
        %v4726 = vld [vmem:[#allocation2 + $0x152] sm:$0xff]
        %v4727 = vld [vmem:[#allocation2 + $0x15a] sm:$0xff]
        %v4728 = vld [vmem:[#allocation2 + $0x16a] sm:$0xff]
        %v4729 = vld [vmem:[#allocation2 + $0x172] sm:$0xff]
        %v4730 = vld [vmem:[#allocation2 + $0x4] sm:$0xff]
        %v4731 = vld [vmem:[#allocation2 + $0xc] sm:$0xff]
        %v4732 = vld [vmem:[#allocation2 + $0x1c] sm:$0xff]
        %v4733 = vld [vmem:[#allocation2 + $0x24] sm:$0xff]
        %v4734 = vld [vmem:[#allocation2 + $0x34] sm:$0xff]
        %v4735 = vld [vmem:[#allocation2 + $0x3c] sm:$0xff]
        %v4736 = vld [vmem:[#allocation2 + $0x4c] sm:$0xff]
        %v4737 = vld [vmem:[#allocation2 + $0x54] sm:$0xff]
        %v4738 = vld [vmem:[#allocation2 + $0x64] sm:$0xff]
        %v4739 = vld [vmem:[#allocation2 + $0x6c] sm:$0xff]
        %v4740 = vld [vmem:[#allocation2 + $0x7c] sm:$0xff]
        %v4741 = vld [vmem:[#allocation2 + $0x84] sm:$0xff]
        %v4742 = vld [vmem:[#allocation2 + $0x94] sm:$0xff]
        %v4743 = vld [vmem:[#allocation2 + $0x9c] sm:$0xff]
        %v4744 = vld [vmem:[#allocation2 + $0xac] sm:$0xff]
        %v4745 = vld [vmem:[#allocation2 + $0xb4] sm:$0xff]
        %v4746 = vld [vmem:[#allocation2 + $0xc4] sm:$0xff]
        %v4747 = vld [vmem:[#allocation2 + $0xcc] sm:$0xff]
        %v4748 = vld [vmem:[#allocation2 + $0xdc] sm:$0xff]
        %v4749 = vld [vmem:[#allocation2 + $0xe4] sm:$0xff]
        %v4750 = vld [vmem:[#allocation2 + $0xf4] sm:$0xff]
        %v4751 = vld [vmem:[#allocation2 + $0xfc] sm:$0xff]
        %v4752 = vld [vmem:[#allocation2 + $0x10c] sm:$0xff]
        %v4753 = vld [vmem:[#allocation2 + $0x114] sm:$0xff]
        %v4754 = vld [vmem:[#allocation2 + $0x124] sm:$0xff]
        %v4755 = vld [vmem:[#allocation2 + $0x12c] sm:$0xff]
        %v4756 = vld [vmem:[#allocation2 + $0x13c] sm:$0xff]
        %v4757 = vld [vmem:[#allocation2 + $0x144] sm:$0xff]
        %v4758 = vld [vmem:[#allocation2 + $0x154] sm:$0xff]
        %v4759 = vld [vmem:[#allocation2 + $0x15c] sm:$0xff]
        %v4760 = vld [vmem:[#allocation2 + $0x16c] sm:$0xff]
        %v4761 = vld [vmem:[#allocation2 + $0x174] sm:$0xff]
        %v4762 = vld [vmem:[%s583] sm:$0xff]
        %v4763 = vld [vmem:[%s583 + $0x8] sm:$0xff]
        %v4764 = vld [vmem:[%s583 + $0x18] sm:$0xff]
        %v4765 = vld [vmem:[%s583 + $0x20] sm:$0xff]
        %v4766 = vld [vmem:[%s583 + $0x30] sm:$0xff]
        %v4767 = vld [vmem:[%s583 + $0x38] sm:$0xff]
        %v4768 = vld [vmem:[%s583 + $0x48] sm:$0xff]
        %v4769 = vld [vmem:[%s583 + $0x50] sm:$0xff]
        %v4770 = vld [vmem:[%s583 + $0x60] sm:$0xff]
        %v4771 = vld [vmem:[%s583 + $0x68] sm:$0xff]
        %v4772 = vld [vmem:[%s583 + $0x78] sm:$0xff]
        %v4773 = vld [vmem:[%s583 + $0x80] sm:$0xff]
        %v4774 = vld [vmem:[%s583 + $0x90] sm:$0xff]
        %v4775 = vld [vmem:[%s583 + $0x98] sm:$0xff]
        %v4776 = vld [vmem:[%s583 + $0xa8] sm:$0xff]
        %v4777 = vld [vmem:[%s583 + $0xb0] sm:$0xff]
        %v4778 = vld [vmem:[%s583 + $0xc0] sm:$0xff]
        %v4779 = vld [vmem:[%s583 + $0xc8] sm:$0xff]
        %v4780 = vld [vmem:[%s583 + $0xd8] sm:$0xff]
        %v4781 = vld [vmem:[%s583 + $0xe0] sm:$0xff]
        %v4782 = vld [vmem:[%s583 + $0xf0] sm:$0xff]
        %v4783 = vld [vmem:[%s583 + $0xf8] sm:$0xff]
        %v4784 = vld [vmem:[%s583 + $0x108] sm:$0xff]
        %v4785 = vld [vmem:[%s583 + $0x110] sm:$0xff]
        %v4786 = vld [vmem:[%s583 + $0x120] sm:$0xff]
        %v4787 = vld [vmem:[%s583 + $0x128] sm:$0xff]
        %v4788 = vld [vmem:[%s583 + $0x138] sm:$0xff]
        %v4789 = vld [vmem:[%s583 + $0x140] sm:$0xff]
        %v4790 = vld [vmem:[%s583 + $0x150] sm:$0xff]
        %v4791 = vld [vmem:[%s583 + $0x158] sm:$0xff]
        %v4792 = vld [vmem:[%s583 + $0x168] sm:$0xff]
        %v4793 = vld [vmem:[%s583 + $0x170] sm:$0xff]
        %v4794 = vld [vmem:[%s583 + $0x2] sm:$0xff]
        %v4795 = vld [vmem:[%s583 + $0xa] sm:$0xff]
        %v4796 = vld [vmem:[%s583 + $0x1a] sm:$0xff]
        %v4797 = vld [vmem:[%s583 + $0x22] sm:$0xff]
        %v4798 = vld [vmem:[%s583 + $0x32] sm:$0xff]
        %v4799 = vld [vmem:[%s583 + $0x3a] sm:$0xff]
        %v4800 = vld [vmem:[%s583 + $0x4a] sm:$0xff]
        %v4801 = vld [vmem:[%s583 + $0x52] sm:$0xff]
        %v4802 = vld [vmem:[%s583 + $0x62] sm:$0xff]
        %v4803 = vld [vmem:[%s583 + $0x6a] sm:$0xff]
        %v4804 = vld [vmem:[%s583 + $0x7a] sm:$0xff]
        %v4805 = vld [vmem:[%s583 + $0x82] sm:$0xff]
        %v4806 = vld [vmem:[%s583 + $0x92] sm:$0xff]
        %v4807 = vld [vmem:[%s583 + $0x9a] sm:$0xff]
        %v4808 = vld [vmem:[%s583 + $0xaa] sm:$0xff]
        %v4809 = vld [vmem:[%s583 + $0xb2] sm:$0xff]
        %v4810 = vld [vmem:[%s583 + $0xc2] sm:$0xff]
        %v4811 = vld [vmem:[%s583 + $0xca] sm:$0xff]
        %v4812 = vld [vmem:[%s583 + $0xda] sm:$0xff]
        %v4813 = vld [vmem:[%s583 + $0xe2] sm:$0xff]
        %v4814 = vld [vmem:[%s583 + $0xf2] sm:$0xff]
        %v4815 = vld [vmem:[%s583 + $0xfa] sm:$0xff]
        %v4816 = vld [vmem:[%s583 + $0x10a] sm:$0xff]
        %v4817 = vld [vmem:[%s583 + $0x112] sm:$0xff]
        %v4818 = vld [vmem:[%s583 + $0x122] sm:$0xff]
        %v4819 = vld [vmem:[%s583 + $0x12a] sm:$0xff]
        %v4820 = vld [vmem:[%s583 + $0x13a] sm:$0xff]
        %v4821 = vld [vmem:[%s583 + $0x142] sm:$0xff]
        %v4822 = vld [vmem:[%s583 + $0x152] sm:$0xff]
        %v4823 = vld [vmem:[%s583 + $0x15a] sm:$0xff]
        %v4824 = vld [vmem:[%s583 + $0x16a] sm:$0xff]
        %v4825 = vld [vmem:[%s583 + $0x172] sm:$0xff]
        %v4826 = vld [vmem:[%s583 + $0x4] sm:$0xff]
        %v4827 = vld [vmem:[%s583 + $0xc] sm:$0xff]
        %v4828 = vld [vmem:[%s583 + $0x1c] sm:$0xff]
        %v4829 = vld [vmem:[%s583 + $0x24] sm:$0xff]
        %v4830 = vld [vmem:[%s583 + $0x34] sm:$0xff]
        %v4831 = vld [vmem:[%s583 + $0x3c] sm:$0xff]
        %v4832 = vld [vmem:[%s583 + $0x4c] sm:$0xff]
        %v4833 = vld [vmem:[%s583 + $0x54] sm:$0xff]
        %v4834 = vld [vmem:[%s583 + $0x64] sm:$0xff]
        %v4835 = vld [vmem:[%s583 + $0x6c] sm:$0xff]
        %v4836 = vld [vmem:[%s583 + $0x7c] sm:$0xff]
        %v4837 = vld [vmem:[%s583 + $0x84] sm:$0xff]
        %v4838 = vld [vmem:[%s583 + $0x94] sm:$0xff]
        %v4839 = vld [vmem:[%s583 + $0x9c] sm:$0xff]
        %v4840 = vld [vmem:[%s583 + $0xac] sm:$0xff]
        %v4841 = vld [vmem:[%s583 + $0xb4] sm:$0xff]
        %v4842 = vld [vmem:[%s583 + $0xc4] sm:$0xff]
        %v4843 = vld [vmem:[%s583 + $0xcc] sm:$0xff]
        %v4844 = vld [vmem:[%s583 + $0xdc] sm:$0xff]
        %v4845 = vld [vmem:[%s583 + $0xe4] sm:$0xff]
        %v4846 = vld [vmem:[%s583 + $0xf4] sm:$0xff]
        %v4847 = vld [vmem:[%s583 + $0xfc] sm:$0xff]
        %v4848 = vld [vmem:[%s583 + $0x10c] sm:$0xff]
        %v4849 = vld [vmem:[%s583 + $0x114] sm:$0xff]
        %v4850 = vld [vmem:[%s583 + $0x124] sm:$0xff]
        %v4851 = vld [vmem:[%s583 + $0x12c] sm:$0xff]
        %v4852 = vld [vmem:[%s583 + $0x13c] sm:$0xff]
        %v4853 = vld [vmem:[%s583 + $0x144] sm:$0xff]
        %v4854 = vld [vmem:[%s583 + $0x154] sm:$0xff]
        %v4855 = vld [vmem:[%s583 + $0x15c] sm:$0xff]
        %v4856 = vld [vmem:[%s583 + $0x16c] sm:$0xff]
        %v4857 = vld [vmem:[%s583 + $0x174] sm:$0xff]
        %s4858 = scalar_lea.vmem [#allocation2], 96
        %v4859 = vld [vmem:[%s4858] sm:$0xff]
        %v4860 = vld [vmem:[%s4858 + $0x8] sm:$0xff]
        %v4861 = vld [vmem:[%s4858 + $0x18] sm:$0xff]
        %v4862 = vld [vmem:[%s4858 + $0x20] sm:$0xff]
        %v4863 = vld [vmem:[%s4858 + $0x30] sm:$0xff]
        %v4864 = vld [vmem:[%s4858 + $0x38] sm:$0xff]
        %v4865 = vld [vmem:[%s4858 + $0x48] sm:$0xff]
        %v4866 = vld [vmem:[%s4858 + $0x50] sm:$0xff]
        %v4867 = vld [vmem:[%s4858 + $0x60] sm:$0xff]
        %v4868 = vld [vmem:[%s4858 + $0x68] sm:$0xff]
        %v4869 = vld [vmem:[%s4858 + $0x78] sm:$0xff]
        %v4870 = vld [vmem:[%s4858 + $0x80] sm:$0xff]
        %v4871 = vld [vmem:[%s4858 + $0x90] sm:$0xff]
        %v4872 = vld [vmem:[%s4858 + $0x98] sm:$0xff]
        %v4873 = vld [vmem:[%s4858 + $0xa8] sm:$0xff]
        %v4874 = vld [vmem:[%s4858 + $0xb0] sm:$0xff]
        %v4875 = vld [vmem:[%s4858 + $0xc0] sm:$0xff]
        %v4876 = vld [vmem:[%s4858 + $0xc8] sm:$0xff]
        %v4877 = vld [vmem:[%s4858 + $0xd8] sm:$0xff]
        %v4878 = vld [vmem:[%s4858 + $0xe0] sm:$0xff]
        %v4879 = vld [vmem:[%s4858 + $0xf0] sm:$0xff]
        %v4880 = vld [vmem:[%s4858 + $0xf8] sm:$0xff]
        %v4881 = vld [vmem:[%s4858 + $0x108] sm:$0xff]
        %v4882 = vld [vmem:[%s4858 + $0x110] sm:$0xff]
        %v4883 = vld [vmem:[%s4858 + $0x120] sm:$0xff]
        %v4884 = vld [vmem:[%s4858 + $0x128] sm:$0xff]
        %v4885 = vld [vmem:[%s4858 + $0x138] sm:$0xff]
        %v4886 = vld [vmem:[%s4858 + $0x140] sm:$0xff]
        %v4887 = vld [vmem:[%s4858 + $0x150] sm:$0xff]
        %v4888 = vld [vmem:[%s4858 + $0x158] sm:$0xff]
        %v4889 = vld [vmem:[%s4858 + $0x168] sm:$0xff]
        %v4890 = vld [vmem:[%s4858 + $0x170] sm:$0xff]
        %v4891 = vld [vmem:[%s4858 + $0x2] sm:$0xff]
        %v4892 = vld [vmem:[%s4858 + $0xa] sm:$0xff]
        %v4893 = vld [vmem:[%s4858 + $0x1a] sm:$0xff]
        %v4894 = vld [vmem:[%s4858 + $0x22] sm:$0xff]
        %v4895 = vld [vmem:[%s4858 + $0x32] sm:$0xff]
        %v4896 = vld [vmem:[%s4858 + $0x3a] sm:$0xff]
        %v4897 = vld [vmem:[%s4858 + $0x4a] sm:$0xff]
        %v4898 = vld [vmem:[%s4858 + $0x52] sm:$0xff]
        %v4899 = vld [vmem:[%s4858 + $0x62] sm:$0xff]
        %v4900 = vld [vmem:[%s4858 + $0x6a] sm:$0xff]
        %v4901 = vld [vmem:[%s4858 + $0x7a] sm:$0xff]
        %v4902 = vld [vmem:[%s4858 + $0x82] sm:$0xff]
        %v4903 = vld [vmem:[%s4858 + $0x92] sm:$0xff]
        %v4904 = vld [vmem:[%s4858 + $0x9a] sm:$0xff]
        %v4905 = vld [vmem:[%s4858 + $0xaa] sm:$0xff]
        %v4906 = vld [vmem:[%s4858 + $0xb2] sm:$0xff]
        %v4907 = vld [vmem:[%s4858 + $0xc2] sm:$0xff]
        %v4908 = vld [vmem:[%s4858 + $0xca] sm:$0xff]
        %v4909 = vld [vmem:[%s4858 + $0xda] sm:$0xff]
        %v4910 = vld [vmem:[%s4858 + $0xe2] sm:$0xff]
        %v4911 = vld [vmem:[%s4858 + $0xf2] sm:$0xff]
        %v4912 = vld [vmem:[%s4858 + $0xfa] sm:$0xff]
        %v4913 = vld [vmem:[%s4858 + $0x10a] sm:$0xff]
        %v4914 = vld [vmem:[%s4858 + $0x112] sm:$0xff]
        %v4915 = vld [vmem:[%s4858 + $0x122] sm:$0xff]
        %v4916 = vld [vmem:[%s4858 + $0x12a] sm:$0xff]
        %v4917 = vld [vmem:[%s4858 + $0x13a] sm:$0xff]
        %v4918 = vld [vmem:[%s4858 + $0x142] sm:$0xff]
        %v4919 = vld [vmem:[%s4858 + $0x152] sm:$0xff]
        %v4920 = vld [vmem:[%s4858 + $0x15a] sm:$0xff]
        %v4921 = vld [vmem:[%s4858 + $0x16a] sm:$0xff]
        %v4922 = vld [vmem:[%s4858 + $0x172] sm:$0xff]
        %v4923 = vld [vmem:[%s4858 + $0x4] sm:$0xff]
        %v4924 = vld [vmem:[%s4858 + $0xc] sm:$0xff]
        %v4925 = vld [vmem:[%s4858 + $0x1c] sm:$0xff]
        %v4926 = vld [vmem:[%s4858 + $0x24] sm:$0xff]
        %v4927 = vld [vmem:[%s4858 + $0x34] sm:$0xff]
        %v4928 = vld [vmem:[%s4858 + $0x3c] sm:$0xff]
        %v4929 = vld [vmem:[%s4858 + $0x4c] sm:$0xff]
        %v4930 = vld [vmem:[%s4858 + $0x54] sm:$0xff]
        %v4931 = vld [vmem:[%s4858 + $0x64] sm:$0xff]
        %v4932 = vld [vmem:[%s4858 + $0x6c] sm:$0xff]
        %v4933 = vld [vmem:[%s4858 + $0x7c] sm:$0xff]
        %v4934 = vld [vmem:[%s4858 + $0x84] sm:$0xff]
        %v4935 = vld [vmem:[%s4858 + $0x94] sm:$0xff]
        %v4936 = vld [vmem:[%s4858 + $0x9c] sm:$0xff]
        %v4937 = vld [vmem:[%s4858 + $0xac] sm:$0xff]
        %v4938 = vld [vmem:[%s4858 + $0xb4] sm:$0xff]
        %v4939 = vld [vmem:[%s4858 + $0xc4] sm:$0xff]
        %v4940 = vld [vmem:[%s4858 + $0xcc] sm:$0xff]
        %v4941 = vld [vmem:[%s4858 + $0xdc] sm:$0xff]
        %v4942 = vld [vmem:[%s4858 + $0xe4] sm:$0xff]
        %v4943 = vld [vmem:[%s4858 + $0xf4] sm:$0xff]
        %v4944 = vld [vmem:[%s4858 + $0xfc] sm:$0xff]
        %v4945 = vld [vmem:[%s4858 + $0x10c] sm:$0xff]
        %v4946 = vld [vmem:[%s4858 + $0x114] sm:$0xff]
        %v4947 = vld [vmem:[%s4858 + $0x124] sm:$0xff]
        %v4948 = vld [vmem:[%s4858 + $0x12c] sm:$0xff]
        %v4949 = vld [vmem:[%s4858 + $0x13c] sm:$0xff]
        %v4950 = vld [vmem:[%s4858 + $0x144] sm:$0xff]
        %v4951 = vld [vmem:[%s4858 + $0x154] sm:$0xff]
        %v4952 = vld [vmem:[%s4858 + $0x15c] sm:$0xff]
        %v4953 = vld [vmem:[%s4858 + $0x16c] sm:$0xff]
        %v4954 = vld [vmem:[%s4858 + $0x174] sm:$0xff]
        %4987 = vrot.lane.b32.xlu0 %v4698, 16
        %v4988 = vpop.permute.xlu0 %4987
        %4989 = vrot.lane.b32.xlu0 %v4699, 16
        %v4990 = vpop.permute.xlu0 %4989
        %4991 = vrot.lane.b32.xlu0 %v4700, 16
        %v4992 = vpop.permute.xlu0 %4991
        %4993 = vrot.lane.b32.xlu0 %v4701, 16
        %v4994 = vpop.permute.xlu0 %4993
        %4995 = vrot.lane.b32.xlu0 %v4702, 16
        %v4996 = vpop.permute.xlu0 %4995
        %4997 = vrot.lane.b32.xlu0 %v4703, 16
        %v4998 = vpop.permute.xlu0 %4997
        %4999 = vrot.lane.b32.xlu0 %v4704, 16
        %v5000 = vpop.permute.xlu0 %4999
        %5001 = vrot.lane.b32.xlu0 %v4705, 16
        %v5002 = vpop.permute.xlu0 %5001
        %5003 = vrot.lane.b32.xlu0 %v4706, 16
        %v5004 = vpop.permute.xlu0 %5003
        %5005 = vrot.lane.b32.xlu0 %v4707, 16
        %v5006 = vpop.permute.xlu0 %5005
        %5007 = vrot.lane.b32.xlu0 %v4708, 16
        %v5008 = vpop.permute.xlu0 %5007
        %5009 = vrot.lane.b32.xlu0 %v4709, 16
        %v5010 = vpop.permute.xlu0 %5009
        %5011 = vrot.lane.b32.xlu0 %v4710, 16
        %v5012 = vpop.permute.xlu0 %5011
        %5013 = vrot.lane.b32.xlu0 %v4711, 16
        %v5014 = vpop.permute.xlu0 %5013
        %5015 = vrot.lane.b32.xlu0 %v4712, 16
        %v5016 = vpop.permute.xlu0 %5015
        %5017 = vrot.lane.b32.xlu0 %v4713, 16
        %v5018 = vpop.permute.xlu0 %5017
        %5019 = vrot.lane.b32.xlu0 %v4714, 16
        %v5020 = vpop.permute.xlu0 %5019
        %5021 = vrot.lane.b32.xlu0 %v4715, 16
        %v5022 = vpop.permute.xlu0 %5021
        %5023 = vrot.lane.b32.xlu0 %v4716, 16
        %v5024 = vpop.permute.xlu0 %5023
        %5025 = vrot.lane.b32.xlu0 %v4717, 16
        %v5026 = vpop.permute.xlu0 %5025
        %5027 = vrot.lane.b32.xlu0 %v4718, 16
        %v5028 = vpop.permute.xlu0 %5027
        %5029 = vrot.lane.b32.xlu0 %v4719, 16
        %v5030 = vpop.permute.xlu0 %5029
        %5031 = vrot.lane.b32.xlu0 %v4720, 16
        %v5032 = vpop.permute.xlu0 %5031
        %5033 = vrot.lane.b32.xlu0 %v4721, 16
        %v5034 = vpop.permute.xlu0 %5033
        %5035 = vrot.lane.b32.xlu0 %v4722, 16
        %v5036 = vpop.permute.xlu0 %5035
        %5037 = vrot.lane.b32.xlu0 %v4723, 16
        %v5038 = vpop.permute.xlu0 %5037
        %5039 = vrot.lane.b32.xlu0 %v4724, 16
        %v5040 = vpop.permute.xlu0 %5039
        %5041 = vrot.lane.b32.xlu0 %v4725, 16
        %v5042 = vpop.permute.xlu0 %5041
        %5043 = vrot.lane.b32.xlu0 %v4726, 16
        %v5044 = vpop.permute.xlu0 %5043
        %5045 = vrot.lane.b32.xlu0 %v4727, 16
        %v5046 = vpop.permute.xlu0 %5045
        %5047 = vrot.lane.b32.xlu0 %v4728, 16
        %v5048 = vpop.permute.xlu0 %5047
        %5049 = vrot.lane.b32.xlu0 %v4729, 16
        %v5050 = vpop.permute.xlu0 %5049
        %5115 = vrot.lane.b32.xlu0 %v4730, 32
        %v5116 = vpop.permute.xlu0 %5115
        %5117 = vrot.lane.b32.xlu0 %v4731, 32
        %v5118 = vpop.permute.xlu0 %5117
        %5119 = vrot.lane.b32.xlu0 %v4732, 32
        %v5120 = vpop.permute.xlu0 %5119
        %5121 = vrot.lane.b32.xlu0 %v4733, 32
        %v5122 = vpop.permute.xlu0 %5121
        %5123 = vrot.lane.b32.xlu0 %v4734, 32
        %v5124 = vpop.permute.xlu0 %5123
        %5125 = vrot.lane.b32.xlu0 %v4735, 32
        %v5126 = vpop.permute.xlu0 %5125
        %5127 = vrot.lane.b32.xlu0 %v4736, 32
        %v5128 = vpop.permute.xlu0 %5127
        %5129 = vrot.lane.b32.xlu0 %v4737, 32
        %v5130 = vpop.permute.xlu0 %5129
        %5131 = vrot.lane.b32.xlu0 %v4738, 32
        %v5132 = vpop.permute.xlu0 %5131
        %5133 = vrot.lane.b32.xlu0 %v4739, 32
        %v5134 = vpop.permute.xlu0 %5133
        %5135 = vrot.lane.b32.xlu0 %v4740, 32
        %v5136 = vpop.permute.xlu0 %5135
        %5137 = vrot.lane.b32.xlu0 %v4741, 32
        %v5138 = vpop.permute.xlu0 %5137
        %5139 = vrot.lane.b32.xlu0 %v4742, 32
        %v5140 = vpop.permute.xlu0 %5139
        %5141 = vrot.lane.b32.xlu0 %v4743, 32
        %v5142 = vpop.permute.xlu0 %5141
        %5143 = vrot.lane.b32.xlu0 %v4744, 32
        %v5144 = vpop.permute.xlu0 %5143
        %5145 = vrot.lane.b32.xlu0 %v4745, 32
        %v5146 = vpop.permute.xlu0 %5145
        %5147 = vrot.lane.b32.xlu0 %v4746, 32
        %v5148 = vpop.permute.xlu0 %5147
        %5149 = vrot.lane.b32.xlu0 %v4747, 32
        %v5150 = vpop.permute.xlu0 %5149
        %5151 = vrot.lane.b32.xlu0 %v4748, 32
        %v5152 = vpop.permute.xlu0 %5151
        %5153 = vrot.lane.b32.xlu0 %v4749, 32
        %v5154 = vpop.permute.xlu0 %5153
        %5155 = vrot.lane.b32.xlu0 %v4750, 32
        %v5156 = vpop.permute.xlu0 %5155
        %5157 = vrot.lane.b32.xlu0 %v4751, 32
        %v5158 = vpop.permute.xlu0 %5157
        %5159 = vrot.lane.b32.xlu0 %v4752, 32
        %v5160 = vpop.permute.xlu0 %5159
        %5161 = vrot.lane.b32.xlu0 %v4753, 32
        %v5162 = vpop.permute.xlu0 %5161
        %5163 = vrot.lane.b32.xlu0 %v4754, 32
        %v5164 = vpop.permute.xlu0 %5163
        %5165 = vrot.lane.b32.xlu0 %v4755, 32
        %v5166 = vpop.permute.xlu0 %5165
        %5167 = vrot.lane.b32.xlu0 %v4756, 32
        %v5168 = vpop.permute.xlu0 %5167
        %5169 = vrot.lane.b32.xlu0 %v4757, 32
        %v5170 = vpop.permute.xlu0 %5169
        %5171 = vrot.lane.b32.xlu0 %v4758, 32
        %v5172 = vpop.permute.xlu0 %5171
        %5173 = vrot.lane.b32.xlu0 %v4759, 32
        %v5174 = vpop.permute.xlu0 %5173
        %5175 = vrot.lane.b32.xlu0 %v4760, 32
        %v5176 = vpop.permute.xlu0 %5175
        %5177 = vrot.lane.b32.xlu0 %v4761, 32
        %v5178 = vpop.permute.xlu0 %5177
        %5243 = vrot.lane.b32.xlu0 %v4762, 48
        %v5244 = vpop.permute.xlu0 %5243
        %5245 = vrot.lane.b32.xlu0 %v4763, 48
        %v5246 = vpop.permute.xlu0 %5245
        %5247 = vrot.lane.b32.xlu0 %v4764, 48
        %v5248 = vpop.permute.xlu0 %5247
        %5249 = vrot.lane.b32.xlu0 %v4765, 48
        %v5250 = vpop.permute.xlu0 %5249
        %5251 = vrot.lane.b32.xlu0 %v4766, 48
        %v5252 = vpop.permute.xlu0 %5251
        %5253 = vrot.lane.b32.xlu0 %v4767, 48
        %v5254 = vpop.permute.xlu0 %5253
        %5255 = vrot.lane.b32.xlu0 %v4768, 48
        %v5256 = vpop.permute.xlu0 %5255
        %5257 = vrot.lane.b32.xlu0 %v4769, 48
        %v5258 = vpop.permute.xlu0 %5257
        %5259 = vrot.lane.b32.xlu0 %v4770, 48
        %v5260 = vpop.permute.xlu0 %5259
        %5261 = vrot.lane.b32.xlu0 %v4771, 48
        %v5262 = vpop.permute.xlu0 %5261
        %5263 = vrot.lane.b32.xlu0 %v4772, 48
        %v5264 = vpop.permute.xlu0 %5263
        %5265 = vrot.lane.b32.xlu0 %v4773, 48
        %v5266 = vpop.permute.xlu0 %5265
        %5267 = vrot.lane.b32.xlu0 %v4774, 48
        %v5268 = vpop.permute.xlu0 %5267
        %5269 = vrot.lane.b32.xlu0 %v4775, 48
        %v5270 = vpop.permute.xlu0 %5269
        %5271 = vrot.lane.b32.xlu0 %v4776, 48
        %v5272 = vpop.permute.xlu0 %5271
        %5273 = vrot.lane.b32.xlu0 %v4777, 48
        %v5274 = vpop.permute.xlu0 %5273
        %5275 = vrot.lane.b32.xlu0 %v4778, 48
        %v5276 = vpop.permute.xlu0 %5275
        %5277 = vrot.lane.b32.xlu0 %v4779, 48
        %v5278 = vpop.permute.xlu0 %5277
        %5279 = vrot.lane.b32.xlu0 %v4780, 48
        %v5280 = vpop.permute.xlu0 %5279
        %5281 = vrot.lane.b32.xlu0 %v4781, 48
        %v5282 = vpop.permute.xlu0 %5281
        %5283 = vrot.lane.b32.xlu0 %v4782, 48
        %v5284 = vpop.permute.xlu0 %5283
        %5285 = vrot.lane.b32.xlu0 %v4783, 48
        %v5286 = vpop.permute.xlu0 %5285
        %5287 = vrot.lane.b32.xlu0 %v4784, 48
        %v5288 = vpop.permute.xlu0 %5287
        %5289 = vrot.lane.b32.xlu0 %v4785, 48
        %v5290 = vpop.permute.xlu0 %5289
        %5291 = vrot.lane.b32.xlu0 %v4786, 48
        %v5292 = vpop.permute.xlu0 %5291
        %5293 = vrot.lane.b32.xlu0 %v4787, 48
        %v5294 = vpop.permute.xlu0 %5293
        %5295 = vrot.lane.b32.xlu0 %v4788, 48
        %v5296 = vpop.permute.xlu0 %5295
        %5297 = vrot.lane.b32.xlu0 %v4789, 48
        %v5298 = vpop.permute.xlu0 %5297
        %5299 = vrot.lane.b32.xlu0 %v4790, 48
        %v5300 = vpop.permute.xlu0 %5299
        %5301 = vrot.lane.b32.xlu0 %v4791, 48
        %v5302 = vpop.permute.xlu0 %5301
        %5303 = vrot.lane.b32.xlu0 %v4792, 48
        %v5304 = vpop.permute.xlu0 %5303
        %5305 = vrot.lane.b32.xlu0 %v4793, 48
        %v5306 = vpop.permute.xlu0 %5305
        %5371 = vrot.lane.b32.xlu0 %v4794, 64
        %v5372 = vpop.permute.xlu0 %5371
        %5373 = vrot.lane.b32.xlu0 %v4795, 64
        %v5374 = vpop.permute.xlu0 %5373
        %5375 = vrot.lane.b32.xlu0 %v4796, 64
        %v5376 = vpop.permute.xlu0 %5375
        %5377 = vrot.lane.b32.xlu0 %v4797, 64
        %v5378 = vpop.permute.xlu0 %5377
        %5379 = vrot.lane.b32.xlu0 %v4798, 64
        %v5380 = vpop.permute.xlu0 %5379
        %5381 = vrot.lane.b32.xlu0 %v4799, 64
        %v5382 = vpop.permute.xlu0 %5381
        %5383 = vrot.lane.b32.xlu0 %v4800, 64
        %v5384 = vpop.permute.xlu0 %5383
        %5385 = vrot.lane.b32.xlu0 %v4801, 64
        %v5386 = vpop.permute.xlu0 %5385
        %5387 = vrot.lane.b32.xlu0 %v4802, 64
        %v5388 = vpop.permute.xlu0 %5387
        %5389 = vrot.lane.b32.xlu0 %v4803, 64
        %v5390 = vpop.permute.xlu0 %5389
        %5391 = vrot.lane.b32.xlu0 %v4804, 64
        %v5392 = vpop.permute.xlu0 %5391
        %5393 = vrot.lane.b32.xlu0 %v4805, 64
        %v5394 = vpop.permute.xlu0 %5393
        %5395 = vrot.lane.b32.xlu0 %v4806, 64
        %v5396 = vpop.permute.xlu0 %5395
        %5397 = vrot.lane.b32.xlu0 %v4807, 64
        %v5398 = vpop.permute.xlu0 %5397
        %5399 = vrot.lane.b32.xlu0 %v4808, 64
        %v5400 = vpop.permute.xlu0 %5399
        %5401 = vrot.lane.b32.xlu0 %v4809, 64
        %v5402 = vpop.permute.xlu0 %5401
        %5403 = vrot.lane.b32.xlu0 %v4810, 64
        %v5404 = vpop.permute.xlu0 %5403
        %5405 = vrot.lane.b32.xlu0 %v4811, 64
        %v5406 = vpop.permute.xlu0 %5405
        %5407 = vrot.lane.b32.xlu0 %v4812, 64
        %v5408 = vpop.permute.xlu0 %5407
        %5409 = vrot.lane.b32.xlu0 %v4813, 64
        %v5410 = vpop.permute.xlu0 %5409
        %5411 = vrot.lane.b32.xlu0 %v4814, 64
        %v5412 = vpop.permute.xlu0 %5411
        %5413 = vrot.lane.b32.xlu0 %v4815, 64
        %v5414 = vpop.permute.xlu0 %5413
        %5415 = vrot.lane.b32.xlu0 %v4816, 64
        %v5416 = vpop.permute.xlu0 %5415
        %5417 = vrot.lane.b32.xlu0 %v4817, 64
        %v5418 = vpop.permute.xlu0 %5417
        %5419 = vrot.lane.b32.xlu0 %v4818, 64
        %v5420 = vpop.permute.xlu0 %5419
        %5421 = vrot.lane.b32.xlu0 %v4819, 64
        %v5422 = vpop.permute.xlu0 %5421
        %5423 = vrot.lane.b32.xlu0 %v4820, 64
        %v5424 = vpop.permute.xlu0 %5423
        %5425 = vrot.lane.b32.xlu0 %v4821, 64
        %v5426 = vpop.permute.xlu0 %5425
        %5427 = vrot.lane.b32.xlu0 %v4822, 64
        %v5428 = vpop.permute.xlu0 %5427
        %5429 = vrot.lane.b32.xlu0 %v4823, 64
        %v5430 = vpop.permute.xlu0 %5429
        %5431 = vrot.lane.b32.xlu0 %v4824, 64
        %v5432 = vpop.permute.xlu0 %5431
        %5433 = vrot.lane.b32.xlu0 %v4825, 64
        %v5434 = vpop.permute.xlu0 %5433
        %5499 = vrot.lane.b32.xlu0 %v4826, 80
        %v5500 = vpop.permute.xlu0 %5499
        %5501 = vrot.lane.b32.xlu0 %v4827, 80
        %v5502 = vpop.permute.xlu0 %5501
        %5503 = vrot.lane.b32.xlu0 %v4828, 80
        %v5504 = vpop.permute.xlu0 %5503
        %5505 = vrot.lane.b32.xlu0 %v4829, 80
        %v5506 = vpop.permute.xlu0 %5505
        %5507 = vrot.lane.b32.xlu0 %v4830, 80
        %v5508 = vpop.permute.xlu0 %5507
        %5509 = vrot.lane.b32.xlu0 %v4831, 80
        %v5510 = vpop.permute.xlu0 %5509
        %5511 = vrot.lane.b32.xlu0 %v4832, 80
        %v5512 = vpop.permute.xlu0 %5511
        %5513 = vrot.lane.b32.xlu0 %v4833, 80
        %v5514 = vpop.permute.xlu0 %5513
        %5515 = vrot.lane.b32.xlu0 %v4834, 80
        %v5516 = vpop.permute.xlu0 %5515
        %5517 = vrot.lane.b32.xlu0 %v4835, 80
        %v5518 = vpop.permute.xlu0 %5517
        %5519 = vrot.lane.b32.xlu0 %v4836, 80
        %v5520 = vpop.permute.xlu0 %5519
        %5521 = vrot.lane.b32.xlu0 %v4837, 80
        %v5522 = vpop.permute.xlu0 %5521
        %5523 = vrot.lane.b32.xlu0 %v4838, 80
        %v5524 = vpop.permute.xlu0 %5523
        %5525 = vrot.lane.b32.xlu0 %v4839, 80
        %v5526 = vpop.permute.xlu0 %5525
        %5527 = vrot.lane.b32.xlu0 %v4840, 80
        %v5528 = vpop.permute.xlu0 %5527
        %5529 = vrot.lane.b32.xlu0 %v4841, 80
        %v5530 = vpop.permute.xlu0 %5529
        %5531 = vrot.lane.b32.xlu0 %v4842, 80
        %v5532 = vpop.permute.xlu0 %5531
        %5533 = vrot.lane.b32.xlu0 %v4843, 80
        %v5534 = vpop.permute.xlu0 %5533
        %5535 = vrot.lane.b32.xlu0 %v4844, 80
        %v5536 = vpop.permute.xlu0 %5535
        %5537 = vrot.lane.b32.xlu0 %v4845, 80
        %v5538 = vpop.permute.xlu0 %5537
        %5539 = vrot.lane.b32.xlu0 %v4846, 80
        %v5540 = vpop.permute.xlu0 %5539
        %5541 = vrot.lane.b32.xlu0 %v4847, 80
        %v5542 = vpop.permute.xlu0 %5541
        %5543 = vrot.lane.b32.xlu0 %v4848, 80
        %v5544 = vpop.permute.xlu0 %5543
        %5545 = vrot.lane.b32.xlu0 %v4849, 80
        %v5546 = vpop.permute.xlu0 %5545
        %5547 = vrot.lane.b32.xlu0 %v4850, 80
        %v5548 = vpop.permute.xlu0 %5547
        %5549 = vrot.lane.b32.xlu0 %v4851, 80
        %v5550 = vpop.permute.xlu0 %5549
        %5551 = vrot.lane.b32.xlu0 %v4852, 80
        %v5552 = vpop.permute.xlu0 %5551
        %5553 = vrot.lane.b32.xlu0 %v4853, 80
        %v5554 = vpop.permute.xlu0 %5553
        %5555 = vrot.lane.b32.xlu0 %v4854, 80
        %v5556 = vpop.permute.xlu0 %5555
        %5557 = vrot.lane.b32.xlu0 %v4855, 80
        %v5558 = vpop.permute.xlu0 %5557
        %5559 = vrot.lane.b32.xlu0 %v4856, 80
        %v5560 = vpop.permute.xlu0 %5559
        %5561 = vrot.lane.b32.xlu0 %v4857, 80
        %v5562 = vpop.permute.xlu0 %5561
        %5627 = vrot.lane.b32.xlu0 %v4859, 96
        %v5628 = vpop.permute.xlu0 %5627
        %5629 = vrot.lane.b32.xlu0 %v4860, 96
        %v5630 = vpop.permute.xlu0 %5629
        %5631 = vrot.lane.b32.xlu0 %v4861, 96
        %v5632 = vpop.permute.xlu0 %5631
        %5633 = vrot.lane.b32.xlu0 %v4862, 96
        %v5634 = vpop.permute.xlu0 %5633
        %5635 = vrot.lane.b32.xlu0 %v4863, 96
        %v5636 = vpop.permute.xlu0 %5635
        %5637 = vrot.lane.b32.xlu0 %v4864, 96
        %v5638 = vpop.permute.xlu0 %5637
        %5639 = vrot.lane.b32.xlu0 %v4865, 96
        %v5640 = vpop.permute.xlu0 %5639
        %5641 = vrot.lane.b32.xlu0 %v4866, 96
        %v5642 = vpop.permute.xlu0 %5641
        %5643 = vrot.lane.b32.xlu0 %v4867, 96
        %v5644 = vpop.permute.xlu0 %5643
        %5645 = vrot.lane.b32.xlu0 %v4868, 96
        %v5646 = vpop.permute.xlu0 %5645
        %5647 = vrot.lane.b32.xlu0 %v4869, 96
        %v5648 = vpop.permute.xlu0 %5647
        %5649 = vrot.lane.b32.xlu0 %v4870, 96
        %v5650 = vpop.permute.xlu0 %5649
        %5651 = vrot.lane.b32.xlu0 %v4871, 96
        %v5652 = vpop.permute.xlu0 %5651
        %5653 = vrot.lane.b32.xlu0 %v4872, 96
        %v5654 = vpop.permute.xlu0 %5653
        %5655 = vrot.lane.b32.xlu0 %v4873, 96
        %v5656 = vpop.permute.xlu0 %5655
        %5657 = vrot.lane.b32.xlu0 %v4874, 96
        %v5658 = vpop.permute.xlu0 %5657
        %5659 = vrot.lane.b32.xlu0 %v4875, 96
        %v5660 = vpop.permute.xlu0 %5659
        %5661 = vrot.lane.b32.xlu0 %v4876, 96
        %v5662 = vpop.permute.xlu0 %5661
        %5663 = vrot.lane.b32.xlu0 %v4877, 96
        %v5664 = vpop.permute.xlu0 %5663
        %5665 = vrot.lane.b32.xlu0 %v4878, 96
        %v5666 = vpop.permute.xlu0 %5665
        %5667 = vrot.lane.b32.xlu0 %v4879, 96
        %v5668 = vpop.permute.xlu0 %5667
        %5669 = vrot.lane.b32.xlu0 %v4880, 96
        %v5670 = vpop.permute.xlu0 %5669
        %5671 = vrot.lane.b32.xlu0 %v4881, 96
        %v5672 = vpop.permute.xlu0 %5671
        %5673 = vrot.lane.b32.xlu0 %v4882, 96
        %v5674 = vpop.permute.xlu0 %5673
        %5675 = vrot.lane.b32.xlu0 %v4883, 96
        %v5676 = vpop.permute.xlu0 %5675
        %5677 = vrot.lane.b32.xlu0 %v4884, 96
        %v5678 = vpop.permute.xlu0 %5677
        %5679 = vrot.lane.b32.xlu0 %v4885, 96
        %v5680 = vpop.permute.xlu0 %5679
        %5681 = vrot.lane.b32.xlu0 %v4886, 96
        %v5682 = vpop.permute.xlu0 %5681
        %5683 = vrot.lane.b32.xlu0 %v4887, 96
        %v5684 = vpop.permute.xlu0 %5683
        %5685 = vrot.lane.b32.xlu0 %v4888, 96
        %v5686 = vpop.permute.xlu0 %5685
        %5687 = vrot.lane.b32.xlu0 %v4889, 96
        %v5688 = vpop.permute.xlu0 %5687
        %5689 = vrot.lane.b32.xlu0 %v4890, 96
        %v5690 = vpop.permute.xlu0 %5689
        %5755 = vrot.lane.b32.xlu0 %v4891, 112
        %v5756 = vpop.permute.xlu0 %5755
        %5757 = vrot.lane.b32.xlu0 %v4892, 112
        %v5758 = vpop.permute.xlu0 %5757
        %5759 = vrot.lane.b32.xlu0 %v4893, 112
        %v5760 = vpop.permute.xlu0 %5759
        %5761 = vrot.lane.b32.xlu0 %v4894, 112
        %v5762 = vpop.permute.xlu0 %5761
        %5763 = vrot.lane.b32.xlu0 %v4895, 112
        %v5764 = vpop.permute.xlu0 %5763
        %5765 = vrot.lane.b32.xlu0 %v4896, 112
        %v5766 = vpop.permute.xlu0 %5765
        %5767 = vrot.lane.b32.xlu0 %v4897, 112
        %v5768 = vpop.permute.xlu0 %5767
        %5769 = vrot.lane.b32.xlu0 %v4898, 112
        %v5770 = vpop.permute.xlu0 %5769
        %5771 = vrot.lane.b32.xlu0 %v4899, 112
        %v5772 = vpop.permute.xlu0 %5771
        %5773 = vrot.lane.b32.xlu0 %v4900, 112
        %v5774 = vpop.permute.xlu0 %5773
        %5775 = vrot.lane.b32.xlu0 %v4901, 112
        %v5776 = vpop.permute.xlu0 %5775
        %5777 = vrot.lane.b32.xlu0 %v4902, 112
        %v5778 = vpop.permute.xlu0 %5777
        %5779 = vrot.lane.b32.xlu0 %v4903, 112
        %v5780 = vpop.permute.xlu0 %5779
        %5781 = vrot.lane.b32.xlu0 %v4904, 112
        %v5782 = vpop.permute.xlu0 %5781
        %5783 = vrot.lane.b32.xlu0 %v4905, 112
        %v5784 = vpop.permute.xlu0 %5783
        %5785 = vrot.lane.b32.xlu0 %v4906, 112
        %v5786 = vpop.permute.xlu0 %5785
        %5787 = vrot.lane.b32.xlu0 %v4907, 112
        %v5788 = vpop.permute.xlu0 %5787
        %5789 = vrot.lane.b32.xlu0 %v4908, 112
        %v5790 = vpop.permute.xlu0 %5789
        %5791 = vrot.lane.b32.xlu0 %v4909, 112
        %v5792 = vpop.permute.xlu0 %5791
        %5793 = vrot.lane.b32.xlu0 %v4910, 112
        %v5794 = vpop.permute.xlu0 %5793
        %5795 = vrot.lane.b32.xlu0 %v4911, 112
        %v5796 = vpop.permute.xlu0 %5795
        %5797 = vrot.lane.b32.xlu0 %v4912, 112
        %v5798 = vpop.permute.xlu0 %5797
        %5799 = vrot.lane.b32.xlu0 %v4913, 112
        %v5800 = vpop.permute.xlu0 %5799
        %5801 = vrot.lane.b32.xlu0 %v4914, 112
        %v5802 = vpop.permute.xlu0 %5801
        %5803 = vrot.lane.b32.xlu0 %v4915, 112
        %v5804 = vpop.permute.xlu0 %5803
        %5805 = vrot.lane.b32.xlu0 %v4916, 112
        %v5806 = vpop.permute.xlu0 %5805
        %5807 = vrot.lane.b32.xlu0 %v4917, 112
        %v5808 = vpop.permute.xlu0 %5807
        %5809 = vrot.lane.b32.xlu0 %v4918, 112
        %v5810 = vpop.permute.xlu0 %5809
        %5811 = vrot.lane.b32.xlu0 %v4919, 112
        %v5812 = vpop.permute.xlu0 %5811
        %5813 = vrot.lane.b32.xlu0 %v4920, 112
        %v5814 = vpop.permute.xlu0 %5813
        %5815 = vrot.lane.b32.xlu0 %v4921, 112
        %v5816 = vpop.permute.xlu0 %5815
        %5817 = vrot.lane.b32.xlu0 %v4922, 112
        %v5818 = vpop.permute.xlu0 %5817
        %v5851 = vsel %vm568, %v4666, %v4988
        %v5852 = vsel %vm568, %v4667, %v4990
        %v5853 = vsel %vm568, %v4668, %v4992
        %v5854 = vsel %vm568, %v4669, %v4994
        %v5855 = vsel %vm568, %v4670, %v4996
        %v5856 = vsel %vm568, %v4671, %v4998
        %v5857 = vsel %vm568, %v4672, %v5000
        %v5858 = vsel %vm568, %v4673, %v5002
        %v5859 = vsel %vm568, %v4674, %v5004
        %v5860 = vsel %vm568, %v4675, %v5006
        %v5861 = vsel %vm568, %v4676, %v5008
        %v5862 = vsel %vm568, %v4677, %v5010
        %v5863 = vsel %vm568, %v4678, %v5012
        %v5864 = vsel %vm568, %v4679, %v5014
        %v5865 = vsel %vm568, %v4680, %v5016
        %v5866 = vsel %vm568, %v4681, %v5018
        %v5867 = vsel %vm568, %v4682, %v5020
        %v5868 = vsel %vm568, %v4683, %v5022
        %v5869 = vsel %vm568, %v4684, %v5024
        %v5870 = vsel %vm568, %v4685, %v5026
        %v5871 = vsel %vm568, %v4686, %v5028
        %v5872 = vsel %vm568, %v4687, %v5030
        %v5873 = vsel %vm568, %v4688, %v5032
        %v5874 = vsel %vm568, %v4689, %v5034
        %v5875 = vsel %vm568, %v4690, %v5036
        %v5876 = vsel %vm568, %v4691, %v5038
        %v5877 = vsel %vm568, %v4692, %v5040
        %v5878 = vsel %vm568, %v4693, %v5042
        %v5879 = vsel %vm568, %v4694, %v5044
        %v5880 = vsel %vm568, %v4695, %v5046
        %v5881 = vsel %vm568, %v4696, %v5048
        %v5882 = vsel %vm568, %v4697, %v5050
        %v5883 = vsel %vm3981, %v5851, %v5116
        %v5884 = vsel %vm3981, %v5852, %v5118
        %v5885 = vsel %vm3981, %v5853, %v5120
        %v5886 = vsel %vm3981, %v5854, %v5122
        %v5887 = vsel %vm3981, %v5855, %v5124
        %v5888 = vsel %vm3981, %v5856, %v5126
        %v5889 = vsel %vm3981, %v5857, %v5128
        %v5890 = vsel %vm3981, %v5858, %v5130
        %v5891 = vsel %vm3981, %v5859, %v5132
        %v5892 = vsel %vm3981, %v5860, %v5134
        %v5893 = vsel %vm3981, %v5861, %v5136
        %v5894 = vsel %vm3981, %v5862, %v5138
        %v5895 = vsel %vm3981, %v5863, %v5140
        %v5896 = vsel %vm3981, %v5864, %v5142
        %v5897 = vsel %vm3981, %v5865, %v5144
        %v5898 = vsel %vm3981, %v5866, %v5146
        %v5899 = vsel %vm3981, %v5867, %v5148
        %v5900 = vsel %vm3981, %v5868, %v5150
        %v5901 = vsel %vm3981, %v5869, %v5152
        %v5902 = vsel %vm3981, %v5870, %v5154
        %v5903 = vsel %vm3981, %v5871, %v5156
        %v5904 = vsel %vm3981, %v5872, %v5158
        %v5905 = vsel %vm3981, %v5873, %v5160
        %v5906 = vsel %vm3981, %v5874, %v5162
        %v5907 = vsel %vm3981, %v5875, %v5164
        %v5908 = vsel %vm3981, %v5876, %v5166
        %v5909 = vsel %vm3981, %v5877, %v5168
        %v5910 = vsel %vm3981, %v5878, %v5170
        %v5911 = vsel %vm3981, %v5879, %v5172
        %v5912 = vsel %vm3981, %v5880, %v5174
        %v5913 = vsel %vm3981, %v5881, %v5176
        %v5914 = vsel %vm3981, %v5882, %v5178
        %v5915 = vsel %vm4014, %v5883, %v5244
        %v5916 = vsel %vm4014, %v5884, %v5246
        %v5917 = vsel %vm4014, %v5885, %v5248
        %v5918 = vsel %vm4014, %v5886, %v5250
        %v5919 = vsel %vm4014, %v5887, %v5252
        %v5920 = vsel %vm4014, %v5888, %v5254
        %v5921 = vsel %vm4014, %v5889, %v5256
        %v5922 = vsel %vm4014, %v5890, %v5258
        %v5923 = vsel %vm4014, %v5891, %v5260
        %v5924 = vsel %vm4014, %v5892, %v5262
        %v5925 = vsel %vm4014, %v5893, %v5264
        %v5926 = vsel %vm4014, %v5894, %v5266
        %v5927 = vsel %vm4014, %v5895, %v5268
        %v5928 = vsel %vm4014, %v5896, %v5270
        %v5929 = vsel %vm4014, %v5897, %v5272
        %v5930 = vsel %vm4014, %v5898, %v5274
        %v5931 = vsel %vm4014, %v5899, %v5276
        %v5932 = vsel %vm4014, %v5900, %v5278
        %v5933 = vsel %vm4014, %v5901, %v5280
        %v5934 = vsel %vm4014, %v5902, %v5282
        %v5935 = vsel %vm4014, %v5903, %v5284
        %v5936 = vsel %vm4014, %v5904, %v5286
        %v5937 = vsel %vm4014, %v5905, %v5288
        %v5938 = vsel %vm4014, %v5906, %v5290
        %v5939 = vsel %vm4014, %v5907, %v5292
        %v5940 = vsel %vm4014, %v5908, %v5294
        %v5941 = vsel %vm4014, %v5909, %v5296
        %v5942 = vsel %vm4014, %v5910, %v5298
        %v5943 = vsel %vm4014, %v5911, %v5300
        %v5944 = vsel %vm4014, %v5912, %v5302
        %v5945 = vsel %vm4014, %v5913, %v5304
        %v5946 = vsel %vm4014, %v5914, %v5306
        %v5947 = vsel %vm4047, %v5915, %v5372
        %v5948 = vsel %vm4047, %v5916, %v5374
        %v5949 = vsel %vm4047, %v5917, %v5376
        %v5950 = vsel %vm4047, %v5918, %v5378
        %v5951 = vsel %vm4047, %v5919, %v5380
        %v5952 = vsel %vm4047, %v5920, %v5382
        %v5953 = vsel %vm4047, %v5921, %v5384
        %v5954 = vsel %vm4047, %v5922, %v5386
        %v5955 = vsel %vm4047, %v5923, %v5388
        %v5956 = vsel %vm4047, %v5924, %v5390
        %v5957 = vsel %vm4047, %v5925, %v5392
        %v5958 = vsel %vm4047, %v5926, %v5394
        %v5959 = vsel %vm4047, %v5927, %v5396
        %v5960 = vsel %vm4047, %v5928, %v5398
        %v5961 = vsel %vm4047, %v5929, %v5400
        %v5962 = vsel %vm4047, %v5930, %v5402
        %v5963 = vsel %vm4047, %v5931, %v5404
        %v5964 = vsel %vm4047, %v5932, %v5406
        %v5965 = vsel %vm4047, %v5933, %v5408
        %v5966 = vsel %vm4047, %v5934, %v5410
        %v5967 = vsel %vm4047, %v5935, %v5412
        %v5968 = vsel %vm4047, %v5936, %v5414
        %v5969 = vsel %vm4047, %v5937, %v5416
        %v5970 = vsel %vm4047, %v5938, %v5418
        %v5971 = vsel %vm4047, %v5939, %v5420
        %v5972 = vsel %vm4047, %v5940, %v5422
        %v5973 = vsel %vm4047, %v5941, %v5424
        %v5974 = vsel %vm4047, %v5942, %v5426
        %v5975 = vsel %vm4047, %v5943, %v5428
        %v5976 = vsel %vm4047, %v5944, %v5430
        %v5977 = vsel %vm4047, %v5945, %v5432
        %v5978 = vsel %vm4047, %v5946, %v5434
        %v5979 = vsel %vm4080, %v5947, %v5500
        %v5980 = vsel %vm4080, %v5948, %v5502
        %v5981 = vsel %vm4080, %v5949, %v5504
        %v5982 = vsel %vm4080, %v5950, %v5506
        %v5983 = vsel %vm4080, %v5951, %v5508
        %v5984 = vsel %vm4080, %v5952, %v5510
        %v5985 = vsel %vm4080, %v5953, %v5512
        %v5986 = vsel %vm4080, %v5954, %v5514
        %v5987 = vsel %vm4080, %v5955, %v5516
        %v5988 = vsel %vm4080, %v5956, %v5518
        %v5989 = vsel %vm4080, %v5957, %v5520
        %v5990 = vsel %vm4080, %v5958, %v5522
        %v5991 = vsel %vm4080, %v5959, %v5524
        %v5992 = vsel %vm4080, %v5960, %v5526
        %v5993 = vsel %vm4080, %v5961, %v5528
        %v5994 = vsel %vm4080, %v5962, %v5530
        %v5995 = vsel %vm4080, %v5963, %v5532
        %v5996 = vsel %vm4080, %v5964, %v5534
        %v5997 = vsel %vm4080, %v5965, %v5536
        %v5998 = vsel %vm4080, %v5966, %v5538
        %v5999 = vsel %vm4080, %v5967, %v5540
        %v6000 = vsel %vm4080, %v5968, %v5542
        %v6001 = vsel %vm4080, %v5969, %v5544
        %v6002 = vsel %vm4080, %v5970, %v5546
        %v6003 = vsel %vm4080, %v5971, %v5548
        %v6004 = vsel %vm4080, %v5972, %v5550
        %v6005 = vsel %vm4080, %v5973, %v5552
        %v6006 = vsel %vm4080, %v5974, %v5554
        %v6007 = vsel %vm4080, %v5975, %v5556
        %v6008 = vsel %vm4080, %v5976, %v5558
        %v6009 = vsel %vm4080, %v5977, %v5560
        %v6010 = vsel %vm4080, %v5978, %v5562
        %v6011 = vsel %vm4113, %v5979, %v5628
        %v6012 = vsel %vm4113, %v5980, %v5630
        %v6013 = vsel %vm4113, %v5981, %v5632
        %v6014 = vsel %vm4113, %v5982, %v5634
        %v6015 = vsel %vm4113, %v5983, %v5636
        %v6016 = vsel %vm4113, %v5984, %v5638
        %v6017 = vsel %vm4113, %v5985, %v5640
        %v6018 = vsel %vm4113, %v5986, %v5642
        %v6019 = vsel %vm4113, %v5987, %v5644
        %v6020 = vsel %vm4113, %v5988, %v5646
        %v6021 = vsel %vm4113, %v5989, %v5648
        %v6022 = vsel %vm4113, %v5990, %v5650
        %v6023 = vsel %vm4113, %v5991, %v5652
        %v6024 = vsel %vm4113, %v5992, %v5654
        %v6025 = vsel %vm4113, %v5993, %v5656
        %v6026 = vsel %vm4113, %v5994, %v5658
        %v6027 = vsel %vm4113, %v5995, %v5660
        %v6028 = vsel %vm4113, %v5996, %v5662
        %v6029 = vsel %vm4113, %v5997, %v5664
        %v6030 = vsel %vm4113, %v5998, %v5666
        %v6031 = vsel %vm4113, %v5999, %v5668
        %v6032 = vsel %vm4113, %v6000, %v5670
        %v6033 = vsel %vm4113, %v6001, %v5672
        %v6034 = vsel %vm4113, %v6002, %v5674
        %v6035 = vsel %vm4113, %v6003, %v5676
        %v6036 = vsel %vm4113, %v6004, %v5678
        %v6037 = vsel %vm4113, %v6005, %v5680
        %v6038 = vsel %vm4113, %v6006, %v5682
        %v6039 = vsel %vm4113, %v6007, %v5684
        %v6040 = vsel %vm4113, %v6008, %v5686
        %v6041 = vsel %vm4113, %v6009, %v5688
        %v6042 = vsel %vm4113, %v6010, %v5690
        %v6043 = vsel %vm4146, %v6011, %v5756
        %v6044 = vsel %vm4146, %v6012, %v5758
        %v6045 = vsel %vm4146, %v6013, %v5760
        %v6046 = vsel %vm4146, %v6014, %v5762
        %v6047 = vsel %vm4146, %v6015, %v5764
        %v6048 = vsel %vm4146, %v6016, %v5766
        %v6049 = vsel %vm4146, %v6017, %v5768
        %v6050 = vsel %vm4146, %v6018, %v5770
        %v6051 = vsel %vm4146, %v6019, %v5772
        %v6052 = vsel %vm4146, %v6020, %v5774
        %v6053 = vsel %vm4146, %v6021, %v5776
        %v6054 = vsel %vm4146, %v6022, %v5778
        %v6055 = vsel %vm4146, %v6023, %v5780
        %v6056 = vsel %vm4146, %v6024, %v5782
        %v6057 = vsel %vm4146, %v6025, %v5784
        %v6058 = vsel %vm4146, %v6026, %v5786
        %v6059 = vsel %vm4146, %v6027, %v5788
        %v6060 = vsel %vm4146, %v6028, %v5790
        %v6061 = vsel %vm4146, %v6029, %v5792
        %v6062 = vsel %vm4146, %v6030, %v5794
        %v6063 = vsel %vm4146, %v6031, %v5796
        %v6064 = vsel %vm4146, %v6032, %v5798
        %v6065 = vsel %vm4146, %v6033, %v5800
        %v6066 = vsel %vm4146, %v6034, %v5802
        %v6067 = vsel %vm4146, %v6035, %v5804
        %v6068 = vsel %vm4146, %v6036, %v5806
        %v6069 = vsel %vm4146, %v6037, %v5808
        %v6070 = vsel %vm4146, %v6038, %v5810
        %v6071 = vsel %vm4146, %v6039, %v5812
        %v6072 = vsel %vm4146, %v6040, %v5814
        %v6073 = vsel %vm4146, %v6041, %v5816
        %v6074 = vsel %vm4146, %v6042, %v5818
        %v6075 = vpack.c.bf16 %v6044, %v6043
        %v6076 = vpack.c.bf16 %v4924, %v4923
        %v6077 = vpack.c.bf16 %v6046, %v6045
        %v6078 = vpack.c.bf16 %v4926, %v4925
        %v6079 = vpack.c.bf16 %v6048, %v6047
        %v6080 = vpack.c.bf16 %v4928, %v4927
        %v6081 = vpack.c.bf16 %v6050, %v6049
        %v6082 = vpack.c.bf16 %v4930, %v4929
        %v6083 = vpack.c.bf16 %v6052, %v6051
        %v6084 = vpack.c.bf16 %v4932, %v4931
        %v6085 = vpack.c.bf16 %v6054, %v6053
        %v6086 = vpack.c.bf16 %v4934, %v4933
        %v6087 = vpack.c.bf16 %v6056, %v6055
        %v6088 = vpack.c.bf16 %v4936, %v4935
        %v6089 = vpack.c.bf16 %v6058, %v6057
        %v6090 = vpack.c.bf16 %v4938, %v4937
        %v6091 = vpack.c.bf16 %v6060, %v6059
        %v6092 = vpack.c.bf16 %v4940, %v4939
        %v6093 = vpack.c.bf16 %v6062, %v6061
        %v6094 = vpack.c.bf16 %v4942, %v4941
        %v6095 = vpack.c.bf16 %v6064, %v6063
        %v6096 = vpack.c.bf16 %v4944, %v4943
        %v6097 = vpack.c.bf16 %v6066, %v6065
        %v6098 = vpack.c.bf16 %v4946, %v4945
        %v6099 = vpack.c.bf16 %v6068, %v6067
        %v6100 = vpack.c.bf16 %v4948, %v4947
        %v6101 = vpack.c.bf16 %v6070, %v6069
        %v6102 = vpack.c.bf16 %v4950, %v4949
        %v6103 = vpack.c.bf16 %v6072, %v6071
        %v6104 = vpack.c.bf16 %v4952, %v4951
        %v6105 = vpack.c.bf16 %v6074, %v6073
        %v6106 = vpack.c.bf16 %v4954, %v4953
        %v6107 = vld [vmem:[%s14] sm:$0xf]
        %v6108 = vld [vmem:[%s14 + $0x4] sm:$0xf]
        %v6109 = vld [vmem:[%s14 + $0x8] sm:$0xf]
        %v6110 = vld [vmem:[%s14 + $0xc] sm:$0xf]
        %v6111 = vld [vmem:[%s14 + $0x10] sm:$0xf]
        %v6112 = vld [vmem:[%s14 + $0x14] sm:$0xf]
        %v6113 = vld [vmem:[%s14 + $0x18] sm:$0xf]
        %v6114 = vld [vmem:[%s14 + $0x1c] sm:$0xf]
        %v6115 = vld [vmem:[%s14 + $0x20] sm:$0xf]
        %v6116 = vld [vmem:[%s14 + $0x24] sm:$0xf]
        %v6117 = vld [vmem:[%s14 + $0x28] sm:$0xf]
        %v6118 = vld [vmem:[%s14 + $0x2c] sm:$0xf]
        %v6119 = vld [vmem:[%s14 + $0x30] sm:$0xf]
        %v6120 = vld [vmem:[%s14 + $0x34] sm:$0xf]
        %v6121 = vld [vmem:[%s14 + $0x38] sm:$0xf]
        %v6122 = vld [vmem:[%s14 + $0x3c] sm:$0xf]
        %v6123 = vld [vmem:[%s14 + $0x40] sm:$0xf]
        %v6124 = vld [vmem:[%s14 + $0x44] sm:$0xf]
        %v6143 = vunpack.c.l.b16 %v6107
        %v6144 = vunpack.c.l.b16 %v6108
        %v6145 = vunpack.c.l.b16 %v6109
        %v6146 = vunpack.c.l.b16 %v6110
        %v6147 = vunpack.c.l.b16 %v6111
        %v6148 = vunpack.c.l.b16 %v6112
        %v6149 = vunpack.c.l.b16 %v6113
        %v6150 = vunpack.c.l.b16 %v6114
        %v6151 = vunpack.c.l.b16 %v6115
        %v6152 = vunpack.c.l.b16 %v6116
        %v6153 = vunpack.c.l.b16 %v6117
        %v6154 = vunpack.c.l.b16 %v6118
        %v6155 = vunpack.c.l.b16 %v6119
        %v6156 = vunpack.c.l.b16 %v6120
        %v6157 = vunpack.c.l.b16 %v6121
        %v6158 = vunpack.c.l.b16 %v6122
        %v6159 = vunpack.c.l.b16 %v6123
        %v6160 = vunpack.c.l.b16 %v6124
        %v6161 = vpack.c.b16 %v6144, %v6143
        %v6162 = vpack.c.b16 %v6146, %v6145
        %v6163 = vpack.c.b16 %v6148, %v6147
        %v6164 = vpack.c.b16 %v6150, %v6149
        %v6165 = vpack.c.b16 %v6152, %v6151
        %v6166 = vpack.c.b16 %v6154, %v6153
        %v6167 = vpack.c.b16 %v6156, %v6155
        %v6168 = vpack.c.b16 %v6158, %v6157
        %v6169 = vpack.c.b16 %v6160, %v6159
        %v6180 = vsel %vm568, %v6076, 0
        %v6183 = vsel %vm568, %v6078, 0
        %v6186 = vsel %vm568, %v6080, 0
        %v6189 = vsel %vm568, %v6082, 0
        %v6192 = vsel %vm568, %v6084, 0
        %v6195 = vsel %vm568, %v6086, 0
        %v6198 = vsel %vm568, %v6088, 0
        %v6201 = vsel %vm568, %v6090, 0
        %v6204 = vsel %vm568, %v6092, 0
        %v6207 = vsel %vm568, %v6094, 0
        %v6210 = vsel %vm568, %v6096, 0
        %v6213 = vsel %vm568, %v6098, 0
        %v6216 = vsel %vm568, %v6100, 0
        %v6219 = vsel %vm568, %v6102, 0
        %v6222 = vsel %vm568, %v6104, 0
        %v6225 = vsel %vm568, %v6106, 0
        %6227 = vmatprep.subr.bf16.mxu0 0
        %6228 = vmatpush1.bf16.msra.mxu0 %v6161
        %6229 = vmatprep.subr.bf16.mxu0 0
        %6230 = vmatpush1.bf16.msra.mxu0 %v6162
        %6231 = vmatprep.subr.bf16.mxu0 0
        %6232 = vmatpush1.bf16.msra.mxu0 %v6163
        %6233 = vmatprep.subr.bf16.mxu0 0
        %6234 = vmatpush1.bf16.msra.mxu0 %v6164
        %6235 = vmatprep.subr.bf16.mxu0 0
        %6236 = vmatpush1.bf16.msra.mxu0 %v6165
        %6237 = vmatprep.subr.bf16.mxu0 0
        %6238 = vmatpush1.bf16.msra.mxu0 %v6166
        %6239 = vmatprep.subr.bf16.mxu0 0
        %6240 = vmatpush1.bf16.msra.mxu0 %v6167
        %6241 = vmatprep.subr.bf16.mxu0 0
        %6242 = vmatpush1.bf16.msra.mxu0 %v6168
        %6243 = vmatprep.subr.bf16.mxu0 0
        %6244 = vmatpush1.bf16.msra.mxu0 %v6169
        %6245 = vmatprep.subr.bf16.mxu0 0
        %6246 = vmatpush1.bf16.msra.mxu0 0
        %6247 = vmatprep.subr.bf16.mxu0 0
        %6248 = vmatpush1.bf16.msra.mxu0 0
        %6249 = vmatprep.subr.bf16.mxu0 0
        %6250 = vmatpush1.bf16.msra.mxu0 0
        %6251 = vmatprep.subr.bf16.mxu0 0
        %6252 = vmatpush1.bf16.msra.mxu0 0
        %6253 = vmatprep.subr.bf16.mxu0 0
        %6254 = vmatpush1.bf16.msra.mxu0 0
        %6255 = vmatprep.subr.bf16.mxu0 0
        %6256 = vmatpush1.bf16.msra.mxu0 0
        %6257 = vmatprep.subr.bf16.mxu0 0
        %6258 = vmatpush1.bf16.msra.mxu0 0
        %6259 = vmatprep.mubr.bf16.mxu0 %v6180
        %6260 = vmatmul.mubr.bf16.gmra.mrb[0].mxu0 %v6075
        %v6261 = vpop.f32.mrb[0].mxu0
        %v6262 = vadd.f32 0.0, %v6261
        %v6263 = vpop.f32.mrb[0].mxu0
        %v6264 = vpop.f32.mrb[0].mxu0
        %v6265 = vadd.f32 0.0, %v6264
        %v6266 = vpop.f32.mrb[0].mxu0
        %6267 = vmatprep.mubr.bf16.mxu0 %v6183
        %6268 = vmatmul.mubr.bf16.gmra.mrb[0].mxu0 %v6077
        %v6269 = vpop.f32.mrb[0].mxu0
        %v6270 = vadd.f32 0.0, %v6269
        %v6271 = vpop.f32.mrb[0].mxu0
        %v6272 = vpop.f32.mrb[0].mxu0
        %v6273 = vadd.f32 0.0, %v6272
        %v6274 = vpop.f32.mrb[0].mxu0
        %6275 = vmatprep.mubr.bf16.mxu0 %v6186
        %6276 = vmatmul.mubr.bf16.gmra.mrb[0].mxu0 %v6079
        %v6277 = vpop.f32.mrb[0].mxu0
        %v6278 = vadd.f32 0.0, %v6277
        %v6279 = vpop.f32.mrb[0].mxu0
        %v6280 = vpop.f32.mrb[0].mxu0
        %v6281 = vadd.f32 0.0, %v6280
        %v6282 = vpop.f32.mrb[0].mxu0
        %6283 = vmatprep.mubr.bf16.mxu0 %v6189
        %6284 = vmatmul.mubr.bf16.gmra.mrb[0].mxu0 %v6081
        %v6285 = vpop.f32.mrb[0].mxu0
        %v6286 = vadd.f32 0.0, %v6285
        %v6287 = vpop.f32.mrb[0].mxu0
        %v6288 = vpop.f32.mrb[0].mxu0
        %v6289 = vadd.f32 0.0, %v6288
        %v6290 = vpop.f32.mrb[0].mxu0
        %6291 = vmatprep.mubr.bf16.mxu0 %v6192
        %6292 = vmatmul.mubr.bf16.gmra.mrb[0].mxu0 %v6083
        %v6293 = vpop.f32.mrb[0].mxu0
        %v6294 = vadd.f32 0.0, %v6293
        %v6295 = vpop.f32.mrb[0].mxu0
        %v6296 = vpop.f32.mrb[0].mxu0
        %v6297 = vadd.f32 0.0, %v6296
        %v6298 = vpop.f32.mrb[0].mxu0
        %6299 = vmatprep.mubr.bf16.mxu0 %v6195
        %6300 = vmatmul.mubr.bf16.gmra.mrb[0].mxu0 %v6085
        %v6301 = vpop.f32.mrb[0].mxu0
        %v6302 = vadd.f32 0.0, %v6301
        %v6303 = vpop.f32.mrb[0].mxu0
        %v6304 = vpop.f32.mrb[0].mxu0
        %v6305 = vadd.f32 0.0, %v6304
        %v6306 = vpop.f32.mrb[0].mxu0
        %6307 = vmatprep.mubr.bf16.mxu0 %v6198
        %6308 = vmatmul.mubr.bf16.gmra.mrb[0].mxu0 %v6087
        %v6309 = vpop.f32.mrb[0].mxu0
        %v6310 = vadd.f32 0.0, %v6309
        %v6311 = vpop.f32.mrb[0].mxu0
        %v6312 = vpop.f32.mrb[0].mxu0
        %v6313 = vadd.f32 0.0, %v6312
        %v6314 = vpop.f32.mrb[0].mxu0
        %6315 = vmatprep.mubr.bf16.mxu0 %v6201
        %6316 = vmatmul.mubr.bf16.gmra.mrb[0].mxu0 %v6089
        %v6317 = vpop.f32.mrb[0].mxu0
        %v6318 = vadd.f32 0.0, %v6317
        %v6319 = vpop.f32.mrb[0].mxu0
        %v6320 = vpop.f32.mrb[0].mxu0
        %v6321 = vadd.f32 0.0, %v6320
        %v6322 = vpop.f32.mrb[0].mxu0
        %6323 = vmatprep.mubr.bf16.mxu0 %v6204
        %6324 = vmatmul.mubr.bf16.gmra.mrb[0].mxu0 %v6091
        %v6325 = vpop.f32.mrb[0].mxu0
        %v6326 = vadd.f32 0.0, %v6325
        %v6327 = vpop.f32.mrb[0].mxu0
        %v6328 = vpop.f32.mrb[0].mxu0
        %v6329 = vadd.f32 0.0, %v6328
        %v6330 = vpop.f32.mrb[0].mxu0
        %6331 = vmatprep.mubr.bf16.mxu0 %v6207
        %6332 = vmatmul.mubr.bf16.gmra.mrb[0].mxu0 %v6093
        %v6333 = vpop.f32.mrb[0].mxu0
        %v6334 = vadd.f32 0.0, %v6333
        %v6335 = vpop.f32.mrb[0].mxu0
        %v6336 = vpop.f32.mrb[0].mxu0
        %v6337 = vadd.f32 0.0, %v6336
        %v6338 = vpop.f32.mrb[0].mxu0
        %6339 = vmatprep.mubr.bf16.mxu0 %v6210
        %6340 = vmatmul.mubr.bf16.gmra.mrb[0].mxu0 %v6095
        %v6341 = vpop.f32.mrb[0].mxu0
        %v6342 = vadd.f32 0.0, %v6341
        %v6343 = vpop.f32.mrb[0].mxu0
        %v6344 = vpop.f32.mrb[0].mxu0
        %v6345 = vadd.f32 0.0, %v6344
        %v6346 = vpop.f32.mrb[0].mxu0
        %6347 = vmatprep.mubr.bf16.mxu0 %v6213
        %6348 = vmatmul.mubr.bf16.gmra.mrb[0].mxu0 %v6097
        %v6349 = vpop.f32.mrb[0].mxu0
        %v6350 = vadd.f32 0.0, %v6349
        %v6351 = vpop.f32.mrb[0].mxu0
        %v6352 = vpop.f32.mrb[0].mxu0
        %v6353 = vadd.f32 0.0, %v6352
        %v6354 = vpop.f32.mrb[0].mxu0
        %6355 = vmatprep.mubr.bf16.mxu0 %v6216
        %6356 = vmatmul.mubr.bf16.gmra.mrb[0].mxu0 %v6099
        %v6357 = vpop.f32.mrb[0].mxu0
        %v6358 = vadd.f32 0.0, %v6357
        %v6359 = vpop.f32.mrb[0].mxu0
        %v6360 = vpop.f32.mrb[0].mxu0
        %v6361 = vadd.f32 0.0, %v6360
        %v6362 = vpop.f32.mrb[0].mxu0
        %6363 = vmatprep.mubr.bf16.mxu0 %v6219
        %6364 = vmatmul.mubr.bf16.gmra.mrb[0].mxu0 %v6101
        %v6365 = vpop.f32.mrb[0].mxu0
        %v6366 = vadd.f32 0.0, %v6365
        %v6367 = vpop.f32.mrb[0].mxu0
        %v6368 = vpop.f32.mrb[0].mxu0
        %v6369 = vadd.f32 0.0, %v6368
        %v6370 = vpop.f32.mrb[0].mxu0
        %6371 = vmatprep.mubr.bf16.mxu0 %v6222
        %6372 = vmatmul.mubr.bf16.gmra.mrb[0].mxu0 %v6103
        %v6373 = vpop.f32.mrb[0].mxu0
        %v6374 = vadd.f32 0.0, %v6373
        %v6375 = vpop.f32.mrb[0].mxu0
        %v6376 = vpop.f32.mrb[0].mxu0
        %v6377 = vadd.f32 0.0, %v6376
        %v6378 = vpop.f32.mrb[0].mxu0
        %6379 = vmatprep.mubr.bf16.mxu0 %v6225
        %6380 = vmatmul.mubr.bf16.gmra.mrb[0].mxu0 %v6105
        %v6381 = vpop.f32.mrb[0].mxu0
        %v6382 = vadd.f32 0.0, %v6381
        %v6383 = vpop.f32.mrb[0].mxu0
        %v6384 = vpop.f32.mrb[0].mxu0
        %v6385 = vadd.f32 0.0, %v6384
        %v6386 = vpop.f32.mrb[0].mxu0
        %6387 = vdwg.mxu0
        %v6388 = vld [vmem:[%s15] sm:$0x1]
        %v6390 = vlaneseq
        %v6391 = vshrl.u32 %v6390, 7
        %v6392 = vsub.s32 0, %v6391
        %v6393 = vrot.slane %v6388, %v6392
        %v6395 = vmul.f32 %v6262, %v6393
        %v6396 = vmul.f32 %v6265, %v6393
        %v6397 = vmul.f32 %v6270, %v6393
        %v6398 = vmul.f32 %v6273, %v6393
        %v6399 = vmul.f32 %v6278, %v6393
        %v6400 = vmul.f32 %v6281, %v6393
        %v6401 = vmul.f32 %v6286, %v6393
        %v6402 = vmul.f32 %v6289, %v6393
        %v6403 = vmul.f32 %v6294, %v6393
        %v6404 = vmul.f32 %v6297, %v6393
        %v6405 = vmul.f32 %v6302, %v6393
        %v6406 = vmul.f32 %v6305, %v6393
        %v6407 = vmul.f32 %v6310, %v6393
        %v6408 = vmul.f32 %v6313, %v6393
        %v6409 = vmul.f32 %v6318, %v6393
        %v6410 = vmul.f32 %v6321, %v6393
        %v6411 = vmul.f32 %v6326, %v6393
        %v6412 = vmul.f32 %v6329, %v6393
        %v6413 = vmul.f32 %v6334, %v6393
        %v6414 = vmul.f32 %v6337, %v6393
        %v6415 = vmul.f32 %v6342, %v6393
        %v6416 = vmul.f32 %v6345, %v6393
        %v6417 = vmul.f32 %v6350, %v6393
        %v6418 = vmul.f32 %v6353, %v6393
        %v6419 = vmul.f32 %v6358, %v6393
        %v6420 = vmul.f32 %v6361, %v6393
        %v6421 = vmul.f32 %v6366, %v6393
        %v6422 = vmul.f32 %v6369, %v6393
        %v6423 = vmul.f32 %v6374, %v6393
        %v6424 = vmul.f32 %v6377, %v6393
        %v6425 = vmul.f32 %v6382, %v6393
        %v6426 = vmul.f32 %v6385, %v6393
        %v6427 = vld [vmem:[%s16] sm:$0x1]
        %v6429 = vlaneseq
        %v6430 = vshrl.u32 %v6429, 7
        %v6431 = vsub.s32 0, %v6430
        %v6432 = vrot.slane %v6427, %v6431
        %v6434 = vadd.f32 %v6395, %v6432
        %v6435 = vadd.f32 %v6396, %v6432
        %v6436 = vadd.f32 %v6397, %v6432
        %v6437 = vadd.f32 %v6398, %v6432
        %v6438 = vadd.f32 %v6399, %v6432
        %v6439 = vadd.f32 %v6400, %v6432
        %v6440 = vadd.f32 %v6401, %v6432
        %v6441 = vadd.f32 %v6402, %v6432
        %v6442 = vadd.f32 %v6403, %v6432
        %v6443 = vadd.f32 %v6404, %v6432
        %v6444 = vadd.f32 %v6405, %v6432
        %v6445 = vadd.f32 %v6406, %v6432
        %v6446 = vadd.f32 %v6407, %v6432
        %v6447 = vadd.f32 %v6408, %v6432
        %v6448 = vadd.f32 %v6409, %v6432
        %v6449 = vadd.f32 %v6410, %v6432
        %v6450 = vadd.f32 %v6411, %v6432
        %v6451 = vadd.f32 %v6412, %v6432
        %v6452 = vadd.f32 %v6413, %v6432
        %v6453 = vadd.f32 %v6414, %v6432
        %v6454 = vadd.f32 %v6415, %v6432
        %v6455 = vadd.f32 %v6416, %v6432
        %v6456 = vadd.f32 %v6417, %v6432
        %v6457 = vadd.f32 %v6418, %v6432
        %v6458 = vadd.f32 %v6419, %v6432
        %v6459 = vadd.f32 %v6420, %v6432
        %v6460 = vadd.f32 %v6421, %v6432
        %v6461 = vadd.f32 %v6422, %v6432
        %v6462 = vadd.f32 %v6423, %v6432
        %v6463 = vadd.f32 %v6424, %v6432
        %v6464 = vadd.f32 %v6425, %v6432
        %v6465 = vadd.f32 %v6426, %v6432
        %v6466 = vxor.u32 %v6434, 2147483648
        %v6467 = vxor.u32 %v6435, 2147483648
        %v6468 = vxor.u32 %v6436, 2147483648
        %v6469 = vxor.u32 %v6437, 2147483648
        %v6470 = vxor.u32 %v6438, 2147483648
        %v6471 = vxor.u32 %v6439, 2147483648
        %v6472 = vxor.u32 %v6440, 2147483648
        %v6473 = vxor.u32 %v6441, 2147483648
        %v6474 = vxor.u32 %v6442, 2147483648
        %v6475 = vxor.u32 %v6443, 2147483648
        %v6476 = vxor.u32 %v6444, 2147483648
        %v6477 = vxor.u32 %v6445, 2147483648
        %v6478 = vxor.u32 %v6446, 2147483648
        %v6479 = vxor.u32 %v6447, 2147483648
        %v6480 = vxor.u32 %v6448, 2147483648
        %v6481 = vxor.u32 %v6449, 2147483648
        %v6482 = vxor.u32 %v6450, 2147483648
        %v6483 = vxor.u32 %v6451, 2147483648
        %v6484 = vxor.u32 %v6452, 2147483648
        %v6485 = vxor.u32 %v6453, 2147483648
        %v6486 = vxor.u32 %v6454, 2147483648
        %v6487 = vxor.u32 %v6455, 2147483648
        %v6488 = vxor.u32 %v6456, 2147483648
        %v6489 = vxor.u32 %v6457, 2147483648
        %v6490 = vxor.u32 %v6458, 2147483648
        %v6491 = vxor.u32 %v6459, 2147483648
        %v6492 = vxor.u32 %v6460, 2147483648
        %v6493 = vxor.u32 %v6461, 2147483648
        %v6494 = vxor.u32 %v6462, 2147483648
        %v6495 = vxor.u32 %v6463, 2147483648
        %v6496 = vxor.u32 %v6464, 2147483648
        %v6497 = vxor.u32 %v6465, 2147483648
        %v6498 = vmul.f32 %v6466, 1.442695
        %v6499 = vpow.pop %v6498
        %v6500 = vmul.f32 %v6467, 1.442695
        %v6501 = vpow.pop %v6500
        %v6502 = vmul.f32 %v6468, 1.442695
        %v6503 = vpow.pop %v6502
        %v6504 = vmul.f32 %v6469, 1.442695
        %v6505 = vpow.pop %v6504
        %v6506 = vmul.f32 %v6470, 1.442695
        %v6507 = vpow.pop %v6506
        %v6508 = vmul.f32 %v6471, 1.442695
        %v6509 = vpow.pop %v6508
        %v6510 = vmul.f32 %v6472, 1.442695
        %v6511 = vpow.pop %v6510
        %v6512 = vmul.f32 %v6473, 1.442695
        %v6513 = vpow.pop %v6512
        %v6514 = vmul.f32 %v6474, 1.442695
        %v6515 = vpow.pop %v6514
        %v6516 = vmul.f32 %v6475, 1.442695
        %v6517 = vpow.pop %v6516
        %v6518 = vmul.f32 %v6476, 1.442695
        %v6519 = vpow.pop %v6518
        %v6520 = vmul.f32 %v6477, 1.442695
        %v6521 = vpow.pop %v6520
        %v6522 = vmul.f32 %v6478, 1.442695
        %v6523 = vpow.pop %v6522
        %v6524 = vmul.f32 %v6479, 1.442695
        %v6525 = vpow.pop %v6524
        %v6526 = vmul.f32 %v6480, 1.442695
        %v6527 = vpow.pop %v6526
        %v6528 = vmul.f32 %v6481, 1.442695
        %v6529 = vpow.pop %v6528
        %v6530 = vmul.f32 %v6482, 1.442695
        %v6531 = vpow.pop %v6530
        %v6532 = vmul.f32 %v6483, 1.442695
        %v6533 = vpow.pop %v6532
        %v6534 = vmul.f32 %v6484, 1.442695
        %v6535 = vpow.pop %v6534
        %v6536 = vmul.f32 %v6485, 1.442695
        %v6537 = vpow.pop %v6536
        %v6538 = vmul.f32 %v6486, 1.442695
        %v6539 = vpow.pop %v6538
        %v6540 = vmul.f32 %v6487, 1.442695
        %v6541 = vpow.pop %v6540
        %v6542 = vmul.f32 %v6488, 1.442695
        %v6543 = vpow.pop %v6542
        %v6544 = vmul.f32 %v6489, 1.442695
        %v6545 = vpow.pop %v6544
        %v6546 = vmul.f32 %v6490, 1.442695
        %v6547 = vpow.pop %v6546
        %v6548 = vmul.f32 %v6491, 1.442695
        %v6549 = vpow.pop %v6548
        %v6550 = vmul.f32 %v6492, 1.442695
        %v6551 = vpow.pop %v6550
        %v6552 = vmul.f32 %v6493, 1.442695
        %v6553 = vpow.pop %v6552
        %v6554 = vmul.f32 %v6494, 1.442695
        %v6555 = vpow.pop %v6554
        %v6556 = vmul.f32 %v6495, 1.442695
        %v6557 = vpow.pop %v6556
        %v6558 = vmul.f32 %v6496, 1.442695
        %v6559 = vpow.pop %v6558
        %v6560 = vmul.f32 %v6497, 1.442695
        %v6561 = vpow.pop %v6560
        %v6562 = vadd.f32 %v6499, 1.0
        %v6563 = vadd.f32 %v6501, 1.0
        %v6564 = vadd.f32 %v6503, 1.0
        %v6565 = vadd.f32 %v6505, 1.0
        %v6566 = vadd.f32 %v6507, 1.0
        %v6567 = vadd.f32 %v6509, 1.0
        %v6568 = vadd.f32 %v6511, 1.0
        %v6569 = vadd.f32 %v6513, 1.0
        %v6570 = vadd.f32 %v6515, 1.0
        %v6571 = vadd.f32 %v6517, 1.0
        %v6572 = vadd.f32 %v6519, 1.0
        %v6573 = vadd.f32 %v6521, 1.0
        %v6574 = vadd.f32 %v6523, 1.0
        %v6575 = vadd.f32 %v6525, 1.0
        %v6576 = vadd.f32 %v6527, 1.0
        %v6577 = vadd.f32 %v6529, 1.0
        %v6578 = vadd.f32 %v6531, 1.0
        %v6579 = vadd.f32 %v6533, 1.0
        %v6580 = vadd.f32 %v6535, 1.0
        %v6581 = vadd.f32 %v6537, 1.0
        %v6582 = vadd.f32 %v6539, 1.0
        %v6583 = vadd.f32 %v6541, 1.0
        %v6584 = vadd.f32 %v6543, 1.0
        %v6585 = vadd.f32 %v6545, 1.0
        %v6586 = vadd.f32 %v6547, 1.0
        %v6587 = vadd.f32 %v6549, 1.0
        %v6588 = vadd.f32 %v6551, 1.0
        %v6589 = vadd.f32 %v6553, 1.0
        %v6590 = vadd.f32 %v6555, 1.0
        %v6591 = vadd.f32 %v6557, 1.0
        %v6592 = vadd.f32 %v6559, 1.0
        %v6593 = vadd.f32 %v6561, 1.0
        %v6594 = vrcp.pop %v6562
        %v6595 = vmul.f32 1.0, %v6594
        %v6596 = vrcp.pop %v6563
        %v6597 = vmul.f32 1.0, %v6596
        %v6598 = vrcp.pop %v6564
        %v6599 = vmul.f32 1.0, %v6598
        %v6600 = vrcp.pop %v6565
        %v6601 = vmul.f32 1.0, %v6600
        %v6602 = vrcp.pop %v6566
        %v6603 = vmul.f32 1.0, %v6602
        %v6604 = vrcp.pop %v6567
        %v6605 = vmul.f32 1.0, %v6604
        %v6606 = vrcp.pop %v6568
        %v6607 = vmul.f32 1.0, %v6606
        %v6608 = vrcp.pop %v6569
        %v6609 = vmul.f32 1.0, %v6608
        %v6610 = vrcp.pop %v6570
        %v6611 = vmul.f32 1.0, %v6610
        %v6612 = vrcp.pop %v6571
        %v6613 = vmul.f32 1.0, %v6612
        %v6614 = vrcp.pop %v6572
        %v6615 = vmul.f32 1.0, %v6614
        %v6616 = vrcp.pop %v6573
        %v6617 = vmul.f32 1.0, %v6616
        %v6618 = vrcp.pop %v6574
        %v6619 = vmul.f32 1.0, %v6618
        %v6620 = vrcp.pop %v6575
        %v6621 = vmul.f32 1.0, %v6620
        %v6622 = vrcp.pop %v6576
        %v6623 = vmul.f32 1.0, %v6622
        %v6624 = vrcp.pop %v6577
        %v6625 = vmul.f32 1.0, %v6624
        %v6626 = vrcp.pop %v6578
        %v6627 = vmul.f32 1.0, %v6626
        %v6628 = vrcp.pop %v6579
        %v6629 = vmul.f32 1.0, %v6628
        %v6630 = vrcp.pop %v6580
        %v6631 = vmul.f32 1.0, %v6630
        %v6632 = vrcp.pop %v6581
        %v6633 = vmul.f32 1.0, %v6632
        %v6634 = vrcp.pop %v6582
        %v6635 = vmul.f32 1.0, %v6634
        %v6636 = vrcp.pop %v6583
        %v6637 = vmul.f32 1.0, %v6636
        %v6638 = vrcp.pop %v6584
        %v6639 = vmul.f32 1.0, %v6638
        %v6640 = vrcp.pop %v6585
        %v6641 = vmul.f32 1.0, %v6640
        %v6642 = vrcp.pop %v6586
        %v6643 = vmul.f32 1.0, %v6642
        %v6644 = vrcp.pop %v6587
        %v6645 = vmul.f32 1.0, %v6644
        %v6646 = vrcp.pop %v6588
        %v6647 = vmul.f32 1.0, %v6646
        %v6648 = vrcp.pop %v6589
        %v6649 = vmul.f32 1.0, %v6648
        %v6650 = vrcp.pop %v6590
        %v6651 = vmul.f32 1.0, %v6650
        %v6652 = vrcp.pop %v6591
        %v6653 = vmul.f32 1.0, %v6652
        %v6654 = vrcp.pop %v6592
        %v6655 = vmul.f32 1.0, %v6654
        %v6656 = vrcp.pop %v6593
        %v6657 = vmul.f32 1.0, %v6656
        %v6658 = vmul.f32 %v6434, %v6595
        %v6659 = vmul.f32 %v6435, %v6597
        %v6660 = vmul.f32 %v6436, %v6599
        %v6661 = vmul.f32 %v6437, %v6601
        %v6662 = vmul.f32 %v6438, %v6603
        %v6663 = vmul.f32 %v6439, %v6605
        %v6664 = vmul.f32 %v6440, %v6607
        %v6665 = vmul.f32 %v6441, %v6609
        %v6666 = vmul.f32 %v6442, %v6611
        %v6667 = vmul.f32 %v6443, %v6613
        %v6668 = vmul.f32 %v6444, %v6615
        %v6669 = vmul.f32 %v6445, %v6617
        %v6670 = vmul.f32 %v6446, %v6619
        %v6671 = vmul.f32 %v6447, %v6621
        %v6672 = vmul.f32 %v6448, %v6623
        %v6673 = vmul.f32 %v6449, %v6625
        %v6674 = vmul.f32 %v6450, %v6627
        %v6675 = vmul.f32 %v6451, %v6629
        %v6676 = vmul.f32 %v6452, %v6631
        %v6677 = vmul.f32 %v6453, %v6633
        %v6678 = vmul.f32 %v6454, %v6635
        %v6679 = vmul.f32 %v6455, %v6637
        %v6680 = vmul.f32 %v6456, %v6639
        %v6681 = vmul.f32 %v6457, %v6641
        %v6682 = vmul.f32 %v6458, %v6643
        %v6683 = vmul.f32 %v6459, %v6645
        %v6684 = vmul.f32 %v6460, %v6647
        %v6685 = vmul.f32 %v6461, %v6649
        %v6686 = vmul.f32 %v6462, %v6651
        %v6687 = vmul.f32 %v6463, %v6653
        %v6688 = vmul.f32 %v6464, %v6655
        %v6689 = vmul.f32 %v6465, %v6657
        %6690 = vst.msk [vmem:[%s566] sm:$0xff] %vm568, %v6658
        %6691 = vst.msk [vmem:[%s566 + $0x8] sm:$0xff] %vm568, %v6659
        %6692 = vst.msk [vmem:[%s566 + $0x10] sm:$0xff] %vm568, %v6660
        %6693 = vst.msk [vmem:[%s566 + $0x18] sm:$0xff] %vm568, %v6661
        %6694 = vst.msk [vmem:[%s566 + $0x20] sm:$0xff] %vm568, %v6662
        %6695 = vst.msk [vmem:[%s566 + $0x28] sm:$0xff] %vm568, %v6663
        %6696 = vst.msk [vmem:[%s566 + $0x30] sm:$0xff] %vm568, %v6664
        %6697 = vst.msk [vmem:[%s566 + $0x38] sm:$0xff] %vm568, %v6665
        %6698 = vst.msk [vmem:[%s566 + $0x40] sm:$0xff] %vm568, %v6666
        %6699 = vst.msk [vmem:[%s566 + $0x48] sm:$0xff] %vm568, %v6667
        %6700 = vst.msk [vmem:[%s566 + $0x50] sm:$0xff] %vm568, %v6668
        %6701 = vst.msk [vmem:[%s566 + $0x58] sm:$0xff] %vm568, %v6669
        %6702 = vst.msk [vmem:[%s566 + $0x60] sm:$0xff] %vm568, %v6670
        %6703 = vst.msk [vmem:[%s566 + $0x68] sm:$0xff] %vm568, %v6671
        %6704 = vst.msk [vmem:[%s566 + $0x70] sm:$0xff] %vm568, %v6672
        %6705 = vst.msk [vmem:[%s566 + $0x78] sm:$0xff] %vm568, %v6673
        %6706 = vst.msk [vmem:[%s566 + $0x80] sm:$0xff] %vm568, %v6674
        %6707 = vst.msk [vmem:[%s566 + $0x88] sm:$0xff] %vm568, %v6675
        %6708 = vst.msk [vmem:[%s566 + $0x90] sm:$0xff] %vm568, %v6676
        %6709 = vst.msk [vmem:[%s566 + $0x98] sm:$0xff] %vm568, %v6677
        %6710 = vst.msk [vmem:[%s566 + $0xa0] sm:$0xff] %vm568, %v6678
        %6711 = vst.msk [vmem:[%s566 + $0xa8] sm:$0xff] %vm568, %v6679
        %6712 = vst.msk [vmem:[%s566 + $0xb0] sm:$0xff] %vm568, %v6680
        %6713 = vst.msk [vmem:[%s566 + $0xb8] sm:$0xff] %vm568, %v6681
        %6714 = vst.msk [vmem:[%s566 + $0xc0] sm:$0xff] %vm568, %v6682
        %6715 = vst.msk [vmem:[%s566 + $0xc8] sm:$0xff] %vm568, %v6683
        %6716 = vst.msk [vmem:[%s566 + $0xd0] sm:$0xff] %vm568, %v6684
        %6717 = vst.msk [vmem:[%s566 + $0xd8] sm:$0xff] %vm568, %v6685
        %6718 = vst.msk [vmem:[%s566 + $0xe0] sm:$0xff] %vm568, %v6686
        %6719 = vst.msk [vmem:[%s566 + $0xe8] sm:$0xff] %vm568, %v6687
        %6720 = vst.msk [vmem:[%s566 + $0xf0] sm:$0xff] %vm568, %v6688
        %6721 = vst.msk [vmem:[%s566 + $0xf8] sm:$0xff] %vm568, %v6689
        %s6722 = sand.u32 %s404, 1
        %s6723 = scalar_lea.sflag [#allocation5], %s6722
        %s6724 = sand.u32 %s404, 1
        %s6725 = smul.addr %s6724, 256
        %s6726 = scalar_lea.vmem [#allocation6], %s6725
        // Predicated region
        $region93: #{tpu_custom_call.1} parent=87 // pred_check
          %p6727 = pneg %p414
        $region94: #{tpu_custom_call.1} parent=87 // pred_check_branch
          %6729 = sbr.rel (%p6727) target = $region96
        $region95: #{tpu_custom_call.1} parent=87 // pred_region
          %s6731 = ssub.s32 4096, 4096
          %6732 = vsyncadd %s6723, %s6731
          %s6733 = smul.addr %s34, 32
          %s6734 = smul.addr %s6733, 128
          %s6735 = scalar_lea.hbm %s17, %s6734
          %s6736 = sshll.u32 %s6726, 4
          %s6737 = int_to_ptr.vmem [resolvable:$true] %s6736
          %6742 = dma.vmem_to_hbm [thread:$0]  %s6737, 4096, %s6735, %s6723, 128, 128, 8
        $region96: #{tpu_custom_call.1} parent=87 // pred_fallthru
          _
      $region88: #{tpu_custom_call.1} parent=5 // pred_fallthru
        _
      %p6743 = scmp.le.s32.totalorder 2, %s29
      // Predicated region
      $region97: #{tpu_custom_call.1} parent=5 // pred_check
        %p6744 = pneg %p6743
      $region98: #{tpu_custom_call.1} parent=5 // pred_check_branch
        %6746 = sbr.rel (%p6744) target = $region100
      $region99: #{tpu_custom_call.1} parent=5 // pred_region
        %s6747 = ssub.s32 %s29, 2
        // Predicated region
        $region101: #{tpu_custom_call.1} parent=99 // pred_check
          %p6748 = pneg %p420
        $region102: #{tpu_custom_call.1} parent=99 // pred_check_branch
          %6750 = sbr.rel (%p6748) target = $region104
        $region103: #{tpu_custom_call.1} parent=99 // pred_region
          %s6751 = sand.u32 %s405, 1
          %s6752 = scalar_lea.sflag [#allocation5], %s6751
          %s6753 = sand.u32 %s405, 1
          %s6754 = smul.addr %s6753, 256
          %s6755 = scalar_lea.vmem [#allocation6], %s6754
          %6756 = dma.done %s6752, 4096
        $region104: #{tpu_custom_call.1} parent=99 // pred_fallthru
          _
      $region100: #{tpu_custom_call.1} parent=5 // pred_fallthru
        _
    $region6: #{tpu_custom_call.1} parent=1 // loop_footer
      %s33 = sadd.s32 1, %s29
    $region7: #{tpu_custom_call.1} parent=1 // loop_footer_branch
      %28 = sbr.rel target = $region3
    $region8: #{tpu_custom_call.1} parent=1 // loop_exit
      _
    %6757 = vsyncpa [#allocation4], 1
    %s6758 = scalar_lea.sflag [#allocation4], 1
    %6759 = vsyncpa %s6758, 1
    %6760 = vsyncpa [#allocation5], 1
    %s6761 = scalar_lea.sflag [#allocation5], 1
    %6762 = vsyncpa %s6761, 1

</llo_original>
